<compile_context>
chip_gen: v6e
topology: v6e:2x2x1
jax: 0.10.0
libtpu: 0.0.40
codegen_flags: <defaults>
</compile_context>

<pallas_src>
import jax
import jax.numpy as jnp
from jax import lax
from jax.experimental import pallas as pl
from jax.experimental.pallas import tpu as pltpu

# ---- hyper-parameters from AirFitBiLSTM.__init__ ------------------------------------
INPUT_SIZE = 8          # embeddings_dim (5) + features (3)
HIDDEN = 10
NUM_LAYERS = 2
NUM_EXERCISES = 23
EMB_DIM = 5
SEQ = 20                # forward() reshapes f to (-1, 20, 3)
NEG_INF = -1000000000.0

H = HIDDEN              # true per-direction hidden size (10)
HP = 16                 # padded per-direction hidden size (lane-aligned)
G2P = 2 * HP            # fused hidden width [h_fwd | h_rev] = 32 lanes
G8P = 8 * HP            # fused gate width [i|i' f|f' o|o' g|g'] = 128 lanes


# ======================================================================================
# Pallas kernel
# ======================================================================================
def airfit_kernel(x_ref, wge_ref, wgf0_ref, b0_ref, whh0_ref,
                  w1_ref, b1_ref, whh1_ref, aw_ref, ab_ref,
                  total_ref, ipe_ref,
                  gx0_ref, gx1_ref, out0_ref, out1_ref):
    T = SEQ
    B = x_ref.shape[1]

    # ---- constant direction mask over the fused-gate lanes (built once) --------------
    col8 = lax.broadcasted_iota(jnp.int32, (B, G8P), 1)
    fwd8 = ((col8 < HP)
            | ((col8 >= 2 * HP) & (col8 < 3 * HP))
            | ((col8 >= 4 * HP) & (col8 < 5 * HP))
            | ((col8 >= 6 * HP) & (col8 < 7 * HP)))        # forward-direction gate columns

    # ---- layer-0 gate-x: ONE batched pass over all T*B rows --------------------------
    x_all = x_ref[...].reshape(T * B, 4)                   # [e | f0 f1 f2]
    pad = x_all[:, 2:3] == 0.0                             # raw f[:, :, 1] == 0   (T*B, 1)
    iota_ex = lax.broadcasted_iota(jnp.int32, (T * B, NUM_EXERCISES), 1)
    oh = (x_all[:, 0:1].astype(jnp.int32) == iota_ex).astype(jnp.float32)   # (T*B, 23)
    p0 = (jnp.dot(oh, wge_ref[...], preferred_element_type=jnp.float32)
          + jnp.dot(x_all[:, 1:4], wgf0_ref[...], preferred_element_type=jnp.float32)
          + b0_ref[...]).reshape(T, B, G8P)
    # bake the reverse-direction time flip into the gate-x buffer (lane-dense stores)
    for t in range(T // 2):
        u = T - 1 - t
        pa, pb = p0[t], p0[u]
        gx0_ref[t] = jnp.where(fwd8, pa, pb)
        gx0_ref[u] = jnp.where(fwd8, pb, pa)

    # ---- fused bidirectional recurrence (one serial matmul + 3 EUP pushes per step) --
    def run_layer(gx_ref, whh, out_ref):
        h = jnp.zeros((B, G2P), jnp.float32)
        c = jnp.zeros((B, G2P), jnp.float32)
        for s in range(T):                                 # fully unrolled, T = 20
            gates = gx_ref[s] + jnp.dot(h, whh, preferred_element_type=jnp.float32)
            sig = jax.nn.sigmoid(gates[:, 0:3 * G2P])      # i | f | o (both directions)
            g_g = jnp.tanh(gates[:, 3 * G2P:4 * G2P])      # g       (both directions)
            c = sig[:, G2P:2 * G2P] * c + sig[:, 0:G2P] * g_g
            h = sig[:, 2 * G2P:3 * G2P] * jnp.tanh(c)
            # store already de-flipped: out_ref[t] = [h_fwd(t) | h_rev(t)]
            out_ref[s, :, 0:HP] = h[:, 0:HP]
            out_ref[T - 1 - s, :, HP:G2P] = h[:, HP:G2P]

    run_layer(gx0_ref, whh0_ref[...], out0_ref)

    # ---- layer-1 gate-x: ONE batched matmul over all T*B rows -------------------------
    p1 = (jnp.dot(out0_ref[...].reshape(T * B, G2P), w1_ref[...],
                  preferred_element_type=jnp.float32)
          + b1_ref[...]).reshape(T, B, G8P)
    for t in range(T // 2):
        u = T - 1 - t
        pa, pb = p1[t], p1[u]
        gx1_ref[t] = jnp.where(fwd8, pa, pb)
        gx1_ref[u] = jnp.where(fwd8, pb, pa)

    run_layer(gx1_ref, whh1_ref[...], out1_ref)

    # ---- attention + masked intensity epilogue (batched over all T*B rows) -----------
    lstm = out1_ref[...].reshape(T * B, G2P)               # lstm_out, already time-ordered
    row2 = lax.broadcasted_iota(jnp.int32, (G2P, 1), 0)
    hsum_col = ((row2 < H) | ((row2 >= HP) & (row2 < HP + H))).astype(jnp.float32)
    scores = (jnp.dot(lstm, aw_ref[...], preferred_element_type=jnp.float32)
              + ab_ref[...])                               # (T*B, 1)
    rsum = jnp.dot(jnp.maximum(lstm, 0.0), hsum_col,
                   preferred_element_type=jnp.float32)     # sum_j relu(h_j)   (T*B, 1)
    scores = jnp.maximum(jnp.where(pad, jnp.float32(NEG_INF), scores), 0.0)
    # relu(score * h_j) == score * relu(h_j) because score >= 0 after the ReLU above
    ipe = scores * rsum * jnp.where(pad, 0.0, 1.0)         # (T*B, 1)
    ipe3 = ipe.reshape(T, B, 1)
    ipe_bt = jnp.concatenate([ipe3[t] for t in range(T)], axis=1)   # (B, T)
    ipe_ref[...] = ipe_bt
    total_ref[...] = jnp.sum(ipe_bt, axis=1, keepdims=True)


# ======================================================================================
# Wrapper: weight fusion / reordering / zero-padding + pallas_call (batch-tiled grid)
# ======================================================================================
def _round_up(x, m):
    return ((x + m - 1) // m) * m


def _w_spec(w):
    n = w.ndim
    return pl.BlockSpec(w.shape, lambda i, n=n: (0,) * n)


def _pad_cols(w):
    return jnp.pad(w, ((0, 0), (0, HP - w.shape[1])))


def _gates_T(w):
    # torch (4H, in) rows [i, f, g, o] -> transposed per-gate (in, H) in fused order i, f, o, g
    wt = w.T.astype(jnp.float32)
    return wt[:, 0:H], wt[:, H:2 * H], wt[:, 3 * H:4 * H], wt[:, 2 * H:3 * H]


def _fuse_ih(w_f, w_r):
    # -> (in, G8P) columns [i_f|i_r|f_f|f_r|o_f|o_r|g_f|g_r], each block HP wide, zero-padded
    blocks = []
    for gf, gr in zip(_gates_T(w_f), _gates_T(w_r)):
        blocks += [_pad_cols(gf), _pad_cols(gr)]
    return jnp.concatenate(blocks, axis=1)


def _fuse_hh(w_f, w_r):
    # (4H, H) each -> block-diagonal (2*HP, G8P): h_f rows feed *_f columns, h_r rows feed *_r
    gf = [_pad_cols(g) for g in _gates_T(w_f)]
    gr = [_pad_cols(g) for g in _gates_T(w_r)]
    z = jnp.zeros((H, HP), jnp.float32)
    top = jnp.concatenate([gf[0], z, gf[1], z, gf[2], z, gf[3], z], axis=1)
    bot = jnp.concatenate([z, gr[0], z, gr[1], z, gr[2], z, gr[3]], axis=1)
    zrow = jnp.zeros((HP - H, G8P), jnp.float32)
    return jnp.concatenate([top, zrow, bot, zrow], axis=0)           # (32, 128)


def _pad_hidden_rows(w):
    # (2H, cols) fwd-then-rev rows -> (2*HP, cols) with exact-zero rows in the padded lanes
    z = jnp.zeros((HP - H, w.shape[1]), jnp.float32)
    return jnp.concatenate([w[:H].astype(jnp.float32), z,
                            w[H:2 * H].astype(jnp.float32), z], axis=0)


def airfit_bilstm_forward(e, f, params, *, batch_block=128):
    """e: (B, 20) int exercise ids; f: reshapeable to (B, 20, 3) features.
    Returns (total_intensity (B, 1), intensity_per_exercise (B, 20)) like the torch module."""
    p = params
    f32 = jnp.float32

    f3 = jnp.reshape(f, (-1, SEQ, 3)).astype(f32)
    B = f3.shape[0]
    e3 = jnp.reshape(e, (B, SEQ)).astype(f32)[:, :, None]
    x = jnp.concatenate([e3, f3], axis=2)                   # (B, T, 4): [e | raw f]
    x_tm = jnp.transpose(x, (1, 0, 2))                      # (T, B, 4)

    B8 = _round_up(B, 8)
    bB = min(batch_block, B8)
    if B8 >= 16 and bB >= B8:
        # v7x megacore: ensure the "parallel" batch grid has at least 2 blocks when splittable.
        bB = _round_up((B8 + 1) // 2, 8)
    B_pad = _round_up(B8, bB)
    if B_pad != B:
        x_tm = jnp.pad(x_tm, ((0, 0), (0, B_pad - B), (0, 0)))
    nb = B_pad // bB

    # ---- layer 0: fold embedding table + feature Linear into the fused gate projection ----
    wih0 = _fuse_ih(p["w_ih"][0][0], p["w_ih"][0][1])                   # (8, 128)
    w_ge = p["emb_w"].astype(f32) @ wih0[0:EMB_DIM]                     # (23, 128)
    w_gf0 = p["feat_w"].T.astype(f32) @ wih0[EMB_DIM:]                  # (3, 128)
    b0 = (_fuse_ih((p["b_ih"][0][0] + p["b_hh"][0][0])[:, None],
                   (p["b_ih"][0][1] + p["b_hh"][0][1])[:, None])
          + p["feat_b"].astype(f32)[None, :] @ wih0[EMB_DIM:])          # (1, 128)
    whh0 = _fuse_hh(p["w_hh"][0][0], p["w_hh"][0][1])                   # (32, 128)

    # ---- layer 1 ---------------------------------------------------------------------------
    w1 = _pad_hidden_rows(_fuse_ih(p["w_ih"][1][0], p["w_ih"][1][1]))   # (32, 128)
    b1 = _fuse_ih((p["b_ih"][1][0] + p["b_hh"][1][0])[:, None],
                  (p["b_ih"][1][1] + p["b_hh"][1][1])[:, None])         # (1, 128)
    whh1 = _fuse_hh(p["w_hh"][1][0], p["w_hh"][1][1])                   # (32, 128)

    # ---- attention -------------------------------------------------------------------------
    aw_col = _pad_hidden_rows(p["attn_w"].astype(f32).T)                # (32, 1) [fwd | rev]
    ab = p["attn_b"].astype(f32).reshape(1, 1)

    weights = (w_ge, w_gf0, b0, whh0, w1, b1, whh1, aw_col, ab)

    total_p, ipe_p = pl.pallas_call(
        airfit_kernel,
        out_shape=(jax.ShapeDtypeStruct((B_pad, 1), f32),
                   jax.ShapeDtypeStruct((B_pad, SEQ), f32)),
        grid=(nb,),
        in_specs=[pl.BlockSpec((SEQ, bB, 4), lambda i: (0, i, 0))]
                 + [_w_spec(w) for w in weights],
        out_specs=(pl.BlockSpec((bB, 1), lambda i: (i, 0)),
                   pl.BlockSpec((bB, SEQ), lambda i: (i, 0))),
        scratch_shapes=[pltpu.VMEM((SEQ, bB, G8P), f32),     # layer-0 gate-x
                        pltpu.VMEM((SEQ, bB, G8P), f32),     # layer-1 gate-x
                        pltpu.VMEM((SEQ, bB, G2P), f32),     # layer-0 hidden outputs
                        pltpu.VMEM((SEQ, bB, G2P), f32)],    # layer-1 hidden outputs
        compiler_params=pltpu.CompilerParams(
            dimension_semantics=("parallel",),
            vmem_limit_bytes=32 * 1024 * 1024),
    )(x_tm, *weights)

    return total_p[:B], ipe_p[:B]


# ======================================================================================
# Deterministic parameter init (same shapes as the torch module) + pure-JAX reference
# ======================================================================================
def init_params(key):
    ks = list(jax.random.split(key, 24))
    it = iter(ks)

    def unif(k, shape, scale):
        return jax.random.uniform(k, shape, jnp.float32, -scale, scale)

    emb_w = jax.random.normal(next(it), (NUM_EXERCISES, EMB_DIM), jnp.float32)
    emb_w = emb_w.at[0].set(0.0)       # embedding.weight[0] = zeros
    s_feat = 1.0 / (3.0 ** 0.5)
    feat_w = unif(next(it), (3, 3), s_feat)
    feat_b = unif(next(it), (3,), s_feat)
    s = 1.0 / (HIDDEN ** 0.5)
    w_ih, w_hh, b_ih, b_hh = [], [], [], []
    for layer in range(NUM_LAYERS):
        in_dim = INPUT_SIZE if layer == 0 else 2 * HIDDEN
        wi, wh, bi, bh = [], [], [], []
        for _d in range(2):            # forward / reverse directions
            wi.append(unif(next(it), (4 * HIDDEN, in_dim), s))
            wh.append(unif(next(it), (4 * HIDDEN, HIDDEN), s))
            bi.append(unif(next(it), (4 * HIDDEN,), s))
            bh.append(unif(next(it), (4 * HIDDEN,), s))
        w_ih.append(wi); w_hh.append(wh); b_ih.append(bi); b_hh.append(bh)
    s_attn = 1.0 / ((2.0 * HIDDEN) ** 0.5)
    attn_w = unif(next(it), (1, 2 * HIDDEN), s_attn)
    attn_b = unif(next(it), (1,), s_attn)
    return dict(emb_w=emb_w, feat_w=feat_w, feat_b=feat_b,
                w_ih=w_ih, w_hh=w_hh, b_ih=b_ih, b_hh=b_hh,
                attn_w=attn_w, attn_b=attn_b)


def reference_forward(e, f, p):
    emb = p["emb_w"][e]                                             # (B, T, 5)
    f3 = jnp.reshape(f, (-1, SEQ, 3)).astype(jnp.float32)
    mask = jnp.where(f3[:, :, 1] == 0.0, 0.0, 1.0)                  # (B, T)
    feat = f3 @ p["feat_w"].T + p["feat_b"]
    x = jnp.concatenate([emb, feat], axis=2)                        # (B, T, 8)

    def cell(x_t, h, c, w_ih, w_hh, b):
        g = x_t @ w_ih.T + h @ w_hh.T + b
        i = jax.nn.sigmoid(g[:, :HIDDEN])
        fg = jax.nn.sigmoid(g[:, HIDDEN:2 * HIDDEN])
        gg = jnp.tanh(g[:, 2 * HIDDEN:3 * HIDDEN])
        o = jax.nn.sigmoid(g[:, 3 * HIDDEN:])
        c = fg * c + i * gg
        h = o * jnp.tanh(c)
        return h, c

    def run_dir(x, w_ih, w_hh, b, reverse):
        B = x.shape[0]
        h = jnp.zeros((B, HIDDEN), jnp.float32)
        c = jnp.zeros((B, HIDDEN), jnp.float32)
        outs = [None] * SEQ
        order = range(SEQ - 1, -1, -1) if reverse else range(SEQ)
        for t in order:
            h, c = cell(x[:, t], h, c, w_ih, w_hh, b)
            outs[t] = h
        return jnp.stack(outs, axis=1)

    for layer in range(NUM_LAYERS):
        of = run_dir(x, p["w_ih"][layer][0], p["w_hh"][layer][0],
                     p["b_ih"][layer][0] + p["b_hh"][layer][0], False)
        orv = run_dir(x, p["w_ih"][layer][1], p["w_hh"][layer][1],
                      p["b_ih"][layer][1] + p["b_hh"][layer][1], True)
        x = jnp.concatenate([of, orv], axis=2)
    lstm_out = x                                                     # (B, T, 20)
    scores = (lstm_out @ p["attn_w"].T)[:, :, 0] + p["attn_b"][0]
    scores = jnp.where(mask == 0.0, NEG_INF, scores)
    scores = jnp.maximum(scores, 0.0)[:, :, None]
    ipe = jnp.maximum(scores * lstm_out, 0.0).sum(axis=2)
    ipe = ipe * mask
    total = ipe.sum(axis=1, keepdims=True)
    return total, ipe


if __name__ == "__main__":
    key = jax.random.PRNGKey(0)
    kp, ke, kf = jax.random.split(key, 3)
    params = init_params(kp)

    B = 2
    e = jax.random.randint(ke, (B, SEQ), 0, NUM_EXERCISES).astype(jnp.int32)
    f = jax.random.normal(kf, (B, SEQ, 3), jnp.float32)
    # zero-pad the tail of each sequence so the mask path (f[:, :, 1] == 0) is exercised
    f = f.at[0, 15:, :].set(0.0)
    f = f.at[1, 18:, :].set(0.0)
    e = e.at[0, 15:].set(0)
    e = e.at[1, 18:].set(0)

    total, ipe = airfit_bilstm_forward(e, f, params)
    jax.block_until_ready((total, ipe))

    ref_total, ref_ipe = reference_forward(e, f, params)
    assert total.shape == (B, 1) and ipe.shape == (B, SEQ)
    assert jnp.allclose(total, ref_total, atol=2e-3, rtol=2e-3)
    assert jnp.allclose(ipe, ref_ipe, atol=2e-3, rtol=2e-3)
    print("KERNEL_OK")
</pallas_src>

<mosaic_0001>
module attributes {stable_mosaic.version = 11 : i64} {
  func.func @airfit_kernel(%arg0: i32, %arg1: memref<20x8x4xf32, #tpu.memory_space<vmem>>, %arg2: memref<23x128xf32, #tpu.memory_space<vmem>>, %arg3: memref<3x128xf32, #tpu.memory_space<vmem>>, %arg4: memref<1x128xf32, #tpu.memory_space<vmem>>, %arg5: memref<32x128xf32, #tpu.memory_space<vmem>>, %arg6: memref<32x128xf32, #tpu.memory_space<vmem>>, %arg7: memref<1x128xf32, #tpu.memory_space<vmem>>, %arg8: memref<32x128xf32, #tpu.memory_space<vmem>>, %arg9: memref<32x1xf32, #tpu.memory_space<vmem>>, %arg10: memref<1x1xf32, #tpu.memory_space<vmem>>, %arg11: memref<8x1xf32, #tpu.memory_space<vmem>>, %arg12: memref<8x20xf32, #tpu.memory_space<vmem>>, %arg13: memref<20x8x128xf32, #tpu.memory_space<vmem>>, %arg14: memref<20x8x128xf32, #tpu.memory_space<vmem>>, %arg15: memref<20x8x32xf32, #tpu.memory_space<vmem>>, %arg16: memref<20x8x32xf32, #tpu.memory_space<vmem>>) attributes {dimension_semantics = [#tpu.dimension_semantics<parallel>], iteration_bounds = array<i64: 1>, scalar_prefetch = 0 : i64, scratch_operands = 4 : i64, tpu.core_type = #tpu.core_type<tc>, window_params = [{transform_indices = @transform_0, window_bounds = array<i64: 20, 8, 4>}, {pipeline_mode = #tpu.pipeline_mode<synchronous>, transform_indices = @transform_1, window_bounds = array<i64: 23, 128>}, {pipeline_mode = #tpu.pipeline_mode<synchronous>, transform_indices = @transform_2, window_bounds = array<i64: 3, 128>}, {pipeline_mode = #tpu.pipeline_mode<synchronous>, transform_indices = @transform_3, window_bounds = array<i64: 1, 128>}, {pipeline_mode = #tpu.pipeline_mode<synchronous>, transform_indices = @transform_4, window_bounds = array<i64: 32, 128>}, {pipeline_mode = #tpu.pipeline_mode<synchronous>, transform_indices = @transform_5, window_bounds = array<i64: 32, 128>}, {pipeline_mode = #tpu.pipeline_mode<synchronous>, transform_indices = @transform_6, window_bounds = array<i64: 1, 128>}, {pipeline_mode = #tpu.pipeline_mode<synchronous>, transform_indices = @transform_7, window_bounds = array<i64: 32, 128>}, {pipeline_mode = #tpu.pipeline_mode<synchronous>, transform_indices = @transform_8, window_bounds = array<i64: 32, 1>}, {pipeline_mode = #tpu.pipeline_mode<synchronous>, transform_indices = @transform_9, window_bounds = array<i64: 1, 1>}, {transform_indices = @transform_10, window_bounds = array<i64: 8, 1>}, {transform_indices = @transform_11, window_bounds = array<i64: 8, 20>}]} {
    %0 = tpu.iota {dimensions = array<i32: 1>} : vector<8x128xi32>
    %c16_i32 = arith.constant 16 : i32
    %1 = vector.broadcast %c16_i32 : i32 to vector<8x128xi32>
    %2 = arith.cmpi slt, %0, %1 : vector<8x128xi32>
    %c32_i32 = arith.constant 32 : i32
    %3 = vector.broadcast %c32_i32 : i32 to vector<8x128xi32>
    %4 = arith.cmpi sge, %0, %3 : vector<8x128xi32>
    %c48_i32 = arith.constant 48 : i32
    %5 = vector.broadcast %c48_i32 : i32 to vector<8x128xi32>
    %6 = arith.cmpi slt, %0, %5 : vector<8x128xi32>
    %7 = arith.andi %4, %6 : vector<8x128xi1>
    %8 = arith.ori %2, %7 : vector<8x128xi1>
    %c64_i32 = arith.constant 64 : i32
    %9 = vector.broadcast %c64_i32 : i32 to vector<8x128xi32>
    %10 = arith.cmpi sge, %0, %9 : vector<8x128xi32>
    %c80_i32 = arith.constant 80 : i32
    %11 = vector.broadcast %c80_i32 : i32 to vector<8x128xi32>
    %12 = arith.cmpi slt, %0, %11 : vector<8x128xi32>
    %13 = arith.andi %10, %12 : vector<8x128xi1>
    %14 = arith.ori %8, %13 : vector<8x128xi1>
    %c96_i32 = arith.constant 96 : i32
    %15 = vector.broadcast %c96_i32 : i32 to vector<8x128xi32>
    %16 = arith.cmpi sge, %0, %15 : vector<8x128xi32>
    %c112_i32 = arith.constant 112 : i32
    %17 = vector.broadcast %c112_i32 : i32 to vector<8x128xi32>
    %18 = arith.cmpi slt, %0, %17 : vector<8x128xi32>
    %19 = arith.andi %16, %18 : vector<8x128xi1>
    %20 = arith.ori %14, %19 : vector<8x128xi1>
    %c0 = arith.constant 0 : index
    %c0_0 = arith.constant 0 : index
    %c0_1 = arith.constant 0 : index
    %21 = vector.load %arg1[%c0, %c0_0, %c0_1] : memref<20x8x4xf32, #tpu.memory_space<vmem>>, vector<20x8x4xf32>
    %22 = vector.shape_cast %21 : vector<20x8x4xf32> to vector<160x4xf32>
    %23 = vector.extract_strided_slice %22 {offsets = [0, 2], sizes = [160, 1], strides = [1, 1]} : vector<160x4xf32> to vector<160x1xf32>
    %cst = arith.constant 0.000000e+00 : f32
    %24 = vector.broadcast %cst : f32 to vector<160x1xf32>
    %25 = arith.cmpf oeq, %23, %24 : vector<160x1xf32>
    %26 = tpu.iota {dimensions = array<i32: 1>} : vector<160x23xi32>
    %27 = vector.extract_strided_slice %22 {offsets = [0, 0], sizes = [160, 1], strides = [1, 1]} : vector<160x4xf32> to vector<160x1xf32>
    %28 = arith.fptosi %27 : vector<160x1xf32> to vector<160x1xi32>
    %29 = vector.broadcast %28 : vector<160x1xi32> to vector<160x23xi32>
    %30 = arith.cmpi eq, %29, %26 : vector<160x23xi32>
    %31 = arith.extui %30 : vector<160x23xi1> to vector<160x23xi32>
    %32 = arith.sitofp %31 : vector<160x23xi32> to vector<160x23xf32>
    %c0_2 = arith.constant 0 : index
    %c0_3 = arith.constant 0 : index
    %33 = vector.load %arg2[%c0_2, %c0_3] : memref<23x128xf32, #tpu.memory_space<vmem>>, vector<23x128xf32>
    %cst_4 = arith.constant dense<0.000000e+00> : vector<160x128xf32>
    %34 = tpu.matmul %32, %33, %cst_4 {dimension_numbers = #tpu.dot_dimension_numbers<[1], [0], [0], [1], [0, 0, 1, 1], [], []>} : vector<160x23xf32>, vector<23x128xf32>, vector<160x128xf32> -> vector<160x128xf32>
    %35 = vector.extract_strided_slice %22 {offsets = [0, 1], sizes = [160, 3], strides = [1, 1]} : vector<160x4xf32> to vector<160x3xf32>
    %c0_5 = arith.constant 0 : index
    %c0_6 = arith.constant 0 : index
    %36 = vector.load %arg3[%c0_5, %c0_6] : memref<3x128xf32, #tpu.memory_space<vmem>>, vector<3x128xf32>
    %cst_7 = arith.constant dense<0.000000e+00> : vector<160x128xf32>
    %37 = tpu.matmul %35, %36, %cst_7 {dimension_numbers = #tpu.dot_dimension_numbers<[1], [0], [0], [1], [0, 0, 1, 1], [], []>} : vector<160x3xf32>, vector<3x128xf32>, vector<160x128xf32> -> vector<160x128xf32>
    %38 = arith.addf %34, %37 : vector<160x128xf32>
    %c0_8 = arith.constant 0 : index
    %c0_9 = arith.constant 0 : index
    %39 = vector.load %arg4[%c0_8, %c0_9] : memref<1x128xf32, #tpu.memory_space<vmem>>, vector<1x128xf32>
    %40 = vector.broadcast %39 : vector<1x128xf32> to vector<160x128xf32>
    %41 = arith.addf %38, %40 : vector<160x128xf32>
    %42 = vector.shape_cast %41 : vector<160x128xf32> to vector<20x8x128xf32>
    %43 = vector.extract_strided_slice %42 {offsets = [0, 0, 0], sizes = [1, 8, 128], strides = [1, 1, 1]} : vector<20x8x128xf32> to vector<1x8x128xf32>
    %44 = vector.shape_cast %43 : vector<1x8x128xf32> to vector<8x128xf32>
    %45 = vector.extract_strided_slice %42 {offsets = [19, 0, 0], sizes = [1, 8, 128], strides = [1, 1, 1]} : vector<20x8x128xf32> to vector<1x8x128xf32>
    %46 = vector.shape_cast %45 : vector<1x8x128xf32> to vector<8x128xf32>
    %47 = arith.select %20, %44, %46 : vector<8x128xi1>, vector<8x128xf32>
    %c0_10 = arith.constant 0 : index
    %c0_11 = arith.constant 0 : index
    %c0_12 = arith.constant 0 : index
    %48 = vector.load %arg13[%c0_10, %c0_11, %c0_12] : memref<20x8x128xf32, #tpu.memory_space<vmem>>, vector<1x8x128xf32>
    %49 = vector.shape_cast %48 : vector<1x8x128xf32> to vector<8x128xf32>
    %50 = vector.shape_cast %47 : vector<8x128xf32> to vector<1x8x128xf32>
    tpu.vector_store %arg13[%c0_10, %c0_11, %c0_12], %50 {strides = array<i32>} : memref<20x8x128xf32, #tpu.memory_space<vmem>>, vector<1x8x128xf32>,
    %51 = arith.select %20, %46, %44 : vector<8x128xi1>, vector<8x128xf32>
    %c19 = arith.constant 19 : index
    %c0_13 = arith.constant 0 : index
    %c0_14 = arith.constant 0 : index
    %52 = vector.load %arg13[%c19, %c0_13, %c0_14] : memref<20x8x128xf32, #tpu.memory_space<vmem>>, vector<1x8x128xf32>
    %53 = vector.shape_cast %52 : vector<1x8x128xf32> to vector<8x128xf32>
    %54 = vector.shape_cast %51 : vector<8x128xf32> to vector<1x8x128xf32>
    tpu.vector_store %arg13[%c19, %c0_13, %c0_14], %54 {strides = array<i32>} : memref<20x8x128xf32, #tpu.memory_space<vmem>>, vector<1x8x128xf32>,
    %55 = vector.extract_strided_slice %42 {offsets = [1, 0, 0], sizes = [1, 8, 128], strides = [1, 1, 1]} : vector<20x8x128xf32> to vector<1x8x128xf32>
    %56 = vector.shape_cast %55 : vector<1x8x128xf32> to vector<8x128xf32>
    %57 = vector.extract_strided_slice %42 {offsets = [18, 0, 0], sizes = [1, 8, 128], strides = [1, 1, 1]} : vector<20x8x128xf32> to vector<1x8x128xf32>
    %58 = vector.shape_cast %57 : vector<1x8x128xf32> to vector<8x128xf32>
    %59 = arith.select %20, %56, %58 : vector<8x128xi1>, vector<8x128xf32>
    %c1 = arith.constant 1 : index
    %c0_15 = arith.constant 0 : index
    %c0_16 = arith.constant 0 : index
    %60 = vector.load %arg13[%c1, %c0_15, %c0_16] : memref<20x8x128xf32, #tpu.memory_space<vmem>>, vector<1x8x128xf32>
    %61 = vector.shape_cast %60 : vector<1x8x128xf32> to vector<8x128xf32>
    %62 = vector.shape_cast %59 : vector<8x128xf32> to vector<1x8x128xf32>
    tpu.vector_store %arg13[%c1, %c0_15, %c0_16], %62 {strides = array<i32>} : memref<20x8x128xf32, #tpu.memory_space<vmem>>, vector<1x8x128xf32>,
    %63 = arith.select %20, %58, %56 : vector<8x128xi1>, vector<8x128xf32>
    %c18 = arith.constant 18 : index
    %c0_17 = arith.constant 0 : index
    %c0_18 = arith.constant 0 : index
    %64 = vector.load %arg13[%c18, %c0_17, %c0_18] : memref<20x8x128xf32, #tpu.memory_space<vmem>>, vector<1x8x128xf32>
    %65 = vector.shape_cast %64 : vector<1x8x128xf32> to vector<8x128xf32>
    %66 = vector.shape_cast %63 : vector<8x128xf32> to vector<1x8x128xf32>
    tpu.vector_store %arg13[%c18, %c0_17, %c0_18], %66 {strides = array<i32>} : memref<20x8x128xf32, #tpu.memory_space<vmem>>, vector<1x8x128xf32>,
    %67 = vector.extract_strided_slice %42 {offsets = [2, 0, 0], sizes = [1, 8, 128], strides = [1, 1, 1]} : vector<20x8x128xf32> to vector<1x8x128xf32>
    %68 = vector.shape_cast %67 : vector<1x8x128xf32> to vector<8x128xf32>
    %69 = vector.extract_strided_slice %42 {offsets = [17, 0, 0], sizes = [1, 8, 128], strides = [1, 1, 1]} : vector<20x8x128xf32> to vector<1x8x128xf32>
    %70 = vector.shape_cast %69 : vector<1x8x128xf32> to vector<8x128xf32>
    %71 = arith.select %20, %68, %70 : vector<8x128xi1>, vector<8x128xf32>
    %c2 = arith.constant 2 : index
    %c0_19 = arith.constant 0 : index
    %c0_20 = arith.constant 0 : index
    %72 = vector.load %arg13[%c2, %c0_19, %c0_20] : memref<20x8x128xf32, #tpu.memory_space<vmem>>, vector<1x8x128xf32>
    %73 = vector.shape_cast %72 : vector<1x8x128xf32> to vector<8x128xf32>
    %74 = vector.shape_cast %71 : vector<8x128xf32> to vector<1x8x128xf32>
    tpu.vector_store %arg13[%c2, %c0_19, %c0_20], %74 {strides = array<i32>} : memref<20x8x128xf32, #tpu.memory_space<vmem>>, vector<1x8x128xf32>,
    %75 = arith.select %20, %70, %68 : vector<8x128xi1>, vector<8x128xf32>
    %c17 = arith.constant 17 : index
    %c0_21 = arith.constant 0 : index
    %c0_22 = arith.constant 0 : index
    %76 = vector.load %arg13[%c17, %c0_21, %c0_22] : memref<20x8x128xf32, #tpu.memory_space<vmem>>, vector<1x8x128xf32>
    %77 = vector.shape_cast %76 : vector<1x8x128xf32> to vector<8x128xf32>
    %78 = vector.shape_cast %75 : vector<8x128xf32> to vector<1x8x128xf32>
    tpu.vector_store %arg13[%c17, %c0_21, %c0_22], %78 {strides = array<i32>} : memref<20x8x128xf32, #tpu.memory_space<vmem>>, vector<1x8x128xf32>,
    %79 = vector.extract_strided_slice %42 {offsets = [3, 0, 0], sizes = [1, 8, 128], strides = [1, 1, 1]} : vector<20x8x128xf32> to vector<1x8x128xf32>
    %80 = vector.shape_cast %79 : vector<1x8x128xf32> to vector<8x128xf32>
    %81 = vector.extract_strided_slice %42 {offsets = [16, 0, 0], sizes = [1, 8, 128], strides = [1, 1, 1]} : vector<20x8x128xf32> to vector<1x8x128xf32>
    %82 = vector.shape_cast %81 : vector<1x8x128xf32> to vector<8x128xf32>
    %83 = arith.select %20, %80, %82 : vector<8x128xi1>, vector<8x128xf32>
    %c3 = arith.constant 3 : index
    %c0_23 = arith.constant 0 : index
    %c0_24 = arith.constant 0 : index
    %84 = vector.load %arg13[%c3, %c0_23, %c0_24] : memref<20x8x128xf32, #tpu.memory_space<vmem>>, vector<1x8x128xf32>
    %85 = vector.shape_cast %84 : vector<1x8x128xf32> to vector<8x128xf32>
    %86 = vector.shape_cast %83 : vector<8x128xf32> to vector<1x8x128xf32>
    tpu.vector_store %arg13[%c3, %c0_23, %c0_24], %86 {strides = array<i32>} : memref<20x8x128xf32, #tpu.memory_space<vmem>>, vector<1x8x128xf32>,
    %87 = arith.select %20, %82, %80 : vector<8x128xi1>, vector<8x128xf32>
    %c16 = arith.constant 16 : index
    %c0_25 = arith.constant 0 : index
    %c0_26 = arith.constant 0 : index
    %88 = vector.load %arg13[%c16, %c0_25, %c0_26] : memref<20x8x128xf32, #tpu.memory_space<vmem>>, vector<1x8x128xf32>
    %89 = vector.shape_cast %88 : vector<1x8x128xf32> to vector<8x128xf32>
    %90 = vector.shape_cast %87 : vector<8x128xf32> to vector<1x8x128xf32>
    tpu.vector_store %arg13[%c16, %c0_25, %c0_26], %90 {strides = array<i32>} : memref<20x8x128xf32, #tpu.memory_space<vmem>>, vector<1x8x128xf32>,
    %91 = vector.extract_strided_slice %42 {offsets = [4, 0, 0], sizes = [1, 8, 128], strides = [1, 1, 1]} : vector<20x8x128xf32> to vector<1x8x128xf32>
    %92 = vector.shape_cast %91 : vector<1x8x128xf32> to vector<8x128xf32>
    %93 = vector.extract_strided_slice %42 {offsets = [15, 0, 0], sizes = [1, 8, 128], strides = [1, 1, 1]} : vector<20x8x128xf32> to vector<1x8x128xf32>
    %94 = vector.shape_cast %93 : vector<1x8x128xf32> to vector<8x128xf32>
    %95 = arith.select %20, %92, %94 : vector<8x128xi1>, vector<8x128xf32>
    %c4 = arith.constant 4 : index
    %c0_27 = arith.constant 0 : index
    %c0_28 = arith.constant 0 : index
    %96 = vector.load %arg13[%c4, %c0_27, %c0_28] : memref<20x8x128xf32, #tpu.memory_space<vmem>>, vector<1x8x128xf32>
    %97 = vector.shape_cast %96 : vector<1x8x128xf32> to vector<8x128xf32>
    %98 = vector.shape_cast %95 : vector<8x128xf32> to vector<1x8x128xf32>
    tpu.vector_store %arg13[%c4, %c0_27, %c0_28], %98 {strides = array<i32>} : memref<20x8x128xf32, #tpu.memory_space<vmem>>, vector<1x8x128xf32>,
    %99 = arith.select %20, %94, %92 : vector<8x128xi1>, vector<8x128xf32>
    %c15 = arith.constant 15 : index
    %c0_29 = arith.constant 0 : index
    %c0_30 = arith.constant 0 : index
    %100 = vector.load %arg13[%c15, %c0_29, %c0_30] : memref<20x8x128xf32, #tpu.memory_space<vmem>>, vector<1x8x128xf32>
    %101 = vector.shape_cast %100 : vector<1x8x128xf32> to vector<8x128xf32>
    %102 = vector.shape_cast %99 : vector<8x128xf32> to vector<1x8x128xf32>
    tpu.vector_store %arg13[%c15, %c0_29, %c0_30], %102 {strides = array<i32>} : memref<20x8x128xf32, #tpu.memory_space<vmem>>, vector<1x8x128xf32>,
    %103 = vector.extract_strided_slice %42 {offsets = [5, 0, 0], sizes = [1, 8, 128], strides = [1, 1, 1]} : vector<20x8x128xf32> to vector<1x8x128xf32>
    %104 = vector.shape_cast %103 : vector<1x8x128xf32> to vector<8x128xf32>
    %105 = vector.extract_strided_slice %42 {offsets = [14, 0, 0], sizes = [1, 8, 128], strides = [1, 1, 1]} : vector<20x8x128xf32> to vector<1x8x128xf32>
    %106 = vector.shape_cast %105 : vector<1x8x128xf32> to vector<8x128xf32>
    %107 = arith.select %20, %104, %106 : vector<8x128xi1>, vector<8x128xf32>
    %c5 = arith.constant 5 : index
    %c0_31 = arith.constant 0 : index
    %c0_32 = arith.constant 0 : index
    %108 = vector.load %arg13[%c5, %c0_31, %c0_32] : memref<20x8x128xf32, #tpu.memory_space<vmem>>, vector<1x8x128xf32>
    %109 = vector.shape_cast %108 : vector<1x8x128xf32> to vector<8x128xf32>
    %110 = vector.shape_cast %107 : vector<8x128xf32> to vector<1x8x128xf32>
    tpu.vector_store %arg13[%c5, %c0_31, %c0_32], %110 {strides = array<i32>} : memref<20x8x128xf32, #tpu.memory_space<vmem>>, vector<1x8x128xf32>,
    %111 = arith.select %20, %106, %104 : vector<8x128xi1>, vector<8x128xf32>
    %c14 = arith.constant 14 : index
    %c0_33 = arith.constant 0 : index
    %c0_34 = arith.constant 0 : index
    %112 = vector.load %arg13[%c14, %c0_33, %c0_34] : memref<20x8x128xf32, #tpu.memory_space<vmem>>, vector<1x8x128xf32>
    %113 = vector.shape_cast %112 : vector<1x8x128xf32> to vector<8x128xf32>
    %114 = vector.shape_cast %111 : vector<8x128xf32> to vector<1x8x128xf32>
    tpu.vector_store %arg13[%c14, %c0_33, %c0_34], %114 {strides = array<i32>} : memref<20x8x128xf32, #tpu.memory_space<vmem>>, vector<1x8x128xf32>,
    %115 = vector.extract_strided_slice %42 {offsets = [6, 0, 0], sizes = [1, 8, 128], strides = [1, 1, 1]} : vector<20x8x128xf32> to vector<1x8x128xf32>
    %116 = vector.shape_cast %115 : vector<1x8x128xf32> to vector<8x128xf32>
    %117 = vector.extract_strided_slice %42 {offsets = [13, 0, 0], sizes = [1, 8, 128], strides = [1, 1, 1]} : vector<20x8x128xf32> to vector<1x8x128xf32>
    %118 = vector.shape_cast %117 : vector<1x8x128xf32> to vector<8x128xf32>
    %119 = arith.select %20, %116, %118 : vector<8x128xi1>, vector<8x128xf32>
    %c6 = arith.constant 6 : index
    %c0_35 = arith.constant 0 : index
    %c0_36 = arith.constant 0 : index
    %120 = vector.load %arg13[%c6, %c0_35, %c0_36] : memref<20x8x128xf32, #tpu.memory_space<vmem>>, vector<1x8x128xf32>
    %121 = vector.shape_cast %120 : vector<1x8x128xf32> to vector<8x128xf32>
    %122 = vector.shape_cast %119 : vector<8x128xf32> to vector<1x8x128xf32>
    tpu.vector_store %arg13[%c6, %c0_35, %c0_36], %122 {strides = array<i32>} : memref<20x8x128xf32, #tpu.memory_space<vmem>>, vector<1x8x128xf32>,
    %123 = arith.select %20, %118, %116 : vector<8x128xi1>, vector<8x128xf32>
    %c13 = arith.constant 13 : index
    %c0_37 = arith.constant 0 : index
    %c0_38 = arith.constant 0 : index
    %124 = vector.load %arg13[%c13, %c0_37, %c0_38] : memref<20x8x128xf32, #tpu.memory_space<vmem>>, vector<1x8x128xf32>
    %125 = vector.shape_cast %124 : vector<1x8x128xf32> to vector<8x128xf32>
    %126 = vector.shape_cast %123 : vector<8x128xf32> to vector<1x8x128xf32>
    tpu.vector_store %arg13[%c13, %c0_37, %c0_38], %126 {strides = array<i32>} : memref<20x8x128xf32, #tpu.memory_space<vmem>>, vector<1x8x128xf32>,
    %127 = vector.extract_strided_slice %42 {offsets = [7, 0, 0], sizes = [1, 8, 128], strides = [1, 1, 1]} : vector<20x8x128xf32> to vector<1x8x128xf32>
    %128 = vector.shape_cast %127 : vector<1x8x128xf32> to vector<8x128xf32>
    %129 = vector.extract_strided_slice %42 {offsets = [12, 0, 0], sizes = [1, 8, 128], strides = [1, 1, 1]} : vector<20x8x128xf32> to vector<1x8x128xf32>
    %130 = vector.shape_cast %129 : vector<1x8x128xf32> to vector<8x128xf32>
    %131 = arith.select %20, %128, %130 : vector<8x128xi1>, vector<8x128xf32>
    %c7 = arith.constant 7 : index
    %c0_39 = arith.constant 0 : index
    %c0_40 = arith.constant 0 : index
    %132 = vector.load %arg13[%c7, %c0_39, %c0_40] : memref<20x8x128xf32, #tpu.memory_space<vmem>>, vector<1x8x128xf32>
    %133 = vector.shape_cast %132 : vector<1x8x128xf32> to vector<8x128xf32>
    %134 = vector.shape_cast %131 : vector<8x128xf32> to vector<1x8x128xf32>
    tpu.vector_store %arg13[%c7, %c0_39, %c0_40], %134 {strides = array<i32>} : memref<20x8x128xf32, #tpu.memory_space<vmem>>, vector<1x8x128xf32>,
    %135 = arith.select %20, %130, %128 : vector<8x128xi1>, vector<8x128xf32>
    %c12 = arith.constant 12 : index
    %c0_41 = arith.constant 0 : index
    %c0_42 = arith.constant 0 : index
    %136 = vector.load %arg13[%c12, %c0_41, %c0_42] : memref<20x8x128xf32, #tpu.memory_space<vmem>>, vector<1x8x128xf32>
    %137 = vector.shape_cast %136 : vector<1x8x128xf32> to vector<8x128xf32>
    %138 = vector.shape_cast %135 : vector<8x128xf32> to vector<1x8x128xf32>
    tpu.vector_store %arg13[%c12, %c0_41, %c0_42], %138 {strides = array<i32>} : memref<20x8x128xf32, #tpu.memory_space<vmem>>, vector<1x8x128xf32>,
    %139 = vector.extract_strided_slice %42 {offsets = [8, 0, 0], sizes = [1, 8, 128], strides = [1, 1, 1]} : vector<20x8x128xf32> to vector<1x8x128xf32>
    %140 = vector.shape_cast %139 : vector<1x8x128xf32> to vector<8x128xf32>
    %141 = vector.extract_strided_slice %42 {offsets = [11, 0, 0], sizes = [1, 8, 128], strides = [1, 1, 1]} : vector<20x8x128xf32> to vector<1x8x128xf32>
    %142 = vector.shape_cast %141 : vector<1x8x128xf32> to vector<8x128xf32>
    %143 = arith.select %20, %140, %142 : vector<8x128xi1>, vector<8x128xf32>
    %c8 = arith.constant 8 : index
    %c0_43 = arith.constant 0 : index
    %c0_44 = arith.constant 0 : index
    %144 = vector.load %arg13[%c8, %c0_43, %c0_44] : memref<20x8x128xf32, #tpu.memory_space<vmem>>, vector<1x8x128xf32>
    %145 = vector.shape_cast %144 : vector<1x8x128xf32> to vector<8x128xf32>
    %146 = vector.shape_cast %143 : vector<8x128xf32> to vector<1x8x128xf32>
    tpu.vector_store %arg13[%c8, %c0_43, %c0_44], %146 {strides = array<i32>} : memref<20x8x128xf32, #tpu.memory_space<vmem>>, vector<1x8x128xf32>,
    %147 = arith.select %20, %142, %140 : vector<8x128xi1>, vector<8x128xf32>
    %c11 = arith.constant 11 : index
    %c0_45 = arith.constant 0 : index
    %c0_46 = arith.constant 0 : index
    %148 = vector.load %arg13[%c11, %c0_45, %c0_46] : memref<20x8x128xf32, #tpu.memory_space<vmem>>, vector<1x8x128xf32>
    %149 = vector.shape_cast %148 : vector<1x8x128xf32> to vector<8x128xf32>
    %150 = vector.shape_cast %147 : vector<8x128xf32> to vector<1x8x128xf32>
    tpu.vector_store %arg13[%c11, %c0_45, %c0_46], %150 {strides = array<i32>} : memref<20x8x128xf32, #tpu.memory_space<vmem>>, vector<1x8x128xf32>,
    %151 = vector.extract_strided_slice %42 {offsets = [9, 0, 0], sizes = [1, 8, 128], strides = [1, 1, 1]} : vector<20x8x128xf32> to vector<1x8x128xf32>
    %152 = vector.shape_cast %151 : vector<1x8x128xf32> to vector<8x128xf32>
    %153 = vector.extract_strided_slice %42 {offsets = [10, 0, 0], sizes = [1, 8, 128], strides = [1, 1, 1]} : vector<20x8x128xf32> to vector<1x8x128xf32>
    %154 = vector.shape_cast %153 : vector<1x8x128xf32> to vector<8x128xf32>
    %155 = arith.select %20, %152, %154 : vector<8x128xi1>, vector<8x128xf32>
    %c9 = arith.constant 9 : index
    %c0_47 = arith.constant 0 : index
    %c0_48 = arith.constant 0 : index
    %156 = vector.load %arg13[%c9, %c0_47, %c0_48] : memref<20x8x128xf32, #tpu.memory_space<vmem>>, vector<1x8x128xf32>
    %157 = vector.shape_cast %156 : vector<1x8x128xf32> to vector<8x128xf32>
    %158 = vector.shape_cast %155 : vector<8x128xf32> to vector<1x8x128xf32>
    tpu.vector_store %arg13[%c9, %c0_47, %c0_48], %158 {strides = array<i32>} : memref<20x8x128xf32, #tpu.memory_space<vmem>>, vector<1x8x128xf32>,
    %159 = arith.select %20, %154, %152 : vector<8x128xi1>, vector<8x128xf32>
    %c10 = arith.constant 10 : index
    %c0_49 = arith.constant 0 : index
    %c0_50 = arith.constant 0 : index
    %160 = vector.load %arg13[%c10, %c0_49, %c0_50] : memref<20x8x128xf32, #tpu.memory_space<vmem>>, vector<1x8x128xf32>
    %161 = vector.shape_cast %160 : vector<1x8x128xf32> to vector<8x128xf32>
    %162 = vector.shape_cast %159 : vector<8x128xf32> to vector<1x8x128xf32>
    tpu.vector_store %arg13[%c10, %c0_49, %c0_50], %162 {strides = array<i32>} : memref<20x8x128xf32, #tpu.memory_space<vmem>>, vector<1x8x128xf32>,
    %c0_51 = arith.constant 0 : index
    %c0_52 = arith.constant 0 : index
    %163 = vector.load %arg5[%c0_51, %c0_52] : memref<32x128xf32, #tpu.memory_space<vmem>>, vector<32x128xf32>
    %cst_53 = arith.constant 0.000000e+00 : f32
    %164 = vector.broadcast %cst_53 : f32 to vector<8x32xf32>
    %cst_54 = arith.constant 0.000000e+00 : f32
    %165 = vector.broadcast %cst_54 : f32 to vector<8x32xf32>
    %c0_55 = arith.constant 0 : index
    %c0_56 = arith.constant 0 : index
    %c0_57 = arith.constant 0 : index
    %166 = vector.load %arg13[%c0_55, %c0_56, %c0_57] : memref<20x8x128xf32, #tpu.memory_space<vmem>>, vector<1x8x128xf32>
    %167 = vector.shape_cast %166 : vector<1x8x128xf32> to vector<8x128xf32>
    %cst_58 = arith.constant dense<0.000000e+00> : vector<8x128xf32>
    %168 = tpu.matmul %164, %163, %cst_58 {dimension_numbers = #tpu.dot_dimension_numbers<[1], [0], [0], [1], [0, 0, 1, 1], [], []>} : vector<8x32xf32>, vector<32x128xf32>, vector<8x128xf32> -> vector<8x128xf32>
    %169 = arith.addf %167, %168 : vector<8x128xf32>
    %170 = vector.extract_strided_slice %169 {offsets = [0, 0], sizes = [8, 96], strides = [1, 1]} : vector<8x128xf32> to vector<8x96xf32>
    %171 = arith.negf %170 : vector<8x96xf32>
    %172 = math.exp %171 : vector<8x96xf32>
    %cst_59 = arith.constant 1.000000e+00 : f32
    %173 = vector.broadcast %cst_59 : f32 to vector<8x96xf32>
    %174 = arith.addf %173, %172 : vector<8x96xf32>
    %175 = arith.divf %173, %174 : vector<8x96xf32>
    %176 = vector.extract_strided_slice %169 {offsets = [0, 96], sizes = [8, 32], strides = [1, 1]} : vector<8x128xf32> to vector<8x32xf32>
    %177 = math.tanh %176 : vector<8x32xf32>
    %178 = vector.extract_strided_slice %175 {offsets = [0, 32], sizes = [8, 32], strides = [1, 1]} : vector<8x96xf32> to vector<8x32xf32>
    %179 = arith.mulf %178, %165 : vector<8x32xf32>
    %180 = vector.extract_strided_slice %175 {offsets = [0, 0], sizes = [8, 32], strides = [1, 1]} : vector<8x96xf32> to vector<8x32xf32>
    %181 = arith.mulf %180, %177 : vector<8x32xf32>
    %182 = arith.addf %179, %181 : vector<8x32xf32>
    %183 = vector.extract_strided_slice %175 {offsets = [0, 64], sizes = [8, 32], strides = [1, 1]} : vector<8x96xf32> to vector<8x32xf32>
    %184 = math.tanh %182 : vector<8x32xf32>
    %185 = arith.mulf %183, %184 : vector<8x32xf32>
    %186 = vector.extract_strided_slice %185 {offsets = [0, 0], sizes = [8, 16], strides = [1, 1]} : vector<8x32xf32> to vector<8x16xf32>
    %c0_60 = arith.constant 0 : index
    %c0_61 = arith.constant 0 : index
    %c0_62 = arith.constant 0 : index
    %187 = vector.load %arg15[%c0_60, %c0_61, %c0_62] : memref<20x8x32xf32, #tpu.memory_space<vmem>>, vector<1x8x16xf32>
    %188 = vector.shape_cast %187 : vector<1x8x16xf32> to vector<8x16xf32>
    %189 = vector.shape_cast %186 : vector<8x16xf32> to vector<1x8x16xf32>
    tpu.vector_store %arg15[%c0_60, %c0_61, %c0_62], %189 {strides = array<i32>} : memref<20x8x32xf32, #tpu.memory_space<vmem>>, vector<1x8x16xf32>,
    %190 = vector.extract_strided_slice %185 {offsets = [0, 16], sizes = [8, 16], strides = [1, 1]} : vector<8x32xf32> to vector<8x16xf32>
    %c19_63 = arith.constant 19 : index
    %c0_64 = arith.constant 0 : index
    %c16_65 = arith.constant 16 : index
    %191 = vector.load %arg15[%c19_63, %c0_64, %c16_65] : memref<20x8x32xf32, #tpu.memory_space<vmem>>, vector<1x8x16xf32>
    %192 = vector.shape_cast %191 : vector<1x8x16xf32> to vector<8x16xf32>
    %193 = vector.shape_cast %190 : vector<8x16xf32> to vector<1x8x16xf32>
    tpu.vector_store %arg15[%c19_63, %c0_64, %c16_65], %193 {strides = array<i32>} : memref<20x8x32xf32, #tpu.memory_space<vmem>>, vector<1x8x16xf32>,
    %c1_66 = arith.constant 1 : index
    %c0_67 = arith.constant 0 : index
    %c0_68 = arith.constant 0 : index
    %194 = vector.load %arg13[%c1_66, %c0_67, %c0_68] : memref<20x8x128xf32, #tpu.memory_space<vmem>>, vector<1x8x128xf32>
    %195 = vector.shape_cast %194 : vector<1x8x128xf32> to vector<8x128xf32>
    %cst_69 = arith.constant dense<0.000000e+00> : vector<8x128xf32>
    %196 = tpu.matmul %185, %163, %cst_69 {dimension_numbers = #tpu.dot_dimension_numbers<[1], [0], [0], [1], [0, 0, 1, 1], [], []>} : vector<8x32xf32>, vector<32x128xf32>, vector<8x128xf32> -> vector<8x128xf32>
    %197 = arith.addf %195, %196 : vector<8x128xf32>
    %198 = vector.extract_strided_slice %197 {offsets = [0, 0], sizes = [8, 96], strides = [1, 1]} : vector<8x128xf32> to vector<8x96xf32>
    %199 = arith.negf %198 : vector<8x96xf32>
    %200 = math.exp %199 : vector<8x96xf32>
    %cst_70 = arith.constant 1.000000e+00 : f32
    %201 = vector.broadcast %cst_70 : f32 to vector<8x96xf32>
    %202 = arith.addf %201, %200 : vector<8x96xf32>
    %203 = arith.divf %201, %202 : vector<8x96xf32>
    %204 = vector.extract_strided_slice %197 {offsets = [0, 96], sizes = [8, 32], strides = [1, 1]} : vector<8x128xf32> to vector<8x32xf32>
    %205 = math.tanh %204 : vector<8x32xf32>
    %206 = vector.extract_strided_slice %203 {offsets = [0, 32], sizes = [8, 32], strides = [1, 1]} : vector<8x96xf32> to vector<8x32xf32>
    %207 = arith.mulf %206, %182 : vector<8x32xf32>
    %208 = vector.extract_strided_slice %203 {offsets = [0, 0], sizes = [8, 32], strides = [1, 1]} : vector<8x96xf32> to vector<8x32xf32>
    %209 = arith.mulf %208, %205 : vector<8x32xf32>
    %210 = arith.addf %207, %209 : vector<8x32xf32>
    %211 = vector.extract_strided_slice %203 {offsets = [0, 64], sizes = [8, 32], strides = [1, 1]} : vector<8x96xf32> to vector<8x32xf32>
    %212 = math.tanh %210 : vector<8x32xf32>
    %213 = arith.mulf %211, %212 : vector<8x32xf32>
    %214 = vector.extract_strided_slice %213 {offsets = [0, 0], sizes = [8, 16], strides = [1, 1]} : vector<8x32xf32> to vector<8x16xf32>
    %c1_71 = arith.constant 1 : index
    %c0_72 = arith.constant 0 : index
    %c0_73 = arith.constant 0 : index
    %215 = vector.load %arg15[%c1_71, %c0_72, %c0_73] : memref<20x8x32xf32, #tpu.memory_space<vmem>>, vector<1x8x16xf32>
    %216 = vector.shape_cast %215 : vector<1x8x16xf32> to vector<8x16xf32>
    %217 = vector.shape_cast %214 : vector<8x16xf32> to vector<1x8x16xf32>
    tpu.vector_store %arg15[%c1_71, %c0_72, %c0_73], %217 {strides = array<i32>} : memref<20x8x32xf32, #tpu.memory_space<vmem>>, vector<1x8x16xf32>,
    %218 = vector.extract_strided_slice %213 {offsets = [0, 16], sizes = [8, 16], strides = [1, 1]} : vector<8x32xf32> to vector<8x16xf32>
    %c18_74 = arith.constant 18 : index
    %c0_75 = arith.constant 0 : index
    %c16_76 = arith.constant 16 : index
    %219 = vector.load %arg15[%c18_74, %c0_75, %c16_76] : memref<20x8x32xf32, #tpu.memory_space<vmem>>, vector<1x8x16xf32>
    %220 = vector.shape_cast %219 : vector<1x8x16xf32> to vector<8x16xf32>
    %221 = vector.shape_cast %218 : vector<8x16xf32> to vector<1x8x16xf32>
    tpu.vector_store %arg15[%c18_74, %c0_75, %c16_76], %221 {strides = array<i32>} : memref<20x8x32xf32, #tpu.memory_space<vmem>>, vector<1x8x16xf32>,
    %c2_77 = arith.constant 2 : index
    %c0_78 = arith.constant 0 : index
    %c0_79 = arith.constant 0 : index
    %222 = vector.load %arg13[%c2_77, %c0_78, %c0_79] : memref<20x8x128xf32, #tpu.memory_space<vmem>>, vector<1x8x128xf32>
    %223 = vector.shape_cast %222 : vector<1x8x128xf32> to vector<8x128xf32>
    %cst_80 = arith.constant dense<0.000000e+00> : vector<8x128xf32>
    %224 = tpu.matmul %213, %163, %cst_80 {dimension_numbers = #tpu.dot_dimension_numbers<[1], [0], [0], [1], [0, 0, 1, 1], [], []>} : vector<8x32xf32>, vector<32x128xf32>, vector<8x128xf32> -> vector<8x128xf32>
    %225 = arith.addf %223, %224 : vector<8x128xf32>
    %226 = vector.extract_strided_slice %225 {offsets = [0, 0], sizes = [8, 96], strides = [1, 1]} : vector<8x128xf32> to vector<8x96xf32>
    %227 = arith.negf %226 : vector<8x96xf32>
    %228 = math.exp %227 : vector<8x96xf32>
    %cst_81 = arith.constant 1.000000e+00 : f32
    %229 = vector.broadcast %cst_81 : f32 to vector<8x96xf32>
    %230 = arith.addf %229, %228 : vector<8x96xf32>
    %231 = arith.divf %229, %230 : vector<8x96xf32>
    %232 = vector.extract_strided_slice %225 {offsets = [0, 96], sizes = [8, 32], strides = [1, 1]} : vector<8x128xf32> to vector<8x32xf32>
    %233 = math.tanh %232 : vector<8x32xf32>
    %234 = vector.extract_strided_slice %231 {offsets = [0, 32], sizes = [8, 32], strides = [1, 1]} : vector<8x96xf32> to vector<8x32xf32>
    %235 = arith.mulf %234, %210 : vector<8x32xf32>
    %236 = vector.extract_strided_slice %231 {offsets = [0, 0], sizes = [8, 32], strides = [1, 1]} : vector<8x96xf32> to vector<8x32xf32>
    %237 = arith.mulf %236, %233 : vector<8x32xf32>
    %238 = arith.addf %235, %237 : vector<8x32xf32>
    %239 = vector.extract_strided_slice %231 {offsets = [0, 64], sizes = [8, 32], strides = [1, 1]} : vector<8x96xf32> to vector<8x32xf32>
    %240 = math.tanh %238 : vector<8x32xf32>
    %241 = arith.mulf %239, %240 : vector<8x32xf32>
    %242 = vector.extract_strided_slice %241 {offsets = [0, 0], sizes = [8, 16], strides = [1, 1]} : vector<8x32xf32> to vector<8x16xf32>
    %c2_82 = arith.constant 2 : index
    %c0_83 = arith.constant 0 : index
    %c0_84 = arith.constant 0 : index
    %243 = vector.load %arg15[%c2_82, %c0_83, %c0_84] : memref<20x8x32xf32, #tpu.memory_space<vmem>>, vector<1x8x16xf32>
    %244 = vector.shape_cast %243 : vector<1x8x16xf32> to vector<8x16xf32>
    %245 = vector.shape_cast %242 : vector<8x16xf32> to vector<1x8x16xf32>
    tpu.vector_store %arg15[%c2_82, %c0_83, %c0_84], %245 {strides = array<i32>} : memref<20x8x32xf32, #tpu.memory_space<vmem>>, vector<1x8x16xf32>,
    %246 = vector.extract_strided_slice %241 {offsets = [0, 16], sizes = [8, 16], strides = [1, 1]} : vector<8x32xf32> to vector<8x16xf32>
    %c17_85 = arith.constant 17 : index
    %c0_86 = arith.constant 0 : index
    %c16_87 = arith.constant 16 : index
    %247 = vector.load %arg15[%c17_85, %c0_86, %c16_87] : memref<20x8x32xf32, #tpu.memory_space<vmem>>, vector<1x8x16xf32>
    %248 = vector.shape_cast %247 : vector<1x8x16xf32> to vector<8x16xf32>
    %249 = vector.shape_cast %246 : vector<8x16xf32> to vector<1x8x16xf32>
    tpu.vector_store %arg15[%c17_85, %c0_86, %c16_87], %249 {strides = array<i32>} : memref<20x8x32xf32, #tpu.memory_space<vmem>>, vector<1x8x16xf32>,
    %c3_88 = arith.constant 3 : index
    %c0_89 = arith.constant 0 : index
    %c0_90 = arith.constant 0 : index
    %250 = vector.load %arg13[%c3_88, %c0_89, %c0_90] : memref<20x8x128xf32, #tpu.memory_space<vmem>>, vector<1x8x128xf32>
    %251 = vector.shape_cast %250 : vector<1x8x128xf32> to vector<8x128xf32>
    %cst_91 = arith.constant dense<0.000000e+00> : vector<8x128xf32>
    %252 = tpu.matmul %241, %163, %cst_91 {dimension_numbers = #tpu.dot_dimension_numbers<[1], [0], [0], [1], [0, 0, 1, 1], [], []>} : vector<8x32xf32>, vector<32x128xf32>, vector<8x128xf32> -> vector<8x128xf32>
    %253 = arith.addf %251, %252 : vector<8x128xf32>
    %254 = vector.extract_strided_slice %253 {offsets = [0, 0], sizes = [8, 96], strides = [1, 1]} : vector<8x128xf32> to vector<8x96xf32>
    %255 = arith.negf %254 : vector<8x96xf32>
    %256 = math.exp %255 : vector<8x96xf32>
    %cst_92 = arith.constant 1.000000e+00 : f32
    %257 = vector.broadcast %cst_92 : f32 to vector<8x96xf32>
    %258 = arith.addf %257, %256 : vector<8x96xf32>
    %259 = arith.divf %257, %258 : vector<8x96xf32>
    %260 = vector.extract_strided_slice %253 {offsets = [0, 96], sizes = [8, 32], strides = [1, 1]} : vector<8x128xf32> to vector<8x32xf32>
    %261 = math.tanh %260 : vector<8x32xf32>
    %262 = vector.extract_strided_slice %259 {offsets = [0, 32], sizes = [8, 32], strides = [1, 1]} : vector<8x96xf32> to vector<8x32xf32>
    %263 = arith.mulf %262, %238 : vector<8x32xf32>
    %264 = vector.extract_strided_slice %259 {offsets = [0, 0], sizes = [8, 32], strides = [1, 1]} : vector<8x96xf32> to vector<8x32xf32>
    %265 = arith.mulf %264, %261 : vector<8x32xf32>
    %266 = arith.addf %263, %265 : vector<8x32xf32>
    %267 = vector.extract_strided_slice %259 {offsets = [0, 64], sizes = [8, 32], strides = [1, 1]} : vector<8x96xf32> to vector<8x32xf32>
    %268 = math.tanh %266 : vector<8x32xf32>
    %269 = arith.mulf %267, %268 : vector<8x32xf32>
    %270 = vector.extract_strided_slice %269 {offsets = [0, 0], sizes = [8, 16], strides = [1, 1]} : vector<8x32xf32> to vector<8x16xf32>
    %c3_93 = arith.constant 3 : index
    %c0_94 = arith.constant 0 : index
    %c0_95 = arith.constant 0 : index
    %271 = vector.load %arg15[%c3_93, %c0_94, %c0_95] : memref<20x8x32xf32, #tpu.memory_space<vmem>>, vector<1x8x16xf32>
    %272 = vector.shape_cast %271 : vector<1x8x16xf32> to vector<8x16xf32>
    %273 = vector.shape_cast %270 : vector<8x16xf32> to vector<1x8x16xf32>
    tpu.vector_store %arg15[%c3_93, %c0_94, %c0_95], %273 {strides = array<i32>} : memref<20x8x32xf32, #tpu.memory_space<vmem>>, vector<1x8x16xf32>,
    %274 = vector.extract_strided_slice %269 {offsets = [0, 16], sizes = [8, 16], strides = [1, 1]} : vector<8x32xf32> to vector<8x16xf32>
    %c16_96 = arith.constant 16 : index
    %c0_97 = arith.constant 0 : index
    %c16_98 = arith.constant 16 : index
    %275 = vector.load %arg15[%c16_96, %c0_97, %c16_98] : memref<20x8x32xf32, #tpu.memory_space<vmem>>, vector<1x8x16xf32>
    %276 = vector.shape_cast %275 : vector<1x8x16xf32> to vector<8x16xf32>
    %277 = vector.shape_cast %274 : vector<8x16xf32> to vector<1x8x16xf32>
    tpu.vector_store %arg15[%c16_96, %c0_97, %c16_98], %277 {strides = array<i32>} : memref<20x8x32xf32, #tpu.memory_space<vmem>>, vector<1x8x16xf32>,
    %c4_99 = arith.constant 4 : index
    %c0_100 = arith.constant 0 : index
    %c0_101 = arith.constant 0 : index
    %278 = vector.load %arg13[%c4_99, %c0_100, %c0_101] : memref<20x8x128xf32, #tpu.memory_space<vmem>>, vector<1x8x128xf32>
    %279 = vector.shape_cast %278 : vector<1x8x128xf32> to vector<8x128xf32>
    %cst_102 = arith.constant dense<0.000000e+00> : vector<8x128xf32>
    %280 = tpu.matmul %269, %163, %cst_102 {dimension_numbers = #tpu.dot_dimension_numbers<[1], [0], [0], [1], [0, 0, 1, 1], [], []>} : vector<8x32xf32>, vector<32x128xf32>, vector<8x128xf32> -> vector<8x128xf32>
    %281 = arith.addf %279, %280 : vector<8x128xf32>
    %282 = vector.extract_strided_slice %281 {offsets = [0, 0], sizes = [8, 96], strides = [1, 1]} : vector<8x128xf32> to vector<8x96xf32>
    %283 = arith.negf %282 : vector<8x96xf32>
    %284 = math.exp %283 : vector<8x96xf32>
    %cst_103 = arith.constant 1.000000e+00 : f32
    %285 = vector.broadcast %cst_103 : f32 to vector<8x96xf32>
    %286 = arith.addf %285, %284 : vector<8x96xf32>
    %287 = arith.divf %285, %286 : vector<8x96xf32>
    %288 = vector.extract_strided_slice %281 {offsets = [0, 96], sizes = [8, 32], strides = [1, 1]} : vector<8x128xf32> to vector<8x32xf32>
    %289 = math.tanh %288 : vector<8x32xf32>
    %290 = vector.extract_strided_slice %287 {offsets = [0, 32], sizes = [8, 32], strides = [1, 1]} : vector<8x96xf32> to vector<8x32xf32>
    %291 = arith.mulf %290, %266 : vector<8x32xf32>
    %292 = vector.extract_strided_slice %287 {offsets = [0, 0], sizes = [8, 32], strides = [1, 1]} : vector<8x96xf32> to vector<8x32xf32>
    %293 = arith.mulf %292, %289 : vector<8x32xf32>
    %294 = arith.addf %291, %293 : vector<8x32xf32>
    %295 = vector.extract_strided_slice %287 {offsets = [0, 64], sizes = [8, 32], strides = [1, 1]} : vector<8x96xf32> to vector<8x32xf32>
    %296 = math.tanh %294 : vector<8x32xf32>
    %297 = arith.mulf %295, %296 : vector<8x32xf32>
    %298 = vector.extract_strided_slice %297 {offsets = [0, 0], sizes = [8, 16], strides = [1, 1]} : vector<8x32xf32> to vector<8x16xf32>
    %c4_104 = arith.constant 4 : index
    %c0_105 = arith.constant 0 : index
    %c0_106 = arith.constant 0 : index
    %299 = vector.load %arg15[%c4_104, %c0_105, %c0_106] : memref<20x8x32xf32, #tpu.memory_space<vmem>>, vector<1x8x16xf32>
    %300 = vector.shape_cast %299 : vector<1x8x16xf32> to vector<8x16xf32>
    %301 = vector.shape_cast %298 : vector<8x16xf32> to vector<1x8x16xf32>
    tpu.vector_store %arg15[%c4_104, %c0_105, %c0_106], %301 {strides = array<i32>} : memref<20x8x32xf32, #tpu.memory_space<vmem>>, vector<1x8x16xf32>,
    %302 = vector.extract_strided_slice %297 {offsets = [0, 16], sizes = [8, 16], strides = [1, 1]} : vector<8x32xf32> to vector<8x16xf32>
    %c15_107 = arith.constant 15 : index
    %c0_108 = arith.constant 0 : index
    %c16_109 = arith.constant 16 : index
    %303 = vector.load %arg15[%c15_107, %c0_108, %c16_109] : memref<20x8x32xf32, #tpu.memory_space<vmem>>, vector<1x8x16xf32>
    %304 = vector.shape_cast %303 : vector<1x8x16xf32> to vector<8x16xf32>
    %305 = vector.shape_cast %302 : vector<8x16xf32> to vector<1x8x16xf32>
    tpu.vector_store %arg15[%c15_107, %c0_108, %c16_109], %305 {strides = array<i32>} : memref<20x8x32xf32, #tpu.memory_space<vmem>>, vector<1x8x16xf32>,
    %c5_110 = arith.constant 5 : index
    %c0_111 = arith.constant 0 : index
    %c0_112 = arith.constant 0 : index
    %306 = vector.load %arg13[%c5_110, %c0_111, %c0_112] : memref<20x8x128xf32, #tpu.memory_space<vmem>>, vector<1x8x128xf32>
    %307 = vector.shape_cast %306 : vector<1x8x128xf32> to vector<8x128xf32>
    %cst_113 = arith.constant dense<0.000000e+00> : vector<8x128xf32>
    %308 = tpu.matmul %297, %163, %cst_113 {dimension_numbers = #tpu.dot_dimension_numbers<[1], [0], [0], [1], [0, 0, 1, 1], [], []>} : vector<8x32xf32>, vector<32x128xf32>, vector<8x128xf32> -> vector<8x128xf32>
    %309 = arith.addf %307, %308 : vector<8x128xf32>
    %310 = vector.extract_strided_slice %309 {offsets = [0, 0], sizes = [8, 96], strides = [1, 1]} : vector<8x128xf32> to vector<8x96xf32>
    %311 = arith.negf %310 : vector<8x96xf32>
    %312 = math.exp %311 : vector<8x96xf32>
    %cst_114 = arith.constant 1.000000e+00 : f32
    %313 = vector.broadcast %cst_114 : f32 to vector<8x96xf32>
    %314 = arith.addf %313, %312 : vector<8x96xf32>
    %315 = arith.divf %313, %314 : vector<8x96xf32>
    %316 = vector.extract_strided_slice %309 {offsets = [0, 96], sizes = [8, 32], strides = [1, 1]} : vector<8x128xf32> to vector<8x32xf32>
    %317 = math.tanh %316 : vector<8x32xf32>
    %318 = vector.extract_strided_slice %315 {offsets = [0, 32], sizes = [8, 32], strides = [1, 1]} : vector<8x96xf32> to vector<8x32xf32>
    %319 = arith.mulf %318, %294 : vector<8x32xf32>
    %320 = vector.extract_strided_slice %315 {offsets = [0, 0], sizes = [8, 32], strides = [1, 1]} : vector<8x96xf32> to vector<8x32xf32>
    %321 = arith.mulf %320, %317 : vector<8x32xf32>
    %322 = arith.addf %319, %321 : vector<8x32xf32>
    %323 = vector.extract_strided_slice %315 {offsets = [0, 64], sizes = [8, 32], strides = [1, 1]} : vector<8x96xf32> to vector<8x32xf32>
    %324 = math.tanh %322 : vector<8x32xf32>
    %325 = arith.mulf %323, %324 : vector<8x32xf32>
    %326 = vector.extract_strided_slice %325 {offsets = [0, 0], sizes = [8, 16], strides = [1, 1]} : vector<8x32xf32> to vector<8x16xf32>
    %c5_115 = arith.constant 5 : index
    %c0_116 = arith.constant 0 : index
    %c0_117 = arith.constant 0 : index
    %327 = vector.load %arg15[%c5_115, %c0_116, %c0_117] : memref<20x8x32xf32, #tpu.memory_space<vmem>>, vector<1x8x16xf32>
    %328 = vector.shape_cast %327 : vector<1x8x16xf32> to vector<8x16xf32>
    %329 = vector.shape_cast %326 : vector<8x16xf32> to vector<1x8x16xf32>
    tpu.vector_store %arg15[%c5_115, %c0_116, %c0_117], %329 {strides = array<i32>} : memref<20x8x32xf32, #tpu.memory_space<vmem>>, vector<1x8x16xf32>,
    %330 = vector.extract_strided_slice %325 {offsets = [0, 16], sizes = [8, 16], strides = [1, 1]} : vector<8x32xf32> to vector<8x16xf32>
    %c14_118 = arith.constant 14 : index
    %c0_119 = arith.constant 0 : index
    %c16_120 = arith.constant 16 : index
    %331 = vector.load %arg15[%c14_118, %c0_119, %c16_120] : memref<20x8x32xf32, #tpu.memory_space<vmem>>, vector<1x8x16xf32>
    %332 = vector.shape_cast %331 : vector<1x8x16xf32> to vector<8x16xf32>
    %333 = vector.shape_cast %330 : vector<8x16xf32> to vector<1x8x16xf32>
    tpu.vector_store %arg15[%c14_118, %c0_119, %c16_120], %333 {strides = array<i32>} : memref<20x8x32xf32, #tpu.memory_space<vmem>>, vector<1x8x16xf32>,
    %c6_121 = arith.constant 6 : index
    %c0_122 = arith.constant 0 : index
    %c0_123 = arith.constant 0 : index
    %334 = vector.load %arg13[%c6_121, %c0_122, %c0_123] : memref<20x8x128xf32, #tpu.memory_space<vmem>>, vector<1x8x128xf32>
    %335 = vector.shape_cast %334 : vector<1x8x128xf32> to vector<8x128xf32>
    %cst_124 = arith.constant dense<0.000000e+00> : vector<8x128xf32>
    %336 = tpu.matmul %325, %163, %cst_124 {dimension_numbers = #tpu.dot_dimension_numbers<[1], [0], [0], [1], [0, 0, 1, 1], [], []>} : vector<8x32xf32>, vector<32x128xf32>, vector<8x128xf32> -> vector<8x128xf32>
    %337 = arith.addf %335, %336 : vector<8x128xf32>
    %338 = vector.extract_strided_slice %337 {offsets = [0, 0], sizes = [8, 96], strides = [1, 1]} : vector<8x128xf32> to vector<8x96xf32>
    %339 = arith.negf %338 : vector<8x96xf32>
    %340 = math.exp %339 : vector<8x96xf32>
    %cst_125 = arith.constant 1.000000e+00 : f32
    %341 = vector.broadcast %cst_125 : f32 to vector<8x96xf32>
    %342 = arith.addf %341, %340 : vector<8x96xf32>
    %343 = arith.divf %341, %342 : vector<8x96xf32>
    %344 = vector.extract_strided_slice %337 {offsets = [0, 96], sizes = [8, 32], strides = [1, 1]} : vector<8x128xf32> to vector<8x32xf32>
    %345 = math.tanh %344 : vector<8x32xf32>
    %346 = vector.extract_strided_slice %343 {offsets = [0, 32], sizes = [8, 32], strides = [1, 1]} : vector<8x96xf32> to vector<8x32xf32>
    %347 = arith.mulf %346, %322 : vector<8x32xf32>
    %348 = vector.extract_strided_slice %343 {offsets = [0, 0], sizes = [8, 32], strides = [1, 1]} : vector<8x96xf32> to vector<8x32xf32>
    %349 = arith.mulf %348, %345 : vector<8x32xf32>
    %350 = arith.addf %347, %349 : vector<8x32xf32>
    %351 = vector.extract_strided_slice %343 {offsets = [0, 64], sizes = [8, 32], strides = [1, 1]} : vector<8x96xf32> to vector<8x32xf32>
    %352 = math.tanh %350 : vector<8x32xf32>
    %353 = arith.mulf %351, %352 : vector<8x32xf32>
    %354 = vector.extract_strided_slice %353 {offsets = [0, 0], sizes = [8, 16], strides = [1, 1]} : vector<8x32xf32> to vector<8x16xf32>
    %c6_126 = arith.constant 6 : index
    %c0_127 = arith.constant 0 : index
    %c0_128 = arith.constant 0 : index
    %355 = vector.load %arg15[%c6_126, %c0_127, %c0_128] : memref<20x8x32xf32, #tpu.memory_space<vmem>>, vector<1x8x16xf32>
    %356 = vector.shape_cast %355 : vector<1x8x16xf32> to vector<8x16xf32>
    %357 = vector.shape_cast %354 : vector<8x16xf32> to vector<1x8x16xf32>
    tpu.vector_store %arg15[%c6_126, %c0_127, %c0_128], %357 {strides = array<i32>} : memref<20x8x32xf32, #tpu.memory_space<vmem>>, vector<1x8x16xf32>,
    %358 = vector.extract_strided_slice %353 {offsets = [0, 16], sizes = [8, 16], strides = [1, 1]} : vector<8x32xf32> to vector<8x16xf32>
    %c13_129 = arith.constant 13 : index
    %c0_130 = arith.constant 0 : index
    %c16_131 = arith.constant 16 : index
    %359 = vector.load %arg15[%c13_129, %c0_130, %c16_131] : memref<20x8x32xf32, #tpu.memory_space<vmem>>, vector<1x8x16xf32>
    %360 = vector.shape_cast %359 : vector<1x8x16xf32> to vector<8x16xf32>
    %361 = vector.shape_cast %358 : vector<8x16xf32> to vector<1x8x16xf32>
    tpu.vector_store %arg15[%c13_129, %c0_130, %c16_131], %361 {strides = array<i32>} : memref<20x8x32xf32, #tpu.memory_space<vmem>>, vector<1x8x16xf32>,
    %c7_132 = arith.constant 7 : index
    %c0_133 = arith.constant 0 : index
    %c0_134 = arith.constant 0 : index
    %362 = vector.load %arg13[%c7_132, %c0_133, %c0_134] : memref<20x8x128xf32, #tpu.memory_space<vmem>>, vector<1x8x128xf32>
    %363 = vector.shape_cast %362 : vector<1x8x128xf32> to vector<8x128xf32>
    %cst_135 = arith.constant dense<0.000000e+00> : vector<8x128xf32>
    %364 = tpu.matmul %353, %163, %cst_135 {dimension_numbers = #tpu.dot_dimension_numbers<[1], [0], [0], [1], [0, 0, 1, 1], [], []>} : vector<8x32xf32>, vector<32x128xf32>, vector<8x128xf32> -> vector<8x128xf32>
    %365 = arith.addf %363, %364 : vector<8x128xf32>
    %366 = vector.extract_strided_slice %365 {offsets = [0, 0], sizes = [8, 96], strides = [1, 1]} : vector<8x128xf32> to vector<8x96xf32>
    %367 = arith.negf %366 : vector<8x96xf32>
    %368 = math.exp %367 : vector<8x96xf32>
    %cst_136 = arith.constant 1.000000e+00 : f32
    %369 = vector.broadcast %cst_136 : f32 to vector<8x96xf32>
    %370 = arith.addf %369, %368 : vector<8x96xf32>
    %371 = arith.divf %369, %370 : vector<8x96xf32>
    %372 = vector.extract_strided_slice %365 {offsets = [0, 96], sizes = [8, 32], strides = [1, 1]} : vector<8x128xf32> to vector<8x32xf32>
    %373 = math.tanh %372 : vector<8x32xf32>
    %374 = vector.extract_strided_slice %371 {offsets = [0, 32], sizes = [8, 32], strides = [1, 1]} : vector<8x96xf32> to vector<8x32xf32>
    %375 = arith.mulf %374, %350 : vector<8x32xf32>
    %376 = vector.extract_strided_slice %371 {offsets = [0, 0], sizes = [8, 32], strides = [1, 1]} : vector<8x96xf32> to vector<8x32xf32>
    %377 = arith.mulf %376, %373 : vector<8x32xf32>
    %378 = arith.addf %375, %377 : vector<8x32xf32>
    %379 = vector.extract_strided_slice %371 {offsets = [0, 64], sizes = [8, 32], strides = [1, 1]} : vector<8x96xf32> to vector<8x32xf32>
    %380 = math.tanh %378 : vector<8x32xf32>
    %381 = arith.mulf %379, %380 : vector<8x32xf32>
    %382 = vector.extract_strided_slice %381 {offsets = [0, 0], sizes = [8, 16], strides = [1, 1]} : vector<8x32xf32> to vector<8x16xf32>
    %c7_137 = arith.constant 7 : index
    %c0_138 = arith.constant 0 : index
    %c0_139 = arith.constant 0 : index
    %383 = vector.load %arg15[%c7_137, %c0_138, %c0_139] : memref<20x8x32xf32, #tpu.memory_space<vmem>>, vector<1x8x16xf32>
    %384 = vector.shape_cast %383 : vector<1x8x16xf32> to vector<8x16xf32>
    %385 = vector.shape_cast %382 : vector<8x16xf32> to vector<1x8x16xf32>
    tpu.vector_store %arg15[%c7_137, %c0_138, %c0_139], %385 {strides = array<i32>} : memref<20x8x32xf32, #tpu.memory_space<vmem>>, vector<1x8x16xf32>,
    %386 = vector.extract_strided_slice %381 {offsets = [0, 16], sizes = [8, 16], strides = [1, 1]} : vector<8x32xf32> to vector<8x16xf32>
    %c12_140 = arith.constant 12 : index
    %c0_141 = arith.constant 0 : index
    %c16_142 = arith.constant 16 : index
    %387 = vector.load %arg15[%c12_140, %c0_141, %c16_142] : memref<20x8x32xf32, #tpu.memory_space<vmem>>, vector<1x8x16xf32>
    %388 = vector.shape_cast %387 : vector<1x8x16xf32> to vector<8x16xf32>
    %389 = vector.shape_cast %386 : vector<8x16xf32> to vector<1x8x16xf32>
    tpu.vector_store %arg15[%c12_140, %c0_141, %c16_142], %389 {strides = array<i32>} : memref<20x8x32xf32, #tpu.memory_space<vmem>>, vector<1x8x16xf32>,
    %c8_143 = arith.constant 8 : index
    %c0_144 = arith.constant 0 : index
    %c0_145 = arith.constant 0 : index
    %390 = vector.load %arg13[%c8_143, %c0_144, %c0_145] : memref<20x8x128xf32, #tpu.memory_space<vmem>>, vector<1x8x128xf32>
    %391 = vector.shape_cast %390 : vector<1x8x128xf32> to vector<8x128xf32>
    %cst_146 = arith.constant dense<0.000000e+00> : vector<8x128xf32>
    %392 = tpu.matmul %381, %163, %cst_146 {dimension_numbers = #tpu.dot_dimension_numbers<[1], [0], [0], [1], [0, 0, 1, 1], [], []>} : vector<8x32xf32>, vector<32x128xf32>, vector<8x128xf32> -> vector<8x128xf32>
    %393 = arith.addf %391, %392 : vector<8x128xf32>
    %394 = vector.extract_strided_slice %393 {offsets = [0, 0], sizes = [8, 96], strides = [1, 1]} : vector<8x128xf32> to vector<8x96xf32>
    %395 = arith.negf %394 : vector<8x96xf32>
    %396 = math.exp %395 : vector<8x96xf32>
    %cst_147 = arith.constant 1.000000e+00 : f32
    %397 = vector.broadcast %cst_147 : f32 to vector<8x96xf32>
    %398 = arith.addf %397, %396 : vector<8x96xf32>
    %399 = arith.divf %397, %398 : vector<8x96xf32>
    %400 = vector.extract_strided_slice %393 {offsets = [0, 96], sizes = [8, 32], strides = [1, 1]} : vector<8x128xf32> to vector<8x32xf32>
    %401 = math.tanh %400 : vector<8x32xf32>
    %402 = vector.extract_strided_slice %399 {offsets = [0, 32], sizes = [8, 32], strides = [1, 1]} : vector<8x96xf32> to vector<8x32xf32>
    %403 = arith.mulf %402, %378 : vector<8x32xf32>
    %404 = vector.extract_strided_slice %399 {offsets = [0, 0], sizes = [8, 32], strides = [1, 1]} : vector<8x96xf32> to vector<8x32xf32>
    %405 = arith.mulf %404, %401 : vector<8x32xf32>
    %406 = arith.addf %403, %405 : vector<8x32xf32>
    %407 = vector.extract_strided_slice %399 {offsets = [0, 64], sizes = [8, 32], strides = [1, 1]} : vector<8x96xf32> to vector<8x32xf32>
    %408 = math.tanh %406 : vector<8x32xf32>
    %409 = arith.mulf %407, %408 : vector<8x32xf32>
    %410 = vector.extract_strided_slice %409 {offsets = [0, 0], sizes = [8, 16], strides = [1, 1]} : vector<8x32xf32> to vector<8x16xf32>
    %c8_148 = arith.constant 8 : index
    %c0_149 = arith.constant 0 : index
    %c0_150 = arith.constant 0 : index
    %411 = vector.load %arg15[%c8_148, %c0_149, %c0_150] : memref<20x8x32xf32, #tpu.memory_space<vmem>>, vector<1x8x16xf32>
    %412 = vector.shape_cast %411 : vector<1x8x16xf32> to vector<8x16xf32>
    %413 = vector.shape_cast %410 : vector<8x16xf32> to vector<1x8x16xf32>
    tpu.vector_store %arg15[%c8_148, %c0_149, %c0_150], %413 {strides = array<i32>} : memref<20x8x32xf32, #tpu.memory_space<vmem>>, vector<1x8x16xf32>,
    %414 = vector.extract_strided_slice %409 {offsets = [0, 16], sizes = [8, 16], strides = [1, 1]} : vector<8x32xf32> to vector<8x16xf32>
    %c11_151 = arith.constant 11 : index
    %c0_152 = arith.constant 0 : index
    %c16_153 = arith.constant 16 : index
    %415 = vector.load %arg15[%c11_151, %c0_152, %c16_153] : memref<20x8x32xf32, #tpu.memory_space<vmem>>, vector<1x8x16xf32>
    %416 = vector.shape_cast %415 : vector<1x8x16xf32> to vector<8x16xf32>
    %417 = vector.shape_cast %414 : vector<8x16xf32> to vector<1x8x16xf32>
    tpu.vector_store %arg15[%c11_151, %c0_152, %c16_153], %417 {strides = array<i32>} : memref<20x8x32xf32, #tpu.memory_space<vmem>>, vector<1x8x16xf32>,
    %c9_154 = arith.constant 9 : index
    %c0_155 = arith.constant 0 : index
    %c0_156 = arith.constant 0 : index
    %418 = vector.load %arg13[%c9_154, %c0_155, %c0_156] : memref<20x8x128xf32, #tpu.memory_space<vmem>>, vector<1x8x128xf32>
    %419 = vector.shape_cast %418 : vector<1x8x128xf32> to vector<8x128xf32>
    %cst_157 = arith.constant dense<0.000000e+00> : vector<8x128xf32>
    %420 = tpu.matmul %409, %163, %cst_157 {dimension_numbers = #tpu.dot_dimension_numbers<[1], [0], [0], [1], [0, 0, 1, 1], [], []>} : vector<8x32xf32>, vector<32x128xf32>, vector<8x128xf32> -> vector<8x128xf32>
    %421 = arith.addf %419, %420 : vector<8x128xf32>
    %422 = vector.extract_strided_slice %421 {offsets = [0, 0], sizes = [8, 96], strides = [1, 1]} : vector<8x128xf32> to vector<8x96xf32>
    %423 = arith.negf %422 : vector<8x96xf32>
    %424 = math.exp %423 : vector<8x96xf32>
    %cst_158 = arith.constant 1.000000e+00 : f32
    %425 = vector.broadcast %cst_158 : f32 to vector<8x96xf32>
    %426 = arith.addf %425, %424 : vector<8x96xf32>
    %427 = arith.divf %425, %426 : vector<8x96xf32>
    %428 = vector.extract_strided_slice %421 {offsets = [0, 96], sizes = [8, 32], strides = [1, 1]} : vector<8x128xf32> to vector<8x32xf32>
    %429 = math.tanh %428 : vector<8x32xf32>
    %430 = vector.extract_strided_slice %427 {offsets = [0, 32], sizes = [8, 32], strides = [1, 1]} : vector<8x96xf32> to vector<8x32xf32>
    %431 = arith.mulf %430, %406 : vector<8x32xf32>
    %432 = vector.extract_strided_slice %427 {offsets = [0, 0], sizes = [8, 32], strides = [1, 1]} : vector<8x96xf32> to vector<8x32xf32>
    %433 = arith.mulf %432, %429 : vector<8x32xf32>
    %434 = arith.addf %431, %433 : vector<8x32xf32>
    %435 = vector.extract_strided_slice %427 {offsets = [0, 64], sizes = [8, 32], strides = [1, 1]} : vector<8x96xf32> to vector<8x32xf32>
    %436 = math.tanh %434 : vector<8x32xf32>
    %437 = arith.mulf %435, %436 : vector<8x32xf32>
    %438 = vector.extract_strided_slice %437 {offsets = [0, 0], sizes = [8, 16], strides = [1, 1]} : vector<8x32xf32> to vector<8x16xf32>
    %c9_159 = arith.constant 9 : index
    %c0_160 = arith.constant 0 : index
    %c0_161 = arith.constant 0 : index
    %439 = vector.load %arg15[%c9_159, %c0_160, %c0_161] : memref<20x8x32xf32, #tpu.memory_space<vmem>>, vector<1x8x16xf32>
    %440 = vector.shape_cast %439 : vector<1x8x16xf32> to vector<8x16xf32>
    %441 = vector.shape_cast %438 : vector<8x16xf32> to vector<1x8x16xf32>
    tpu.vector_store %arg15[%c9_159, %c0_160, %c0_161], %441 {strides = array<i32>} : memref<20x8x32xf32, #tpu.memory_space<vmem>>, vector<1x8x16xf32>,
    %442 = vector.extract_strided_slice %437 {offsets = [0, 16], sizes = [8, 16], strides = [1, 1]} : vector<8x32xf32> to vector<8x16xf32>
    %c10_162 = arith.constant 10 : index
    %c0_163 = arith.constant 0 : index
    %c16_164 = arith.constant 16 : index
    %443 = vector.load %arg15[%c10_162, %c0_163, %c16_164] : memref<20x8x32xf32, #tpu.memory_space<vmem>>, vector<1x8x16xf32>
    %444 = vector.shape_cast %443 : vector<1x8x16xf32> to vector<8x16xf32>
    %445 = vector.shape_cast %442 : vector<8x16xf32> to vector<1x8x16xf32>
    tpu.vector_store %arg15[%c10_162, %c0_163, %c16_164], %445 {strides = array<i32>} : memref<20x8x32xf32, #tpu.memory_space<vmem>>, vector<1x8x16xf32>,
    %c10_165 = arith.constant 10 : index
    %c0_166 = arith.constant 0 : index
    %c0_167 = arith.constant 0 : index
    %446 = vector.load %arg13[%c10_165, %c0_166, %c0_167] : memref<20x8x128xf32, #tpu.memory_space<vmem>>, vector<1x8x128xf32>
    %447 = vector.shape_cast %446 : vector<1x8x128xf32> to vector<8x128xf32>
    %cst_168 = arith.constant dense<0.000000e+00> : vector<8x128xf32>
    %448 = tpu.matmul %437, %163, %cst_168 {dimension_numbers = #tpu.dot_dimension_numbers<[1], [0], [0], [1], [0, 0, 1, 1], [], []>} : vector<8x32xf32>, vector<32x128xf32>, vector<8x128xf32> -> vector<8x128xf32>
    %449 = arith.addf %447, %448 : vector<8x128xf32>
    %450 = vector.extract_strided_slice %449 {offsets = [0, 0], sizes = [8, 96], strides = [1, 1]} : vector<8x128xf32> to vector<8x96xf32>
    %451 = arith.negf %450 : vector<8x96xf32>
    %452 = math.exp %451 : vector<8x96xf32>
    %cst_169 = arith.constant 1.000000e+00 : f32
    %453 = vector.broadcast %cst_169 : f32 to vector<8x96xf32>
    %454 = arith.addf %453, %452 : vector<8x96xf32>
    %455 = arith.divf %453, %454 : vector<8x96xf32>
    %456 = vector.extract_strided_slice %449 {offsets = [0, 96], sizes = [8, 32], strides = [1, 1]} : vector<8x128xf32> to vector<8x32xf32>
    %457 = math.tanh %456 : vector<8x32xf32>
    %458 = vector.extract_strided_slice %455 {offsets = [0, 32], sizes = [8, 32], strides = [1, 1]} : vector<8x96xf32> to vector<8x32xf32>
    %459 = arith.mulf %458, %434 : vector<8x32xf32>
    %460 = vector.extract_strided_slice %455 {offsets = [0, 0], sizes = [8, 32], strides = [1, 1]} : vector<8x96xf32> to vector<8x32xf32>
    %461 = arith.mulf %460, %457 : vector<8x32xf32>
    %462 = arith.addf %459, %461 : vector<8x32xf32>
    %463 = vector.extract_strided_slice %455 {offsets = [0, 64], sizes = [8, 32], strides = [1, 1]} : vector<8x96xf32> to vector<8x32xf32>
    %464 = math.tanh %462 : vector<8x32xf32>
    %465 = arith.mulf %463, %464 : vector<8x32xf32>
    %466 = vector.extract_strided_slice %465 {offsets = [0, 0], sizes = [8, 16], strides = [1, 1]} : vector<8x32xf32> to vector<8x16xf32>
    %c10_170 = arith.constant 10 : index
    %c0_171 = arith.constant 0 : index
    %c0_172 = arith.constant 0 : index
    %467 = vector.load %arg15[%c10_170, %c0_171, %c0_172] : memref<20x8x32xf32, #tpu.memory_space<vmem>>, vector<1x8x16xf32>
    %468 = vector.shape_cast %467 : vector<1x8x16xf32> to vector<8x16xf32>
    %469 = vector.shape_cast %466 : vector<8x16xf32> to vector<1x8x16xf32>
    tpu.vector_store %arg15[%c10_170, %c0_171, %c0_172], %469 {strides = array<i32>} : memref<20x8x32xf32, #tpu.memory_space<vmem>>, vector<1x8x16xf32>,
    %470 = vector.extract_strided_slice %465 {offsets = [0, 16], sizes = [8, 16], strides = [1, 1]} : vector<8x32xf32> to vector<8x16xf32>
    %c9_173 = arith.constant 9 : index
    %c0_174 = arith.constant 0 : index
    %c16_175 = arith.constant 16 : index
    %471 = vector.load %arg15[%c9_173, %c0_174, %c16_175] : memref<20x8x32xf32, #tpu.memory_space<vmem>>, vector<1x8x16xf32>
    %472 = vector.shape_cast %471 : vector<1x8x16xf32> to vector<8x16xf32>
    %473 = vector.shape_cast %470 : vector<8x16xf32> to vector<1x8x16xf32>
    tpu.vector_store %arg15[%c9_173, %c0_174, %c16_175], %473 {strides = array<i32>} : memref<20x8x32xf32, #tpu.memory_space<vmem>>, vector<1x8x16xf32>,
    %c11_176 = arith.constant 11 : index
    %c0_177 = arith.constant 0 : index
    %c0_178 = arith.constant 0 : index
    %474 = vector.load %arg13[%c11_176, %c0_177, %c0_178] : memref<20x8x128xf32, #tpu.memory_space<vmem>>, vector<1x8x128xf32>
    %475 = vector.shape_cast %474 : vector<1x8x128xf32> to vector<8x128xf32>
    %cst_179 = arith.constant dense<0.000000e+00> : vector<8x128xf32>
    %476 = tpu.matmul %465, %163, %cst_179 {dimension_numbers = #tpu.dot_dimension_numbers<[1], [0], [0], [1], [0, 0, 1, 1], [], []>} : vector<8x32xf32>, vector<32x128xf32>, vector<8x128xf32> -> vector<8x128xf32>
    %477 = arith.addf %475, %476 : vector<8x128xf32>
    %478 = vector.extract_strided_slice %477 {offsets = [0, 0], sizes = [8, 96], strides = [1, 1]} : vector<8x128xf32> to vector<8x96xf32>
    %479 = arith.negf %478 : vector<8x96xf32>
    %480 = math.exp %479 : vector<8x96xf32>
    %cst_180 = arith.constant 1.000000e+00 : f32
    %481 = vector.broadcast %cst_180 : f32 to vector<8x96xf32>
    %482 = arith.addf %481, %480 : vector<8x96xf32>
    %483 = arith.divf %481, %482 : vector<8x96xf32>
    %484 = vector.extract_strided_slice %477 {offsets = [0, 96], sizes = [8, 32], strides = [1, 1]} : vector<8x128xf32> to vector<8x32xf32>
    %485 = math.tanh %484 : vector<8x32xf32>
    %486 = vector.extract_strided_slice %483 {offsets = [0, 32], sizes = [8, 32], strides = [1, 1]} : vector<8x96xf32> to vector<8x32xf32>
    %487 = arith.mulf %486, %462 : vector<8x32xf32>
    %488 = vector.extract_strided_slice %483 {offsets = [0, 0], sizes = [8, 32], strides = [1, 1]} : vector<8x96xf32> to vector<8x32xf32>
    %489 = arith.mulf %488, %485 : vector<8x32xf32>
    %490 = arith.addf %487, %489 : vector<8x32xf32>
    %491 = vector.extract_strided_slice %483 {offsets = [0, 64], sizes = [8, 32], strides = [1, 1]} : vector<8x96xf32> to vector<8x32xf32>
    %492 = math.tanh %490 : vector<8x32xf32>
    %493 = arith.mulf %491, %492 : vector<8x32xf32>
    %494 = vector.extract_strided_slice %493 {offsets = [0, 0], sizes = [8, 16], strides = [1, 1]} : vector<8x32xf32> to vector<8x16xf32>
    %c11_181 = arith.constant 11 : index
    %c0_182 = arith.constant 0 : index
    %c0_183 = arith.constant 0 : index
    %495 = vector.load %arg15[%c11_181, %c0_182, %c0_183] : memref<20x8x32xf32, #tpu.memory_space<vmem>>, vector<1x8x16xf32>
    %496 = vector.shape_cast %495 : vector<1x8x16xf32> to vector<8x16xf32>
    %497 = vector.shape_cast %494 : vector<8x16xf32> to vector<1x8x16xf32>
    tpu.vector_store %arg15[%c11_181, %c0_182, %c0_183], %497 {strides = array<i32>} : memref<20x8x32xf32, #tpu.memory_space<vmem>>, vector<1x8x16xf32>,
    %498 = vector.extract_strided_slice %493 {offsets = [0, 16], sizes = [8, 16], strides = [1, 1]} : vector<8x32xf32> to vector<8x16xf32>
    %c8_184 = arith.constant 8 : index
    %c0_185 = arith.constant 0 : index
    %c16_186 = arith.constant 16 : index
    %499 = vector.load %arg15[%c8_184, %c0_185, %c16_186] : memref<20x8x32xf32, #tpu.memory_space<vmem>>, vector<1x8x16xf32>
    %500 = vector.shape_cast %499 : vector<1x8x16xf32> to vector<8x16xf32>
    %501 = vector.shape_cast %498 : vector<8x16xf32> to vector<1x8x16xf32>
    tpu.vector_store %arg15[%c8_184, %c0_185, %c16_186], %501 {strides = array<i32>} : memref<20x8x32xf32, #tpu.memory_space<vmem>>, vector<1x8x16xf32>,
    %c12_187 = arith.constant 12 : index
    %c0_188 = arith.constant 0 : index
    %c0_189 = arith.constant 0 : index
    %502 = vector.load %arg13[%c12_187, %c0_188, %c0_189] : memref<20x8x128xf32, #tpu.memory_space<vmem>>, vector<1x8x128xf32>
    %503 = vector.shape_cast %502 : vector<1x8x128xf32> to vector<8x128xf32>
    %cst_190 = arith.constant dense<0.000000e+00> : vector<8x128xf32>
    %504 = tpu.matmul %493, %163, %cst_190 {dimension_numbers = #tpu.dot_dimension_numbers<[1], [0], [0], [1], [0, 0, 1, 1], [], []>} : vector<8x32xf32>, vector<32x128xf32>, vector<8x128xf32> -> vector<8x128xf32>
    %505 = arith.addf %503, %504 : vector<8x128xf32>
    %506 = vector.extract_strided_slice %505 {offsets = [0, 0], sizes = [8, 96], strides = [1, 1]} : vector<8x128xf32> to vector<8x96xf32>
    %507 = arith.negf %506 : vector<8x96xf32>
    %508 = math.exp %507 : vector<8x96xf32>
    %cst_191 = arith.constant 1.000000e+00 : f32
    %509 = vector.broadcast %cst_191 : f32 to vector<8x96xf32>
    %510 = arith.addf %509, %508 : vector<8x96xf32>
    %511 = arith.divf %509, %510 : vector<8x96xf32>
    %512 = vector.extract_strided_slice %505 {offsets = [0, 96], sizes = [8, 32], strides = [1, 1]} : vector<8x128xf32> to vector<8x32xf32>
    %513 = math.tanh %512 : vector<8x32xf32>
    %514 = vector.extract_strided_slice %511 {offsets = [0, 32], sizes = [8, 32], strides = [1, 1]} : vector<8x96xf32> to vector<8x32xf32>
    %515 = arith.mulf %514, %490 : vector<8x32xf32>
    %516 = vector.extract_strided_slice %511 {offsets = [0, 0], sizes = [8, 32], strides = [1, 1]} : vector<8x96xf32> to vector<8x32xf32>
    %517 = arith.mulf %516, %513 : vector<8x32xf32>
    %518 = arith.addf %515, %517 : vector<8x32xf32>
    %519 = vector.extract_strided_slice %511 {offsets = [0, 64], sizes = [8, 32], strides = [1, 1]} : vector<8x96xf32> to vector<8x32xf32>
    %520 = math.tanh %518 : vector<8x32xf32>
    %521 = arith.mulf %519, %520 : vector<8x32xf32>
    %522 = vector.extract_strided_slice %521 {offsets = [0, 0], sizes = [8, 16], strides = [1, 1]} : vector<8x32xf32> to vector<8x16xf32>
    %c12_192 = arith.constant 12 : index
    %c0_193 = arith.constant 0 : index
    %c0_194 = arith.constant 0 : index
    %523 = vector.load %arg15[%c12_192, %c0_193, %c0_194] : memref<20x8x32xf32, #tpu.memory_space<vmem>>, vector<1x8x16xf32>
    %524 = vector.shape_cast %523 : vector<1x8x16xf32> to vector<8x16xf32>
    %525 = vector.shape_cast %522 : vector<8x16xf32> to vector<1x8x16xf32>
    tpu.vector_store %arg15[%c12_192, %c0_193, %c0_194], %525 {strides = array<i32>} : memref<20x8x32xf32, #tpu.memory_space<vmem>>, vector<1x8x16xf32>,
    %526 = vector.extract_strided_slice %521 {offsets = [0, 16], sizes = [8, 16], strides = [1, 1]} : vector<8x32xf32> to vector<8x16xf32>
    %c7_195 = arith.constant 7 : index
    %c0_196 = arith.constant 0 : index
    %c16_197 = arith.constant 16 : index
    %527 = vector.load %arg15[%c7_195, %c0_196, %c16_197] : memref<20x8x32xf32, #tpu.memory_space<vmem>>, vector<1x8x16xf32>
    %528 = vector.shape_cast %527 : vector<1x8x16xf32> to vector<8x16xf32>
    %529 = vector.shape_cast %526 : vector<8x16xf32> to vector<1x8x16xf32>
    tpu.vector_store %arg15[%c7_195, %c0_196, %c16_197], %529 {strides = array<i32>} : memref<20x8x32xf32, #tpu.memory_space<vmem>>, vector<1x8x16xf32>,
    %c13_198 = arith.constant 13 : index
    %c0_199 = arith.constant 0 : index
    %c0_200 = arith.constant 0 : index
    %530 = vector.load %arg13[%c13_198, %c0_199, %c0_200] : memref<20x8x128xf32, #tpu.memory_space<vmem>>, vector<1x8x128xf32>
    %531 = vector.shape_cast %530 : vector<1x8x128xf32> to vector<8x128xf32>
    %cst_201 = arith.constant dense<0.000000e+00> : vector<8x128xf32>
    %532 = tpu.matmul %521, %163, %cst_201 {dimension_numbers = #tpu.dot_dimension_numbers<[1], [0], [0], [1], [0, 0, 1, 1], [], []>} : vector<8x32xf32>, vector<32x128xf32>, vector<8x128xf32> -> vector<8x128xf32>
    %533 = arith.addf %531, %532 : vector<8x128xf32>
    %534 = vector.extract_strided_slice %533 {offsets = [0, 0], sizes = [8, 96], strides = [1, 1]} : vector<8x128xf32> to vector<8x96xf32>
    %535 = arith.negf %534 : vector<8x96xf32>
    %536 = math.exp %535 : vector<8x96xf32>
    %cst_202 = arith.constant 1.000000e+00 : f32
    %537 = vector.broadcast %cst_202 : f32 to vector<8x96xf32>
    %538 = arith.addf %537, %536 : vector<8x96xf32>
    %539 = arith.divf %537, %538 : vector<8x96xf32>
    %540 = vector.extract_strided_slice %533 {offsets = [0, 96], sizes = [8, 32], strides = [1, 1]} : vector<8x128xf32> to vector<8x32xf32>
    %541 = math.tanh %540 : vector<8x32xf32>
    %542 = vector.extract_strided_slice %539 {offsets = [0, 32], sizes = [8, 32], strides = [1, 1]} : vector<8x96xf32> to vector<8x32xf32>
    %543 = arith.mulf %542, %518 : vector<8x32xf32>
    %544 = vector.extract_strided_slice %539 {offsets = [0, 0], sizes = [8, 32], strides = [1, 1]} : vector<8x96xf32> to vector<8x32xf32>
    %545 = arith.mulf %544, %541 : vector<8x32xf32>
    %546 = arith.addf %543, %545 : vector<8x32xf32>
    %547 = vector.extract_strided_slice %539 {offsets = [0, 64], sizes = [8, 32], strides = [1, 1]} : vector<8x96xf32> to vector<8x32xf32>
    %548 = math.tanh %546 : vector<8x32xf32>
    %549 = arith.mulf %547, %548 : vector<8x32xf32>
    %550 = vector.extract_strided_slice %549 {offsets = [0, 0], sizes = [8, 16], strides = [1, 1]} : vector<8x32xf32> to vector<8x16xf32>
    %c13_203 = arith.constant 13 : index
    %c0_204 = arith.constant 0 : index
    %c0_205 = arith.constant 0 : index
    %551 = vector.load %arg15[%c13_203, %c0_204, %c0_205] : memref<20x8x32xf32, #tpu.memory_space<vmem>>, vector<1x8x16xf32>
    %552 = vector.shape_cast %551 : vector<1x8x16xf32> to vector<8x16xf32>
    %553 = vector.shape_cast %550 : vector<8x16xf32> to vector<1x8x16xf32>
    tpu.vector_store %arg15[%c13_203, %c0_204, %c0_205], %553 {strides = array<i32>} : memref<20x8x32xf32, #tpu.memory_space<vmem>>, vector<1x8x16xf32>,
    %554 = vector.extract_strided_slice %549 {offsets = [0, 16], sizes = [8, 16], strides = [1, 1]} : vector<8x32xf32> to vector<8x16xf32>
    %c6_206 = arith.constant 6 : index
    %c0_207 = arith.constant 0 : index
    %c16_208 = arith.constant 16 : index
    %555 = vector.load %arg15[%c6_206, %c0_207, %c16_208] : memref<20x8x32xf32, #tpu.memory_space<vmem>>, vector<1x8x16xf32>
    %556 = vector.shape_cast %555 : vector<1x8x16xf32> to vector<8x16xf32>
    %557 = vector.shape_cast %554 : vector<8x16xf32> to vector<1x8x16xf32>
    tpu.vector_store %arg15[%c6_206, %c0_207, %c16_208], %557 {strides = array<i32>} : memref<20x8x32xf32, #tpu.memory_space<vmem>>, vector<1x8x16xf32>,
    %c14_209 = arith.constant 14 : index
    %c0_210 = arith.constant 0 : index
    %c0_211 = arith.constant 0 : index
    %558 = vector.load %arg13[%c14_209, %c0_210, %c0_211] : memref<20x8x128xf32, #tpu.memory_space<vmem>>, vector<1x8x128xf32>
    %559 = vector.shape_cast %558 : vector<1x8x128xf32> to vector<8x128xf32>
    %cst_212 = arith.constant dense<0.000000e+00> : vector<8x128xf32>
    %560 = tpu.matmul %549, %163, %cst_212 {dimension_numbers = #tpu.dot_dimension_numbers<[1], [0], [0], [1], [0, 0, 1, 1], [], []>} : vector<8x32xf32>, vector<32x128xf32>, vector<8x128xf32> -> vector<8x128xf32>
    %561 = arith.addf %559, %560 : vector<8x128xf32>
    %562 = vector.extract_strided_slice %561 {offsets = [0, 0], sizes = [8, 96], strides = [1, 1]} : vector<8x128xf32> to vector<8x96xf32>
    %563 = arith.negf %562 : vector<8x96xf32>
    %564 = math.exp %563 : vector<8x96xf32>
    %cst_213 = arith.constant 1.000000e+00 : f32
    %565 = vector.broadcast %cst_213 : f32 to vector<8x96xf32>
    %566 = arith.addf %565, %564 : vector<8x96xf32>
    %567 = arith.divf %565, %566 : vector<8x96xf32>
    %568 = vector.extract_strided_slice %561 {offsets = [0, 96], sizes = [8, 32], strides = [1, 1]} : vector<8x128xf32> to vector<8x32xf32>
    %569 = math.tanh %568 : vector<8x32xf32>
    %570 = vector.extract_strided_slice %567 {offsets = [0, 32], sizes = [8, 32], strides = [1, 1]} : vector<8x96xf32> to vector<8x32xf32>
    %571 = arith.mulf %570, %546 : vector<8x32xf32>
    %572 = vector.extract_strided_slice %567 {offsets = [0, 0], sizes = [8, 32], strides = [1, 1]} : vector<8x96xf32> to vector<8x32xf32>
    %573 = arith.mulf %572, %569 : vector<8x32xf32>
    %574 = arith.addf %571, %573 : vector<8x32xf32>
    %575 = vector.extract_strided_slice %567 {offsets = [0, 64], sizes = [8, 32], strides = [1, 1]} : vector<8x96xf32> to vector<8x32xf32>
    %576 = math.tanh %574 : vector<8x32xf32>
    %577 = arith.mulf %575, %576 : vector<8x32xf32>
    %578 = vector.extract_strided_slice %577 {offsets = [0, 0], sizes = [8, 16], strides = [1, 1]} : vector<8x32xf32> to vector<8x16xf32>
    %c14_214 = arith.constant 14 : index
    %c0_215 = arith.constant 0 : index
    %c0_216 = arith.constant 0 : index
    %579 = vector.load %arg15[%c14_214, %c0_215, %c0_216] : memref<20x8x32xf32, #tpu.memory_space<vmem>>, vector<1x8x16xf32>
    %580 = vector.shape_cast %579 : vector<1x8x16xf32> to vector<8x16xf32>
    %581 = vector.shape_cast %578 : vector<8x16xf32> to vector<1x8x16xf32>
    tpu.vector_store %arg15[%c14_214, %c0_215, %c0_216], %581 {strides = array<i32>} : memref<20x8x32xf32, #tpu.memory_space<vmem>>, vector<1x8x16xf32>,
    %582 = vector.extract_strided_slice %577 {offsets = [0, 16], sizes = [8, 16], strides = [1, 1]} : vector<8x32xf32> to vector<8x16xf32>
    %c5_217 = arith.constant 5 : index
    %c0_218 = arith.constant 0 : index
    %c16_219 = arith.constant 16 : index
    %583 = vector.load %arg15[%c5_217, %c0_218, %c16_219] : memref<20x8x32xf32, #tpu.memory_space<vmem>>, vector<1x8x16xf32>
    %584 = vector.shape_cast %583 : vector<1x8x16xf32> to vector<8x16xf32>
    %585 = vector.shape_cast %582 : vector<8x16xf32> to vector<1x8x16xf32>
    tpu.vector_store %arg15[%c5_217, %c0_218, %c16_219], %585 {strides = array<i32>} : memref<20x8x32xf32, #tpu.memory_space<vmem>>, vector<1x8x16xf32>,
    %c15_220 = arith.constant 15 : index
    %c0_221 = arith.constant 0 : index
    %c0_222 = arith.constant 0 : index
    %586 = vector.load %arg13[%c15_220, %c0_221, %c0_222] : memref<20x8x128xf32, #tpu.memory_space<vmem>>, vector<1x8x128xf32>
    %587 = vector.shape_cast %586 : vector<1x8x128xf32> to vector<8x128xf32>
    %cst_223 = arith.constant dense<0.000000e+00> : vector<8x128xf32>
    %588 = tpu.matmul %577, %163, %cst_223 {dimension_numbers = #tpu.dot_dimension_numbers<[1], [0], [0], [1], [0, 0, 1, 1], [], []>} : vector<8x32xf32>, vector<32x128xf32>, vector<8x128xf32> -> vector<8x128xf32>
    %589 = arith.addf %587, %588 : vector<8x128xf32>
    %590 = vector.extract_strided_slice %589 {offsets = [0, 0], sizes = [8, 96], strides = [1, 1]} : vector<8x128xf32> to vector<8x96xf32>
    %591 = arith.negf %590 : vector<8x96xf32>
    %592 = math.exp %591 : vector<8x96xf32>
    %cst_224 = arith.constant 1.000000e+00 : f32
    %593 = vector.broadcast %cst_224 : f32 to vector<8x96xf32>
    %594 = arith.addf %593, %592 : vector<8x96xf32>
    %595 = arith.divf %593, %594 : vector<8x96xf32>
    %596 = vector.extract_strided_slice %589 {offsets = [0, 96], sizes = [8, 32], strides = [1, 1]} : vector<8x128xf32> to vector<8x32xf32>
    %597 = math.tanh %596 : vector<8x32xf32>
    %598 = vector.extract_strided_slice %595 {offsets = [0, 32], sizes = [8, 32], strides = [1, 1]} : vector<8x96xf32> to vector<8x32xf32>
    %599 = arith.mulf %598, %574 : vector<8x32xf32>
    %600 = vector.extract_strided_slice %595 {offsets = [0, 0], sizes = [8, 32], strides = [1, 1]} : vector<8x96xf32> to vector<8x32xf32>
    %601 = arith.mulf %600, %597 : vector<8x32xf32>
    %602 = arith.addf %599, %601 : vector<8x32xf32>
    %603 = vector.extract_strided_slice %595 {offsets = [0, 64], sizes = [8, 32], strides = [1, 1]} : vector<8x96xf32> to vector<8x32xf32>
    %604 = math.tanh %602 : vector<8x32xf32>
    %605 = arith.mulf %603, %604 : vector<8x32xf32>
    %606 = vector.extract_strided_slice %605 {offsets = [0, 0], sizes = [8, 16], strides = [1, 1]} : vector<8x32xf32> to vector<8x16xf32>
    %c15_225 = arith.constant 15 : index
    %c0_226 = arith.constant 0 : index
    %c0_227 = arith.constant 0 : index
    %607 = vector.load %arg15[%c15_225, %c0_226, %c0_227] : memref<20x8x32xf32, #tpu.memory_space<vmem>>, vector<1x8x16xf32>
    %608 = vector.shape_cast %607 : vector<1x8x16xf32> to vector<8x16xf32>
    %609 = vector.shape_cast %606 : vector<8x16xf32> to vector<1x8x16xf32>
    tpu.vector_store %arg15[%c15_225, %c0_226, %c0_227], %609 {strides = array<i32>} : memref<20x8x32xf32, #tpu.memory_space<vmem>>, vector<1x8x16xf32>,
    %610 = vector.extract_strided_slice %605 {offsets = [0, 16], sizes = [8, 16], strides = [1, 1]} : vector<8x32xf32> to vector<8x16xf32>
    %c4_228 = arith.constant 4 : index
    %c0_229 = arith.constant 0 : index
    %c16_230 = arith.constant 16 : index
    %611 = vector.load %arg15[%c4_228, %c0_229, %c16_230] : memref<20x8x32xf32, #tpu.memory_space<vmem>>, vector<1x8x16xf32>
    %612 = vector.shape_cast %611 : vector<1x8x16xf32> to vector<8x16xf32>
    %613 = vector.shape_cast %610 : vector<8x16xf32> to vector<1x8x16xf32>
    tpu.vector_store %arg15[%c4_228, %c0_229, %c16_230], %613 {strides = array<i32>} : memref<20x8x32xf32, #tpu.memory_space<vmem>>, vector<1x8x16xf32>,
    %c16_231 = arith.constant 16 : index
    %c0_232 = arith.constant 0 : index
    %c0_233 = arith.constant 0 : index
    %614 = vector.load %arg13[%c16_231, %c0_232, %c0_233] : memref<20x8x128xf32, #tpu.memory_space<vmem>>, vector<1x8x128xf32>
    %615 = vector.shape_cast %614 : vector<1x8x128xf32> to vector<8x128xf32>
    %cst_234 = arith.constant dense<0.000000e+00> : vector<8x128xf32>
    %616 = tpu.matmul %605, %163, %cst_234 {dimension_numbers = #tpu.dot_dimension_numbers<[1], [0], [0], [1], [0, 0, 1, 1], [], []>} : vector<8x32xf32>, vector<32x128xf32>, vector<8x128xf32> -> vector<8x128xf32>
    %617 = arith.addf %615, %616 : vector<8x128xf32>
    %618 = vector.extract_strided_slice %617 {offsets = [0, 0], sizes = [8, 96], strides = [1, 1]} : vector<8x128xf32> to vector<8x96xf32>
    %619 = arith.negf %618 : vector<8x96xf32>
    %620 = math.exp %619 : vector<8x96xf32>
    %cst_235 = arith.constant 1.000000e+00 : f32
    %621 = vector.broadcast %cst_235 : f32 to vector<8x96xf32>
    %622 = arith.addf %621, %620 : vector<8x96xf32>
    %623 = arith.divf %621, %622 : vector<8x96xf32>
    %624 = vector.extract_strided_slice %617 {offsets = [0, 96], sizes = [8, 32], strides = [1, 1]} : vector<8x128xf32> to vector<8x32xf32>
    %625 = math.tanh %624 : vector<8x32xf32>
    %626 = vector.extract_strided_slice %623 {offsets = [0, 32], sizes = [8, 32], strides = [1, 1]} : vector<8x96xf32> to vector<8x32xf32>
    %627 = arith.mulf %626, %602 : vector<8x32xf32>
    %628 = vector.extract_strided_slice %623 {offsets = [0, 0], sizes = [8, 32], strides = [1, 1]} : vector<8x96xf32> to vector<8x32xf32>
    %629 = arith.mulf %628, %625 : vector<8x32xf32>
    %630 = arith.addf %627, %629 : vector<8x32xf32>
    %631 = vector.extract_strided_slice %623 {offsets = [0, 64], sizes = [8, 32], strides = [1, 1]} : vector<8x96xf32> to vector<8x32xf32>
    %632 = math.tanh %630 : vector<8x32xf32>
    %633 = arith.mulf %631, %632 : vector<8x32xf32>
    %634 = vector.extract_strided_slice %633 {offsets = [0, 0], sizes = [8, 16], strides = [1, 1]} : vector<8x32xf32> to vector<8x16xf32>
    %c16_236 = arith.constant 16 : index
    %c0_237 = arith.constant 0 : index
    %c0_238 = arith.constant 0 : index
    %635 = vector.load %arg15[%c16_236, %c0_237, %c0_238] : memref<20x8x32xf32, #tpu.memory_space<vmem>>, vector<1x8x16xf32>
    %636 = vector.shape_cast %635 : vector<1x8x16xf32> to vector<8x16xf32>
    %637 = vector.shape_cast %634 : vector<8x16xf32> to vector<1x8x16xf32>
    tpu.vector_store %arg15[%c16_236, %c0_237, %c0_238], %637 {strides = array<i32>} : memref<20x8x32xf32, #tpu.memory_space<vmem>>, vector<1x8x16xf32>,
    %638 = vector.extract_strided_slice %633 {offsets = [0, 16], sizes = [8, 16], strides = [1, 1]} : vector<8x32xf32> to vector<8x16xf32>
    %c3_239 = arith.constant 3 : index
    %c0_240 = arith.constant 0 : index
    %c16_241 = arith.constant 16 : index
    %639 = vector.load %arg15[%c3_239, %c0_240, %c16_241] : memref<20x8x32xf32, #tpu.memory_space<vmem>>, vector<1x8x16xf32>
    %640 = vector.shape_cast %639 : vector<1x8x16xf32> to vector<8x16xf32>
    %641 = vector.shape_cast %638 : vector<8x16xf32> to vector<1x8x16xf32>
    tpu.vector_store %arg15[%c3_239, %c0_240, %c16_241], %641 {strides = array<i32>} : memref<20x8x32xf32, #tpu.memory_space<vmem>>, vector<1x8x16xf32>,
    %c17_242 = arith.constant 17 : index
    %c0_243 = arith.constant 0 : index
    %c0_244 = arith.constant 0 : index
    %642 = vector.load %arg13[%c17_242, %c0_243, %c0_244] : memref<20x8x128xf32, #tpu.memory_space<vmem>>, vector<1x8x128xf32>
    %643 = vector.shape_cast %642 : vector<1x8x128xf32> to vector<8x128xf32>
    %cst_245 = arith.constant dense<0.000000e+00> : vector<8x128xf32>
    %644 = tpu.matmul %633, %163, %cst_245 {dimension_numbers = #tpu.dot_dimension_numbers<[1], [0], [0], [1], [0, 0, 1, 1], [], []>} : vector<8x32xf32>, vector<32x128xf32>, vector<8x128xf32> -> vector<8x128xf32>
    %645 = arith.addf %643, %644 : vector<8x128xf32>
    %646 = vector.extract_strided_slice %645 {offsets = [0, 0], sizes = [8, 96], strides = [1, 1]} : vector<8x128xf32> to vector<8x96xf32>
    %647 = arith.negf %646 : vector<8x96xf32>
    %648 = math.exp %647 : vector<8x96xf32>
    %cst_246 = arith.constant 1.000000e+00 : f32
    %649 = vector.broadcast %cst_246 : f32 to vector<8x96xf32>
    %650 = arith.addf %649, %648 : vector<8x96xf32>
    %651 = arith.divf %649, %650 : vector<8x96xf32>
    %652 = vector.extract_strided_slice %645 {offsets = [0, 96], sizes = [8, 32], strides = [1, 1]} : vector<8x128xf32> to vector<8x32xf32>
    %653 = math.tanh %652 : vector<8x32xf32>
    %654 = vector.extract_strided_slice %651 {offsets = [0, 32], sizes = [8, 32], strides = [1, 1]} : vector<8x96xf32> to vector<8x32xf32>
    %655 = arith.mulf %654, %630 : vector<8x32xf32>
    %656 = vector.extract_strided_slice %651 {offsets = [0, 0], sizes = [8, 32], strides = [1, 1]} : vector<8x96xf32> to vector<8x32xf32>
    %657 = arith.mulf %656, %653 : vector<8x32xf32>
    %658 = arith.addf %655, %657 : vector<8x32xf32>
    %659 = vector.extract_strided_slice %651 {offsets = [0, 64], sizes = [8, 32], strides = [1, 1]} : vector<8x96xf32> to vector<8x32xf32>
    %660 = math.tanh %658 : vector<8x32xf32>
    %661 = arith.mulf %659, %660 : vector<8x32xf32>
    %662 = vector.extract_strided_slice %661 {offsets = [0, 0], sizes = [8, 16], strides = [1, 1]} : vector<8x32xf32> to vector<8x16xf32>
    %c17_247 = arith.constant 17 : index
    %c0_248 = arith.constant 0 : index
    %c0_249 = arith.constant 0 : index
    %663 = vector.load %arg15[%c17_247, %c0_248, %c0_249] : memref<20x8x32xf32, #tpu.memory_space<vmem>>, vector<1x8x16xf32>
    %664 = vector.shape_cast %663 : vector<1x8x16xf32> to vector<8x16xf32>
    %665 = vector.shape_cast %662 : vector<8x16xf32> to vector<1x8x16xf32>
    tpu.vector_store %arg15[%c17_247, %c0_248, %c0_249], %665 {strides = array<i32>} : memref<20x8x32xf32, #tpu.memory_space<vmem>>, vector<1x8x16xf32>,
    %666 = vector.extract_strided_slice %661 {offsets = [0, 16], sizes = [8, 16], strides = [1, 1]} : vector<8x32xf32> to vector<8x16xf32>
    %c2_250 = arith.constant 2 : index
    %c0_251 = arith.constant 0 : index
    %c16_252 = arith.constant 16 : index
    %667 = vector.load %arg15[%c2_250, %c0_251, %c16_252] : memref<20x8x32xf32, #tpu.memory_space<vmem>>, vector<1x8x16xf32>
    %668 = vector.shape_cast %667 : vector<1x8x16xf32> to vector<8x16xf32>
    %669 = vector.shape_cast %666 : vector<8x16xf32> to vector<1x8x16xf32>
    tpu.vector_store %arg15[%c2_250, %c0_251, %c16_252], %669 {strides = array<i32>} : memref<20x8x32xf32, #tpu.memory_space<vmem>>, vector<1x8x16xf32>,
    %c18_253 = arith.constant 18 : index
    %c0_254 = arith.constant 0 : index
    %c0_255 = arith.constant 0 : index
    %670 = vector.load %arg13[%c18_253, %c0_254, %c0_255] : memref<20x8x128xf32, #tpu.memory_space<vmem>>, vector<1x8x128xf32>
    %671 = vector.shape_cast %670 : vector<1x8x128xf32> to vector<8x128xf32>
    %cst_256 = arith.constant dense<0.000000e+00> : vector<8x128xf32>
    %672 = tpu.matmul %661, %163, %cst_256 {dimension_numbers = #tpu.dot_dimension_numbers<[1], [0], [0], [1], [0, 0, 1, 1], [], []>} : vector<8x32xf32>, vector<32x128xf32>, vector<8x128xf32> -> vector<8x128xf32>
    %673 = arith.addf %671, %672 : vector<8x128xf32>
    %674 = vector.extract_strided_slice %673 {offsets = [0, 0], sizes = [8, 96], strides = [1, 1]} : vector<8x128xf32> to vector<8x96xf32>
    %675 = arith.negf %674 : vector<8x96xf32>
    %676 = math.exp %675 : vector<8x96xf32>
    %cst_257 = arith.constant 1.000000e+00 : f32
    %677 = vector.broadcast %cst_257 : f32 to vector<8x96xf32>
    %678 = arith.addf %677, %676 : vector<8x96xf32>
    %679 = arith.divf %677, %678 : vector<8x96xf32>
    %680 = vector.extract_strided_slice %673 {offsets = [0, 96], sizes = [8, 32], strides = [1, 1]} : vector<8x128xf32> to vector<8x32xf32>
    %681 = math.tanh %680 : vector<8x32xf32>
    %682 = vector.extract_strided_slice %679 {offsets = [0, 32], sizes = [8, 32], strides = [1, 1]} : vector<8x96xf32> to vector<8x32xf32>
    %683 = arith.mulf %682, %658 : vector<8x32xf32>
    %684 = vector.extract_strided_slice %679 {offsets = [0, 0], sizes = [8, 32], strides = [1, 1]} : vector<8x96xf32> to vector<8x32xf32>
    %685 = arith.mulf %684, %681 : vector<8x32xf32>
    %686 = arith.addf %683, %685 : vector<8x32xf32>
    %687 = vector.extract_strided_slice %679 {offsets = [0, 64], sizes = [8, 32], strides = [1, 1]} : vector<8x96xf32> to vector<8x32xf32>
    %688 = math.tanh %686 : vector<8x32xf32>
    %689 = arith.mulf %687, %688 : vector<8x32xf32>
    %690 = vector.extract_strided_slice %689 {offsets = [0, 0], sizes = [8, 16], strides = [1, 1]} : vector<8x32xf32> to vector<8x16xf32>
    %c18_258 = arith.constant 18 : index
    %c0_259 = arith.constant 0 : index
    %c0_260 = arith.constant 0 : index
    %691 = vector.load %arg15[%c18_258, %c0_259, %c0_260] : memref<20x8x32xf32, #tpu.memory_space<vmem>>, vector<1x8x16xf32>
    %692 = vector.shape_cast %691 : vector<1x8x16xf32> to vector<8x16xf32>
    %693 = vector.shape_cast %690 : vector<8x16xf32> to vector<1x8x16xf32>
    tpu.vector_store %arg15[%c18_258, %c0_259, %c0_260], %693 {strides = array<i32>} : memref<20x8x32xf32, #tpu.memory_space<vmem>>, vector<1x8x16xf32>,
    %694 = vector.extract_strided_slice %689 {offsets = [0, 16], sizes = [8, 16], strides = [1, 1]} : vector<8x32xf32> to vector<8x16xf32>
    %c1_261 = arith.constant 1 : index
    %c0_262 = arith.constant 0 : index
    %c16_263 = arith.constant 16 : index
    %695 = vector.load %arg15[%c1_261, %c0_262, %c16_263] : memref<20x8x32xf32, #tpu.memory_space<vmem>>, vector<1x8x16xf32>
    %696 = vector.shape_cast %695 : vector<1x8x16xf32> to vector<8x16xf32>
    %697 = vector.shape_cast %694 : vector<8x16xf32> to vector<1x8x16xf32>
    tpu.vector_store %arg15[%c1_261, %c0_262, %c16_263], %697 {strides = array<i32>} : memref<20x8x32xf32, #tpu.memory_space<vmem>>, vector<1x8x16xf32>,
    %c19_264 = arith.constant 19 : index
    %c0_265 = arith.constant 0 : index
    %c0_266 = arith.constant 0 : index
    %698 = vector.load %arg13[%c19_264, %c0_265, %c0_266] : memref<20x8x128xf32, #tpu.memory_space<vmem>>, vector<1x8x128xf32>
    %699 = vector.shape_cast %698 : vector<1x8x128xf32> to vector<8x128xf32>
    %cst_267 = arith.constant dense<0.000000e+00> : vector<8x128xf32>
    %700 = tpu.matmul %689, %163, %cst_267 {dimension_numbers = #tpu.dot_dimension_numbers<[1], [0], [0], [1], [0, 0, 1, 1], [], []>} : vector<8x32xf32>, vector<32x128xf32>, vector<8x128xf32> -> vector<8x128xf32>
    %701 = arith.addf %699, %700 : vector<8x128xf32>
    %702 = vector.extract_strided_slice %701 {offsets = [0, 0], sizes = [8, 96], strides = [1, 1]} : vector<8x128xf32> to vector<8x96xf32>
    %703 = arith.negf %702 : vector<8x96xf32>
    %704 = math.exp %703 : vector<8x96xf32>
    %cst_268 = arith.constant 1.000000e+00 : f32
    %705 = vector.broadcast %cst_268 : f32 to vector<8x96xf32>
    %706 = arith.addf %705, %704 : vector<8x96xf32>
    %707 = arith.divf %705, %706 : vector<8x96xf32>
    %708 = vector.extract_strided_slice %701 {offsets = [0, 96], sizes = [8, 32], strides = [1, 1]} : vector<8x128xf32> to vector<8x32xf32>
    %709 = math.tanh %708 : vector<8x32xf32>
    %710 = vector.extract_strided_slice %707 {offsets = [0, 32], sizes = [8, 32], strides = [1, 1]} : vector<8x96xf32> to vector<8x32xf32>
    %711 = arith.mulf %710, %686 : vector<8x32xf32>
    %712 = vector.extract_strided_slice %707 {offsets = [0, 0], sizes = [8, 32], strides = [1, 1]} : vector<8x96xf32> to vector<8x32xf32>
    %713 = arith.mulf %712, %709 : vector<8x32xf32>
    %714 = arith.addf %711, %713 : vector<8x32xf32>
    %715 = vector.extract_strided_slice %707 {offsets = [0, 64], sizes = [8, 32], strides = [1, 1]} : vector<8x96xf32> to vector<8x32xf32>
    %716 = math.tanh %714 : vector<8x32xf32>
    %717 = arith.mulf %715, %716 : vector<8x32xf32>
    %718 = vector.extract_strided_slice %717 {offsets = [0, 0], sizes = [8, 16], strides = [1, 1]} : vector<8x32xf32> to vector<8x16xf32>
    %c19_269 = arith.constant 19 : index
    %c0_270 = arith.constant 0 : index
    %c0_271 = arith.constant 0 : index
    %719 = vector.load %arg15[%c19_269, %c0_270, %c0_271] : memref<20x8x32xf32, #tpu.memory_space<vmem>>, vector<1x8x16xf32>
    %720 = vector.shape_cast %719 : vector<1x8x16xf32> to vector<8x16xf32>
    %721 = vector.shape_cast %718 : vector<8x16xf32> to vector<1x8x16xf32>
    tpu.vector_store %arg15[%c19_269, %c0_270, %c0_271], %721 {strides = array<i32>} : memref<20x8x32xf32, #tpu.memory_space<vmem>>, vector<1x8x16xf32>,
    %722 = vector.extract_strided_slice %717 {offsets = [0, 16], sizes = [8, 16], strides = [1, 1]} : vector<8x32xf32> to vector<8x16xf32>
    %c0_272 = arith.constant 0 : index
    %c0_273 = arith.constant 0 : index
    %c16_274 = arith.constant 16 : index
    %723 = vector.load %arg15[%c0_272, %c0_273, %c16_274] : memref<20x8x32xf32, #tpu.memory_space<vmem>>, vector<1x8x16xf32>
    %724 = vector.shape_cast %723 : vector<1x8x16xf32> to vector<8x16xf32>
    %725 = vector.shape_cast %722 : vector<8x16xf32> to vector<1x8x16xf32>
    tpu.vector_store %arg15[%c0_272, %c0_273, %c16_274], %725 {strides = array<i32>} : memref<20x8x32xf32, #tpu.memory_space<vmem>>, vector<1x8x16xf32>,
    %c0_275 = arith.constant 0 : index
    %c0_276 = arith.constant 0 : index
    %c0_277 = arith.constant 0 : index
    %726 = vector.load %arg15[%c0_275, %c0_276, %c0_277] : memref<20x8x32xf32, #tpu.memory_space<vmem>>, vector<20x8x32xf32>
    %727 = vector.shape_cast %726 : vector<20x8x32xf32> to vector<160x32xf32>
    %c0_278 = arith.constant 0 : index
    %c0_279 = arith.constant 0 : index
    %728 = vector.load %arg6[%c0_278, %c0_279] : memref<32x128xf32, #tpu.memory_space<vmem>>, vector<32x128xf32>
    %cst_280 = arith.constant dense<0.000000e+00> : vector<160x128xf32>
    %729 = tpu.matmul %727, %728, %cst_280 {dimension_numbers = #tpu.dot_dimension_numbers<[1], [0], [0], [1], [0, 0, 1, 1], [], []>} : vector<160x32xf32>, vector<32x128xf32>, vector<160x128xf32> -> vector<160x128xf32>
    %c0_281 = arith.constant 0 : index
    %c0_282 = arith.constant 0 : index
    %730 = vector.load %arg7[%c0_281, %c0_282] : memref<1x128xf32, #tpu.memory_space<vmem>>, vector<1x128xf32>
    %731 = vector.broadcast %730 : vector<1x128xf32> to vector<160x128xf32>
    %732 = arith.addf %729, %731 : vector<160x128xf32>
    %733 = vector.shape_cast %732 : vector<160x128xf32> to vector<20x8x128xf32>
    %734 = vector.extract_strided_slice %733 {offsets = [0, 0, 0], sizes = [1, 8, 128], strides = [1, 1, 1]} : vector<20x8x128xf32> to vector<1x8x128xf32>
    %735 = vector.shape_cast %734 : vector<1x8x128xf32> to vector<8x128xf32>
    %736 = vector.extract_strided_slice %733 {offsets = [19, 0, 0], sizes = [1, 8, 128], strides = [1, 1, 1]} : vector<20x8x128xf32> to vector<1x8x128xf32>
    %737 = vector.shape_cast %736 : vector<1x8x128xf32> to vector<8x128xf32>
    %738 = arith.select %20, %735, %737 : vector<8x128xi1>, vector<8x128xf32>
    %c0_283 = arith.constant 0 : index
    %c0_284 = arith.constant 0 : index
    %c0_285 = arith.constant 0 : index
    %739 = vector.load %arg14[%c0_283, %c0_284, %c0_285] : memref<20x8x128xf32, #tpu.memory_space<vmem>>, vector<1x8x128xf32>
    %740 = vector.shape_cast %739 : vector<1x8x128xf32> to vector<8x128xf32>
    %741 = vector.shape_cast %738 : vector<8x128xf32> to vector<1x8x128xf32>
    tpu.vector_store %arg14[%c0_283, %c0_284, %c0_285], %741 {strides = array<i32>} : memref<20x8x128xf32, #tpu.memory_space<vmem>>, vector<1x8x128xf32>,
    %742 = arith.select %20, %737, %735 : vector<8x128xi1>, vector<8x128xf32>
    %c19_286 = arith.constant 19 : index
    %c0_287 = arith.constant 0 : index
    %c0_288 = arith.constant 0 : index
    %743 = vector.load %arg14[%c19_286, %c0_287, %c0_288] : memref<20x8x128xf32, #tpu.memory_space<vmem>>, vector<1x8x128xf32>
    %744 = vector.shape_cast %743 : vector<1x8x128xf32> to vector<8x128xf32>
    %745 = vector.shape_cast %742 : vector<8x128xf32> to vector<1x8x128xf32>
    tpu.vector_store %arg14[%c19_286, %c0_287, %c0_288], %745 {strides = array<i32>} : memref<20x8x128xf32, #tpu.memory_space<vmem>>, vector<1x8x128xf32>,
    %746 = vector.extract_strided_slice %733 {offsets = [1, 0, 0], sizes = [1, 8, 128], strides = [1, 1, 1]} : vector<20x8x128xf32> to vector<1x8x128xf32>
    %747 = vector.shape_cast %746 : vector<1x8x128xf32> to vector<8x128xf32>
    %748 = vector.extract_strided_slice %733 {offsets = [18, 0, 0], sizes = [1, 8, 128], strides = [1, 1, 1]} : vector<20x8x128xf32> to vector<1x8x128xf32>
    %749 = vector.shape_cast %748 : vector<1x8x128xf32> to vector<8x128xf32>
    %750 = arith.select %20, %747, %749 : vector<8x128xi1>, vector<8x128xf32>
    %c1_289 = arith.constant 1 : index
    %c0_290 = arith.constant 0 : index
    %c0_291 = arith.constant 0 : index
    %751 = vector.load %arg14[%c1_289, %c0_290, %c0_291] : memref<20x8x128xf32, #tpu.memory_space<vmem>>, vector<1x8x128xf32>
    %752 = vector.shape_cast %751 : vector<1x8x128xf32> to vector<8x128xf32>
    %753 = vector.shape_cast %750 : vector<8x128xf32> to vector<1x8x128xf32>
    tpu.vector_store %arg14[%c1_289, %c0_290, %c0_291], %753 {strides = array<i32>} : memref<20x8x128xf32, #tpu.memory_space<vmem>>, vector<1x8x128xf32>,
    %754 = arith.select %20, %749, %747 : vector<8x128xi1>, vector<8x128xf32>
    %c18_292 = arith.constant 18 : index
    %c0_293 = arith.constant 0 : index
    %c0_294 = arith.constant 0 : index
    %755 = vector.load %arg14[%c18_292, %c0_293, %c0_294] : memref<20x8x128xf32, #tpu.memory_space<vmem>>, vector<1x8x128xf32>
    %756 = vector.shape_cast %755 : vector<1x8x128xf32> to vector<8x128xf32>
    %757 = vector.shape_cast %754 : vector<8x128xf32> to vector<1x8x128xf32>
    tpu.vector_store %arg14[%c18_292, %c0_293, %c0_294], %757 {strides = array<i32>} : memref<20x8x128xf32, #tpu.memory_space<vmem>>, vector<1x8x128xf32>,
    %758 = vector.extract_strided_slice %733 {offsets = [2, 0, 0], sizes = [1, 8, 128], strides = [1, 1, 1]} : vector<20x8x128xf32> to vector<1x8x128xf32>
    %759 = vector.shape_cast %758 : vector<1x8x128xf32> to vector<8x128xf32>
    %760 = vector.extract_strided_slice %733 {offsets = [17, 0, 0], sizes = [1, 8, 128], strides = [1, 1, 1]} : vector<20x8x128xf32> to vector<1x8x128xf32>
    %761 = vector.shape_cast %760 : vector<1x8x128xf32> to vector<8x128xf32>
    %762 = arith.select %20, %759, %761 : vector<8x128xi1>, vector<8x128xf32>
    %c2_295 = arith.constant 2 : index
    %c0_296 = arith.constant 0 : index
    %c0_297 = arith.constant 0 : index
    %763 = vector.load %arg14[%c2_295, %c0_296, %c0_297] : memref<20x8x128xf32, #tpu.memory_space<vmem>>, vector<1x8x128xf32>
    %764 = vector.shape_cast %763 : vector<1x8x128xf32> to vector<8x128xf32>
    %765 = vector.shape_cast %762 : vector<8x128xf32> to vector<1x8x128xf32>
    tpu.vector_store %arg14[%c2_295, %c0_296, %c0_297], %765 {strides = array<i32>} : memref<20x8x128xf32, #tpu.memory_space<vmem>>, vector<1x8x128xf32>,
    %766 = arith.select %20, %761, %759 : vector<8x128xi1>, vector<8x128xf32>
    %c17_298 = arith.constant 17 : index
    %c0_299 = arith.constant 0 : index
    %c0_300 = arith.constant 0 : index
    %767 = vector.load %arg14[%c17_298, %c0_299, %c0_300] : memref<20x8x128xf32, #tpu.memory_space<vmem>>, vector<1x8x128xf32>
    %768 = vector.shape_cast %767 : vector<1x8x128xf32> to vector<8x128xf32>
    %769 = vector.shape_cast %766 : vector<8x128xf32> to vector<1x8x128xf32>
    tpu.vector_store %arg14[%c17_298, %c0_299, %c0_300], %769 {strides = array<i32>} : memref<20x8x128xf32, #tpu.memory_space<vmem>>, vector<1x8x128xf32>,
    %770 = vector.extract_strided_slice %733 {offsets = [3, 0, 0], sizes = [1, 8, 128], strides = [1, 1, 1]} : vector<20x8x128xf32> to vector<1x8x128xf32>
    %771 = vector.shape_cast %770 : vector<1x8x128xf32> to vector<8x128xf32>
    %772 = vector.extract_strided_slice %733 {offsets = [16, 0, 0], sizes = [1, 8, 128], strides = [1, 1, 1]} : vector<20x8x128xf32> to vector<1x8x128xf32>
    %773 = vector.shape_cast %772 : vector<1x8x128xf32> to vector<8x128xf32>
    %774 = arith.select %20, %771, %773 : vector<8x128xi1>, vector<8x128xf32>
    %c3_301 = arith.constant 3 : index
    %c0_302 = arith.constant 0 : index
    %c0_303 = arith.constant 0 : index
    %775 = vector.load %arg14[%c3_301, %c0_302, %c0_303] : memref<20x8x128xf32, #tpu.memory_space<vmem>>, vector<1x8x128xf32>
    %776 = vector.shape_cast %775 : vector<1x8x128xf32> to vector<8x128xf32>
    %777 = vector.shape_cast %774 : vector<8x128xf32> to vector<1x8x128xf32>
    tpu.vector_store %arg14[%c3_301, %c0_302, %c0_303], %777 {strides = array<i32>} : memref<20x8x128xf32, #tpu.memory_space<vmem>>, vector<1x8x128xf32>,
    %778 = arith.select %20, %773, %771 : vector<8x128xi1>, vector<8x128xf32>
    %c16_304 = arith.constant 16 : index
    %c0_305 = arith.constant 0 : index
    %c0_306 = arith.constant 0 : index
    %779 = vector.load %arg14[%c16_304, %c0_305, %c0_306] : memref<20x8x128xf32, #tpu.memory_space<vmem>>, vector<1x8x128xf32>
    %780 = vector.shape_cast %779 : vector<1x8x128xf32> to vector<8x128xf32>
    %781 = vector.shape_cast %778 : vector<8x128xf32> to vector<1x8x128xf32>
    tpu.vector_store %arg14[%c16_304, %c0_305, %c0_306], %781 {strides = array<i32>} : memref<20x8x128xf32, #tpu.memory_space<vmem>>, vector<1x8x128xf32>,
    %782 = vector.extract_strided_slice %733 {offsets = [4, 0, 0], sizes = [1, 8, 128], strides = [1, 1, 1]} : vector<20x8x128xf32> to vector<1x8x128xf32>
    %783 = vector.shape_cast %782 : vector<1x8x128xf32> to vector<8x128xf32>
    %784 = vector.extract_strided_slice %733 {offsets = [15, 0, 0], sizes = [1, 8, 128], strides = [1, 1, 1]} : vector<20x8x128xf32> to vector<1x8x128xf32>
    %785 = vector.shape_cast %784 : vector<1x8x128xf32> to vector<8x128xf32>
    %786 = arith.select %20, %783, %785 : vector<8x128xi1>, vector<8x128xf32>
    %c4_307 = arith.constant 4 : index
    %c0_308 = arith.constant 0 : index
    %c0_309 = arith.constant 0 : index
    %787 = vector.load %arg14[%c4_307, %c0_308, %c0_309] : memref<20x8x128xf32, #tpu.memory_space<vmem>>, vector<1x8x128xf32>
    %788 = vector.shape_cast %787 : vector<1x8x128xf32> to vector<8x128xf32>
    %789 = vector.shape_cast %786 : vector<8x128xf32> to vector<1x8x128xf32>
    tpu.vector_store %arg14[%c4_307, %c0_308, %c0_309], %789 {strides = array<i32>} : memref<20x8x128xf32, #tpu.memory_space<vmem>>, vector<1x8x128xf32>,
    %790 = arith.select %20, %785, %783 : vector<8x128xi1>, vector<8x128xf32>
    %c15_310 = arith.constant 15 : index
    %c0_311 = arith.constant 0 : index
    %c0_312 = arith.constant 0 : index
    %791 = vector.load %arg14[%c15_310, %c0_311, %c0_312] : memref<20x8x128xf32, #tpu.memory_space<vmem>>, vector<1x8x128xf32>
    %792 = vector.shape_cast %791 : vector<1x8x128xf32> to vector<8x128xf32>
    %793 = vector.shape_cast %790 : vector<8x128xf32> to vector<1x8x128xf32>
    tpu.vector_store %arg14[%c15_310, %c0_311, %c0_312], %793 {strides = array<i32>} : memref<20x8x128xf32, #tpu.memory_space<vmem>>, vector<1x8x128xf32>,
    %794 = vector.extract_strided_slice %733 {offsets = [5, 0, 0], sizes = [1, 8, 128], strides = [1, 1, 1]} : vector<20x8x128xf32> to vector<1x8x128xf32>
    %795 = vector.shape_cast %794 : vector<1x8x128xf32> to vector<8x128xf32>
    %796 = vector.extract_strided_slice %733 {offsets = [14, 0, 0], sizes = [1, 8, 128], strides = [1, 1, 1]} : vector<20x8x128xf32> to vector<1x8x128xf32>
    %797 = vector.shape_cast %796 : vector<1x8x128xf32> to vector<8x128xf32>
    %798 = arith.select %20, %795, %797 : vector<8x128xi1>, vector<8x128xf32>
    %c5_313 = arith.constant 5 : index
    %c0_314 = arith.constant 0 : index
    %c0_315 = arith.constant 0 : index
    %799 = vector.load %arg14[%c5_313, %c0_314, %c0_315] : memref<20x8x128xf32, #tpu.memory_space<vmem>>, vector<1x8x128xf32>
    %800 = vector.shape_cast %799 : vector<1x8x128xf32> to vector<8x128xf32>
    %801 = vector.shape_cast %798 : vector<8x128xf32> to vector<1x8x128xf32>
    tpu.vector_store %arg14[%c5_313, %c0_314, %c0_315], %801 {strides = array<i32>} : memref<20x8x128xf32, #tpu.memory_space<vmem>>, vector<1x8x128xf32>,
    %802 = arith.select %20, %797, %795 : vector<8x128xi1>, vector<8x128xf32>
    %c14_316 = arith.constant 14 : index
    %c0_317 = arith.constant 0 : index
    %c0_318 = arith.constant 0 : index
    %803 = vector.load %arg14[%c14_316, %c0_317, %c0_318] : memref<20x8x128xf32, #tpu.memory_space<vmem>>, vector<1x8x128xf32>
    %804 = vector.shape_cast %803 : vector<1x8x128xf32> to vector<8x128xf32>
    %805 = vector.shape_cast %802 : vector<8x128xf32> to vector<1x8x128xf32>
    tpu.vector_store %arg14[%c14_316, %c0_317, %c0_318], %805 {strides = array<i32>} : memref<20x8x128xf32, #tpu.memory_space<vmem>>, vector<1x8x128xf32>,
    %806 = vector.extract_strided_slice %733 {offsets = [6, 0, 0], sizes = [1, 8, 128], strides = [1, 1, 1]} : vector<20x8x128xf32> to vector<1x8x128xf32>
    %807 = vector.shape_cast %806 : vector<1x8x128xf32> to vector<8x128xf32>
    %808 = vector.extract_strided_slice %733 {offsets = [13, 0, 0], sizes = [1, 8, 128], strides = [1, 1, 1]} : vector<20x8x128xf32> to vector<1x8x128xf32>
    %809 = vector.shape_cast %808 : vector<1x8x128xf32> to vector<8x128xf32>
    %810 = arith.select %20, %807, %809 : vector<8x128xi1>, vector<8x128xf32>
    %c6_319 = arith.constant 6 : index
    %c0_320 = arith.constant 0 : index
    %c0_321 = arith.constant 0 : index
    %811 = vector.load %arg14[%c6_319, %c0_320, %c0_321] : memref<20x8x128xf32, #tpu.memory_space<vmem>>, vector<1x8x128xf32>
    %812 = vector.shape_cast %811 : vector<1x8x128xf32> to vector<8x128xf32>
    %813 = vector.shape_cast %810 : vector<8x128xf32> to vector<1x8x128xf32>
    tpu.vector_store %arg14[%c6_319, %c0_320, %c0_321], %813 {strides = array<i32>} : memref<20x8x128xf32, #tpu.memory_space<vmem>>, vector<1x8x128xf32>,
    %814 = arith.select %20, %809, %807 : vector<8x128xi1>, vector<8x128xf32>
    %c13_322 = arith.constant 13 : index
    %c0_323 = arith.constant 0 : index
    %c0_324 = arith.constant 0 : index
    %815 = vector.load %arg14[%c13_322, %c0_323, %c0_324] : memref<20x8x128xf32, #tpu.memory_space<vmem>>, vector<1x8x128xf32>
    %816 = vector.shape_cast %815 : vector<1x8x128xf32> to vector<8x128xf32>
    %817 = vector.shape_cast %814 : vector<8x128xf32> to vector<1x8x128xf32>
    tpu.vector_store %arg14[%c13_322, %c0_323, %c0_324], %817 {strides = array<i32>} : memref<20x8x128xf32, #tpu.memory_space<vmem>>, vector<1x8x128xf32>,
    %818 = vector.extract_strided_slice %733 {offsets = [7, 0, 0], sizes = [1, 8, 128], strides = [1, 1, 1]} : vector<20x8x128xf32> to vector<1x8x128xf32>
    %819 = vector.shape_cast %818 : vector<1x8x128xf32> to vector<8x128xf32>
    %820 = vector.extract_strided_slice %733 {offsets = [12, 0, 0], sizes = [1, 8, 128], strides = [1, 1, 1]} : vector<20x8x128xf32> to vector<1x8x128xf32>
    %821 = vector.shape_cast %820 : vector<1x8x128xf32> to vector<8x128xf32>
    %822 = arith.select %20, %819, %821 : vector<8x128xi1>, vector<8x128xf32>
    %c7_325 = arith.constant 7 : index
    %c0_326 = arith.constant 0 : index
    %c0_327 = arith.constant 0 : index
    %823 = vector.load %arg14[%c7_325, %c0_326, %c0_327] : memref<20x8x128xf32, #tpu.memory_space<vmem>>, vector<1x8x128xf32>
    %824 = vector.shape_cast %823 : vector<1x8x128xf32> to vector<8x128xf32>
    %825 = vector.shape_cast %822 : vector<8x128xf32> to vector<1x8x128xf32>
    tpu.vector_store %arg14[%c7_325, %c0_326, %c0_327], %825 {strides = array<i32>} : memref<20x8x128xf32, #tpu.memory_space<vmem>>, vector<1x8x128xf32>,
    %826 = arith.select %20, %821, %819 : vector<8x128xi1>, vector<8x128xf32>
    %c12_328 = arith.constant 12 : index
    %c0_329 = arith.constant 0 : index
    %c0_330 = arith.constant 0 : index
    %827 = vector.load %arg14[%c12_328, %c0_329, %c0_330] : memref<20x8x128xf32, #tpu.memory_space<vmem>>, vector<1x8x128xf32>
    %828 = vector.shape_cast %827 : vector<1x8x128xf32> to vector<8x128xf32>
    %829 = vector.shape_cast %826 : vector<8x128xf32> to vector<1x8x128xf32>
    tpu.vector_store %arg14[%c12_328, %c0_329, %c0_330], %829 {strides = array<i32>} : memref<20x8x128xf32, #tpu.memory_space<vmem>>, vector<1x8x128xf32>,
    %830 = vector.extract_strided_slice %733 {offsets = [8, 0, 0], sizes = [1, 8, 128], strides = [1, 1, 1]} : vector<20x8x128xf32> to vector<1x8x128xf32>
    %831 = vector.shape_cast %830 : vector<1x8x128xf32> to vector<8x128xf32>
    %832 = vector.extract_strided_slice %733 {offsets = [11, 0, 0], sizes = [1, 8, 128], strides = [1, 1, 1]} : vector<20x8x128xf32> to vector<1x8x128xf32>
    %833 = vector.shape_cast %832 : vector<1x8x128xf32> to vector<8x128xf32>
    %834 = arith.select %20, %831, %833 : vector<8x128xi1>, vector<8x128xf32>
    %c8_331 = arith.constant 8 : index
    %c0_332 = arith.constant 0 : index
    %c0_333 = arith.constant 0 : index
    %835 = vector.load %arg14[%c8_331, %c0_332, %c0_333] : memref<20x8x128xf32, #tpu.memory_space<vmem>>, vector<1x8x128xf32>
    %836 = vector.shape_cast %835 : vector<1x8x128xf32> to vector<8x128xf32>
    %837 = vector.shape_cast %834 : vector<8x128xf32> to vector<1x8x128xf32>
    tpu.vector_store %arg14[%c8_331, %c0_332, %c0_333], %837 {strides = array<i32>} : memref<20x8x128xf32, #tpu.memory_space<vmem>>, vector<1x8x128xf32>,
    %838 = arith.select %20, %833, %831 : vector<8x128xi1>, vector<8x128xf32>
    %c11_334 = arith.constant 11 : index
    %c0_335 = arith.constant 0 : index
    %c0_336 = arith.constant 0 : index
    %839 = vector.load %arg14[%c11_334, %c0_335, %c0_336] : memref<20x8x128xf32, #tpu.memory_space<vmem>>, vector<1x8x128xf32>
    %840 = vector.shape_cast %839 : vector<1x8x128xf32> to vector<8x128xf32>
    %841 = vector.shape_cast %838 : vector<8x128xf32> to vector<1x8x128xf32>
    tpu.vector_store %arg14[%c11_334, %c0_335, %c0_336], %841 {strides = array<i32>} : memref<20x8x128xf32, #tpu.memory_space<vmem>>, vector<1x8x128xf32>,
    %842 = vector.extract_strided_slice %733 {offsets = [9, 0, 0], sizes = [1, 8, 128], strides = [1, 1, 1]} : vector<20x8x128xf32> to vector<1x8x128xf32>
    %843 = vector.shape_cast %842 : vector<1x8x128xf32> to vector<8x128xf32>
    %844 = vector.extract_strided_slice %733 {offsets = [10, 0, 0], sizes = [1, 8, 128], strides = [1, 1, 1]} : vector<20x8x128xf32> to vector<1x8x128xf32>
    %845 = vector.shape_cast %844 : vector<1x8x128xf32> to vector<8x128xf32>
    %846 = arith.select %20, %843, %845 : vector<8x128xi1>, vector<8x128xf32>
    %c9_337 = arith.constant 9 : index
    %c0_338 = arith.constant 0 : index
    %c0_339 = arith.constant 0 : index
    %847 = vector.load %arg14[%c9_337, %c0_338, %c0_339] : memref<20x8x128xf32, #tpu.memory_space<vmem>>, vector<1x8x128xf32>
    %848 = vector.shape_cast %847 : vector<1x8x128xf32> to vector<8x128xf32>
    %849 = vector.shape_cast %846 : vector<8x128xf32> to vector<1x8x128xf32>
    tpu.vector_store %arg14[%c9_337, %c0_338, %c0_339], %849 {strides = array<i32>} : memref<20x8x128xf32, #tpu.memory_space<vmem>>, vector<1x8x128xf32>,
    %850 = arith.select %20, %845, %843 : vector<8x128xi1>, vector<8x128xf32>
    %c10_340 = arith.constant 10 : index
    %c0_341 = arith.constant 0 : index
    %c0_342 = arith.constant 0 : index
    %851 = vector.load %arg14[%c10_340, %c0_341, %c0_342] : memref<20x8x128xf32, #tpu.memory_space<vmem>>, vector<1x8x128xf32>
    %852 = vector.shape_cast %851 : vector<1x8x128xf32> to vector<8x128xf32>
    %853 = vector.shape_cast %850 : vector<8x128xf32> to vector<1x8x128xf32>
    tpu.vector_store %arg14[%c10_340, %c0_341, %c0_342], %853 {strides = array<i32>} : memref<20x8x128xf32, #tpu.memory_space<vmem>>, vector<1x8x128xf32>,
    %c0_343 = arith.constant 0 : index
    %c0_344 = arith.constant 0 : index
    %854 = vector.load %arg8[%c0_343, %c0_344] : memref<32x128xf32, #tpu.memory_space<vmem>>, vector<32x128xf32>
    %cst_345 = arith.constant 0.000000e+00 : f32
    %855 = vector.broadcast %cst_345 : f32 to vector<8x32xf32>
    %cst_346 = arith.constant 0.000000e+00 : f32
    %856 = vector.broadcast %cst_346 : f32 to vector<8x32xf32>
    %c0_347 = arith.constant 0 : index
    %c0_348 = arith.constant 0 : index
    %c0_349 = arith.constant 0 : index
    %857 = vector.load %arg14[%c0_347, %c0_348, %c0_349] : memref<20x8x128xf32, #tpu.memory_space<vmem>>, vector<1x8x128xf32>
    %858 = vector.shape_cast %857 : vector<1x8x128xf32> to vector<8x128xf32>
    %cst_350 = arith.constant dense<0.000000e+00> : vector<8x128xf32>
    %859 = tpu.matmul %855, %854, %cst_350 {dimension_numbers = #tpu.dot_dimension_numbers<[1], [0], [0], [1], [0, 0, 1, 1], [], []>} : vector<8x32xf32>, vector<32x128xf32>, vector<8x128xf32> -> vector<8x128xf32>
    %860 = arith.addf %858, %859 : vector<8x128xf32>
    %861 = vector.extract_strided_slice %860 {offsets = [0, 0], sizes = [8, 96], strides = [1, 1]} : vector<8x128xf32> to vector<8x96xf32>
    %862 = arith.negf %861 : vector<8x96xf32>
    %863 = math.exp %862 : vector<8x96xf32>
    %cst_351 = arith.constant 1.000000e+00 : f32
    %864 = vector.broadcast %cst_351 : f32 to vector<8x96xf32>
    %865 = arith.addf %864, %863 : vector<8x96xf32>
    %866 = arith.divf %864, %865 : vector<8x96xf32>
    %867 = vector.extract_strided_slice %860 {offsets = [0, 96], sizes = [8, 32], strides = [1, 1]} : vector<8x128xf32> to vector<8x32xf32>
    %868 = math.tanh %867 : vector<8x32xf32>
    %869 = vector.extract_strided_slice %866 {offsets = [0, 32], sizes = [8, 32], strides = [1, 1]} : vector<8x96xf32> to vector<8x32xf32>
    %870 = arith.mulf %869, %856 : vector<8x32xf32>
    %871 = vector.extract_strided_slice %866 {offsets = [0, 0], sizes = [8, 32], strides = [1, 1]} : vector<8x96xf32> to vector<8x32xf32>
    %872 = arith.mulf %871, %868 : vector<8x32xf32>
    %873 = arith.addf %870, %872 : vector<8x32xf32>
    %874 = vector.extract_strided_slice %866 {offsets = [0, 64], sizes = [8, 32], strides = [1, 1]} : vector<8x96xf32> to vector<8x32xf32>
    %875 = math.tanh %873 : vector<8x32xf32>
    %876 = arith.mulf %874, %875 : vector<8x32xf32>
    %877 = vector.extract_strided_slice %876 {offsets = [0, 0], sizes = [8, 16], strides = [1, 1]} : vector<8x32xf32> to vector<8x16xf32>
    %c0_352 = arith.constant 0 : index
    %c0_353 = arith.constant 0 : index
    %c0_354 = arith.constant 0 : index
    %878 = vector.load %arg16[%c0_352, %c0_353, %c0_354] : memref<20x8x32xf32, #tpu.memory_space<vmem>>, vector<1x8x16xf32>
    %879 = vector.shape_cast %878 : vector<1x8x16xf32> to vector<8x16xf32>
    %880 = vector.shape_cast %877 : vector<8x16xf32> to vector<1x8x16xf32>
    tpu.vector_store %arg16[%c0_352, %c0_353, %c0_354], %880 {strides = array<i32>} : memref<20x8x32xf32, #tpu.memory_space<vmem>>, vector<1x8x16xf32>,
    %881 = vector.extract_strided_slice %876 {offsets = [0, 16], sizes = [8, 16], strides = [1, 1]} : vector<8x32xf32> to vector<8x16xf32>
    %c19_355 = arith.constant 19 : index
    %c0_356 = arith.constant 0 : index
    %c16_357 = arith.constant 16 : index
    %882 = vector.load %arg16[%c19_355, %c0_356, %c16_357] : memref<20x8x32xf32, #tpu.memory_space<vmem>>, vector<1x8x16xf32>
    %883 = vector.shape_cast %882 : vector<1x8x16xf32> to vector<8x16xf32>
    %884 = vector.shape_cast %881 : vector<8x16xf32> to vector<1x8x16xf32>
    tpu.vector_store %arg16[%c19_355, %c0_356, %c16_357], %884 {strides = array<i32>} : memref<20x8x32xf32, #tpu.memory_space<vmem>>, vector<1x8x16xf32>,
    %c1_358 = arith.constant 1 : index
    %c0_359 = arith.constant 0 : index
    %c0_360 = arith.constant 0 : index
    %885 = vector.load %arg14[%c1_358, %c0_359, %c0_360] : memref<20x8x128xf32, #tpu.memory_space<vmem>>, vector<1x8x128xf32>
    %886 = vector.shape_cast %885 : vector<1x8x128xf32> to vector<8x128xf32>
    %cst_361 = arith.constant dense<0.000000e+00> : vector<8x128xf32>
    %887 = tpu.matmul %876, %854, %cst_361 {dimension_numbers = #tpu.dot_dimension_numbers<[1], [0], [0], [1], [0, 0, 1, 1], [], []>} : vector<8x32xf32>, vector<32x128xf32>, vector<8x128xf32> -> vector<8x128xf32>
    %888 = arith.addf %886, %887 : vector<8x128xf32>
    %889 = vector.extract_strided_slice %888 {offsets = [0, 0], sizes = [8, 96], strides = [1, 1]} : vector<8x128xf32> to vector<8x96xf32>
    %890 = arith.negf %889 : vector<8x96xf32>
    %891 = math.exp %890 : vector<8x96xf32>
    %cst_362 = arith.constant 1.000000e+00 : f32
    %892 = vector.broadcast %cst_362 : f32 to vector<8x96xf32>
    %893 = arith.addf %892, %891 : vector<8x96xf32>
    %894 = arith.divf %892, %893 : vector<8x96xf32>
    %895 = vector.extract_strided_slice %888 {offsets = [0, 96], sizes = [8, 32], strides = [1, 1]} : vector<8x128xf32> to vector<8x32xf32>
    %896 = math.tanh %895 : vector<8x32xf32>
    %897 = vector.extract_strided_slice %894 {offsets = [0, 32], sizes = [8, 32], strides = [1, 1]} : vector<8x96xf32> to vector<8x32xf32>
    %898 = arith.mulf %897, %873 : vector<8x32xf32>
    %899 = vector.extract_strided_slice %894 {offsets = [0, 0], sizes = [8, 32], strides = [1, 1]} : vector<8x96xf32> to vector<8x32xf32>
    %900 = arith.mulf %899, %896 : vector<8x32xf32>
    %901 = arith.addf %898, %900 : vector<8x32xf32>
    %902 = vector.extract_strided_slice %894 {offsets = [0, 64], sizes = [8, 32], strides = [1, 1]} : vector<8x96xf32> to vector<8x32xf32>
    %903 = math.tanh %901 : vector<8x32xf32>
    %904 = arith.mulf %902, %903 : vector<8x32xf32>
    %905 = vector.extract_strided_slice %904 {offsets = [0, 0], sizes = [8, 16], strides = [1, 1]} : vector<8x32xf32> to vector<8x16xf32>
    %c1_363 = arith.constant 1 : index
    %c0_364 = arith.constant 0 : index
    %c0_365 = arith.constant 0 : index
    %906 = vector.load %arg16[%c1_363, %c0_364, %c0_365] : memref<20x8x32xf32, #tpu.memory_space<vmem>>, vector<1x8x16xf32>
    %907 = vector.shape_cast %906 : vector<1x8x16xf32> to vector<8x16xf32>
    %908 = vector.shape_cast %905 : vector<8x16xf32> to vector<1x8x16xf32>
    tpu.vector_store %arg16[%c1_363, %c0_364, %c0_365], %908 {strides = array<i32>} : memref<20x8x32xf32, #tpu.memory_space<vmem>>, vector<1x8x16xf32>,
    %909 = vector.extract_strided_slice %904 {offsets = [0, 16], sizes = [8, 16], strides = [1, 1]} : vector<8x32xf32> to vector<8x16xf32>
    %c18_366 = arith.constant 18 : index
    %c0_367 = arith.constant 0 : index
    %c16_368 = arith.constant 16 : index
    %910 = vector.load %arg16[%c18_366, %c0_367, %c16_368] : memref<20x8x32xf32, #tpu.memory_space<vmem>>, vector<1x8x16xf32>
    %911 = vector.shape_cast %910 : vector<1x8x16xf32> to vector<8x16xf32>
    %912 = vector.shape_cast %909 : vector<8x16xf32> to vector<1x8x16xf32>
    tpu.vector_store %arg16[%c18_366, %c0_367, %c16_368], %912 {strides = array<i32>} : memref<20x8x32xf32, #tpu.memory_space<vmem>>, vector<1x8x16xf32>,
    %c2_369 = arith.constant 2 : index
    %c0_370 = arith.constant 0 : index
    %c0_371 = arith.constant 0 : index
    %913 = vector.load %arg14[%c2_369, %c0_370, %c0_371] : memref<20x8x128xf32, #tpu.memory_space<vmem>>, vector<1x8x128xf32>
    %914 = vector.shape_cast %913 : vector<1x8x128xf32> to vector<8x128xf32>
    %cst_372 = arith.constant dense<0.000000e+00> : vector<8x128xf32>
    %915 = tpu.matmul %904, %854, %cst_372 {dimension_numbers = #tpu.dot_dimension_numbers<[1], [0], [0], [1], [0, 0, 1, 1], [], []>} : vector<8x32xf32>, vector<32x128xf32>, vector<8x128xf32> -> vector<8x128xf32>
    %916 = arith.addf %914, %915 : vector<8x128xf32>
    %917 = vector.extract_strided_slice %916 {offsets = [0, 0], sizes = [8, 96], strides = [1, 1]} : vector<8x128xf32> to vector<8x96xf32>
    %918 = arith.negf %917 : vector<8x96xf32>
    %919 = math.exp %918 : vector<8x96xf32>
    %cst_373 = arith.constant 1.000000e+00 : f32
    %920 = vector.broadcast %cst_373 : f32 to vector<8x96xf32>
    %921 = arith.addf %920, %919 : vector<8x96xf32>
    %922 = arith.divf %920, %921 : vector<8x96xf32>
    %923 = vector.extract_strided_slice %916 {offsets = [0, 96], sizes = [8, 32], strides = [1, 1]} : vector<8x128xf32> to vector<8x32xf32>
    %924 = math.tanh %923 : vector<8x32xf32>
    %925 = vector.extract_strided_slice %922 {offsets = [0, 32], sizes = [8, 32], strides = [1, 1]} : vector<8x96xf32> to vector<8x32xf32>
    %926 = arith.mulf %925, %901 : vector<8x32xf32>
    %927 = vector.extract_strided_slice %922 {offsets = [0, 0], sizes = [8, 32], strides = [1, 1]} : vector<8x96xf32> to vector<8x32xf32>
    %928 = arith.mulf %927, %924 : vector<8x32xf32>
    %929 = arith.addf %926, %928 : vector<8x32xf32>
    %930 = vector.extract_strided_slice %922 {offsets = [0, 64], sizes = [8, 32], strides = [1, 1]} : vector<8x96xf32> to vector<8x32xf32>
    %931 = math.tanh %929 : vector<8x32xf32>
    %932 = arith.mulf %930, %931 : vector<8x32xf32>
    %933 = vector.extract_strided_slice %932 {offsets = [0, 0], sizes = [8, 16], strides = [1, 1]} : vector<8x32xf32> to vector<8x16xf32>
    %c2_374 = arith.constant 2 : index
    %c0_375 = arith.constant 0 : index
    %c0_376 = arith.constant 0 : index
    %934 = vector.load %arg16[%c2_374, %c0_375, %c0_376] : memref<20x8x32xf32, #tpu.memory_space<vmem>>, vector<1x8x16xf32>
    %935 = vector.shape_cast %934 : vector<1x8x16xf32> to vector<8x16xf32>
    %936 = vector.shape_cast %933 : vector<8x16xf32> to vector<1x8x16xf32>
    tpu.vector_store %arg16[%c2_374, %c0_375, %c0_376], %936 {strides = array<i32>} : memref<20x8x32xf32, #tpu.memory_space<vmem>>, vector<1x8x16xf32>,
    %937 = vector.extract_strided_slice %932 {offsets = [0, 16], sizes = [8, 16], strides = [1, 1]} : vector<8x32xf32> to vector<8x16xf32>
    %c17_377 = arith.constant 17 : index
    %c0_378 = arith.constant 0 : index
    %c16_379 = arith.constant 16 : index
    %938 = vector.load %arg16[%c17_377, %c0_378, %c16_379] : memref<20x8x32xf32, #tpu.memory_space<vmem>>, vector<1x8x16xf32>
    %939 = vector.shape_cast %938 : vector<1x8x16xf32> to vector<8x16xf32>
    %940 = vector.shape_cast %937 : vector<8x16xf32> to vector<1x8x16xf32>
    tpu.vector_store %arg16[%c17_377, %c0_378, %c16_379], %940 {strides = array<i32>} : memref<20x8x32xf32, #tpu.memory_space<vmem>>, vector<1x8x16xf32>,
    %c3_380 = arith.constant 3 : index
    %c0_381 = arith.constant 0 : index
    %c0_382 = arith.constant 0 : index
    %941 = vector.load %arg14[%c3_380, %c0_381, %c0_382] : memref<20x8x128xf32, #tpu.memory_space<vmem>>, vector<1x8x128xf32>
    %942 = vector.shape_cast %941 : vector<1x8x128xf32> to vector<8x128xf32>
    %cst_383 = arith.constant dense<0.000000e+00> : vector<8x128xf32>
    %943 = tpu.matmul %932, %854, %cst_383 {dimension_numbers = #tpu.dot_dimension_numbers<[1], [0], [0], [1], [0, 0, 1, 1], [], []>} : vector<8x32xf32>, vector<32x128xf32>, vector<8x128xf32> -> vector<8x128xf32>
    %944 = arith.addf %942, %943 : vector<8x128xf32>
    %945 = vector.extract_strided_slice %944 {offsets = [0, 0], sizes = [8, 96], strides = [1, 1]} : vector<8x128xf32> to vector<8x96xf32>
    %946 = arith.negf %945 : vector<8x96xf32>
    %947 = math.exp %946 : vector<8x96xf32>
    %cst_384 = arith.constant 1.000000e+00 : f32
    %948 = vector.broadcast %cst_384 : f32 to vector<8x96xf32>
    %949 = arith.addf %948, %947 : vector<8x96xf32>
    %950 = arith.divf %948, %949 : vector<8x96xf32>
    %951 = vector.extract_strided_slice %944 {offsets = [0, 96], sizes = [8, 32], strides = [1, 1]} : vector<8x128xf32> to vector<8x32xf32>
    %952 = math.tanh %951 : vector<8x32xf32>
    %953 = vector.extract_strided_slice %950 {offsets = [0, 32], sizes = [8, 32], strides = [1, 1]} : vector<8x96xf32> to vector<8x32xf32>
    %954 = arith.mulf %953, %929 : vector<8x32xf32>
    %955 = vector.extract_strided_slice %950 {offsets = [0, 0], sizes = [8, 32], strides = [1, 1]} : vector<8x96xf32> to vector<8x32xf32>
    %956 = arith.mulf %955, %952 : vector<8x32xf32>
    %957 = arith.addf %954, %956 : vector<8x32xf32>
    %958 = vector.extract_strided_slice %950 {offsets = [0, 64], sizes = [8, 32], strides = [1, 1]} : vector<8x96xf32> to vector<8x32xf32>
    %959 = math.tanh %957 : vector<8x32xf32>
    %960 = arith.mulf %958, %959 : vector<8x32xf32>
    %961 = vector.extract_strided_slice %960 {offsets = [0, 0], sizes = [8, 16], strides = [1, 1]} : vector<8x32xf32> to vector<8x16xf32>
    %c3_385 = arith.constant 3 : index
    %c0_386 = arith.constant 0 : index
    %c0_387 = arith.constant 0 : index
    %962 = vector.load %arg16[%c3_385, %c0_386, %c0_387] : memref<20x8x32xf32, #tpu.memory_space<vmem>>, vector<1x8x16xf32>
    %963 = vector.shape_cast %962 : vector<1x8x16xf32> to vector<8x16xf32>
    %964 = vector.shape_cast %961 : vector<8x16xf32> to vector<1x8x16xf32>
    tpu.vector_store %arg16[%c3_385, %c0_386, %c0_387], %964 {strides = array<i32>} : memref<20x8x32xf32, #tpu.memory_space<vmem>>, vector<1x8x16xf32>,
    %965 = vector.extract_strided_slice %960 {offsets = [0, 16], sizes = [8, 16], strides = [1, 1]} : vector<8x32xf32> to vector<8x16xf32>
    %c16_388 = arith.constant 16 : index
    %c0_389 = arith.constant 0 : index
    %c16_390 = arith.constant 16 : index
    %966 = vector.load %arg16[%c16_388, %c0_389, %c16_390] : memref<20x8x32xf32, #tpu.memory_space<vmem>>, vector<1x8x16xf32>
    %967 = vector.shape_cast %966 : vector<1x8x16xf32> to vector<8x16xf32>
    %968 = vector.shape_cast %965 : vector<8x16xf32> to vector<1x8x16xf32>
    tpu.vector_store %arg16[%c16_388, %c0_389, %c16_390], %968 {strides = array<i32>} : memref<20x8x32xf32, #tpu.memory_space<vmem>>, vector<1x8x16xf32>,
    %c4_391 = arith.constant 4 : index
    %c0_392 = arith.constant 0 : index
    %c0_393 = arith.constant 0 : index
    %969 = vector.load %arg14[%c4_391, %c0_392, %c0_393] : memref<20x8x128xf32, #tpu.memory_space<vmem>>, vector<1x8x128xf32>
    %970 = vector.shape_cast %969 : vector<1x8x128xf32> to vector<8x128xf32>
    %cst_394 = arith.constant dense<0.000000e+00> : vector<8x128xf32>
    %971 = tpu.matmul %960, %854, %cst_394 {dimension_numbers = #tpu.dot_dimension_numbers<[1], [0], [0], [1], [0, 0, 1, 1], [], []>} : vector<8x32xf32>, vector<32x128xf32>, vector<8x128xf32> -> vector<8x128xf32>
    %972 = arith.addf %970, %971 : vector<8x128xf32>
    %973 = vector.extract_strided_slice %972 {offsets = [0, 0], sizes = [8, 96], strides = [1, 1]} : vector<8x128xf32> to vector<8x96xf32>
    %974 = arith.negf %973 : vector<8x96xf32>
    %975 = math.exp %974 : vector<8x96xf32>
    %cst_395 = arith.constant 1.000000e+00 : f32
    %976 = vector.broadcast %cst_395 : f32 to vector<8x96xf32>
    %977 = arith.addf %976, %975 : vector<8x96xf32>
    %978 = arith.divf %976, %977 : vector<8x96xf32>
    %979 = vector.extract_strided_slice %972 {offsets = [0, 96], sizes = [8, 32], strides = [1, 1]} : vector<8x128xf32> to vector<8x32xf32>
    %980 = math.tanh %979 : vector<8x32xf32>
    %981 = vector.extract_strided_slice %978 {offsets = [0, 32], sizes = [8, 32], strides = [1, 1]} : vector<8x96xf32> to vector<8x32xf32>
    %982 = arith.mulf %981, %957 : vector<8x32xf32>
    %983 = vector.extract_strided_slice %978 {offsets = [0, 0], sizes = [8, 32], strides = [1, 1]} : vector<8x96xf32> to vector<8x32xf32>
    %984 = arith.mulf %983, %980 : vector<8x32xf32>
    %985 = arith.addf %982, %984 : vector<8x32xf32>
    %986 = vector.extract_strided_slice %978 {offsets = [0, 64], sizes = [8, 32], strides = [1, 1]} : vector<8x96xf32> to vector<8x32xf32>
    %987 = math.tanh %985 : vector<8x32xf32>
    %988 = arith.mulf %986, %987 : vector<8x32xf32>
    %989 = vector.extract_strided_slice %988 {offsets = [0, 0], sizes = [8, 16], strides = [1, 1]} : vector<8x32xf32> to vector<8x16xf32>
    %c4_396 = arith.constant 4 : index
    %c0_397 = arith.constant 0 : index
    %c0_398 = arith.constant 0 : index
    %990 = vector.load %arg16[%c4_396, %c0_397, %c0_398] : memref<20x8x32xf32, #tpu.memory_space<vmem>>, vector<1x8x16xf32>
    %991 = vector.shape_cast %990 : vector<1x8x16xf32> to vector<8x16xf32>
    %992 = vector.shape_cast %989 : vector<8x16xf32> to vector<1x8x16xf32>
    tpu.vector_store %arg16[%c4_396, %c0_397, %c0_398], %992 {strides = array<i32>} : memref<20x8x32xf32, #tpu.memory_space<vmem>>, vector<1x8x16xf32>,
    %993 = vector.extract_strided_slice %988 {offsets = [0, 16], sizes = [8, 16], strides = [1, 1]} : vector<8x32xf32> to vector<8x16xf32>
    %c15_399 = arith.constant 15 : index
    %c0_400 = arith.constant 0 : index
    %c16_401 = arith.constant 16 : index
    %994 = vector.load %arg16[%c15_399, %c0_400, %c16_401] : memref<20x8x32xf32, #tpu.memory_space<vmem>>, vector<1x8x16xf32>
    %995 = vector.shape_cast %994 : vector<1x8x16xf32> to vector<8x16xf32>
    %996 = vector.shape_cast %993 : vector<8x16xf32> to vector<1x8x16xf32>
    tpu.vector_store %arg16[%c15_399, %c0_400, %c16_401], %996 {strides = array<i32>} : memref<20x8x32xf32, #tpu.memory_space<vmem>>, vector<1x8x16xf32>,
    %c5_402 = arith.constant 5 : index
    %c0_403 = arith.constant 0 : index
    %c0_404 = arith.constant 0 : index
    %997 = vector.load %arg14[%c5_402, %c0_403, %c0_404] : memref<20x8x128xf32, #tpu.memory_space<vmem>>, vector<1x8x128xf32>
    %998 = vector.shape_cast %997 : vector<1x8x128xf32> to vector<8x128xf32>
    %cst_405 = arith.constant dense<0.000000e+00> : vector<8x128xf32>
    %999 = tpu.matmul %988, %854, %cst_405 {dimension_numbers = #tpu.dot_dimension_numbers<[1], [0], [0], [1], [0, 0, 1, 1], [], []>} : vector<8x32xf32>, vector<32x128xf32>, vector<8x128xf32> -> vector<8x128xf32>
    %1000 = arith.addf %998, %999 : vector<8x128xf32>
    %1001 = vector.extract_strided_slice %1000 {offsets = [0, 0], sizes = [8, 96], strides = [1, 1]} : vector<8x128xf32> to vector<8x96xf32>
    %1002 = arith.negf %1001 : vector<8x96xf32>
    %1003 = math.exp %1002 : vector<8x96xf32>
    %cst_406 = arith.constant 1.000000e+00 : f32
    %1004 = vector.broadcast %cst_406 : f32 to vector<8x96xf32>
    %1005 = arith.addf %1004, %1003 : vector<8x96xf32>
    %1006 = arith.divf %1004, %1005 : vector<8x96xf32>
    %1007 = vector.extract_strided_slice %1000 {offsets = [0, 96], sizes = [8, 32], strides = [1, 1]} : vector<8x128xf32> to vector<8x32xf32>
    %1008 = math.tanh %1007 : vector<8x32xf32>
    %1009 = vector.extract_strided_slice %1006 {offsets = [0, 32], sizes = [8, 32], strides = [1, 1]} : vector<8x96xf32> to vector<8x32xf32>
    %1010 = arith.mulf %1009, %985 : vector<8x32xf32>
    %1011 = vector.extract_strided_slice %1006 {offsets = [0, 0], sizes = [8, 32], strides = [1, 1]} : vector<8x96xf32> to vector<8x32xf32>
    %1012 = arith.mulf %1011, %1008 : vector<8x32xf32>
    %1013 = arith.addf %1010, %1012 : vector<8x32xf32>
    %1014 = vector.extract_strided_slice %1006 {offsets = [0, 64], sizes = [8, 32], strides = [1, 1]} : vector<8x96xf32> to vector<8x32xf32>
    %1015 = math.tanh %1013 : vector<8x32xf32>
    %1016 = arith.mulf %1014, %1015 : vector<8x32xf32>
    %1017 = vector.extract_strided_slice %1016 {offsets = [0, 0], sizes = [8, 16], strides = [1, 1]} : vector<8x32xf32> to vector<8x16xf32>
    %c5_407 = arith.constant 5 : index
    %c0_408 = arith.constant 0 : index
    %c0_409 = arith.constant 0 : index
    %1018 = vector.load %arg16[%c5_407, %c0_408, %c0_409] : memref<20x8x32xf32, #tpu.memory_space<vmem>>, vector<1x8x16xf32>
    %1019 = vector.shape_cast %1018 : vector<1x8x16xf32> to vector<8x16xf32>
    %1020 = vector.shape_cast %1017 : vector<8x16xf32> to vector<1x8x16xf32>
    tpu.vector_store %arg16[%c5_407, %c0_408, %c0_409], %1020 {strides = array<i32>} : memref<20x8x32xf32, #tpu.memory_space<vmem>>, vector<1x8x16xf32>,
    %1021 = vector.extract_strided_slice %1016 {offsets = [0, 16], sizes = [8, 16], strides = [1, 1]} : vector<8x32xf32> to vector<8x16xf32>
    %c14_410 = arith.constant 14 : index
    %c0_411 = arith.constant 0 : index
    %c16_412 = arith.constant 16 : index
    %1022 = vector.load %arg16[%c14_410, %c0_411, %c16_412] : memref<20x8x32xf32, #tpu.memory_space<vmem>>, vector<1x8x16xf32>
    %1023 = vector.shape_cast %1022 : vector<1x8x16xf32> to vector<8x16xf32>
    %1024 = vector.shape_cast %1021 : vector<8x16xf32> to vector<1x8x16xf32>
    tpu.vector_store %arg16[%c14_410, %c0_411, %c16_412], %1024 {strides = array<i32>} : memref<20x8x32xf32, #tpu.memory_space<vmem>>, vector<1x8x16xf32>,
    %c6_413 = arith.constant 6 : index
    %c0_414 = arith.constant 0 : index
    %c0_415 = arith.constant 0 : index
    %1025 = vector.load %arg14[%c6_413, %c0_414, %c0_415] : memref<20x8x128xf32, #tpu.memory_space<vmem>>, vector<1x8x128xf32>
    %1026 = vector.shape_cast %1025 : vector<1x8x128xf32> to vector<8x128xf32>
    %cst_416 = arith.constant dense<0.000000e+00> : vector<8x128xf32>
    %1027 = tpu.matmul %1016, %854, %cst_416 {dimension_numbers = #tpu.dot_dimension_numbers<[1], [0], [0], [1], [0, 0, 1, 1], [], []>} : vector<8x32xf32>, vector<32x128xf32>, vector<8x128xf32> -> vector<8x128xf32>
    %1028 = arith.addf %1026, %1027 : vector<8x128xf32>
    %1029 = vector.extract_strided_slice %1028 {offsets = [0, 0], sizes = [8, 96], strides = [1, 1]} : vector<8x128xf32> to vector<8x96xf32>
    %1030 = arith.negf %1029 : vector<8x96xf32>
    %1031 = math.exp %1030 : vector<8x96xf32>
    %cst_417 = arith.constant 1.000000e+00 : f32
    %1032 = vector.broadcast %cst_417 : f32 to vector<8x96xf32>
    %1033 = arith.addf %1032, %1031 : vector<8x96xf32>
    %1034 = arith.divf %1032, %1033 : vector<8x96xf32>
    %1035 = vector.extract_strided_slice %1028 {offsets = [0, 96], sizes = [8, 32], strides = [1, 1]} : vector<8x128xf32> to vector<8x32xf32>
    %1036 = math.tanh %1035 : vector<8x32xf32>
    %1037 = vector.extract_strided_slice %1034 {offsets = [0, 32], sizes = [8, 32], strides = [1, 1]} : vector<8x96xf32> to vector<8x32xf32>
    %1038 = arith.mulf %1037, %1013 : vector<8x32xf32>
    %1039 = vector.extract_strided_slice %1034 {offsets = [0, 0], sizes = [8, 32], strides = [1, 1]} : vector<8x96xf32> to vector<8x32xf32>
    %1040 = arith.mulf %1039, %1036 : vector<8x32xf32>
    %1041 = arith.addf %1038, %1040 : vector<8x32xf32>
    %1042 = vector.extract_strided_slice %1034 {offsets = [0, 64], sizes = [8, 32], strides = [1, 1]} : vector<8x96xf32> to vector<8x32xf32>
    %1043 = math.tanh %1041 : vector<8x32xf32>
    %1044 = arith.mulf %1042, %1043 : vector<8x32xf32>
    %1045 = vector.extract_strided_slice %1044 {offsets = [0, 0], sizes = [8, 16], strides = [1, 1]} : vector<8x32xf32> to vector<8x16xf32>
    %c6_418 = arith.constant 6 : index
    %c0_419 = arith.constant 0 : index
    %c0_420 = arith.constant 0 : index
    %1046 = vector.load %arg16[%c6_418, %c0_419, %c0_420] : memref<20x8x32xf32, #tpu.memory_space<vmem>>, vector<1x8x16xf32>
    %1047 = vector.shape_cast %1046 : vector<1x8x16xf32> to vector<8x16xf32>
    %1048 = vector.shape_cast %1045 : vector<8x16xf32> to vector<1x8x16xf32>
    tpu.vector_store %arg16[%c6_418, %c0_419, %c0_420], %1048 {strides = array<i32>} : memref<20x8x32xf32, #tpu.memory_space<vmem>>, vector<1x8x16xf32>,
    %1049 = vector.extract_strided_slice %1044 {offsets = [0, 16], sizes = [8, 16], strides = [1, 1]} : vector<8x32xf32> to vector<8x16xf32>
    %c13_421 = arith.constant 13 : index
    %c0_422 = arith.constant 0 : index
    %c16_423 = arith.constant 16 : index
    %1050 = vector.load %arg16[%c13_421, %c0_422, %c16_423] : memref<20x8x32xf32, #tpu.memory_space<vmem>>, vector<1x8x16xf32>
    %1051 = vector.shape_cast %1050 : vector<1x8x16xf32> to vector<8x16xf32>
    %1052 = vector.shape_cast %1049 : vector<8x16xf32> to vector<1x8x16xf32>
    tpu.vector_store %arg16[%c13_421, %c0_422, %c16_423], %1052 {strides = array<i32>} : memref<20x8x32xf32, #tpu.memory_space<vmem>>, vector<1x8x16xf32>,
    %c7_424 = arith.constant 7 : index
    %c0_425 = arith.constant 0 : index
    %c0_426 = arith.constant 0 : index
    %1053 = vector.load %arg14[%c7_424, %c0_425, %c0_426] : memref<20x8x128xf32, #tpu.memory_space<vmem>>, vector<1x8x128xf32>
    %1054 = vector.shape_cast %1053 : vector<1x8x128xf32> to vector<8x128xf32>
    %cst_427 = arith.constant dense<0.000000e+00> : vector<8x128xf32>
    %1055 = tpu.matmul %1044, %854, %cst_427 {dimension_numbers = #tpu.dot_dimension_numbers<[1], [0], [0], [1], [0, 0, 1, 1], [], []>} : vector<8x32xf32>, vector<32x128xf32>, vector<8x128xf32> -> vector<8x128xf32>
    %1056 = arith.addf %1054, %1055 : vector<8x128xf32>
    %1057 = vector.extract_strided_slice %1056 {offsets = [0, 0], sizes = [8, 96], strides = [1, 1]} : vector<8x128xf32> to vector<8x96xf32>
    %1058 = arith.negf %1057 : vector<8x96xf32>
    %1059 = math.exp %1058 : vector<8x96xf32>
    %cst_428 = arith.constant 1.000000e+00 : f32
    %1060 = vector.broadcast %cst_428 : f32 to vector<8x96xf32>
    %1061 = arith.addf %1060, %1059 : vector<8x96xf32>
    %1062 = arith.divf %1060, %1061 : vector<8x96xf32>
    %1063 = vector.extract_strided_slice %1056 {offsets = [0, 96], sizes = [8, 32], strides = [1, 1]} : vector<8x128xf32> to vector<8x32xf32>
    %1064 = math.tanh %1063 : vector<8x32xf32>
    %1065 = vector.extract_strided_slice %1062 {offsets = [0, 32], sizes = [8, 32], strides = [1, 1]} : vector<8x96xf32> to vector<8x32xf32>
    %1066 = arith.mulf %1065, %1041 : vector<8x32xf32>
    %1067 = vector.extract_strided_slice %1062 {offsets = [0, 0], sizes = [8, 32], strides = [1, 1]} : vector<8x96xf32> to vector<8x32xf32>
    %1068 = arith.mulf %1067, %1064 : vector<8x32xf32>
    %1069 = arith.addf %1066, %1068 : vector<8x32xf32>
    %1070 = vector.extract_strided_slice %1062 {offsets = [0, 64], sizes = [8, 32], strides = [1, 1]} : vector<8x96xf32> to vector<8x32xf32>
    %1071 = math.tanh %1069 : vector<8x32xf32>
    %1072 = arith.mulf %1070, %1071 : vector<8x32xf32>
    %1073 = vector.extract_strided_slice %1072 {offsets = [0, 0], sizes = [8, 16], strides = [1, 1]} : vector<8x32xf32> to vector<8x16xf32>
    %c7_429 = arith.constant 7 : index
    %c0_430 = arith.constant 0 : index
    %c0_431 = arith.constant 0 : index
    %1074 = vector.load %arg16[%c7_429, %c0_430, %c0_431] : memref<20x8x32xf32, #tpu.memory_space<vmem>>, vector<1x8x16xf32>
    %1075 = vector.shape_cast %1074 : vector<1x8x16xf32> to vector<8x16xf32>
    %1076 = vector.shape_cast %1073 : vector<8x16xf32> to vector<1x8x16xf32>
    tpu.vector_store %arg16[%c7_429, %c0_430, %c0_431], %1076 {strides = array<i32>} : memref<20x8x32xf32, #tpu.memory_space<vmem>>, vector<1x8x16xf32>,
    %1077 = vector.extract_strided_slice %1072 {offsets = [0, 16], sizes = [8, 16], strides = [1, 1]} : vector<8x32xf32> to vector<8x16xf32>
    %c12_432 = arith.constant 12 : index
    %c0_433 = arith.constant 0 : index
    %c16_434 = arith.constant 16 : index
    %1078 = vector.load %arg16[%c12_432, %c0_433, %c16_434] : memref<20x8x32xf32, #tpu.memory_space<vmem>>, vector<1x8x16xf32>
    %1079 = vector.shape_cast %1078 : vector<1x8x16xf32> to vector<8x16xf32>
    %1080 = vector.shape_cast %1077 : vector<8x16xf32> to vector<1x8x16xf32>
    tpu.vector_store %arg16[%c12_432, %c0_433, %c16_434], %1080 {strides = array<i32>} : memref<20x8x32xf32, #tpu.memory_space<vmem>>, vector<1x8x16xf32>,
    %c8_435 = arith.constant 8 : index
    %c0_436 = arith.constant 0 : index
    %c0_437 = arith.constant 0 : index
    %1081 = vector.load %arg14[%c8_435, %c0_436, %c0_437] : memref<20x8x128xf32, #tpu.memory_space<vmem>>, vector<1x8x128xf32>
    %1082 = vector.shape_cast %1081 : vector<1x8x128xf32> to vector<8x128xf32>
    %cst_438 = arith.constant dense<0.000000e+00> : vector<8x128xf32>
    %1083 = tpu.matmul %1072, %854, %cst_438 {dimension_numbers = #tpu.dot_dimension_numbers<[1], [0], [0], [1], [0, 0, 1, 1], [], []>} : vector<8x32xf32>, vector<32x128xf32>, vector<8x128xf32> -> vector<8x128xf32>
    %1084 = arith.addf %1082, %1083 : vector<8x128xf32>
    %1085 = vector.extract_strided_slice %1084 {offsets = [0, 0], sizes = [8, 96], strides = [1, 1]} : vector<8x128xf32> to vector<8x96xf32>
    %1086 = arith.negf %1085 : vector<8x96xf32>
    %1087 = math.exp %1086 : vector<8x96xf32>
    %cst_439 = arith.constant 1.000000e+00 : f32
    %1088 = vector.broadcast %cst_439 : f32 to vector<8x96xf32>
    %1089 = arith.addf %1088, %1087 : vector<8x96xf32>
    %1090 = arith.divf %1088, %1089 : vector<8x96xf32>
    %1091 = vector.extract_strided_slice %1084 {offsets = [0, 96], sizes = [8, 32], strides = [1, 1]} : vector<8x128xf32> to vector<8x32xf32>
    %1092 = math.tanh %1091 : vector<8x32xf32>
    %1093 = vector.extract_strided_slice %1090 {offsets = [0, 32], sizes = [8, 32], strides = [1, 1]} : vector<8x96xf32> to vector<8x32xf32>
    %1094 = arith.mulf %1093, %1069 : vector<8x32xf32>
    %1095 = vector.extract_strided_slice %1090 {offsets = [0, 0], sizes = [8, 32], strides = [1, 1]} : vector<8x96xf32> to vector<8x32xf32>
    %1096 = arith.mulf %1095, %1092 : vector<8x32xf32>
    %1097 = arith.addf %1094, %1096 : vector<8x32xf32>
    %1098 = vector.extract_strided_slice %1090 {offsets = [0, 64], sizes = [8, 32], strides = [1, 1]} : vector<8x96xf32> to vector<8x32xf32>
    %1099 = math.tanh %1097 : vector<8x32xf32>
    %1100 = arith.mulf %1098, %1099 : vector<8x32xf32>
    %1101 = vector.extract_strided_slice %1100 {offsets = [0, 0], sizes = [8, 16], strides = [1, 1]} : vector<8x32xf32> to vector<8x16xf32>
    %c8_440 = arith.constant 8 : index
    %c0_441 = arith.constant 0 : index
    %c0_442 = arith.constant 0 : index
    %1102 = vector.load %arg16[%c8_440, %c0_441, %c0_442] : memref<20x8x32xf32, #tpu.memory_space<vmem>>, vector<1x8x16xf32>
    %1103 = vector.shape_cast %1102 : vector<1x8x16xf32> to vector<8x16xf32>
    %1104 = vector.shape_cast %1101 : vector<8x16xf32> to vector<1x8x16xf32>
    tpu.vector_store %arg16[%c8_440, %c0_441, %c0_442], %1104 {strides = array<i32>} : memref<20x8x32xf32, #tpu.memory_space<vmem>>, vector<1x8x16xf32>,
    %1105 = vector.extract_strided_slice %1100 {offsets = [0, 16], sizes = [8, 16], strides = [1, 1]} : vector<8x32xf32> to vector<8x16xf32>
    %c11_443 = arith.constant 11 : index
    %c0_444 = arith.constant 0 : index
    %c16_445 = arith.constant 16 : index
    %1106 = vector.load %arg16[%c11_443, %c0_444, %c16_445] : memref<20x8x32xf32, #tpu.memory_space<vmem>>, vector<1x8x16xf32>
    %1107 = vector.shape_cast %1106 : vector<1x8x16xf32> to vector<8x16xf32>
    %1108 = vector.shape_cast %1105 : vector<8x16xf32> to vector<1x8x16xf32>
    tpu.vector_store %arg16[%c11_443, %c0_444, %c16_445], %1108 {strides = array<i32>} : memref<20x8x32xf32, #tpu.memory_space<vmem>>, vector<1x8x16xf32>,
    %c9_446 = arith.constant 9 : index
    %c0_447 = arith.constant 0 : index
    %c0_448 = arith.constant 0 : index
    %1109 = vector.load %arg14[%c9_446, %c0_447, %c0_448] : memref<20x8x128xf32, #tpu.memory_space<vmem>>, vector<1x8x128xf32>
    %1110 = vector.shape_cast %1109 : vector<1x8x128xf32> to vector<8x128xf32>
    %cst_449 = arith.constant dense<0.000000e+00> : vector<8x128xf32>
    %1111 = tpu.matmul %1100, %854, %cst_449 {dimension_numbers = #tpu.dot_dimension_numbers<[1], [0], [0], [1], [0, 0, 1, 1], [], []>} : vector<8x32xf32>, vector<32x128xf32>, vector<8x128xf32> -> vector<8x128xf32>
    %1112 = arith.addf %1110, %1111 : vector<8x128xf32>
    %1113 = vector.extract_strided_slice %1112 {offsets = [0, 0], sizes = [8, 96], strides = [1, 1]} : vector<8x128xf32> to vector<8x96xf32>
    %1114 = arith.negf %1113 : vector<8x96xf32>
    %1115 = math.exp %1114 : vector<8x96xf32>
    %cst_450 = arith.constant 1.000000e+00 : f32
    %1116 = vector.broadcast %cst_450 : f32 to vector<8x96xf32>
    %1117 = arith.addf %1116, %1115 : vector<8x96xf32>
    %1118 = arith.divf %1116, %1117 : vector<8x96xf32>
    %1119 = vector.extract_strided_slice %1112 {offsets = [0, 96], sizes = [8, 32], strides = [1, 1]} : vector<8x128xf32> to vector<8x32xf32>
    %1120 = math.tanh %1119 : vector<8x32xf32>
    %1121 = vector.extract_strided_slice %1118 {offsets = [0, 32], sizes = [8, 32], strides = [1, 1]} : vector<8x96xf32> to vector<8x32xf32>
    %1122 = arith.mulf %1121, %1097 : vector<8x32xf32>
    %1123 = vector.extract_strided_slice %1118 {offsets = [0, 0], sizes = [8, 32], strides = [1, 1]} : vector<8x96xf32> to vector<8x32xf32>
    %1124 = arith.mulf %1123, %1120 : vector<8x32xf32>
    %1125 = arith.addf %1122, %1124 : vector<8x32xf32>
    %1126 = vector.extract_strided_slice %1118 {offsets = [0, 64], sizes = [8, 32], strides = [1, 1]} : vector<8x96xf32> to vector<8x32xf32>
    %1127 = math.tanh %1125 : vector<8x32xf32>
    %1128 = arith.mulf %1126, %1127 : vector<8x32xf32>
    %1129 = vector.extract_strided_slice %1128 {offsets = [0, 0], sizes = [8, 16], strides = [1, 1]} : vector<8x32xf32> to vector<8x16xf32>
    %c9_451 = arith.constant 9 : index
    %c0_452 = arith.constant 0 : index
    %c0_453 = arith.constant 0 : index
    %1130 = vector.load %arg16[%c9_451, %c0_452, %c0_453] : memref<20x8x32xf32, #tpu.memory_space<vmem>>, vector<1x8x16xf32>
    %1131 = vector.shape_cast %1130 : vector<1x8x16xf32> to vector<8x16xf32>
    %1132 = vector.shape_cast %1129 : vector<8x16xf32> to vector<1x8x16xf32>
    tpu.vector_store %arg16[%c9_451, %c0_452, %c0_453], %1132 {strides = array<i32>} : memref<20x8x32xf32, #tpu.memory_space<vmem>>, vector<1x8x16xf32>,
    %1133 = vector.extract_strided_slice %1128 {offsets = [0, 16], sizes = [8, 16], strides = [1, 1]} : vector<8x32xf32> to vector<8x16xf32>
    %c10_454 = arith.constant 10 : index
    %c0_455 = arith.constant 0 : index
    %c16_456 = arith.constant 16 : index
    %1134 = vector.load %arg16[%c10_454, %c0_455, %c16_456] : memref<20x8x32xf32, #tpu.memory_space<vmem>>, vector<1x8x16xf32>
    %1135 = vector.shape_cast %1134 : vector<1x8x16xf32> to vector<8x16xf32>
    %1136 = vector.shape_cast %1133 : vector<8x16xf32> to vector<1x8x16xf32>
    tpu.vector_store %arg16[%c10_454, %c0_455, %c16_456], %1136 {strides = array<i32>} : memref<20x8x32xf32, #tpu.memory_space<vmem>>, vector<1x8x16xf32>,
    %c10_457 = arith.constant 10 : index
    %c0_458 = arith.constant 0 : index
    %c0_459 = arith.constant 0 : index
    %1137 = vector.load %arg14[%c10_457, %c0_458, %c0_459] : memref<20x8x128xf32, #tpu.memory_space<vmem>>, vector<1x8x128xf32>
    %1138 = vector.shape_cast %1137 : vector<1x8x128xf32> to vector<8x128xf32>
    %cst_460 = arith.constant dense<0.000000e+00> : vector<8x128xf32>
    %1139 = tpu.matmul %1128, %854, %cst_460 {dimension_numbers = #tpu.dot_dimension_numbers<[1], [0], [0], [1], [0, 0, 1, 1], [], []>} : vector<8x32xf32>, vector<32x128xf32>, vector<8x128xf32> -> vector<8x128xf32>
    %1140 = arith.addf %1138, %1139 : vector<8x128xf32>
    %1141 = vector.extract_strided_slice %1140 {offsets = [0, 0], sizes = [8, 96], strides = [1, 1]} : vector<8x128xf32> to vector<8x96xf32>
    %1142 = arith.negf %1141 : vector<8x96xf32>
    %1143 = math.exp %1142 : vector<8x96xf32>
    %cst_461 = arith.constant 1.000000e+00 : f32
    %1144 = vector.broadcast %cst_461 : f32 to vector<8x96xf32>
    %1145 = arith.addf %1144, %1143 : vector<8x96xf32>
    %1146 = arith.divf %1144, %1145 : vector<8x96xf32>
    %1147 = vector.extract_strided_slice %1140 {offsets = [0, 96], sizes = [8, 32], strides = [1, 1]} : vector<8x128xf32> to vector<8x32xf32>
    %1148 = math.tanh %1147 : vector<8x32xf32>
    %1149 = vector.extract_strided_slice %1146 {offsets = [0, 32], sizes = [8, 32], strides = [1, 1]} : vector<8x96xf32> to vector<8x32xf32>
    %1150 = arith.mulf %1149, %1125 : vector<8x32xf32>
    %1151 = vector.extract_strided_slice %1146 {offsets = [0, 0], sizes = [8, 32], strides = [1, 1]} : vector<8x96xf32> to vector<8x32xf32>
    %1152 = arith.mulf %1151, %1148 : vector<8x32xf32>
    %1153 = arith.addf %1150, %1152 : vector<8x32xf32>
    %1154 = vector.extract_strided_slice %1146 {offsets = [0, 64], sizes = [8, 32], strides = [1, 1]} : vector<8x96xf32> to vector<8x32xf32>
    %1155 = math.tanh %1153 : vector<8x32xf32>
    %1156 = arith.mulf %1154, %1155 : vector<8x32xf32>
    %1157 = vector.extract_strided_slice %1156 {offsets = [0, 0], sizes = [8, 16], strides = [1, 1]} : vector<8x32xf32> to vector<8x16xf32>
    %c10_462 = arith.constant 10 : index
    %c0_463 = arith.constant 0 : index
    %c0_464 = arith.constant 0 : index
    %1158 = vector.load %arg16[%c10_462, %c0_463, %c0_464] : memref<20x8x32xf32, #tpu.memory_space<vmem>>, vector<1x8x16xf32>
    %1159 = vector.shape_cast %1158 : vector<1x8x16xf32> to vector<8x16xf32>
    %1160 = vector.shape_cast %1157 : vector<8x16xf32> to vector<1x8x16xf32>
    tpu.vector_store %arg16[%c10_462, %c0_463, %c0_464], %1160 {strides = array<i32>} : memref<20x8x32xf32, #tpu.memory_space<vmem>>, vector<1x8x16xf32>,
    %1161 = vector.extract_strided_slice %1156 {offsets = [0, 16], sizes = [8, 16], strides = [1, 1]} : vector<8x32xf32> to vector<8x16xf32>
    %c9_465 = arith.constant 9 : index
    %c0_466 = arith.constant 0 : index
    %c16_467 = arith.constant 16 : index
    %1162 = vector.load %arg16[%c9_465, %c0_466, %c16_467] : memref<20x8x32xf32, #tpu.memory_space<vmem>>, vector<1x8x16xf32>
    %1163 = vector.shape_cast %1162 : vector<1x8x16xf32> to vector<8x16xf32>
    %1164 = vector.shape_cast %1161 : vector<8x16xf32> to vector<1x8x16xf32>
    tpu.vector_store %arg16[%c9_465, %c0_466, %c16_467], %1164 {strides = array<i32>} : memref<20x8x32xf32, #tpu.memory_space<vmem>>, vector<1x8x16xf32>,
    %c11_468 = arith.constant 11 : index
    %c0_469 = arith.constant 0 : index
    %c0_470 = arith.constant 0 : index
    %1165 = vector.load %arg14[%c11_468, %c0_469, %c0_470] : memref<20x8x128xf32, #tpu.memory_space<vmem>>, vector<1x8x128xf32>
    %1166 = vector.shape_cast %1165 : vector<1x8x128xf32> to vector<8x128xf32>
    %cst_471 = arith.constant dense<0.000000e+00> : vector<8x128xf32>
    %1167 = tpu.matmul %1156, %854, %cst_471 {dimension_numbers = #tpu.dot_dimension_numbers<[1], [0], [0], [1], [0, 0, 1, 1], [], []>} : vector<8x32xf32>, vector<32x128xf32>, vector<8x128xf32> -> vector<8x128xf32>
    %1168 = arith.addf %1166, %1167 : vector<8x128xf32>
    %1169 = vector.extract_strided_slice %1168 {offsets = [0, 0], sizes = [8, 96], strides = [1, 1]} : vector<8x128xf32> to vector<8x96xf32>
    %1170 = arith.negf %1169 : vector<8x96xf32>
    %1171 = math.exp %1170 : vector<8x96xf32>
    %cst_472 = arith.constant 1.000000e+00 : f32
    %1172 = vector.broadcast %cst_472 : f32 to vector<8x96xf32>
    %1173 = arith.addf %1172, %1171 : vector<8x96xf32>
    %1174 = arith.divf %1172, %1173 : vector<8x96xf32>
    %1175 = vector.extract_strided_slice %1168 {offsets = [0, 96], sizes = [8, 32], strides = [1, 1]} : vector<8x128xf32> to vector<8x32xf32>
    %1176 = math.tanh %1175 : vector<8x32xf32>
    %1177 = vector.extract_strided_slice %1174 {offsets = [0, 32], sizes = [8, 32], strides = [1, 1]} : vector<8x96xf32> to vector<8x32xf32>
    %1178 = arith.mulf %1177, %1153 : vector<8x32xf32>
    %1179 = vector.extract_strided_slice %1174 {offsets = [0, 0], sizes = [8, 32], strides = [1, 1]} : vector<8x96xf32> to vector<8x32xf32>
    %1180 = arith.mulf %1179, %1176 : vector<8x32xf32>
    %1181 = arith.addf %1178, %1180 : vector<8x32xf32>
    %1182 = vector.extract_strided_slice %1174 {offsets = [0, 64], sizes = [8, 32], strides = [1, 1]} : vector<8x96xf32> to vector<8x32xf32>
    %1183 = math.tanh %1181 : vector<8x32xf32>
    %1184 = arith.mulf %1182, %1183 : vector<8x32xf32>
    %1185 = vector.extract_strided_slice %1184 {offsets = [0, 0], sizes = [8, 16], strides = [1, 1]} : vector<8x32xf32> to vector<8x16xf32>
    %c11_473 = arith.constant 11 : index
    %c0_474 = arith.constant 0 : index
    %c0_475 = arith.constant 0 : index
    %1186 = vector.load %arg16[%c11_473, %c0_474, %c0_475] : memref<20x8x32xf32, #tpu.memory_space<vmem>>, vector<1x8x16xf32>
    %1187 = vector.shape_cast %1186 : vector<1x8x16xf32> to vector<8x16xf32>
    %1188 = vector.shape_cast %1185 : vector<8x16xf32> to vector<1x8x16xf32>
    tpu.vector_store %arg16[%c11_473, %c0_474, %c0_475], %1188 {strides = array<i32>} : memref<20x8x32xf32, #tpu.memory_space<vmem>>, vector<1x8x16xf32>,
    %1189 = vector.extract_strided_slice %1184 {offsets = [0, 16], sizes = [8, 16], strides = [1, 1]} : vector<8x32xf32> to vector<8x16xf32>
    %c8_476 = arith.constant 8 : index
    %c0_477 = arith.constant 0 : index
    %c16_478 = arith.constant 16 : index
    %1190 = vector.load %arg16[%c8_476, %c0_477, %c16_478] : memref<20x8x32xf32, #tpu.memory_space<vmem>>, vector<1x8x16xf32>
    %1191 = vector.shape_cast %1190 : vector<1x8x16xf32> to vector<8x16xf32>
    %1192 = vector.shape_cast %1189 : vector<8x16xf32> to vector<1x8x16xf32>
    tpu.vector_store %arg16[%c8_476, %c0_477, %c16_478], %1192 {strides = array<i32>} : memref<20x8x32xf32, #tpu.memory_space<vmem>>, vector<1x8x16xf32>,
    %c12_479 = arith.constant 12 : index
    %c0_480 = arith.constant 0 : index
    %c0_481 = arith.constant 0 : index
    %1193 = vector.load %arg14[%c12_479, %c0_480, %c0_481] : memref<20x8x128xf32, #tpu.memory_space<vmem>>, vector<1x8x128xf32>
    %1194 = vector.shape_cast %1193 : vector<1x8x128xf32> to vector<8x128xf32>
    %cst_482 = arith.constant dense<0.000000e+00> : vector<8x128xf32>
    %1195 = tpu.matmul %1184, %854, %cst_482 {dimension_numbers = #tpu.dot_dimension_numbers<[1], [0], [0], [1], [0, 0, 1, 1], [], []>} : vector<8x32xf32>, vector<32x128xf32>, vector<8x128xf32> -> vector<8x128xf32>
    %1196 = arith.addf %1194, %1195 : vector<8x128xf32>
    %1197 = vector.extract_strided_slice %1196 {offsets = [0, 0], sizes = [8, 96], strides = [1, 1]} : vector<8x128xf32> to vector<8x96xf32>
    %1198 = arith.negf %1197 : vector<8x96xf32>
    %1199 = math.exp %1198 : vector<8x96xf32>
    %cst_483 = arith.constant 1.000000e+00 : f32
    %1200 = vector.broadcast %cst_483 : f32 to vector<8x96xf32>
    %1201 = arith.addf %1200, %1199 : vector<8x96xf32>
    %1202 = arith.divf %1200, %1201 : vector<8x96xf32>
    %1203 = vector.extract_strided_slice %1196 {offsets = [0, 96], sizes = [8, 32], strides = [1, 1]} : vector<8x128xf32> to vector<8x32xf32>
    %1204 = math.tanh %1203 : vector<8x32xf32>
    %1205 = vector.extract_strided_slice %1202 {offsets = [0, 32], sizes = [8, 32], strides = [1, 1]} : vector<8x96xf32> to vector<8x32xf32>
    %1206 = arith.mulf %1205, %1181 : vector<8x32xf32>
    %1207 = vector.extract_strided_slice %1202 {offsets = [0, 0], sizes = [8, 32], strides = [1, 1]} : vector<8x96xf32> to vector<8x32xf32>
    %1208 = arith.mulf %1207, %1204 : vector<8x32xf32>
    %1209 = arith.addf %1206, %1208 : vector<8x32xf32>
    %1210 = vector.extract_strided_slice %1202 {offsets = [0, 64], sizes = [8, 32], strides = [1, 1]} : vector<8x96xf32> to vector<8x32xf32>
    %1211 = math.tanh %1209 : vector<8x32xf32>
    %1212 = arith.mulf %1210, %1211 : vector<8x32xf32>
    %1213 = vector.extract_strided_slice %1212 {offsets = [0, 0], sizes = [8, 16], strides = [1, 1]} : vector<8x32xf32> to vector<8x16xf32>
    %c12_484 = arith.constant 12 : index
    %c0_485 = arith.constant 0 : index
    %c0_486 = arith.constant 0 : index
    %1214 = vector.load %arg16[%c12_484, %c0_485, %c0_486] : memref<20x8x32xf32, #tpu.memory_space<vmem>>, vector<1x8x16xf32>
    %1215 = vector.shape_cast %1214 : vector<1x8x16xf32> to vector<8x16xf32>
    %1216 = vector.shape_cast %1213 : vector<8x16xf32> to vector<1x8x16xf32>
    tpu.vector_store %arg16[%c12_484, %c0_485, %c0_486], %1216 {strides = array<i32>} : memref<20x8x32xf32, #tpu.memory_space<vmem>>, vector<1x8x16xf32>,
    %1217 = vector.extract_strided_slice %1212 {offsets = [0, 16], sizes = [8, 16], strides = [1, 1]} : vector<8x32xf32> to vector<8x16xf32>
    %c7_487 = arith.constant 7 : index
    %c0_488 = arith.constant 0 : index
    %c16_489 = arith.constant 16 : index
    %1218 = vector.load %arg16[%c7_487, %c0_488, %c16_489] : memref<20x8x32xf32, #tpu.memory_space<vmem>>, vector<1x8x16xf32>
    %1219 = vector.shape_cast %1218 : vector<1x8x16xf32> to vector<8x16xf32>
    %1220 = vector.shape_cast %1217 : vector<8x16xf32> to vector<1x8x16xf32>
    tpu.vector_store %arg16[%c7_487, %c0_488, %c16_489], %1220 {strides = array<i32>} : memref<20x8x32xf32, #tpu.memory_space<vmem>>, vector<1x8x16xf32>,
    %c13_490 = arith.constant 13 : index
    %c0_491 = arith.constant 0 : index
    %c0_492 = arith.constant 0 : index
    %1221 = vector.load %arg14[%c13_490, %c0_491, %c0_492] : memref<20x8x128xf32, #tpu.memory_space<vmem>>, vector<1x8x128xf32>
    %1222 = vector.shape_cast %1221 : vector<1x8x128xf32> to vector<8x128xf32>
    %cst_493 = arith.constant dense<0.000000e+00> : vector<8x128xf32>
    %1223 = tpu.matmul %1212, %854, %cst_493 {dimension_numbers = #tpu.dot_dimension_numbers<[1], [0], [0], [1], [0, 0, 1, 1], [], []>} : vector<8x32xf32>, vector<32x128xf32>, vector<8x128xf32> -> vector<8x128xf32>
    %1224 = arith.addf %1222, %1223 : vector<8x128xf32>
    %1225 = vector.extract_strided_slice %1224 {offsets = [0, 0], sizes = [8, 96], strides = [1, 1]} : vector<8x128xf32> to vector<8x96xf32>
    %1226 = arith.negf %1225 : vector<8x96xf32>
    %1227 = math.exp %1226 : vector<8x96xf32>
    %cst_494 = arith.constant 1.000000e+00 : f32
    %1228 = vector.broadcast %cst_494 : f32 to vector<8x96xf32>
    %1229 = arith.addf %1228, %1227 : vector<8x96xf32>
    %1230 = arith.divf %1228, %1229 : vector<8x96xf32>
    %1231 = vector.extract_strided_slice %1224 {offsets = [0, 96], sizes = [8, 32], strides = [1, 1]} : vector<8x128xf32> to vector<8x32xf32>
    %1232 = math.tanh %1231 : vector<8x32xf32>
    %1233 = vector.extract_strided_slice %1230 {offsets = [0, 32], sizes = [8, 32], strides = [1, 1]} : vector<8x96xf32> to vector<8x32xf32>
    %1234 = arith.mulf %1233, %1209 : vector<8x32xf32>
    %1235 = vector.extract_strided_slice %1230 {offsets = [0, 0], sizes = [8, 32], strides = [1, 1]} : vector<8x96xf32> to vector<8x32xf32>
    %1236 = arith.mulf %1235, %1232 : vector<8x32xf32>
    %1237 = arith.addf %1234, %1236 : vector<8x32xf32>
    %1238 = vector.extract_strided_slice %1230 {offsets = [0, 64], sizes = [8, 32], strides = [1, 1]} : vector<8x96xf32> to vector<8x32xf32>
    %1239 = math.tanh %1237 : vector<8x32xf32>
    %1240 = arith.mulf %1238, %1239 : vector<8x32xf32>
    %1241 = vector.extract_strided_slice %1240 {offsets = [0, 0], sizes = [8, 16], strides = [1, 1]} : vector<8x32xf32> to vector<8x16xf32>
    %c13_495 = arith.constant 13 : index
    %c0_496 = arith.constant 0 : index
    %c0_497 = arith.constant 0 : index
    %1242 = vector.load %arg16[%c13_495, %c0_496, %c0_497] : memref<20x8x32xf32, #tpu.memory_space<vmem>>, vector<1x8x16xf32>
    %1243 = vector.shape_cast %1242 : vector<1x8x16xf32> to vector<8x16xf32>
    %1244 = vector.shape_cast %1241 : vector<8x16xf32> to vector<1x8x16xf32>
    tpu.vector_store %arg16[%c13_495, %c0_496, %c0_497], %1244 {strides = array<i32>} : memref<20x8x32xf32, #tpu.memory_space<vmem>>, vector<1x8x16xf32>,
    %1245 = vector.extract_strided_slice %1240 {offsets = [0, 16], sizes = [8, 16], strides = [1, 1]} : vector<8x32xf32> to vector<8x16xf32>
    %c6_498 = arith.constant 6 : index
    %c0_499 = arith.constant 0 : index
    %c16_500 = arith.constant 16 : index
    %1246 = vector.load %arg16[%c6_498, %c0_499, %c16_500] : memref<20x8x32xf32, #tpu.memory_space<vmem>>, vector<1x8x16xf32>
    %1247 = vector.shape_cast %1246 : vector<1x8x16xf32> to vector<8x16xf32>
    %1248 = vector.shape_cast %1245 : vector<8x16xf32> to vector<1x8x16xf32>
    tpu.vector_store %arg16[%c6_498, %c0_499, %c16_500], %1248 {strides = array<i32>} : memref<20x8x32xf32, #tpu.memory_space<vmem>>, vector<1x8x16xf32>,
    %c14_501 = arith.constant 14 : index
    %c0_502 = arith.constant 0 : index
    %c0_503 = arith.constant 0 : index
    %1249 = vector.load %arg14[%c14_501, %c0_502, %c0_503] : memref<20x8x128xf32, #tpu.memory_space<vmem>>, vector<1x8x128xf32>
    %1250 = vector.shape_cast %1249 : vector<1x8x128xf32> to vector<8x128xf32>
    %cst_504 = arith.constant dense<0.000000e+00> : vector<8x128xf32>
    %1251 = tpu.matmul %1240, %854, %cst_504 {dimension_numbers = #tpu.dot_dimension_numbers<[1], [0], [0], [1], [0, 0, 1, 1], [], []>} : vector<8x32xf32>, vector<32x128xf32>, vector<8x128xf32> -> vector<8x128xf32>
    %1252 = arith.addf %1250, %1251 : vector<8x128xf32>
    %1253 = vector.extract_strided_slice %1252 {offsets = [0, 0], sizes = [8, 96], strides = [1, 1]} : vector<8x128xf32> to vector<8x96xf32>
    %1254 = arith.negf %1253 : vector<8x96xf32>
    %1255 = math.exp %1254 : vector<8x96xf32>
    %cst_505 = arith.constant 1.000000e+00 : f32
    %1256 = vector.broadcast %cst_505 : f32 to vector<8x96xf32>
    %1257 = arith.addf %1256, %1255 : vector<8x96xf32>
    %1258 = arith.divf %1256, %1257 : vector<8x96xf32>
    %1259 = vector.extract_strided_slice %1252 {offsets = [0, 96], sizes = [8, 32], strides = [1, 1]} : vector<8x128xf32> to vector<8x32xf32>
    %1260 = math.tanh %1259 : vector<8x32xf32>
    %1261 = vector.extract_strided_slice %1258 {offsets = [0, 32], sizes = [8, 32], strides = [1, 1]} : vector<8x96xf32> to vector<8x32xf32>
    %1262 = arith.mulf %1261, %1237 : vector<8x32xf32>
    %1263 = vector.extract_strided_slice %1258 {offsets = [0, 0], sizes = [8, 32], strides = [1, 1]} : vector<8x96xf32> to vector<8x32xf32>
    %1264 = arith.mulf %1263, %1260 : vector<8x32xf32>
    %1265 = arith.addf %1262, %1264 : vector<8x32xf32>
    %1266 = vector.extract_strided_slice %1258 {offsets = [0, 64], sizes = [8, 32], strides = [1, 1]} : vector<8x96xf32> to vector<8x32xf32>
    %1267 = math.tanh %1265 : vector<8x32xf32>
    %1268 = arith.mulf %1266, %1267 : vector<8x32xf32>
    %1269 = vector.extract_strided_slice %1268 {offsets = [0, 0], sizes = [8, 16], strides = [1, 1]} : vector<8x32xf32> to vector<8x16xf32>
    %c14_506 = arith.constant 14 : index
    %c0_507 = arith.constant 0 : index
    %c0_508 = arith.constant 0 : index
    %1270 = vector.load %arg16[%c14_506, %c0_507, %c0_508] : memref<20x8x32xf32, #tpu.memory_space<vmem>>, vector<1x8x16xf32>
    %1271 = vector.shape_cast %1270 : vector<1x8x16xf32> to vector<8x16xf32>
    %1272 = vector.shape_cast %1269 : vector<8x16xf32> to vector<1x8x16xf32>
    tpu.vector_store %arg16[%c14_506, %c0_507, %c0_508], %1272 {strides = array<i32>} : memref<20x8x32xf32, #tpu.memory_space<vmem>>, vector<1x8x16xf32>,
    %1273 = vector.extract_strided_slice %1268 {offsets = [0, 16], sizes = [8, 16], strides = [1, 1]} : vector<8x32xf32> to vector<8x16xf32>
    %c5_509 = arith.constant 5 : index
    %c0_510 = arith.constant 0 : index
    %c16_511 = arith.constant 16 : index
    %1274 = vector.load %arg16[%c5_509, %c0_510, %c16_511] : memref<20x8x32xf32, #tpu.memory_space<vmem>>, vector<1x8x16xf32>
    %1275 = vector.shape_cast %1274 : vector<1x8x16xf32> to vector<8x16xf32>
    %1276 = vector.shape_cast %1273 : vector<8x16xf32> to vector<1x8x16xf32>
    tpu.vector_store %arg16[%c5_509, %c0_510, %c16_511], %1276 {strides = array<i32>} : memref<20x8x32xf32, #tpu.memory_space<vmem>>, vector<1x8x16xf32>,
    %c15_512 = arith.constant 15 : index
    %c0_513 = arith.constant 0 : index
    %c0_514 = arith.constant 0 : index
    %1277 = vector.load %arg14[%c15_512, %c0_513, %c0_514] : memref<20x8x128xf32, #tpu.memory_space<vmem>>, vector<1x8x128xf32>
    %1278 = vector.shape_cast %1277 : vector<1x8x128xf32> to vector<8x128xf32>
    %cst_515 = arith.constant dense<0.000000e+00> : vector<8x128xf32>
    %1279 = tpu.matmul %1268, %854, %cst_515 {dimension_numbers = #tpu.dot_dimension_numbers<[1], [0], [0], [1], [0, 0, 1, 1], [], []>} : vector<8x32xf32>, vector<32x128xf32>, vector<8x128xf32> -> vector<8x128xf32>
    %1280 = arith.addf %1278, %1279 : vector<8x128xf32>
    %1281 = vector.extract_strided_slice %1280 {offsets = [0, 0], sizes = [8, 96], strides = [1, 1]} : vector<8x128xf32> to vector<8x96xf32>
    %1282 = arith.negf %1281 : vector<8x96xf32>
    %1283 = math.exp %1282 : vector<8x96xf32>
    %cst_516 = arith.constant 1.000000e+00 : f32
    %1284 = vector.broadcast %cst_516 : f32 to vector<8x96xf32>
    %1285 = arith.addf %1284, %1283 : vector<8x96xf32>
    %1286 = arith.divf %1284, %1285 : vector<8x96xf32>
    %1287 = vector.extract_strided_slice %1280 {offsets = [0, 96], sizes = [8, 32], strides = [1, 1]} : vector<8x128xf32> to vector<8x32xf32>
    %1288 = math.tanh %1287 : vector<8x32xf32>
    %1289 = vector.extract_strided_slice %1286 {offsets = [0, 32], sizes = [8, 32], strides = [1, 1]} : vector<8x96xf32> to vector<8x32xf32>
    %1290 = arith.mulf %1289, %1265 : vector<8x32xf32>
    %1291 = vector.extract_strided_slice %1286 {offsets = [0, 0], sizes = [8, 32], strides = [1, 1]} : vector<8x96xf32> to vector<8x32xf32>
    %1292 = arith.mulf %1291, %1288 : vector<8x32xf32>
    %1293 = arith.addf %1290, %1292 : vector<8x32xf32>
    %1294 = vector.extract_strided_slice %1286 {offsets = [0, 64], sizes = [8, 32], strides = [1, 1]} : vector<8x96xf32> to vector<8x32xf32>
    %1295 = math.tanh %1293 : vector<8x32xf32>
    %1296 = arith.mulf %1294, %1295 : vector<8x32xf32>
    %1297 = vector.extract_strided_slice %1296 {offsets = [0, 0], sizes = [8, 16], strides = [1, 1]} : vector<8x32xf32> to vector<8x16xf32>
    %c15_517 = arith.constant 15 : index
    %c0_518 = arith.constant 0 : index
    %c0_519 = arith.constant 0 : index
    %1298 = vector.load %arg16[%c15_517, %c0_518, %c0_519] : memref<20x8x32xf32, #tpu.memory_space<vmem>>, vector<1x8x16xf32>
    %1299 = vector.shape_cast %1298 : vector<1x8x16xf32> to vector<8x16xf32>
    %1300 = vector.shape_cast %1297 : vector<8x16xf32> to vector<1x8x16xf32>
    tpu.vector_store %arg16[%c15_517, %c0_518, %c0_519], %1300 {strides = array<i32>} : memref<20x8x32xf32, #tpu.memory_space<vmem>>, vector<1x8x16xf32>,
    %1301 = vector.extract_strided_slice %1296 {offsets = [0, 16], sizes = [8, 16], strides = [1, 1]} : vector<8x32xf32> to vector<8x16xf32>
    %c4_520 = arith.constant 4 : index
    %c0_521 = arith.constant 0 : index
    %c16_522 = arith.constant 16 : index
    %1302 = vector.load %arg16[%c4_520, %c0_521, %c16_522] : memref<20x8x32xf32, #tpu.memory_space<vmem>>, vector<1x8x16xf32>
    %1303 = vector.shape_cast %1302 : vector<1x8x16xf32> to vector<8x16xf32>
    %1304 = vector.shape_cast %1301 : vector<8x16xf32> to vector<1x8x16xf32>
    tpu.vector_store %arg16[%c4_520, %c0_521, %c16_522], %1304 {strides = array<i32>} : memref<20x8x32xf32, #tpu.memory_space<vmem>>, vector<1x8x16xf32>,
    %c16_523 = arith.constant 16 : index
    %c0_524 = arith.constant 0 : index
    %c0_525 = arith.constant 0 : index
    %1305 = vector.load %arg14[%c16_523, %c0_524, %c0_525] : memref<20x8x128xf32, #tpu.memory_space<vmem>>, vector<1x8x128xf32>
    %1306 = vector.shape_cast %1305 : vector<1x8x128xf32> to vector<8x128xf32>
    %cst_526 = arith.constant dense<0.000000e+00> : vector<8x128xf32>
    %1307 = tpu.matmul %1296, %854, %cst_526 {dimension_numbers = #tpu.dot_dimension_numbers<[1], [0], [0], [1], [0, 0, 1, 1], [], []>} : vector<8x32xf32>, vector<32x128xf32>, vector<8x128xf32> -> vector<8x128xf32>
    %1308 = arith.addf %1306, %1307 : vector<8x128xf32>
    %1309 = vector.extract_strided_slice %1308 {offsets = [0, 0], sizes = [8, 96], strides = [1, 1]} : vector<8x128xf32> to vector<8x96xf32>
    %1310 = arith.negf %1309 : vector<8x96xf32>
    %1311 = math.exp %1310 : vector<8x96xf32>
    %cst_527 = arith.constant 1.000000e+00 : f32
    %1312 = vector.broadcast %cst_527 : f32 to vector<8x96xf32>
    %1313 = arith.addf %1312, %1311 : vector<8x96xf32>
    %1314 = arith.divf %1312, %1313 : vector<8x96xf32>
    %1315 = vector.extract_strided_slice %1308 {offsets = [0, 96], sizes = [8, 32], strides = [1, 1]} : vector<8x128xf32> to vector<8x32xf32>
    %1316 = math.tanh %1315 : vector<8x32xf32>
    %1317 = vector.extract_strided_slice %1314 {offsets = [0, 32], sizes = [8, 32], strides = [1, 1]} : vector<8x96xf32> to vector<8x32xf32>
    %1318 = arith.mulf %1317, %1293 : vector<8x32xf32>
    %1319 = vector.extract_strided_slice %1314 {offsets = [0, 0], sizes = [8, 32], strides = [1, 1]} : vector<8x96xf32> to vector<8x32xf32>
    %1320 = arith.mulf %1319, %1316 : vector<8x32xf32>
    %1321 = arith.addf %1318, %1320 : vector<8x32xf32>
    %1322 = vector.extract_strided_slice %1314 {offsets = [0, 64], sizes = [8, 32], strides = [1, 1]} : vector<8x96xf32> to vector<8x32xf32>
    %1323 = math.tanh %1321 : vector<8x32xf32>
    %1324 = arith.mulf %1322, %1323 : vector<8x32xf32>
    %1325 = vector.extract_strided_slice %1324 {offsets = [0, 0], sizes = [8, 16], strides = [1, 1]} : vector<8x32xf32> to vector<8x16xf32>
    %c16_528 = arith.constant 16 : index
    %c0_529 = arith.constant 0 : index
    %c0_530 = arith.constant 0 : index
    %1326 = vector.load %arg16[%c16_528, %c0_529, %c0_530] : memref<20x8x32xf32, #tpu.memory_space<vmem>>, vector<1x8x16xf32>
    %1327 = vector.shape_cast %1326 : vector<1x8x16xf32> to vector<8x16xf32>
    %1328 = vector.shape_cast %1325 : vector<8x16xf32> to vector<1x8x16xf32>
    tpu.vector_store %arg16[%c16_528, %c0_529, %c0_530], %1328 {strides = array<i32>} : memref<20x8x32xf32, #tpu.memory_space<vmem>>, vector<1x8x16xf32>,
    %1329 = vector.extract_strided_slice %1324 {offsets = [0, 16], sizes = [8, 16], strides = [1, 1]} : vector<8x32xf32> to vector<8x16xf32>
    %c3_531 = arith.constant 3 : index
    %c0_532 = arith.constant 0 : index
    %c16_533 = arith.constant 16 : index
    %1330 = vector.load %arg16[%c3_531, %c0_532, %c16_533] : memref<20x8x32xf32, #tpu.memory_space<vmem>>, vector<1x8x16xf32>
    %1331 = vector.shape_cast %1330 : vector<1x8x16xf32> to vector<8x16xf32>
    %1332 = vector.shape_cast %1329 : vector<8x16xf32> to vector<1x8x16xf32>
    tpu.vector_store %arg16[%c3_531, %c0_532, %c16_533], %1332 {strides = array<i32>} : memref<20x8x32xf32, #tpu.memory_space<vmem>>, vector<1x8x16xf32>,
    %c17_534 = arith.constant 17 : index
    %c0_535 = arith.constant 0 : index
    %c0_536 = arith.constant 0 : index
    %1333 = vector.load %arg14[%c17_534, %c0_535, %c0_536] : memref<20x8x128xf32, #tpu.memory_space<vmem>>, vector<1x8x128xf32>
    %1334 = vector.shape_cast %1333 : vector<1x8x128xf32> to vector<8x128xf32>
    %cst_537 = arith.constant dense<0.000000e+00> : vector<8x128xf32>
    %1335 = tpu.matmul %1324, %854, %cst_537 {dimension_numbers = #tpu.dot_dimension_numbers<[1], [0], [0], [1], [0, 0, 1, 1], [], []>} : vector<8x32xf32>, vector<32x128xf32>, vector<8x128xf32> -> vector<8x128xf32>
    %1336 = arith.addf %1334, %1335 : vector<8x128xf32>
    %1337 = vector.extract_strided_slice %1336 {offsets = [0, 0], sizes = [8, 96], strides = [1, 1]} : vector<8x128xf32> to vector<8x96xf32>
    %1338 = arith.negf %1337 : vector<8x96xf32>
    %1339 = math.exp %1338 : vector<8x96xf32>
    %cst_538 = arith.constant 1.000000e+00 : f32
    %1340 = vector.broadcast %cst_538 : f32 to vector<8x96xf32>
    %1341 = arith.addf %1340, %1339 : vector<8x96xf32>
    %1342 = arith.divf %1340, %1341 : vector<8x96xf32>
    %1343 = vector.extract_strided_slice %1336 {offsets = [0, 96], sizes = [8, 32], strides = [1, 1]} : vector<8x128xf32> to vector<8x32xf32>
    %1344 = math.tanh %1343 : vector<8x32xf32>
    %1345 = vector.extract_strided_slice %1342 {offsets = [0, 32], sizes = [8, 32], strides = [1, 1]} : vector<8x96xf32> to vector<8x32xf32>
    %1346 = arith.mulf %1345, %1321 : vector<8x32xf32>
    %1347 = vector.extract_strided_slice %1342 {offsets = [0, 0], sizes = [8, 32], strides = [1, 1]} : vector<8x96xf32> to vector<8x32xf32>
    %1348 = arith.mulf %1347, %1344 : vector<8x32xf32>
    %1349 = arith.addf %1346, %1348 : vector<8x32xf32>
    %1350 = vector.extract_strided_slice %1342 {offsets = [0, 64], sizes = [8, 32], strides = [1, 1]} : vector<8x96xf32> to vector<8x32xf32>
    %1351 = math.tanh %1349 : vector<8x32xf32>
    %1352 = arith.mulf %1350, %1351 : vector<8x32xf32>
    %1353 = vector.extract_strided_slice %1352 {offsets = [0, 0], sizes = [8, 16], strides = [1, 1]} : vector<8x32xf32> to vector<8x16xf32>
    %c17_539 = arith.constant 17 : index
    %c0_540 = arith.constant 0 : index
    %c0_541 = arith.constant 0 : index
    %1354 = vector.load %arg16[%c17_539, %c0_540, %c0_541] : memref<20x8x32xf32, #tpu.memory_space<vmem>>, vector<1x8x16xf32>
    %1355 = vector.shape_cast %1354 : vector<1x8x16xf32> to vector<8x16xf32>
    %1356 = vector.shape_cast %1353 : vector<8x16xf32> to vector<1x8x16xf32>
    tpu.vector_store %arg16[%c17_539, %c0_540, %c0_541], %1356 {strides = array<i32>} : memref<20x8x32xf32, #tpu.memory_space<vmem>>, vector<1x8x16xf32>,
    %1357 = vector.extract_strided_slice %1352 {offsets = [0, 16], sizes = [8, 16], strides = [1, 1]} : vector<8x32xf32> to vector<8x16xf32>
    %c2_542 = arith.constant 2 : index
    %c0_543 = arith.constant 0 : index
    %c16_544 = arith.constant 16 : index
    %1358 = vector.load %arg16[%c2_542, %c0_543, %c16_544] : memref<20x8x32xf32, #tpu.memory_space<vmem>>, vector<1x8x16xf32>
    %1359 = vector.shape_cast %1358 : vector<1x8x16xf32> to vector<8x16xf32>
    %1360 = vector.shape_cast %1357 : vector<8x16xf32> to vector<1x8x16xf32>
    tpu.vector_store %arg16[%c2_542, %c0_543, %c16_544], %1360 {strides = array<i32>} : memref<20x8x32xf32, #tpu.memory_space<vmem>>, vector<1x8x16xf32>,
    %c18_545 = arith.constant 18 : index
    %c0_546 = arith.constant 0 : index
    %c0_547 = arith.constant 0 : index
    %1361 = vector.load %arg14[%c18_545, %c0_546, %c0_547] : memref<20x8x128xf32, #tpu.memory_space<vmem>>, vector<1x8x128xf32>
    %1362 = vector.shape_cast %1361 : vector<1x8x128xf32> to vector<8x128xf32>
    %cst_548 = arith.constant dense<0.000000e+00> : vector<8x128xf32>
    %1363 = tpu.matmul %1352, %854, %cst_548 {dimension_numbers = #tpu.dot_dimension_numbers<[1], [0], [0], [1], [0, 0, 1, 1], [], []>} : vector<8x32xf32>, vector<32x128xf32>, vector<8x128xf32> -> vector<8x128xf32>
    %1364 = arith.addf %1362, %1363 : vector<8x128xf32>
    %1365 = vector.extract_strided_slice %1364 {offsets = [0, 0], sizes = [8, 96], strides = [1, 1]} : vector<8x128xf32> to vector<8x96xf32>
    %1366 = arith.negf %1365 : vector<8x96xf32>
    %1367 = math.exp %1366 : vector<8x96xf32>
    %cst_549 = arith.constant 1.000000e+00 : f32
    %1368 = vector.broadcast %cst_549 : f32 to vector<8x96xf32>
    %1369 = arith.addf %1368, %1367 : vector<8x96xf32>
    %1370 = arith.divf %1368, %1369 : vector<8x96xf32>
    %1371 = vector.extract_strided_slice %1364 {offsets = [0, 96], sizes = [8, 32], strides = [1, 1]} : vector<8x128xf32> to vector<8x32xf32>
    %1372 = math.tanh %1371 : vector<8x32xf32>
    %1373 = vector.extract_strided_slice %1370 {offsets = [0, 32], sizes = [8, 32], strides = [1, 1]} : vector<8x96xf32> to vector<8x32xf32>
    %1374 = arith.mulf %1373, %1349 : vector<8x32xf32>
    %1375 = vector.extract_strided_slice %1370 {offsets = [0, 0], sizes = [8, 32], strides = [1, 1]} : vector<8x96xf32> to vector<8x32xf32>
    %1376 = arith.mulf %1375, %1372 : vector<8x32xf32>
    %1377 = arith.addf %1374, %1376 : vector<8x32xf32>
    %1378 = vector.extract_strided_slice %1370 {offsets = [0, 64], sizes = [8, 32], strides = [1, 1]} : vector<8x96xf32> to vector<8x32xf32>
    %1379 = math.tanh %1377 : vector<8x32xf32>
    %1380 = arith.mulf %1378, %1379 : vector<8x32xf32>
    %1381 = vector.extract_strided_slice %1380 {offsets = [0, 0], sizes = [8, 16], strides = [1, 1]} : vector<8x32xf32> to vector<8x16xf32>
    %c18_550 = arith.constant 18 : index
    %c0_551 = arith.constant 0 : index
    %c0_552 = arith.constant 0 : index
    %1382 = vector.load %arg16[%c18_550, %c0_551, %c0_552] : memref<20x8x32xf32, #tpu.memory_space<vmem>>, vector<1x8x16xf32>
    %1383 = vector.shape_cast %1382 : vector<1x8x16xf32> to vector<8x16xf32>
    %1384 = vector.shape_cast %1381 : vector<8x16xf32> to vector<1x8x16xf32>
    tpu.vector_store %arg16[%c18_550, %c0_551, %c0_552], %1384 {strides = array<i32>} : memref<20x8x32xf32, #tpu.memory_space<vmem>>, vector<1x8x16xf32>,
    %1385 = vector.extract_strided_slice %1380 {offsets = [0, 16], sizes = [8, 16], strides = [1, 1]} : vector<8x32xf32> to vector<8x16xf32>
    %c1_553 = arith.constant 1 : index
    %c0_554 = arith.constant 0 : index
    %c16_555 = arith.constant 16 : index
    %1386 = vector.load %arg16[%c1_553, %c0_554, %c16_555] : memref<20x8x32xf32, #tpu.memory_space<vmem>>, vector<1x8x16xf32>
    %1387 = vector.shape_cast %1386 : vector<1x8x16xf32> to vector<8x16xf32>
    %1388 = vector.shape_cast %1385 : vector<8x16xf32> to vector<1x8x16xf32>
    tpu.vector_store %arg16[%c1_553, %c0_554, %c16_555], %1388 {strides = array<i32>} : memref<20x8x32xf32, #tpu.memory_space<vmem>>, vector<1x8x16xf32>,
    %c19_556 = arith.constant 19 : index
    %c0_557 = arith.constant 0 : index
    %c0_558 = arith.constant 0 : index
    %1389 = vector.load %arg14[%c19_556, %c0_557, %c0_558] : memref<20x8x128xf32, #tpu.memory_space<vmem>>, vector<1x8x128xf32>
    %1390 = vector.shape_cast %1389 : vector<1x8x128xf32> to vector<8x128xf32>
    %cst_559 = arith.constant dense<0.000000e+00> : vector<8x128xf32>
    %1391 = tpu.matmul %1380, %854, %cst_559 {dimension_numbers = #tpu.dot_dimension_numbers<[1], [0], [0], [1], [0, 0, 1, 1], [], []>} : vector<8x32xf32>, vector<32x128xf32>, vector<8x128xf32> -> vector<8x128xf32>
    %1392 = arith.addf %1390, %1391 : vector<8x128xf32>
    %1393 = vector.extract_strided_slice %1392 {offsets = [0, 0], sizes = [8, 96], strides = [1, 1]} : vector<8x128xf32> to vector<8x96xf32>
    %1394 = arith.negf %1393 : vector<8x96xf32>
    %1395 = math.exp %1394 : vector<8x96xf32>
    %cst_560 = arith.constant 1.000000e+00 : f32
    %1396 = vector.broadcast %cst_560 : f32 to vector<8x96xf32>
    %1397 = arith.addf %1396, %1395 : vector<8x96xf32>
    %1398 = arith.divf %1396, %1397 : vector<8x96xf32>
    %1399 = vector.extract_strided_slice %1392 {offsets = [0, 96], sizes = [8, 32], strides = [1, 1]} : vector<8x128xf32> to vector<8x32xf32>
    %1400 = math.tanh %1399 : vector<8x32xf32>
    %1401 = vector.extract_strided_slice %1398 {offsets = [0, 32], sizes = [8, 32], strides = [1, 1]} : vector<8x96xf32> to vector<8x32xf32>
    %1402 = arith.mulf %1401, %1377 : vector<8x32xf32>
    %1403 = vector.extract_strided_slice %1398 {offsets = [0, 0], sizes = [8, 32], strides = [1, 1]} : vector<8x96xf32> to vector<8x32xf32>
    %1404 = arith.mulf %1403, %1400 : vector<8x32xf32>
    %1405 = arith.addf %1402, %1404 : vector<8x32xf32>
    %1406 = vector.extract_strided_slice %1398 {offsets = [0, 64], sizes = [8, 32], strides = [1, 1]} : vector<8x96xf32> to vector<8x32xf32>
    %1407 = math.tanh %1405 : vector<8x32xf32>
    %1408 = arith.mulf %1406, %1407 : vector<8x32xf32>
    %1409 = vector.extract_strided_slice %1408 {offsets = [0, 0], sizes = [8, 16], strides = [1, 1]} : vector<8x32xf32> to vector<8x16xf32>
    %c19_561 = arith.constant 19 : index
    %c0_562 = arith.constant 0 : index
    %c0_563 = arith.constant 0 : index
    %1410 = vector.load %arg16[%c19_561, %c0_562, %c0_563] : memref<20x8x32xf32, #tpu.memory_space<vmem>>, vector<1x8x16xf32>
    %1411 = vector.shape_cast %1410 : vector<1x8x16xf32> to vector<8x16xf32>
    %1412 = vector.shape_cast %1409 : vector<8x16xf32> to vector<1x8x16xf32>
    tpu.vector_store %arg16[%c19_561, %c0_562, %c0_563], %1412 {strides = array<i32>} : memref<20x8x32xf32, #tpu.memory_space<vmem>>, vector<1x8x16xf32>,
    %1413 = vector.extract_strided_slice %1408 {offsets = [0, 16], sizes = [8, 16], strides = [1, 1]} : vector<8x32xf32> to vector<8x16xf32>
    %c0_564 = arith.constant 0 : index
    %c0_565 = arith.constant 0 : index
    %c16_566 = arith.constant 16 : index
    %1414 = vector.load %arg16[%c0_564, %c0_565, %c16_566] : memref<20x8x32xf32, #tpu.memory_space<vmem>>, vector<1x8x16xf32>
    %1415 = vector.shape_cast %1414 : vector<1x8x16xf32> to vector<8x16xf32>
    %1416 = vector.shape_cast %1413 : vector<8x16xf32> to vector<1x8x16xf32>
    tpu.vector_store %arg16[%c0_564, %c0_565, %c16_566], %1416 {strides = array<i32>} : memref<20x8x32xf32, #tpu.memory_space<vmem>>, vector<1x8x16xf32>,
    %c0_567 = arith.constant 0 : index
    %c0_568 = arith.constant 0 : index
    %c0_569 = arith.constant 0 : index
    %1417 = vector.load %arg16[%c0_567, %c0_568, %c0_569] : memref<20x8x32xf32, #tpu.memory_space<vmem>>, vector<20x8x32xf32>
    %1418 = vector.shape_cast %1417 : vector<20x8x32xf32> to vector<160x32xf32>
    %1419 = tpu.iota {dimensions = array<i32: 0>} : vector<32x1xi32>
    %c10_i32 = arith.constant 10 : i32
    %1420 = vector.broadcast %c10_i32 : i32 to vector<32x1xi32>
    %1421 = arith.cmpi slt, %1419, %1420 : vector<32x1xi32>
    %c16_i32_570 = arith.constant 16 : i32
    %1422 = vector.broadcast %c16_i32_570 : i32 to vector<32x1xi32>
    %1423 = arith.cmpi sge, %1419, %1422 : vector<32x1xi32>
    %c26_i32 = arith.constant 26 : i32
    %1424 = vector.broadcast %c26_i32 : i32 to vector<32x1xi32>
    %1425 = arith.cmpi slt, %1419, %1424 : vector<32x1xi32>
    %1426 = arith.andi %1423, %1425 : vector<32x1xi1>
    %1427 = arith.ori %1421, %1426 : vector<32x1xi1>
    %1428 = arith.extui %1427 : vector<32x1xi1> to vector<32x1xi32>
    %1429 = arith.sitofp %1428 : vector<32x1xi32> to vector<32x1xf32>
    %c0_571 = arith.constant 0 : index
    %c0_572 = arith.constant 0 : index
    %1430 = vector.load %arg9[%c0_571, %c0_572] : memref<32x1xf32, #tpu.memory_space<vmem>>, vector<32x1xf32>
    %cst_573 = arith.constant dense<0.000000e+00> : vector<160x1xf32>
    %1431 = tpu.matmul %1418, %1430, %cst_573 {dimension_numbers = #tpu.dot_dimension_numbers<[1], [0], [0], [1], [0, 0, 1, 1], [], []>} : vector<160x32xf32>, vector<32x1xf32>, vector<160x1xf32> -> vector<160x1xf32>
    %c0_574 = arith.constant 0 : index
    %c0_575 = arith.constant 0 : index
    %1432 = vector.load %arg10[%c0_574, %c0_575] : memref<1x1xf32, #tpu.memory_space<vmem>>, vector<1x1xf32>
    %1433 = vector.broadcast %1432 : vector<1x1xf32> to vector<160x1xf32>
    %1434 = arith.addf %1431, %1433 : vector<160x1xf32>
    %cst_576 = arith.constant 0.000000e+00 : f32
    %1435 = vector.broadcast %cst_576 : f32 to vector<160x32xf32>
    %1436 = arith.maximumf %1418, %1435 : vector<160x32xf32>
    %cst_577 = arith.constant dense<0.000000e+00> : vector<160x1xf32>
    %1437 = tpu.matmul %1436, %1429, %cst_577 {dimension_numbers = #tpu.dot_dimension_numbers<[1], [0], [0], [1], [0, 0, 1, 1], [], []>} : vector<160x32xf32>, vector<32x1xf32>, vector<160x1xf32> -> vector<160x1xf32>
    %cst_578 = arith.constant -1.000000e+09 : f32
    %1438 = vector.broadcast %cst_578 : f32 to vector<160x1xf32>
    %1439 = arith.select %25, %1438, %1434 : vector<160x1xi1>, vector<160x1xf32>
    %cst_579 = arith.constant 0.000000e+00 : f32
    %1440 = vector.broadcast %cst_579 : f32 to vector<160x1xf32>
    %1441 = arith.maximumf %1439, %1440 : vector<160x1xf32>
    %1442 = arith.mulf %1441, %1437 : vector<160x1xf32>
    %cst_580 = arith.constant 0.000000e+00 : f32
    %cst_581 = arith.constant 1.000000e+00 : f32
    %1443 = vector.broadcast %cst_580 : f32 to vector<160x1xf32>
    %1444 = vector.broadcast %cst_581 : f32 to vector<160x1xf32>
    %1445 = arith.select %25, %1443, %1444 : vector<160x1xi1>, vector<160x1xf32>
    %1446 = arith.mulf %1442, %1445 : vector<160x1xf32>
    %1447 = vector.shape_cast %1446 : vector<160x1xf32> to vector<20x8x1xf32>
    %1448 = vector.extract_strided_slice %1447 {offsets = [0, 0, 0], sizes = [1, 8, 1], strides = [1, 1, 1]} : vector<20x8x1xf32> to vector<1x8x1xf32>
    %1449 = vector.shape_cast %1448 : vector<1x8x1xf32> to vector<8x1xf32>
    %1450 = vector.extract_strided_slice %1447 {offsets = [1, 0, 0], sizes = [1, 8, 1], strides = [1, 1, 1]} : vector<20x8x1xf32> to vector<1x8x1xf32>
    %1451 = vector.shape_cast %1450 : vector<1x8x1xf32> to vector<8x1xf32>
    %1452 = vector.extract_strided_slice %1447 {offsets = [2, 0, 0], sizes = [1, 8, 1], strides = [1, 1, 1]} : vector<20x8x1xf32> to vector<1x8x1xf32>
    %1453 = vector.shape_cast %1452 : vector<1x8x1xf32> to vector<8x1xf32>
    %1454 = vector.extract_strided_slice %1447 {offsets = [3, 0, 0], sizes = [1, 8, 1], strides = [1, 1, 1]} : vector<20x8x1xf32> to vector<1x8x1xf32>
    %1455 = vector.shape_cast %1454 : vector<1x8x1xf32> to vector<8x1xf32>
    %1456 = vector.extract_strided_slice %1447 {offsets = [4, 0, 0], sizes = [1, 8, 1], strides = [1, 1, 1]} : vector<20x8x1xf32> to vector<1x8x1xf32>
    %1457 = vector.shape_cast %1456 : vector<1x8x1xf32> to vector<8x1xf32>
    %1458 = vector.extract_strided_slice %1447 {offsets = [5, 0, 0], sizes = [1, 8, 1], strides = [1, 1, 1]} : vector<20x8x1xf32> to vector<1x8x1xf32>
    %1459 = vector.shape_cast %1458 : vector<1x8x1xf32> to vector<8x1xf32>
    %1460 = vector.extract_strided_slice %1447 {offsets = [6, 0, 0], sizes = [1, 8, 1], strides = [1, 1, 1]} : vector<20x8x1xf32> to vector<1x8x1xf32>
    %1461 = vector.shape_cast %1460 : vector<1x8x1xf32> to vector<8x1xf32>
    %1462 = vector.extract_strided_slice %1447 {offsets = [7, 0, 0], sizes = [1, 8, 1], strides = [1, 1, 1]} : vector<20x8x1xf32> to vector<1x8x1xf32>
    %1463 = vector.shape_cast %1462 : vector<1x8x1xf32> to vector<8x1xf32>
    %1464 = vector.extract_strided_slice %1447 {offsets = [8, 0, 0], sizes = [1, 8, 1], strides = [1, 1, 1]} : vector<20x8x1xf32> to vector<1x8x1xf32>
    %1465 = vector.shape_cast %1464 : vector<1x8x1xf32> to vector<8x1xf32>
    %1466 = vector.extract_strided_slice %1447 {offsets = [9, 0, 0], sizes = [1, 8, 1], strides = [1, 1, 1]} : vector<20x8x1xf32> to vector<1x8x1xf32>
    %1467 = vector.shape_cast %1466 : vector<1x8x1xf32> to vector<8x1xf32>
    %1468 = vector.extract_strided_slice %1447 {offsets = [10, 0, 0], sizes = [1, 8, 1], strides = [1, 1, 1]} : vector<20x8x1xf32> to vector<1x8x1xf32>
    %1469 = vector.shape_cast %1468 : vector<1x8x1xf32> to vector<8x1xf32>
    %1470 = vector.extract_strided_slice %1447 {offsets = [11, 0, 0], sizes = [1, 8, 1], strides = [1, 1, 1]} : vector<20x8x1xf32> to vector<1x8x1xf32>
    %1471 = vector.shape_cast %1470 : vector<1x8x1xf32> to vector<8x1xf32>
    %1472 = vector.extract_strided_slice %1447 {offsets = [12, 0, 0], sizes = [1, 8, 1], strides = [1, 1, 1]} : vector<20x8x1xf32> to vector<1x8x1xf32>
    %1473 = vector.shape_cast %1472 : vector<1x8x1xf32> to vector<8x1xf32>
    %1474 = vector.extract_strided_slice %1447 {offsets = [13, 0, 0], sizes = [1, 8, 1], strides = [1, 1, 1]} : vector<20x8x1xf32> to vector<1x8x1xf32>
    %1475 = vector.shape_cast %1474 : vector<1x8x1xf32> to vector<8x1xf32>
    %1476 = vector.extract_strided_slice %1447 {offsets = [14, 0, 0], sizes = [1, 8, 1], strides = [1, 1, 1]} : vector<20x8x1xf32> to vector<1x8x1xf32>
    %1477 = vector.shape_cast %1476 : vector<1x8x1xf32> to vector<8x1xf32>
    %1478 = vector.extract_strided_slice %1447 {offsets = [15, 0, 0], sizes = [1, 8, 1], strides = [1, 1, 1]} : vector<20x8x1xf32> to vector<1x8x1xf32>
    %1479 = vector.shape_cast %1478 : vector<1x8x1xf32> to vector<8x1xf32>
    %1480 = vector.extract_strided_slice %1447 {offsets = [16, 0, 0], sizes = [1, 8, 1], strides = [1, 1, 1]} : vector<20x8x1xf32> to vector<1x8x1xf32>
    %1481 = vector.shape_cast %1480 : vector<1x8x1xf32> to vector<8x1xf32>
    %1482 = vector.extract_strided_slice %1447 {offsets = [17, 0, 0], sizes = [1, 8, 1], strides = [1, 1, 1]} : vector<20x8x1xf32> to vector<1x8x1xf32>
    %1483 = vector.shape_cast %1482 : vector<1x8x1xf32> to vector<8x1xf32>
    %1484 = vector.extract_strided_slice %1447 {offsets = [18, 0, 0], sizes = [1, 8, 1], strides = [1, 1, 1]} : vector<20x8x1xf32> to vector<1x8x1xf32>
    %1485 = vector.shape_cast %1484 : vector<1x8x1xf32> to vector<8x1xf32>
    %1486 = vector.extract_strided_slice %1447 {offsets = [19, 0, 0], sizes = [1, 8, 1], strides = [1, 1, 1]} : vector<20x8x1xf32> to vector<1x8x1xf32>
    %1487 = vector.shape_cast %1486 : vector<1x8x1xf32> to vector<8x1xf32>
    %1488 = tpu.concatenate %1449, %1451, %1453, %1455, %1457, %1459, %1461, %1463, %1465, %1467, %1469, %1471, %1473, %1475, %1477, %1479 in 1 : vector<8x1xf32>, vector<8x1xf32>, vector<8x1xf32>, vector<8x1xf32>, vector<8x1xf32>, vector<8x1xf32>, vector<8x1xf32>, vector<8x1xf32>, vector<8x1xf32>, vector<8x1xf32>, vector<8x1xf32>, vector<8x1xf32>, vector<8x1xf32>, vector<8x1xf32>, vector<8x1xf32>, vector<8x1xf32> -> vector<8x16xf32>
    %1489 = tpu.concatenate %1481, %1483, %1485, %1487 in 1 : vector<8x1xf32>, vector<8x1xf32>, vector<8x1xf32>, vector<8x1xf32> -> vector<8x4xf32>
    %1490 = tpu.concatenate %1488, %1489 in 1 : vector<8x16xf32>, vector<8x4xf32> -> vector<8x20xf32>
    %c0_582 = arith.constant 0 : index
    %c0_583 = arith.constant 0 : index
    %1491 = vector.load %arg12[%c0_582, %c0_583] : memref<8x20xf32, #tpu.memory_space<vmem>>, vector<8x20xf32>
    tpu.vector_store %arg12[%c0_582, %c0_583], %1490 {strides = array<i32>} : memref<8x20xf32, #tpu.memory_space<vmem>>, vector<8x20xf32>,
    %cst_584 = arith.constant dense<0.000000e+00> : vector<8xf32>
    %1492 = vector.multi_reduction <add>, %1490, %cst_584 [1] : vector<8x20xf32> to vector<8xf32>
    %1493 = vector.shape_cast %1492 : vector<8xf32> to vector<8x1xf32>
    %c0_585 = arith.constant 0 : index
    %c0_586 = arith.constant 0 : index
    %1494 = vector.load %arg11[%c0_585, %c0_586] : memref<8x1xf32, #tpu.memory_space<vmem>>, vector<8x1xf32>
    tpu.vector_store %arg11[%c0_585, %c0_586], %1493 {strides = array<i32>} : memref<8x1xf32, #tpu.memory_space<vmem>>, vector<8x1xf32>,
    return
  }
  func.func @transform_0(%arg0: i32) -> (i32, i32, i32) {
    %c0_i32 = arith.constant 0 : i32
    %c0_i32_0 = arith.constant 0 : i32
    %c0_i32_1 = arith.constant 0 : i32
    return %c0_i32, %arg0, %c0_i32_0 : i32, i32, i32
  }
  func.func @transform_1(%arg0: i32) -> (i32, i32) {
    %c0_i32 = arith.constant 0 : i32
    %c0_i32_0 = arith.constant 0 : i32
    %c0_i32_1 = arith.constant 0 : i32
    return %c0_i32, %c0_i32_0 : i32, i32
  }
  func.func @transform_2(%arg0: i32) -> (i32, i32) {
    %c0_i32 = arith.constant 0 : i32
    %c0_i32_0 = arith.constant 0 : i32
    %c0_i32_1 = arith.constant 0 : i32
    return %c0_i32, %c0_i32_0 : i32, i32
  }
  func.func @transform_3(%arg0: i32) -> (i32, i32) {
    %c0_i32 = arith.constant 0 : i32
    %c0_i32_0 = arith.constant 0 : i32
    %c0_i32_1 = arith.constant 0 : i32
    return %c0_i32, %c0_i32_0 : i32, i32
  }
  func.func @transform_4(%arg0: i32) -> (i32, i32) {
    %c0_i32 = arith.constant 0 : i32
    %c0_i32_0 = arith.constant 0 : i32
    %c0_i32_1 = arith.constant 0 : i32
    return %c0_i32, %c0_i32_0 : i32, i32
  }
  func.func @transform_5(%arg0: i32) -> (i32, i32) {
    %c0_i32 = arith.constant 0 : i32
    %c0_i32_0 = arith.constant 0 : i32
    %c0_i32_1 = arith.constant 0 : i32
    return %c0_i32, %c0_i32_0 : i32, i32
  }
  func.func @transform_6(%arg0: i32) -> (i32, i32) {
    %c0_i32 = arith.constant 0 : i32
    %c0_i32_0 = arith.constant 0 : i32
    %c0_i32_1 = arith.constant 0 : i32
    return %c0_i32, %c0_i32_0 : i32, i32
  }
  func.func @transform_7(%arg0: i32) -> (i32, i32) {
    %c0_i32 = arith.constant 0 : i32
    %c0_i32_0 = arith.constant 0 : i32
    %c0_i32_1 = arith.constant 0 : i32
    return %c0_i32, %c0_i32_0 : i32, i32
  }
  func.func @transform_8(%arg0: i32) -> (i32, i32) {
    %c0_i32 = arith.constant 0 : i32
    %c0_i32_0 = arith.constant 0 : i32
    %c0_i32_1 = arith.constant 0 : i32
    return %c0_i32, %c0_i32_0 : i32, i32
  }
  func.func @transform_9(%arg0: i32) -> (i32, i32) {
    %c0_i32 = arith.constant 0 : i32
    %c0_i32_0 = arith.constant 0 : i32
    %c0_i32_1 = arith.constant 0 : i32
    return %c0_i32, %c0_i32_0 : i32, i32
  }
  func.func @transform_10(%arg0: i32) -> (i32, i32) {
    %c0_i32 = arith.constant 0 : i32
    %c0_i32_0 = arith.constant 0 : i32
    return %arg0, %c0_i32 : i32, i32
  }
  func.func @transform_11(%arg0: i32) -> (i32, i32) {
    %c0_i32 = arith.constant 0 : i32
    %c0_i32_0 = arith.constant 0 : i32
    return %arg0, %c0_i32 : i32, i32
  }
}

</mosaic_0001>

<llo_original>
// kernel: tpu_custom_call.1
$region0: #{tpu_custom_call.1}
  #allocation0 [shape = 'u32[]', space=smem, size = 0x4, offset = 0x4, fixed_abs, tag = 'smem constant byte address 0x4 - core index']
  #allocation1 [shape = 'u32[144,128]{1,0:T(1,128)}', space=vmem, size = 0x12000, scoped, tag = 'internal scratch']
  #allocation2 [shape = 'f32[20,8,128]{2,1,0:T(8,128)}', space=vmem, size = 0x14000, scoped, tag = 'scratch operand']
  #allocation3 [shape = 'f32[20,8,128]{2,1,0:T(8,128)}', space=vmem, size = 0x14000, scoped, tag = 'scratch operand']
  #allocation4 [shape = 'f32[20,8,32]{2,1,0:T(8,128)}', space=vmem, size = 0x14000, scoped, tag = 'scratch operand']
  #allocation5 [shape = 'f32[20,8,32]{2,1,0:T(8,128)}', space=vmem, size = 0x14000, scoped, tag = 'scratch operand']
  #allocation6 [shape = 'f32[1,1]{1,0:T(1,128)S(1)}', space=vmem, size = 0x200, scoped, tag = 'scoped memory for tpu_custom_call.1']
  %s0 = inlined_call_operand.vmem [shape: f32[20,8,4], index: 0, kind: input, shape index: {}]
  %s1 = inlined_call_operand.vmem [shape: f32[23,128], index: 1, kind: input, shape index: {}]
  %s2 = inlined_call_operand.vmem [shape: f32[3,128], index: 2, kind: input, shape index: {}]
  %s3 = inlined_call_operand.vmem [shape: f32[1,128], index: 3, kind: input, shape index: {}]
  %s4 = inlined_call_operand.vmem [shape: f32[32,128], index: 4, kind: input, shape index: {}]
  %s5 = inlined_call_operand.vmem [shape: f32[32,128], index: 5, kind: input, shape index: {}]
  %s6 = inlined_call_operand.vmem [shape: f32[1,128], index: 6, kind: input, shape index: {}]
  %s7 = inlined_call_operand.vmem [shape: f32[32,128], index: 7, kind: input, shape index: {}]
  %s8 = inlined_call_operand.vmem [shape: f32[32,1], index: 8, kind: input, shape index: {}]
  %s9 = inlined_call_operand.<no memory space> [shape: f32[1,1], index: 9, kind: input, shape index: {}]
  %s10 = inlined_call_operand.vmem [shape: f32[8,1], index: 10, kind: output, shape index: {0}]
  %s11 = inlined_call_operand.hbm [shape: f32[8,20], index: 11, kind: output, shape index: {1}]
  %12 = xla_tuple %s10, %s11
  %s13 = sld [smem:[#allocation0]]
  $region58: #{tpu_custom_call.1} parent=0
    _
  %s15 = ssub.s32 1, %s13
  %s16 = scalar_select 0, %s15, %s13
  %v17 = vstv %s9
  %18 = vst [vmem:[#allocation6] sm:$0x1] %v17
  $region1: #{tpu_custom_call.1} parent=0
    #allocation7 [shape = 'u8[4096]{0}', space=vmem, size = 0x1000, scoped, tag = 'output window, operand 1, single buffered']
    #allocation8 [shape = 's32[1]{0}', space=sflag, size = 0x4, scoped, tag = 'scoped memory for tpu_custom_call.1']
    %19 = vsyncpa [#allocation8], 0
    // Predicated region
    $region2: #{tpu_custom_call.1} parent=1 // pred_check
      _
    $region3: #{tpu_custom_call.1} parent=1 // pred_check_branch
      %21 = sbr.rel (0) target = $region5
    $region4: #{tpu_custom_call.1} parent=1 // pred_region
      _
    $region5: #{tpu_custom_call.1} parent=1 // pred_fallthru
      _
    // Predicated region
    $region6: #{tpu_custom_call.1} parent=1 // pred_check
      _
    $region7: #{tpu_custom_call.1} parent=1 // pred_check_branch
      %23 = sbr.rel (0) target = $region9
    $region8: #{tpu_custom_call.1} parent=1 // pred_region
      _
    $region9: #{tpu_custom_call.1} parent=1 // pred_fallthru
      _
    // Predicated region
    $region10: #{tpu_custom_call.1} parent=1 // pred_check
      _
    $region11: #{tpu_custom_call.1} parent=1 // pred_check_branch
      %25 = sbr.rel (0) target = $region13
    $region12: #{tpu_custom_call.1} parent=1 // pred_region
      _
    $region13: #{tpu_custom_call.1} parent=1 // pred_fallthru
      _
    // Predicated region
    $region14: #{tpu_custom_call.1} parent=1 // pred_check
      _
    $region15: #{tpu_custom_call.1} parent=1 // pred_check_branch
      %27 = sbr.rel (0) target = $region17
    $region16: #{tpu_custom_call.1} parent=1 // pred_region
      _
    $region17: #{tpu_custom_call.1} parent=1 // pred_fallthru
      _
    // Predicated region
    $region18: #{tpu_custom_call.1} parent=1 // pred_check
      _
    $region19: #{tpu_custom_call.1} parent=1 // pred_check_branch
      %29 = sbr.rel (0) target = $region21
    $region20: #{tpu_custom_call.1} parent=1 // pred_region
      _
    $region21: #{tpu_custom_call.1} parent=1 // pred_fallthru
      _
    // Predicated region
    $region22: #{tpu_custom_call.1} parent=1 // pred_check
      _
    $region23: #{tpu_custom_call.1} parent=1 // pred_check_branch
      %31 = sbr.rel (0) target = $region25
    $region24: #{tpu_custom_call.1} parent=1 // pred_region
      _
    $region25: #{tpu_custom_call.1} parent=1 // pred_fallthru
      _
    // Predicated region
    $region26: #{tpu_custom_call.1} parent=1 // pred_check
      _
    $region27: #{tpu_custom_call.1} parent=1 // pred_check_branch
      %33 = sbr.rel (0) target = $region29
    $region28: #{tpu_custom_call.1} parent=1 // pred_region
      _
    $region29: #{tpu_custom_call.1} parent=1 // pred_fallthru
      _
    // Predicated region
    $region30: #{tpu_custom_call.1} parent=1 // pred_check
      _
    $region31: #{tpu_custom_call.1} parent=1 // pred_check_branch
      %35 = sbr.rel (0) target = $region33
    $region32: #{tpu_custom_call.1} parent=1 // pred_region
      _
    $region33: #{tpu_custom_call.1} parent=1 // pred_fallthru
      _
    // Predicated region
    $region34: #{tpu_custom_call.1} parent=1 // pred_check
      _
    $region35: #{tpu_custom_call.1} parent=1 // pred_check_branch
      %37 = sbr.rel (0) target = $region37
    $region36: #{tpu_custom_call.1} parent=1 // pred_region
      _
    $region37: #{tpu_custom_call.1} parent=1 // pred_fallthru
      _
    // Predicated region
    $region38: #{tpu_custom_call.1} parent=1 // pred_check
      _
    $region39: #{tpu_custom_call.1} parent=1 // pred_check_branch
      %39 = sbr.rel (0) target = $region41
    $region40: #{tpu_custom_call.1} parent=1 // pred_region
      _
    $region41: #{tpu_custom_call.1} parent=1 // pred_fallthru
      _
    %v40 = vlaneseq
    %v41 = vand.u32 %v40, 127
    %vm42 = vcmp.lt.s32.totalorder %v41, 16
    %vm43 = vcmp.ge.s32.totalorder %v41, 32
    %vm44 = vcmp.lt.s32.totalorder %v41, 48
    %vm45 = vmand %vm43, %vm44
    %vm46 = vmor %vm42, %vm45
    %vm47 = vcmp.ge.s32.totalorder %v41, 64
    %vm48 = vcmp.lt.s32.totalorder %v41, 80
    %vm49 = vmand %vm47, %vm48
    %vm50 = vmor %vm46, %vm49
    %vm51 = vcmp.ge.s32.totalorder %v41, 96
    %vm52 = vcmp.lt.s32.totalorder %v41, 112
    %vm53 = vmand %vm51, %vm52
    %vm54 = vmor %vm50, %vm53
    %v55 = vld [vmem:[%s0] sm:$0xff]
    %v56 = vld [vmem:[%s0 + $0x8] sm:$0xff]
    %v57 = vld [vmem:[%s0 + $0x10] sm:$0xff]
    %v58 = vld [vmem:[%s0 + $0x18] sm:$0xff]
    %v59 = vld [vmem:[%s0 + $0x20] sm:$0xff]
    %v60 = vld [vmem:[%s0 + $0x28] sm:$0xff]
    %v61 = vld [vmem:[%s0 + $0x30] sm:$0xff]
    %v62 = vld [vmem:[%s0 + $0x38] sm:$0xff]
    %v63 = vld [vmem:[%s0 + $0x40] sm:$0xff]
    %v64 = vld [vmem:[%s0 + $0x48] sm:$0xff]
    %v65 = vld [vmem:[%s0 + $0x50] sm:$0xff]
    %v66 = vld [vmem:[%s0 + $0x58] sm:$0xff]
    %v67 = vld [vmem:[%s0 + $0x60] sm:$0xff]
    %v68 = vld [vmem:[%s0 + $0x68] sm:$0xff]
    %v69 = vld [vmem:[%s0 + $0x70] sm:$0xff]
    %v70 = vld [vmem:[%s0 + $0x78] sm:$0xff]
    %v71 = vld [vmem:[%s0 + $0x80] sm:$0xff]
    %v72 = vld [vmem:[%s0 + $0x88] sm:$0xff]
    %v73 = vld [vmem:[%s0 + $0x90] sm:$0xff]
    %v74 = vld [vmem:[%s0 + $0x98] sm:$0xff]
    %vm75 = vcmp.eq.f32.partialorder %v55, 0.0
    %vm76 = vcmp.eq.f32.partialorder %v56, 0.0
    %vm77 = vcmp.eq.f32.partialorder %v57, 0.0
    %vm78 = vcmp.eq.f32.partialorder %v58, 0.0
    %vm79 = vcmp.eq.f32.partialorder %v59, 0.0
    %vm80 = vcmp.eq.f32.partialorder %v60, 0.0
    %vm81 = vcmp.eq.f32.partialorder %v61, 0.0
    %vm82 = vcmp.eq.f32.partialorder %v62, 0.0
    %vm83 = vcmp.eq.f32.partialorder %v63, 0.0
    %vm84 = vcmp.eq.f32.partialorder %v64, 0.0
    %vm85 = vcmp.eq.f32.partialorder %v65, 0.0
    %vm86 = vcmp.eq.f32.partialorder %v66, 0.0
    %vm87 = vcmp.eq.f32.partialorder %v67, 0.0
    %vm88 = vcmp.eq.f32.partialorder %v68, 0.0
    %vm89 = vcmp.eq.f32.partialorder %v69, 0.0
    %vm90 = vcmp.eq.f32.partialorder %v70, 0.0
    %vm91 = vcmp.eq.f32.partialorder %v71, 0.0
    %vm92 = vcmp.eq.f32.partialorder %v72, 0.0
    %vm93 = vcmp.eq.f32.partialorder %v73, 0.0
    %vm94 = vcmp.eq.f32.partialorder %v74, 0.0
    %v95 = vcvt.f32.s32.to.zero.pseudo %v55
    %v96 = vcvt.f32.s32.to.zero.pseudo %v56
    %v97 = vcvt.f32.s32.to.zero.pseudo %v57
    %v98 = vcvt.f32.s32.to.zero.pseudo %v58
    %v99 = vcvt.f32.s32.to.zero.pseudo %v59
    %v100 = vcvt.f32.s32.to.zero.pseudo %v60
    %v101 = vcvt.f32.s32.to.zero.pseudo %v61
    %v102 = vcvt.f32.s32.to.zero.pseudo %v62
    %v103 = vcvt.f32.s32.to.zero.pseudo %v63
    %v104 = vcvt.f32.s32.to.zero.pseudo %v64
    %v105 = vcvt.f32.s32.to.zero.pseudo %v65
    %v106 = vcvt.f32.s32.to.zero.pseudo %v66
    %v107 = vcvt.f32.s32.to.zero.pseudo %v67
    %v108 = vcvt.f32.s32.to.zero.pseudo %v68
    %v109 = vcvt.f32.s32.to.zero.pseudo %v69
    %v110 = vcvt.f32.s32.to.zero.pseudo %v70
    %v111 = vcvt.f32.s32.to.zero.pseudo %v71
    %v112 = vcvt.f32.s32.to.zero.pseudo %v72
    %v113 = vcvt.f32.s32.to.zero.pseudo %v73
    %v114 = vcvt.f32.s32.to.zero.pseudo %v74
    %115 = vset.pattern.permute.xlu0 0
    %116 = vperm.xlu0 %115, %v95
    %v117 = vpop.permute.xlu0 %116
    %118 = vset.pattern.permute.xlu0 0
    %119 = vperm.xlu0 %118, %v96
    %v120 = vpop.permute.xlu0 %119
    %121 = vset.pattern.permute.xlu0 0
    %122 = vperm.xlu0 %121, %v97
    %v123 = vpop.permute.xlu0 %122
    %124 = vset.pattern.permute.xlu0 0
    %125 = vperm.xlu0 %124, %v98
    %v126 = vpop.permute.xlu0 %125
    %127 = vset.pattern.permute.xlu0 0
    %128 = vperm.xlu0 %127, %v99
    %v129 = vpop.permute.xlu0 %128
    %130 = vset.pattern.permute.xlu0 0
    %131 = vperm.xlu0 %130, %v100
    %v132 = vpop.permute.xlu0 %131
    %133 = vset.pattern.permute.xlu0 0
    %134 = vperm.xlu0 %133, %v101
    %v135 = vpop.permute.xlu0 %134
    %136 = vset.pattern.permute.xlu0 0
    %137 = vperm.xlu0 %136, %v102
    %v138 = vpop.permute.xlu0 %137
    %139 = vset.pattern.permute.xlu0 0
    %140 = vperm.xlu0 %139, %v103
    %v141 = vpop.permute.xlu0 %140
    %142 = vset.pattern.permute.xlu0 0
    %143 = vperm.xlu0 %142, %v104
    %v144 = vpop.permute.xlu0 %143
    %145 = vset.pattern.permute.xlu0 0
    %146 = vperm.xlu0 %145, %v105
    %v147 = vpop.permute.xlu0 %146
    %148 = vset.pattern.permute.xlu0 0
    %149 = vperm.xlu0 %148, %v106
    %v150 = vpop.permute.xlu0 %149
    %151 = vset.pattern.permute.xlu0 0
    %152 = vperm.xlu0 %151, %v107
    %v153 = vpop.permute.xlu0 %152
    %154 = vset.pattern.permute.xlu0 0
    %155 = vperm.xlu0 %154, %v108
    %v156 = vpop.permute.xlu0 %155
    %157 = vset.pattern.permute.xlu0 0
    %158 = vperm.xlu0 %157, %v109
    %v159 = vpop.permute.xlu0 %158
    %160 = vset.pattern.permute.xlu0 0
    %161 = vperm.xlu0 %160, %v110
    %v162 = vpop.permute.xlu0 %161
    %163 = vset.pattern.permute.xlu0 0
    %164 = vperm.xlu0 %163, %v111
    %v165 = vpop.permute.xlu0 %164
    %166 = vset.pattern.permute.xlu0 0
    %167 = vperm.xlu0 %166, %v112
    %v168 = vpop.permute.xlu0 %167
    %169 = vset.pattern.permute.xlu0 0
    %170 = vperm.xlu0 %169, %v113
    %v171 = vpop.permute.xlu0 %170
    %172 = vset.pattern.permute.xlu0 0
    %173 = vperm.xlu0 %172, %v114
    %v174 = vpop.permute.xlu0 %173
    %vm175 = vcmp.eq.s32.totalorder %v117, %v41
    %vm176 = vcmp.eq.s32.totalorder %v120, %v41
    %vm177 = vcmp.eq.s32.totalorder %v123, %v41
    %vm178 = vcmp.eq.s32.totalorder %v126, %v41
    %vm179 = vcmp.eq.s32.totalorder %v129, %v41
    %vm180 = vcmp.eq.s32.totalorder %v132, %v41
    %vm181 = vcmp.eq.s32.totalorder %v135, %v41
    %vm182 = vcmp.eq.s32.totalorder %v138, %v41
    %vm183 = vcmp.eq.s32.totalorder %v141, %v41
    %vm184 = vcmp.eq.s32.totalorder %v144, %v41
    %vm185 = vcmp.eq.s32.totalorder %v147, %v41
    %vm186 = vcmp.eq.s32.totalorder %v150, %v41
    %vm187 = vcmp.eq.s32.totalorder %v153, %v41
    %vm188 = vcmp.eq.s32.totalorder %v156, %v41
    %vm189 = vcmp.eq.s32.totalorder %v159, %v41
    %vm190 = vcmp.eq.s32.totalorder %v162, %v41
    %vm191 = vcmp.eq.s32.totalorder %v165, %v41
    %vm192 = vcmp.eq.s32.totalorder %v168, %v41
    %vm193 = vcmp.eq.s32.totalorder %v171, %v41
    %vm194 = vcmp.eq.s32.totalorder %v174, %v41
    %v195 = vsel %vm175, 1, 0
    %v196 = vsel %vm176, 1, 0
    %v197 = vsel %vm177, 1, 0
    %v198 = vsel %vm178, 1, 0
    %v199 = vsel %vm179, 1, 0
    %v200 = vsel %vm180, 1, 0
    %v201 = vsel %vm181, 1, 0
    %v202 = vsel %vm182, 1, 0
    %v203 = vsel %vm183, 1, 0
    %v204 = vsel %vm184, 1, 0
    %v205 = vsel %vm185, 1, 0
    %v206 = vsel %vm186, 1, 0
    %v207 = vsel %vm187, 1, 0
    %v208 = vsel %vm188, 1, 0
    %v209 = vsel %vm189, 1, 0
    %v210 = vsel %vm190, 1, 0
    %v211 = vsel %vm191, 1, 0
    %v212 = vsel %vm192, 1, 0
    %v213 = vsel %vm193, 1, 0
    %v214 = vsel %vm194, 1, 0
    %v215 = vcvt.s32.f32 %v195
    %v216 = vcvt.s32.f32 %v196
    %v217 = vcvt.s32.f32 %v197
    %v218 = vcvt.s32.f32 %v198
    %v219 = vcvt.s32.f32 %v199
    %v220 = vcvt.s32.f32 %v200
    %v221 = vcvt.s32.f32 %v201
    %v222 = vcvt.s32.f32 %v202
    %v223 = vcvt.s32.f32 %v203
    %v224 = vcvt.s32.f32 %v204
    %v225 = vcvt.s32.f32 %v205
    %v226 = vcvt.s32.f32 %v206
    %v227 = vcvt.s32.f32 %v207
    %v228 = vcvt.s32.f32 %v208
    %v229 = vcvt.s32.f32 %v209
    %v230 = vcvt.s32.f32 %v210
    %v231 = vcvt.s32.f32 %v211
    %v232 = vcvt.s32.f32 %v212
    %v233 = vcvt.s32.f32 %v213
    %v234 = vcvt.s32.f32 %v214
    %v235 = vld [vmem:[%s1] sm:$0xff]
    %v236 = vld [vmem:[%s1 + $0x8] sm:$0xff]
    %v237 = vld [vmem:[%s1 + $0x10] sm:$0x7f]
    %v238 = vld [vmem:[%s2] sm:$0x7]
    %259 = vrot.lane.b32.xlu0 %v55, 127
    %v260 = vpop.permute.xlu0 %259
    %261 = vrot.lane.b32.xlu0 %v56, 127
    %v262 = vpop.permute.xlu0 %261
    %263 = vrot.lane.b32.xlu0 %v57, 127
    %v264 = vpop.permute.xlu0 %263
    %265 = vrot.lane.b32.xlu0 %v58, 127
    %v266 = vpop.permute.xlu0 %265
    %267 = vrot.lane.b32.xlu0 %v59, 127
    %v268 = vpop.permute.xlu0 %267
    %269 = vrot.lane.b32.xlu0 %v60, 127
    %v270 = vpop.permute.xlu0 %269
    %271 = vrot.lane.b32.xlu0 %v61, 127
    %v272 = vpop.permute.xlu0 %271
    %273 = vrot.lane.b32.xlu0 %v62, 127
    %v274 = vpop.permute.xlu0 %273
    %275 = vrot.lane.b32.xlu0 %v63, 127
    %v276 = vpop.permute.xlu0 %275
    %277 = vrot.lane.b32.xlu0 %v64, 127
    %v278 = vpop.permute.xlu0 %277
    %279 = vrot.lane.b32.xlu0 %v65, 127
    %v280 = vpop.permute.xlu0 %279
    %281 = vrot.lane.b32.xlu0 %v66, 127
    %v282 = vpop.permute.xlu0 %281
    %283 = vrot.lane.b32.xlu0 %v67, 127
    %v284 = vpop.permute.xlu0 %283
    %285 = vrot.lane.b32.xlu0 %v68, 127
    %v286 = vpop.permute.xlu0 %285
    %287 = vrot.lane.b32.xlu0 %v69, 127
    %v288 = vpop.permute.xlu0 %287
    %289 = vrot.lane.b32.xlu0 %v70, 127
    %v290 = vpop.permute.xlu0 %289
    %291 = vrot.lane.b32.xlu0 %v71, 127
    %v292 = vpop.permute.xlu0 %291
    %293 = vrot.lane.b32.xlu0 %v72, 127
    %v294 = vpop.permute.xlu0 %293
    %295 = vrot.lane.b32.xlu0 %v73, 127
    %v296 = vpop.permute.xlu0 %295
    %297 = vrot.lane.b32.xlu0 %v74, 127
    %v298 = vpop.permute.xlu0 %297
    %vm299 = vcmask 23552
    %v300 = vsel %vm299, %v260, 0
    %v302 = vsel %vm299, %v262, 0
    %v304 = vsel %vm299, %v264, 0
    %v306 = vsel %vm299, %v266, 0
    %v308 = vsel %vm299, %v268, 0
    %v310 = vsel %vm299, %v270, 0
    %v312 = vsel %vm299, %v272, 0
    %v314 = vsel %vm299, %v274, 0
    %v316 = vsel %vm299, %v276, 0
    %v318 = vsel %vm299, %v278, 0
    %v320 = vsel %vm299, %v280, 0
    %v322 = vsel %vm299, %v282, 0
    %v324 = vsel %vm299, %v284, 0
    %v326 = vsel %vm299, %v286, 0
    %v328 = vsel %vm299, %v288, 0
    %v330 = vsel %vm299, %v290, 0
    %v332 = vsel %vm299, %v292, 0
    %v334 = vsel %vm299, %v294, 0
    %v336 = vsel %vm299, %v296, 0
    %v338 = vsel %vm299, %v298, 0
    %vm340 = vcmask 1042432
    %v342 = vsel %vm340, %v238, 0
    %344 = vmatprep.subr.mxu0 0.0
    %345 = vmatpush1.msra.mxu0 0.0
    %346 = vmatprep.subr.mxu0 0.0
    %347 = vmatpush1.msra.mxu0 0.0
    %348 = vmatprep.subr.mxu0 0.0
    %349 = vmatpush1.msra.mxu0 0.0
    %350 = vmatprep.subr.mxu0 0.0
    %351 = vmatpush1.msra.mxu0 0.0
    %352 = vmatprep.subr.mxu0 0.0
    %353 = vmatpush1.msra.mxu0 0.0
    %354 = vmatprep.subr.mxu0 0.0
    %355 = vmatpush1.msra.mxu0 0.0
    %356 = vmatprep.subr.mxu0 0.0
    %357 = vmatpush1.msra.mxu0 0.0
    %358 = vmatprep.subr.mxu0 0.0
    %359 = vmatpush1.msra.mxu0 0.0
    %360 = vmatprep.subr.mxu0 0.0
    %361 = vmatpush1.msra.mxu0 0.0
    %362 = vmatprep.subr.mxu0 0.0
    %363 = vmatpush1.msra.mxu0 0.0
    %364 = vmatprep.subr.mxu0 0.0
    %365 = vmatpush1.msra.mxu0 0.0
    %366 = vmatprep.subr.mxu0 0.0
    %367 = vmatpush1.msra.mxu0 0.0
    %368 = vmatprep.subr.mxu0 0.0
    %369 = vmatpush1.msra.mxu0 0.0
    %370 = vmatprep.subr.mxu0 0.0
    %371 = vmatpush1.msra.mxu0 0.0
    %372 = vmatprep.subr.mxu0 0.0
    %373 = vmatpush1.msra.mxu0 0.0
    %374 = vmatprep.subr.mxu0 0.0
    %375 = vmatpush1.msra.mxu0 %v342
    %376 = vmatprep.subr.mxu0 0.0
    %377 = vmatpush2.msra.mxu0 0.0
    %378 = vmatprep.subr.mxu0 0.0
    %379 = vmatpush2.msra.mxu0 0.0
    %380 = vmatprep.subr.mxu0 0.0
    %381 = vmatpush2.msra.mxu0 0.0
    %382 = vmatprep.subr.mxu0 0.0
    %383 = vmatpush2.msra.mxu0 0.0
    %384 = vmatprep.subr.mxu0 0.0
    %385 = vmatpush2.msra.mxu0 0.0
    %386 = vmatprep.subr.mxu0 0.0
    %387 = vmatpush2.msra.mxu0 0.0
    %388 = vmatprep.subr.mxu0 0.0
    %389 = vmatpush2.msra.mxu0 0.0
    %390 = vmatprep.subr.mxu0 0.0
    %391 = vmatpush2.msra.mxu0 0.0
    %392 = vmatprep.subr.mxu0 0.0
    %393 = vmatpush2.msra.mxu0 0.0
    %394 = vmatprep.subr.mxu0 0.0
    %395 = vmatpush2.msra.mxu0 0.0
    %396 = vmatprep.subr.mxu0 0.0
    %397 = vmatpush2.msra.mxu0 0.0
    %398 = vmatprep.subr.mxu0 0.0
    %399 = vmatpush2.msra.mxu0 0.0
    %400 = vmatprep.subr.mxu0 0.0
    %401 = vmatpush2.msra.mxu0 0.0
    %402 = vmatprep.subr.mxu0 0.0
    %403 = vmatpush2.msra.mxu0 0.0
    %404 = vmatprep.subr.mxu0 0.0
    %405 = vmatpush2.msra.mxu0 0.0
    %406 = vmatprep.subr.mxu0 0.0
    %407 = vmatpush2.msra.mxu0 0.0
    %408 = vmatprep.mubr.f32.mxu0 0.0
    %409 = vmatmul.mubr.f32.gmra.mxu0 %v300
    %v410 = vpop.f32.mrf.mxu0
    %v411 = vadd.f32 0.0, %v410
    %v412 = vpop.f32.mrf.mxu0
    %413 = vmatprep.mubr.f32.mxu0 0.0
    %414 = vmatmul.mubr.f32.gmra.mxu0 %v302
    %v415 = vpop.f32.mrf.mxu0
    %v416 = vadd.f32 0.0, %v415
    %v417 = vpop.f32.mrf.mxu0
    %418 = vmatprep.mubr.f32.mxu0 0.0
    %419 = vmatmul.mubr.f32.gmra.mxu0 %v304
    %v420 = vpop.f32.mrf.mxu0
    %v421 = vadd.f32 0.0, %v420
    %v422 = vpop.f32.mrf.mxu0
    %423 = vmatprep.mubr.f32.mxu0 0.0
    %424 = vmatmul.mubr.f32.gmra.mxu0 %v306
    %v425 = vpop.f32.mrf.mxu0
    %v426 = vadd.f32 0.0, %v425
    %v427 = vpop.f32.mrf.mxu0
    %428 = vmatprep.mubr.f32.mxu0 0.0
    %429 = vmatmul.mubr.f32.gmra.mxu0 %v308
    %v430 = vpop.f32.mrf.mxu0
    %v431 = vadd.f32 0.0, %v430
    %v432 = vpop.f32.mrf.mxu0
    %433 = vmatprep.mubr.f32.mxu0 0.0
    %434 = vmatmul.mubr.f32.gmra.mxu0 %v310
    %v435 = vpop.f32.mrf.mxu0
    %v436 = vadd.f32 0.0, %v435
    %v437 = vpop.f32.mrf.mxu0
    %438 = vmatprep.mubr.f32.mxu0 0.0
    %439 = vmatmul.mubr.f32.gmra.mxu0 %v312
    %v440 = vpop.f32.mrf.mxu0
    %v441 = vadd.f32 0.0, %v440
    %v442 = vpop.f32.mrf.mxu0
    %443 = vmatprep.mubr.f32.mxu0 0.0
    %444 = vmatmul.mubr.f32.gmra.mxu0 %v314
    %v445 = vpop.f32.mrf.mxu0
    %v446 = vadd.f32 0.0, %v445
    %v447 = vpop.f32.mrf.mxu0
    %448 = vmatprep.mubr.f32.mxu0 0.0
    %449 = vmatmul.mubr.f32.gmra.mxu0 %v316
    %v450 = vpop.f32.mrf.mxu0
    %v451 = vadd.f32 0.0, %v450
    %v452 = vpop.f32.mrf.mxu0
    %453 = vmatprep.mubr.f32.mxu0 0.0
    %454 = vmatmul.mubr.f32.gmra.mxu0 %v318
    %v455 = vpop.f32.mrf.mxu0
    %v456 = vadd.f32 0.0, %v455
    %v457 = vpop.f32.mrf.mxu0
    %458 = vmatprep.mubr.f32.mxu0 0.0
    %459 = vmatmul.mubr.f32.gmra.mxu0 %v320
    %v460 = vpop.f32.mrf.mxu0
    %v461 = vadd.f32 0.0, %v460
    %v462 = vpop.f32.mrf.mxu0
    %463 = vmatprep.mubr.f32.mxu0 0.0
    %464 = vmatmul.mubr.f32.gmra.mxu0 %v322
    %v465 = vpop.f32.mrf.mxu0
    %v466 = vadd.f32 0.0, %v465
    %v467 = vpop.f32.mrf.mxu0
    %468 = vmatprep.mubr.f32.mxu0 0.0
    %469 = vmatmul.mubr.f32.gmra.mxu0 %v324
    %v470 = vpop.f32.mrf.mxu0
    %v471 = vadd.f32 0.0, %v470
    %v472 = vpop.f32.mrf.mxu0
    %473 = vmatprep.mubr.f32.mxu0 0.0
    %474 = vmatmul.mubr.f32.gmra.mxu0 %v326
    %v475 = vpop.f32.mrf.mxu0
    %v476 = vadd.f32 0.0, %v475
    %v477 = vpop.f32.mrf.mxu0
    %478 = vmatprep.mubr.f32.mxu0 0.0
    %479 = vmatmul.mubr.f32.gmra.mxu0 %v328
    %v480 = vpop.f32.mrf.mxu0
    %v481 = vadd.f32 0.0, %v480
    %v482 = vpop.f32.mrf.mxu0
    %483 = vmatprep.mubr.f32.mxu0 0.0
    %484 = vmatmul.mubr.f32.gmra.mxu0 %v330
    %v485 = vpop.f32.mrf.mxu0
    %v486 = vadd.f32 0.0, %v485
    %v487 = vpop.f32.mrf.mxu0
    %488 = vmatprep.mubr.f32.mxu0 0.0
    %489 = vmatmul.mubr.f32.gmra.mxu0 %v332
    %v490 = vpop.f32.mrf.mxu0
    %v491 = vadd.f32 0.0, %v490
    %v492 = vpop.f32.mrf.mxu0
    %493 = vmatprep.mubr.f32.mxu0 0.0
    %494 = vmatmul.mubr.f32.gmra.mxu0 %v334
    %v495 = vpop.f32.mrf.mxu0
    %v496 = vadd.f32 0.0, %v495
    %v497 = vpop.f32.mrf.mxu0
    %498 = vmatprep.mubr.f32.mxu0 0.0
    %499 = vmatmul.mubr.f32.gmra.mxu0 %v336
    %v500 = vpop.f32.mrf.mxu0
    %v501 = vadd.f32 0.0, %v500
    %v502 = vpop.f32.mrf.mxu0
    %503 = vmatprep.mubr.f32.mxu0 0.0
    %504 = vmatmul.mubr.f32.gmra.mxu0 %v338
    %v505 = vpop.f32.mrf.mxu0
    %v506 = vadd.f32 0.0, %v505
    %v507 = vpop.f32.mrf.mxu0
    %508 = vdwg.mxu0
    %vm509 = vcmask 187392
    %v511 = vsel %vm509, %v215, 0
    %v514 = vsel %vm509, %v216, 0
    %v517 = vsel %vm509, %v217, 0
    %v520 = vsel %vm509, %v218, 0
    %v523 = vsel %vm509, %v219, 0
    %v526 = vsel %vm509, %v220, 0
    %v529 = vsel %vm509, %v221, 0
    %v532 = vsel %vm509, %v222, 0
    %v535 = vsel %vm509, %v223, 0
    %v538 = vsel %vm509, %v224, 0
    %v541 = vsel %vm509, %v225, 0
    %v544 = vsel %vm509, %v226, 0
    %v547 = vsel %vm509, %v227, 0
    %v550 = vsel %vm509, %v228, 0
    %v553 = vsel %vm509, %v229, 0
    %v556 = vsel %vm509, %v230, 0
    %v559 = vsel %vm509, %v231, 0
    %v562 = vsel %vm509, %v232, 0
    %v565 = vsel %vm509, %v233, 0
    %v568 = vsel %vm509, %v234, 0
    %vm570 = vcmask 1046528
    %v572 = vsel %vm570, %v237, 0
    %574 = vmatprep.subr.mxu0 0.0
    %575 = vmatpush1.msra.mxu0 0.0
    %576 = vmatprep.subr.mxu0 0.0
    %577 = vmatpush1.msra.mxu0 0.0
    %578 = vmatprep.subr.mxu0 0.0
    %579 = vmatpush1.msra.mxu0 0.0
    %580 = vmatprep.subr.mxu0 0.0
    %581 = vmatpush1.msra.mxu0 0.0
    %582 = vmatprep.subr.mxu0 0.0
    %583 = vmatpush1.msra.mxu0 0.0
    %584 = vmatprep.subr.mxu0 0.0
    %585 = vmatpush1.msra.mxu0 0.0
    %586 = vmatprep.subr.mxu0 0.0
    %587 = vmatpush1.msra.mxu0 0.0
    %588 = vmatprep.subr.mxu0 0.0
    %589 = vmatpush1.msra.mxu0 0.0
    %590 = vmatprep.subr.mxu0 0.0
    %591 = vmatpush1.msra.mxu0 0.0
    %592 = vmatprep.subr.mxu0 0.0
    %593 = vmatpush1.msra.mxu0 0.0
    %594 = vmatprep.subr.mxu0 0.0
    %595 = vmatpush1.msra.mxu0 0.0
    %596 = vmatprep.subr.mxu0 0.0
    %597 = vmatpush1.msra.mxu0 0.0
    %598 = vmatprep.subr.mxu0 0.0
    %599 = vmatpush1.msra.mxu0 0.0
    %600 = vmatprep.subr.mxu0 0.0
    %601 = vmatpush1.msra.mxu0 %v572
    %602 = vmatprep.subr.mxu0 0.0
    %603 = vmatpush1.msra.mxu0 %v236
    %604 = vmatprep.subr.mxu0 0.0
    %605 = vmatpush1.msra.mxu0 %v235
    %606 = vmatprep.subr.mxu0 0.0
    %607 = vmatpush2.msra.mxu0 0.0
    %608 = vmatprep.subr.mxu0 0.0
    %609 = vmatpush2.msra.mxu0 0.0
    %610 = vmatprep.subr.mxu0 0.0
    %611 = vmatpush2.msra.mxu0 0.0
    %612 = vmatprep.subr.mxu0 0.0
    %613 = vmatpush2.msra.mxu0 0.0
    %614 = vmatprep.subr.mxu0 0.0
    %615 = vmatpush2.msra.mxu0 0.0
    %616 = vmatprep.subr.mxu0 0.0
    %617 = vmatpush2.msra.mxu0 0.0
    %618 = vmatprep.subr.mxu0 0.0
    %619 = vmatpush2.msra.mxu0 0.0
    %620 = vmatprep.subr.mxu0 0.0
    %621 = vmatpush2.msra.mxu0 0.0
    %622 = vmatprep.subr.mxu0 0.0
    %623 = vmatpush2.msra.mxu0 0.0
    %624 = vmatprep.subr.mxu0 0.0
    %625 = vmatpush2.msra.mxu0 0.0
    %626 = vmatprep.subr.mxu0 0.0
    %627 = vmatpush2.msra.mxu0 0.0
    %628 = vmatprep.subr.mxu0 0.0
    %629 = vmatpush2.msra.mxu0 0.0
    %630 = vmatprep.subr.mxu0 0.0
    %631 = vmatpush2.msra.mxu0 0.0
    %632 = vmatprep.subr.mxu0 0.0
    %633 = vmatpush2.msra.mxu0 0.0
    %634 = vmatprep.subr.mxu0 0.0
    %635 = vmatpush2.msra.mxu0 0.0
    %636 = vmatprep.subr.mxu0 0.0
    %637 = vmatpush2.msra.mxu0 0.0
    %638 = vmatprep.mubr.f32.mxu0 0.0
    %639 = vmatmul.mubr.f32.gmra.mxu0 %v511
    %v640 = vpop.f32.mrf.mxu0
    %v641 = vadd.f32 %v411, %v640
    %v642 = vpop.f32.mrf.mxu0
    %643 = vmatprep.mubr.f32.mxu0 0.0
    %644 = vmatmul.mubr.f32.gmra.mxu0 %v514
    %v645 = vpop.f32.mrf.mxu0
    %v646 = vadd.f32 %v416, %v645
    %v647 = vpop.f32.mrf.mxu0
    %648 = vmatprep.mubr.f32.mxu0 0.0
    %649 = vmatmul.mubr.f32.gmra.mxu0 %v517
    %v650 = vpop.f32.mrf.mxu0
    %v651 = vadd.f32 %v421, %v650
    %v652 = vpop.f32.mrf.mxu0
    %653 = vmatprep.mubr.f32.mxu0 0.0
    %654 = vmatmul.mubr.f32.gmra.mxu0 %v520
    %v655 = vpop.f32.mrf.mxu0
    %v656 = vadd.f32 %v426, %v655
    %v657 = vpop.f32.mrf.mxu0
    %658 = vmatprep.mubr.f32.mxu0 0.0
    %659 = vmatmul.mubr.f32.gmra.mxu0 %v523
    %v660 = vpop.f32.mrf.mxu0
    %v661 = vadd.f32 %v431, %v660
    %v662 = vpop.f32.mrf.mxu0
    %663 = vmatprep.mubr.f32.mxu0 0.0
    %664 = vmatmul.mubr.f32.gmra.mxu0 %v526
    %v665 = vpop.f32.mrf.mxu0
    %v666 = vadd.f32 %v436, %v665
    %v667 = vpop.f32.mrf.mxu0
    %668 = vmatprep.mubr.f32.mxu0 0.0
    %669 = vmatmul.mubr.f32.gmra.mxu0 %v529
    %v670 = vpop.f32.mrf.mxu0
    %v671 = vadd.f32 %v441, %v670
    %v672 = vpop.f32.mrf.mxu0
    %673 = vmatprep.mubr.f32.mxu0 0.0
    %674 = vmatmul.mubr.f32.gmra.mxu0 %v532
    %v675 = vpop.f32.mrf.mxu0
    %v676 = vadd.f32 %v446, %v675
    %v677 = vpop.f32.mrf.mxu0
    %678 = vmatprep.mubr.f32.mxu0 0.0
    %679 = vmatmul.mubr.f32.gmra.mxu0 %v535
    %v680 = vpop.f32.mrf.mxu0
    %v681 = vadd.f32 %v451, %v680
    %v682 = vpop.f32.mrf.mxu0
    %683 = vmatprep.mubr.f32.mxu0 0.0
    %684 = vmatmul.mubr.f32.gmra.mxu0 %v538
    %v685 = vpop.f32.mrf.mxu0
    %v686 = vadd.f32 %v456, %v685
    %v687 = vpop.f32.mrf.mxu0
    %688 = vmatprep.mubr.f32.mxu0 0.0
    %689 = vmatmul.mubr.f32.gmra.mxu0 %v541
    %v690 = vpop.f32.mrf.mxu0
    %v691 = vadd.f32 %v461, %v690
    %v692 = vpop.f32.mrf.mxu0
    %693 = vmatprep.mubr.f32.mxu0 0.0
    %694 = vmatmul.mubr.f32.gmra.mxu0 %v544
    %v695 = vpop.f32.mrf.mxu0
    %v696 = vadd.f32 %v466, %v695
    %v697 = vpop.f32.mrf.mxu0
    %698 = vmatprep.mubr.f32.mxu0 0.0
    %699 = vmatmul.mubr.f32.gmra.mxu0 %v547
    %v700 = vpop.f32.mrf.mxu0
    %v701 = vadd.f32 %v471, %v700
    %v702 = vpop.f32.mrf.mxu0
    %703 = vmatprep.mubr.f32.mxu0 0.0
    %704 = vmatmul.mubr.f32.gmra.mxu0 %v550
    %v705 = vpop.f32.mrf.mxu0
    %v706 = vadd.f32 %v476, %v705
    %v707 = vpop.f32.mrf.mxu0
    %708 = vmatprep.mubr.f32.mxu0 0.0
    %709 = vmatmul.mubr.f32.gmra.mxu0 %v553
    %v710 = vpop.f32.mrf.mxu0
    %v711 = vadd.f32 %v481, %v710
    %v712 = vpop.f32.mrf.mxu0
    %713 = vmatprep.mubr.f32.mxu0 0.0
    %714 = vmatmul.mubr.f32.gmra.mxu0 %v556
    %v715 = vpop.f32.mrf.mxu0
    %v716 = vadd.f32 %v486, %v715
    %v717 = vpop.f32.mrf.mxu0
    %718 = vmatprep.mubr.f32.mxu0 0.0
    %719 = vmatmul.mubr.f32.gmra.mxu0 %v559
    %v720 = vpop.f32.mrf.mxu0
    %v721 = vadd.f32 %v491, %v720
    %v722 = vpop.f32.mrf.mxu0
    %723 = vmatprep.mubr.f32.mxu0 0.0
    %724 = vmatmul.mubr.f32.gmra.mxu0 %v562
    %v725 = vpop.f32.mrf.mxu0
    %v726 = vadd.f32 %v496, %v725
    %v727 = vpop.f32.mrf.mxu0
    %728 = vmatprep.mubr.f32.mxu0 0.0
    %729 = vmatmul.mubr.f32.gmra.mxu0 %v565
    %v730 = vpop.f32.mrf.mxu0
    %v731 = vadd.f32 %v501, %v730
    %v732 = vpop.f32.mrf.mxu0
    %733 = vmatprep.mubr.f32.mxu0 0.0
    %734 = vmatmul.mubr.f32.gmra.mxu0 %v568
    %v735 = vpop.f32.mrf.mxu0
    %v736 = vadd.f32 %v506, %v735
    %v737 = vpop.f32.mrf.mxu0
    %738 = vdwg.mxu0
    %v739 = vld [vmem:[%s3] sm:$0x1]
    %v741 = vlaneseq
    %v742 = vshrl.u32 %v741, 7
    %v743 = vsub.s32 0, %v742
    %v744 = vrot.slane %v739, %v743
    %v746 = vadd.f32 %v641, %v744
    %v747 = vadd.f32 %v646, %v744
    %v748 = vadd.f32 %v651, %v744
    %v749 = vadd.f32 %v656, %v744
    %v750 = vadd.f32 %v661, %v744
    %v751 = vadd.f32 %v666, %v744
    %v752 = vadd.f32 %v671, %v744
    %v753 = vadd.f32 %v676, %v744
    %v754 = vadd.f32 %v681, %v744
    %v755 = vadd.f32 %v686, %v744
    %v756 = vadd.f32 %v691, %v744
    %v757 = vadd.f32 %v696, %v744
    %v758 = vadd.f32 %v701, %v744
    %v759 = vadd.f32 %v706, %v744
    %v760 = vadd.f32 %v711, %v744
    %v761 = vadd.f32 %v716, %v744
    %v762 = vadd.f32 %v721, %v744
    %v763 = vadd.f32 %v726, %v744
    %v764 = vadd.f32 %v731, %v744
    %v765 = vadd.f32 %v736, %v744
    %v766 = vsel %vm54, %v746, %v765
    %767 = vst [vmem:[#allocation2] sm:$0xff] %v766
    %v768 = vsel %vm54, %v765, %v746
    %s769 = scalar_lea.vmem [#allocation2], 152
    %770 = vst [vmem:[%s769] sm:$0xff] %v768
    %v771 = vsel %vm54, %v747, %v764
    %s772 = scalar_lea.vmem [#allocation2], 8
    %773 = vst [vmem:[%s772] sm:$0xff] %v771
    %v774 = vsel %vm54, %v764, %v747
    %s775 = scalar_lea.vmem [#allocation2], 144
    %776 = vst [vmem:[%s775] sm:$0xff] %v774
    %v777 = vsel %vm54, %v748, %v763
    %s778 = scalar_lea.vmem [#allocation2], 16
    %779 = vst [vmem:[%s778] sm:$0xff] %v777
    %v780 = vsel %vm54, %v763, %v748
    %s781 = scalar_lea.vmem [#allocation2], 136
    %782 = vst [vmem:[%s781] sm:$0xff] %v780
    %v783 = vsel %vm54, %v749, %v762
    %s784 = scalar_lea.vmem [#allocation2], 24
    %785 = vst [vmem:[%s784] sm:$0xff] %v783
    %v786 = vsel %vm54, %v762, %v749
    %s787 = scalar_lea.vmem [#allocation2], 128
    %788 = vst [vmem:[%s787] sm:$0xff] %v786
    %v789 = vsel %vm54, %v750, %v761
    %s790 = scalar_lea.vmem [#allocation2], 32
    %791 = vst [vmem:[%s790] sm:$0xff] %v789
    %v792 = vsel %vm54, %v761, %v750
    %s793 = scalar_lea.vmem [#allocation2], 120
    %794 = vst [vmem:[%s793] sm:$0xff] %v792
    %v795 = vsel %vm54, %v751, %v760
    %s796 = scalar_lea.vmem [#allocation2], 40
    %797 = vst [vmem:[%s796] sm:$0xff] %v795
    %v798 = vsel %vm54, %v760, %v751
    %s799 = scalar_lea.vmem [#allocation2], 112
    %800 = vst [vmem:[%s799] sm:$0xff] %v798
    %v801 = vsel %vm54, %v752, %v759
    %s802 = scalar_lea.vmem [#allocation2], 48
    %803 = vst [vmem:[%s802] sm:$0xff] %v801
    %v804 = vsel %vm54, %v759, %v752
    %s805 = scalar_lea.vmem [#allocation2], 104
    %806 = vst [vmem:[%s805] sm:$0xff] %v804
    %v807 = vsel %vm54, %v753, %v758
    %s808 = scalar_lea.vmem [#allocation2], 56
    %809 = vst [vmem:[%s808] sm:$0xff] %v807
    %v810 = vsel %vm54, %v758, %v753
    %s811 = scalar_lea.vmem [#allocation2], 96
    %812 = vst [vmem:[%s811] sm:$0xff] %v810
    %v813 = vsel %vm54, %v754, %v757
    %s814 = scalar_lea.vmem [#allocation2], 64
    %815 = vst [vmem:[%s814] sm:$0xff] %v813
    %v816 = vsel %vm54, %v757, %v754
    %s817 = scalar_lea.vmem [#allocation2], 88
    %818 = vst [vmem:[%s817] sm:$0xff] %v816
    %v819 = vsel %vm54, %v755, %v756
    %s820 = scalar_lea.vmem [#allocation2], 72
    %821 = vst [vmem:[%s820] sm:$0xff] %v819
    %v822 = vsel %vm54, %v756, %v755
    %s823 = scalar_lea.vmem [#allocation2], 80
    %824 = vst [vmem:[%s823] sm:$0xff] %v822
    %v825 = vld [vmem:[%s4] sm:$0xff]
    %v826 = vld [vmem:[%s4 + $0x8] sm:$0xff]
    %v827 = vld [vmem:[%s4 + $0x10] sm:$0xff]
    %v828 = vld [vmem:[%s4 + $0x18] sm:$0xff]
    %v829 = vld [vmem:[#allocation2] sm:$0xff]
    %vm830 = vcmask 261120
    %v832 = vsel %vm830, 0.0, 0
    %834 = vmatprep.subr.mxu0 0.0
    %835 = vmatpush1.msra.mxu0 0.0
    %836 = vmatprep.subr.mxu0 0.0
    %837 = vmatpush1.msra.mxu0 0.0
    %838 = vmatprep.subr.mxu0 0.0
    %839 = vmatpush1.msra.mxu0 0.0
    %840 = vmatprep.subr.mxu0 0.0
    %841 = vmatpush1.msra.mxu0 0.0
    %842 = vmatprep.subr.mxu0 0.0
    %843 = vmatpush1.msra.mxu0 0.0
    %844 = vmatprep.subr.mxu0 0.0
    %845 = vmatpush1.msra.mxu0 0.0
    %846 = vmatprep.subr.mxu0 0.0
    %847 = vmatpush1.msra.mxu0 0.0
    %848 = vmatprep.subr.mxu0 0.0
    %849 = vmatpush1.msra.mxu0 0.0
    %850 = vmatprep.subr.mxu0 0.0
    %851 = vmatpush1.msra.mxu0 0.0
    %852 = vmatprep.subr.mxu0 0.0
    %853 = vmatpush1.msra.mxu0 0.0
    %854 = vmatprep.subr.mxu0 0.0
    %855 = vmatpush1.msra.mxu0 0.0
    %856 = vmatprep.subr.mxu0 0.0
    %857 = vmatpush1.msra.mxu0 0.0
    %858 = vmatprep.subr.mxu0 0.0
    %859 = vmatpush1.msra.mxu0 %v828
    %860 = vmatprep.subr.mxu0 0.0
    %861 = vmatpush1.msra.mxu0 %v827
    %862 = vmatprep.subr.mxu0 0.0
    %863 = vmatpush1.msra.mxu0 %v826
    %864 = vmatprep.subr.mxu0 0.0
    %865 = vmatpush1.msra.mxu0 %v825
    %866 = vmatprep.subr.mxu0 0.0
    %867 = vmatpush2.msra.mxu0 0.0
    %868 = vmatprep.subr.mxu0 0.0
    %869 = vmatpush2.msra.mxu0 0.0
    %870 = vmatprep.subr.mxu0 0.0
    %871 = vmatpush2.msra.mxu0 0.0
    %872 = vmatprep.subr.mxu0 0.0
    %873 = vmatpush2.msra.mxu0 0.0
    %874 = vmatprep.subr.mxu0 0.0
    %875 = vmatpush2.msra.mxu0 0.0
    %876 = vmatprep.subr.mxu0 0.0
    %877 = vmatpush2.msra.mxu0 0.0
    %878 = vmatprep.subr.mxu0 0.0
    %879 = vmatpush2.msra.mxu0 0.0
    %880 = vmatprep.subr.mxu0 0.0
    %881 = vmatpush2.msra.mxu0 0.0
    %882 = vmatprep.subr.mxu0 0.0
    %883 = vmatpush2.msra.mxu0 0.0
    %884 = vmatprep.subr.mxu0 0.0
    %885 = vmatpush2.msra.mxu0 0.0
    %886 = vmatprep.subr.mxu0 0.0
    %887 = vmatpush2.msra.mxu0 0.0
    %888 = vmatprep.subr.mxu0 0.0
    %889 = vmatpush2.msra.mxu0 0.0
    %890 = vmatprep.subr.mxu0 0.0
    %891 = vmatpush2.msra.mxu0 0.0
    %892 = vmatprep.subr.mxu0 0.0
    %893 = vmatpush2.msra.mxu0 0.0
    %894 = vmatprep.subr.mxu0 0.0
    %895 = vmatpush2.msra.mxu0 0.0
    %896 = vmatprep.subr.mxu0 0.0
    %897 = vmatpush2.msra.mxu0 0.0
    %898 = vmatprep.mubr.f32.mxu0 0.0
    %899 = vmatmul.mubr.f32.gmra.mxu0 %v832
    %v900 = vpop.f32.mrf.mxu0
    %v901 = vadd.f32 0.0, %v900
    %v902 = vpop.f32.mrf.mxu0
    %903 = vdwg.mxu0
    %v904 = vadd.f32 %v829, %v901
    %v905 = vxor.u32 %v904, 2147483648
    %v906 = vmul.f32 %v905, 1.442695
    %v907 = vpow.pop %v906
    %v908 = vadd.f32 %v907, 1.0
    %v909 = vrcp.pop %v908
    %v910 = vmul.f32 1.0, %v909
    %v911 = vtanh.pop %v904
    %v912 = vmul.f32 %v910, 0.0
    %914 = vrot.lane.b32.xlu0 %v911, 32
    %v915 = vpop.permute.xlu0 %914
    %v917 = vmul.f32 %v910, %v915
    %919 = vrot.lane.b32.xlu0 %v917, 32
    %v920 = vpop.permute.xlu0 %919
    %v922 = vadd.f32 %v912, %v920
    %v923 = vtanh.pop %v922
    %925 = vrot.lane.b32.xlu0 %v923, 32
    %v926 = vpop.permute.xlu0 %925
    %v928 = vmul.f32 %v910, %v926
    %930 = vrot.lane.b32.xlu0 %v928, 64
    %v931 = vpop.permute.xlu0 %930
    %vm933 = vcmask 130048
    %934 = vst.msk [vmem:[#allocation4] sm:$0xff] %vm933, %v931
    %s935 = scalar_lea.vmem [#allocation4], 152
    %vm936 = vcmask 261248
    %937 = vst.msk [vmem:[%s935] sm:$0xff] %vm936, %v931
    %v938 = vld [vmem:[%s772] sm:$0xff]
    %v939 = vsel %vm830, %v931, 0
    %941 = vmatprep.subr.mxu0 0.0
    %942 = vmatpush1.msra.mxu0 0.0
    %943 = vmatprep.subr.mxu0 0.0
    %944 = vmatpush1.msra.mxu0 0.0
    %945 = vmatprep.subr.mxu0 0.0
    %946 = vmatpush1.msra.mxu0 0.0
    %947 = vmatprep.subr.mxu0 0.0
    %948 = vmatpush1.msra.mxu0 0.0
    %949 = vmatprep.subr.mxu0 0.0
    %950 = vmatpush1.msra.mxu0 0.0
    %951 = vmatprep.subr.mxu0 0.0
    %952 = vmatpush1.msra.mxu0 0.0
    %953 = vmatprep.subr.mxu0 0.0
    %954 = vmatpush1.msra.mxu0 0.0
    %955 = vmatprep.subr.mxu0 0.0
    %956 = vmatpush1.msra.mxu0 0.0
    %957 = vmatprep.subr.mxu0 0.0
    %958 = vmatpush1.msra.mxu0 0.0
    %959 = vmatprep.subr.mxu0 0.0
    %960 = vmatpush1.msra.mxu0 0.0
    %961 = vmatprep.subr.mxu0 0.0
    %962 = vmatpush1.msra.mxu0 0.0
    %963 = vmatprep.subr.mxu0 0.0
    %964 = vmatpush1.msra.mxu0 0.0
    %965 = vmatprep.subr.mxu0 0.0
    %966 = vmatpush1.msra.mxu0 %v828
    %967 = vmatprep.subr.mxu0 0.0
    %968 = vmatpush1.msra.mxu0 %v827
    %969 = vmatprep.subr.mxu0 0.0
    %970 = vmatpush1.msra.mxu0 %v826
    %971 = vmatprep.subr.mxu0 0.0
    %972 = vmatpush1.msra.mxu0 %v825
    %973 = vmatprep.subr.mxu0 0.0
    %974 = vmatpush2.msra.mxu0 0.0
    %975 = vmatprep.subr.mxu0 0.0
    %976 = vmatpush2.msra.mxu0 0.0
    %977 = vmatprep.subr.mxu0 0.0
    %978 = vmatpush2.msra.mxu0 0.0
    %979 = vmatprep.subr.mxu0 0.0
    %980 = vmatpush2.msra.mxu0 0.0
    %981 = vmatprep.subr.mxu0 0.0
    %982 = vmatpush2.msra.mxu0 0.0
    %983 = vmatprep.subr.mxu0 0.0
    %984 = vmatpush2.msra.mxu0 0.0
    %985 = vmatprep.subr.mxu0 0.0
    %986 = vmatpush2.msra.mxu0 0.0
    %987 = vmatprep.subr.mxu0 0.0
    %988 = vmatpush2.msra.mxu0 0.0
    %989 = vmatprep.subr.mxu0 0.0
    %990 = vmatpush2.msra.mxu0 0.0
    %991 = vmatprep.subr.mxu0 0.0
    %992 = vmatpush2.msra.mxu0 0.0
    %993 = vmatprep.subr.mxu0 0.0
    %994 = vmatpush2.msra.mxu0 0.0
    %995 = vmatprep.subr.mxu0 0.0
    %996 = vmatpush2.msra.mxu0 0.0
    %997 = vmatprep.subr.mxu0 0.0
    %998 = vmatpush2.msra.mxu0 0.0
    %999 = vmatprep.subr.mxu0 0.0
    %1000 = vmatpush2.msra.mxu0 0.0
    %1001 = vmatprep.subr.mxu0 0.0
    %1002 = vmatpush2.msra.mxu0 0.0
    %1003 = vmatprep.subr.mxu0 0.0
    %1004 = vmatpush2.msra.mxu0 0.0
    %1005 = vmatprep.mubr.f32.mxu0 0.0
    %1006 = vmatmul.mubr.f32.gmra.mxu0 %v939
    %v1007 = vpop.f32.mrf.mxu0
    %v1008 = vadd.f32 0.0, %v1007
    %v1009 = vpop.f32.mrf.mxu0
    %1010 = vdwg.mxu0
    %v1011 = vadd.f32 %v938, %v1008
    %v1012 = vxor.u32 %v1011, 2147483648
    %v1013 = vmul.f32 %v1012, 1.442695
    %v1014 = vpow.pop %v1013
    %v1015 = vadd.f32 %v1014, 1.0
    %v1016 = vrcp.pop %v1015
    %v1017 = vmul.f32 1.0, %v1016
    %v1018 = vtanh.pop %v1011
    %v1019 = vmul.f32 %v1017, %v922
    %1021 = vrot.lane.b32.xlu0 %v1018, 32
    %v1022 = vpop.permute.xlu0 %1021
    %v1024 = vmul.f32 %v1017, %v1022
    %1026 = vrot.lane.b32.xlu0 %v1024, 32
    %v1027 = vpop.permute.xlu0 %1026
    %v1029 = vadd.f32 %v1019, %v1027
    %v1030 = vtanh.pop %v1029
    %1032 = vrot.lane.b32.xlu0 %v1030, 32
    %v1033 = vpop.permute.xlu0 %1032
    %v1035 = vmul.f32 %v1017, %v1033
    %1037 = vrot.lane.b32.xlu0 %v1035, 64
    %v1038 = vpop.permute.xlu0 %1037
    %s1040 = scalar_lea.vmem [#allocation4], 8
    %1041 = vst.msk [vmem:[%s1040] sm:$0xff] %vm933, %v1038
    %s1042 = scalar_lea.vmem [#allocation4], 144
    %1043 = vst.msk [vmem:[%s1042] sm:$0xff] %vm936, %v1038
    %v1044 = vld [vmem:[%s778] sm:$0xff]
    %v1045 = vsel %vm830, %v1038, 0
    %1047 = vmatprep.subr.mxu0 0.0
    %1048 = vmatpush1.msra.mxu0 0.0
    %1049 = vmatprep.subr.mxu0 0.0
    %1050 = vmatpush1.msra.mxu0 0.0
    %1051 = vmatprep.subr.mxu0 0.0
    %1052 = vmatpush1.msra.mxu0 0.0
    %1053 = vmatprep.subr.mxu0 0.0
    %1054 = vmatpush1.msra.mxu0 0.0
    %1055 = vmatprep.subr.mxu0 0.0
    %1056 = vmatpush1.msra.mxu0 0.0
    %1057 = vmatprep.subr.mxu0 0.0
    %1058 = vmatpush1.msra.mxu0 0.0
    %1059 = vmatprep.subr.mxu0 0.0
    %1060 = vmatpush1.msra.mxu0 0.0
    %1061 = vmatprep.subr.mxu0 0.0
    %1062 = vmatpush1.msra.mxu0 0.0
    %1063 = vmatprep.subr.mxu0 0.0
    %1064 = vmatpush1.msra.mxu0 0.0
    %1065 = vmatprep.subr.mxu0 0.0
    %1066 = vmatpush1.msra.mxu0 0.0
    %1067 = vmatprep.subr.mxu0 0.0
    %1068 = vmatpush1.msra.mxu0 0.0
    %1069 = vmatprep.subr.mxu0 0.0
    %1070 = vmatpush1.msra.mxu0 0.0
    %1071 = vmatprep.subr.mxu0 0.0
    %1072 = vmatpush1.msra.mxu0 %v828
    %1073 = vmatprep.subr.mxu0 0.0
    %1074 = vmatpush1.msra.mxu0 %v827
    %1075 = vmatprep.subr.mxu0 0.0
    %1076 = vmatpush1.msra.mxu0 %v826
    %1077 = vmatprep.subr.mxu0 0.0
    %1078 = vmatpush1.msra.mxu0 %v825
    %1079 = vmatprep.subr.mxu0 0.0
    %1080 = vmatpush2.msra.mxu0 0.0
    %1081 = vmatprep.subr.mxu0 0.0
    %1082 = vmatpush2.msra.mxu0 0.0
    %1083 = vmatprep.subr.mxu0 0.0
    %1084 = vmatpush2.msra.mxu0 0.0
    %1085 = vmatprep.subr.mxu0 0.0
    %1086 = vmatpush2.msra.mxu0 0.0
    %1087 = vmatprep.subr.mxu0 0.0
    %1088 = vmatpush2.msra.mxu0 0.0
    %1089 = vmatprep.subr.mxu0 0.0
    %1090 = vmatpush2.msra.mxu0 0.0
    %1091 = vmatprep.subr.mxu0 0.0
    %1092 = vmatpush2.msra.mxu0 0.0
    %1093 = vmatprep.subr.mxu0 0.0
    %1094 = vmatpush2.msra.mxu0 0.0
    %1095 = vmatprep.subr.mxu0 0.0
    %1096 = vmatpush2.msra.mxu0 0.0
    %1097 = vmatprep.subr.mxu0 0.0
    %1098 = vmatpush2.msra.mxu0 0.0
    %1099 = vmatprep.subr.mxu0 0.0
    %1100 = vmatpush2.msra.mxu0 0.0
    %1101 = vmatprep.subr.mxu0 0.0
    %1102 = vmatpush2.msra.mxu0 0.0
    %1103 = vmatprep.subr.mxu0 0.0
    %1104 = vmatpush2.msra.mxu0 0.0
    %1105 = vmatprep.subr.mxu0 0.0
    %1106 = vmatpush2.msra.mxu0 0.0
    %1107 = vmatprep.subr.mxu0 0.0
    %1108 = vmatpush2.msra.mxu0 0.0
    %1109 = vmatprep.subr.mxu0 0.0
    %1110 = vmatpush2.msra.mxu0 0.0
    %1111 = vmatprep.mubr.f32.mxu0 0.0
    %1112 = vmatmul.mubr.f32.gmra.mxu0 %v1045
    %v1113 = vpop.f32.mrf.mxu0
    %v1114 = vadd.f32 0.0, %v1113
    %v1115 = vpop.f32.mrf.mxu0
    %1116 = vdwg.mxu0
    %v1117 = vadd.f32 %v1044, %v1114
    %v1118 = vxor.u32 %v1117, 2147483648
    %v1119 = vmul.f32 %v1118, 1.442695
    %v1120 = vpow.pop %v1119
    %v1121 = vadd.f32 %v1120, 1.0
    %v1122 = vrcp.pop %v1121
    %v1123 = vmul.f32 1.0, %v1122
    %v1124 = vtanh.pop %v1117
    %v1125 = vmul.f32 %v1123, %v1029
    %1127 = vrot.lane.b32.xlu0 %v1124, 32
    %v1128 = vpop.permute.xlu0 %1127
    %v1130 = vmul.f32 %v1123, %v1128
    %1132 = vrot.lane.b32.xlu0 %v1130, 32
    %v1133 = vpop.permute.xlu0 %1132
    %v1135 = vadd.f32 %v1125, %v1133
    %v1136 = vtanh.pop %v1135
    %1138 = vrot.lane.b32.xlu0 %v1136, 32
    %v1139 = vpop.permute.xlu0 %1138
    %v1141 = vmul.f32 %v1123, %v1139
    %1143 = vrot.lane.b32.xlu0 %v1141, 64
    %v1144 = vpop.permute.xlu0 %1143
    %s1146 = scalar_lea.vmem [#allocation4], 16
    %1147 = vst.msk [vmem:[%s1146] sm:$0xff] %vm933, %v1144
    %s1148 = scalar_lea.vmem [#allocation4], 136
    %1149 = vst.msk [vmem:[%s1148] sm:$0xff] %vm936, %v1144
    %v1150 = vld [vmem:[%s784] sm:$0xff]
    %v1151 = vsel %vm830, %v1144, 0
    %1153 = vmatprep.subr.mxu0 0.0
    %1154 = vmatpush1.msra.mxu0 0.0
    %1155 = vmatprep.subr.mxu0 0.0
    %1156 = vmatpush1.msra.mxu0 0.0
    %1157 = vmatprep.subr.mxu0 0.0
    %1158 = vmatpush1.msra.mxu0 0.0
    %1159 = vmatprep.subr.mxu0 0.0
    %1160 = vmatpush1.msra.mxu0 0.0
    %1161 = vmatprep.subr.mxu0 0.0
    %1162 = vmatpush1.msra.mxu0 0.0
    %1163 = vmatprep.subr.mxu0 0.0
    %1164 = vmatpush1.msra.mxu0 0.0
    %1165 = vmatprep.subr.mxu0 0.0
    %1166 = vmatpush1.msra.mxu0 0.0
    %1167 = vmatprep.subr.mxu0 0.0
    %1168 = vmatpush1.msra.mxu0 0.0
    %1169 = vmatprep.subr.mxu0 0.0
    %1170 = vmatpush1.msra.mxu0 0.0
    %1171 = vmatprep.subr.mxu0 0.0
    %1172 = vmatpush1.msra.mxu0 0.0
    %1173 = vmatprep.subr.mxu0 0.0
    %1174 = vmatpush1.msra.mxu0 0.0
    %1175 = vmatprep.subr.mxu0 0.0
    %1176 = vmatpush1.msra.mxu0 0.0
    %1177 = vmatprep.subr.mxu0 0.0
    %1178 = vmatpush1.msra.mxu0 %v828
    %1179 = vmatprep.subr.mxu0 0.0
    %1180 = vmatpush1.msra.mxu0 %v827
    %1181 = vmatprep.subr.mxu0 0.0
    %1182 = vmatpush1.msra.mxu0 %v826
    %1183 = vmatprep.subr.mxu0 0.0
    %1184 = vmatpush1.msra.mxu0 %v825
    %1185 = vmatprep.subr.mxu0 0.0
    %1186 = vmatpush2.msra.mxu0 0.0
    %1187 = vmatprep.subr.mxu0 0.0
    %1188 = vmatpush2.msra.mxu0 0.0
    %1189 = vmatprep.subr.mxu0 0.0
    %1190 = vmatpush2.msra.mxu0 0.0
    %1191 = vmatprep.subr.mxu0 0.0
    %1192 = vmatpush2.msra.mxu0 0.0
    %1193 = vmatprep.subr.mxu0 0.0
    %1194 = vmatpush2.msra.mxu0 0.0
    %1195 = vmatprep.subr.mxu0 0.0
    %1196 = vmatpush2.msra.mxu0 0.0
    %1197 = vmatprep.subr.mxu0 0.0
    %1198 = vmatpush2.msra.mxu0 0.0
    %1199 = vmatprep.subr.mxu0 0.0
    %1200 = vmatpush2.msra.mxu0 0.0
    %1201 = vmatprep.subr.mxu0 0.0
    %1202 = vmatpush2.msra.mxu0 0.0
    %1203 = vmatprep.subr.mxu0 0.0
    %1204 = vmatpush2.msra.mxu0 0.0
    %1205 = vmatprep.subr.mxu0 0.0
    %1206 = vmatpush2.msra.mxu0 0.0
    %1207 = vmatprep.subr.mxu0 0.0
    %1208 = vmatpush2.msra.mxu0 0.0
    %1209 = vmatprep.subr.mxu0 0.0
    %1210 = vmatpush2.msra.mxu0 0.0
    %1211 = vmatprep.subr.mxu0 0.0
    %1212 = vmatpush2.msra.mxu0 0.0
    %1213 = vmatprep.subr.mxu0 0.0
    %1214 = vmatpush2.msra.mxu0 0.0
    %1215 = vmatprep.subr.mxu0 0.0
    %1216 = vmatpush2.msra.mxu0 0.0
    %1217 = vmatprep.mubr.f32.mxu0 0.0
    %1218 = vmatmul.mubr.f32.gmra.mxu0 %v1151
    %v1219 = vpop.f32.mrf.mxu0
    %v1220 = vadd.f32 0.0, %v1219
    %v1221 = vpop.f32.mrf.mxu0
    %1222 = vdwg.mxu0
    %v1223 = vadd.f32 %v1150, %v1220
    %v1224 = vxor.u32 %v1223, 2147483648
    %v1225 = vmul.f32 %v1224, 1.442695
    %v1226 = vpow.pop %v1225
    %v1227 = vadd.f32 %v1226, 1.0
    %v1228 = vrcp.pop %v1227
    %v1229 = vmul.f32 1.0, %v1228
    %v1230 = vtanh.pop %v1223
    %v1231 = vmul.f32 %v1229, %v1135
    %1233 = vrot.lane.b32.xlu0 %v1230, 32
    %v1234 = vpop.permute.xlu0 %1233
    %v1236 = vmul.f32 %v1229, %v1234
    %1238 = vrot.lane.b32.xlu0 %v1236, 32
    %v1239 = vpop.permute.xlu0 %1238
    %v1241 = vadd.f32 %v1231, %v1239
    %v1242 = vtanh.pop %v1241
    %1244 = vrot.lane.b32.xlu0 %v1242, 32
    %v1245 = vpop.permute.xlu0 %1244
    %v1247 = vmul.f32 %v1229, %v1245
    %1249 = vrot.lane.b32.xlu0 %v1247, 64
    %v1250 = vpop.permute.xlu0 %1249
    %s1252 = scalar_lea.vmem [#allocation4], 24
    %1253 = vst.msk [vmem:[%s1252] sm:$0xff] %vm933, %v1250
    %s1254 = scalar_lea.vmem [#allocation4], 128
    %1255 = vst.msk [vmem:[%s1254] sm:$0xff] %vm936, %v1250
    %v1256 = vld [vmem:[%s790] sm:$0xff]
    %v1257 = vsel %vm830, %v1250, 0
    %1259 = vmatprep.subr.mxu0 0.0
    %1260 = vmatpush1.msra.mxu0 0.0
    %1261 = vmatprep.subr.mxu0 0.0
    %1262 = vmatpush1.msra.mxu0 0.0
    %1263 = vmatprep.subr.mxu0 0.0
    %1264 = vmatpush1.msra.mxu0 0.0
    %1265 = vmatprep.subr.mxu0 0.0
    %1266 = vmatpush1.msra.mxu0 0.0
    %1267 = vmatprep.subr.mxu0 0.0
    %1268 = vmatpush1.msra.mxu0 0.0
    %1269 = vmatprep.subr.mxu0 0.0
    %1270 = vmatpush1.msra.mxu0 0.0
    %1271 = vmatprep.subr.mxu0 0.0
    %1272 = vmatpush1.msra.mxu0 0.0
    %1273 = vmatprep.subr.mxu0 0.0
    %1274 = vmatpush1.msra.mxu0 0.0
    %1275 = vmatprep.subr.mxu0 0.0
    %1276 = vmatpush1.msra.mxu0 0.0
    %1277 = vmatprep.subr.mxu0 0.0
    %1278 = vmatpush1.msra.mxu0 0.0
    %1279 = vmatprep.subr.mxu0 0.0
    %1280 = vmatpush1.msra.mxu0 0.0
    %1281 = vmatprep.subr.mxu0 0.0
    %1282 = vmatpush1.msra.mxu0 0.0
    %1283 = vmatprep.subr.mxu0 0.0
    %1284 = vmatpush1.msra.mxu0 %v828
    %1285 = vmatprep.subr.mxu0 0.0
    %1286 = vmatpush1.msra.mxu0 %v827
    %1287 = vmatprep.subr.mxu0 0.0
    %1288 = vmatpush1.msra.mxu0 %v826
    %1289 = vmatprep.subr.mxu0 0.0
    %1290 = vmatpush1.msra.mxu0 %v825
    %1291 = vmatprep.subr.mxu0 0.0
    %1292 = vmatpush2.msra.mxu0 0.0
    %1293 = vmatprep.subr.mxu0 0.0
    %1294 = vmatpush2.msra.mxu0 0.0
    %1295 = vmatprep.subr.mxu0 0.0
    %1296 = vmatpush2.msra.mxu0 0.0
    %1297 = vmatprep.subr.mxu0 0.0
    %1298 = vmatpush2.msra.mxu0 0.0
    %1299 = vmatprep.subr.mxu0 0.0
    %1300 = vmatpush2.msra.mxu0 0.0
    %1301 = vmatprep.subr.mxu0 0.0
    %1302 = vmatpush2.msra.mxu0 0.0
    %1303 = vmatprep.subr.mxu0 0.0
    %1304 = vmatpush2.msra.mxu0 0.0
    %1305 = vmatprep.subr.mxu0 0.0
    %1306 = vmatpush2.msra.mxu0 0.0
    %1307 = vmatprep.subr.mxu0 0.0
    %1308 = vmatpush2.msra.mxu0 0.0
    %1309 = vmatprep.subr.mxu0 0.0
    %1310 = vmatpush2.msra.mxu0 0.0
    %1311 = vmatprep.subr.mxu0 0.0
    %1312 = vmatpush2.msra.mxu0 0.0
    %1313 = vmatprep.subr.mxu0 0.0
    %1314 = vmatpush2.msra.mxu0 0.0
    %1315 = vmatprep.subr.mxu0 0.0
    %1316 = vmatpush2.msra.mxu0 0.0
    %1317 = vmatprep.subr.mxu0 0.0
    %1318 = vmatpush2.msra.mxu0 0.0
    %1319 = vmatprep.subr.mxu0 0.0
    %1320 = vmatpush2.msra.mxu0 0.0
    %1321 = vmatprep.subr.mxu0 0.0
    %1322 = vmatpush2.msra.mxu0 0.0
    %1323 = vmatprep.mubr.f32.mxu0 0.0
    %1324 = vmatmul.mubr.f32.gmra.mxu0 %v1257
    %v1325 = vpop.f32.mrf.mxu0
    %v1326 = vadd.f32 0.0, %v1325
    %v1327 = vpop.f32.mrf.mxu0
    %1328 = vdwg.mxu0
    %v1329 = vadd.f32 %v1256, %v1326
    %v1330 = vxor.u32 %v1329, 2147483648
    %v1331 = vmul.f32 %v1330, 1.442695
    %v1332 = vpow.pop %v1331
    %v1333 = vadd.f32 %v1332, 1.0
    %v1334 = vrcp.pop %v1333
    %v1335 = vmul.f32 1.0, %v1334
    %v1336 = vtanh.pop %v1329
    %v1337 = vmul.f32 %v1335, %v1241
    %1339 = vrot.lane.b32.xlu0 %v1336, 32
    %v1340 = vpop.permute.xlu0 %1339
    %v1342 = vmul.f32 %v1335, %v1340
    %1344 = vrot.lane.b32.xlu0 %v1342, 32
    %v1345 = vpop.permute.xlu0 %1344
    %v1347 = vadd.f32 %v1337, %v1345
    %v1348 = vtanh.pop %v1347
    %1350 = vrot.lane.b32.xlu0 %v1348, 32
    %v1351 = vpop.permute.xlu0 %1350
    %v1353 = vmul.f32 %v1335, %v1351
    %1355 = vrot.lane.b32.xlu0 %v1353, 64
    %v1356 = vpop.permute.xlu0 %1355
    %s1358 = scalar_lea.vmem [#allocation4], 32
    %1359 = vst.msk [vmem:[%s1358] sm:$0xff] %vm933, %v1356
    %s1360 = scalar_lea.vmem [#allocation4], 120
    %1361 = vst.msk [vmem:[%s1360] sm:$0xff] %vm936, %v1356
    %v1362 = vld [vmem:[%s796] sm:$0xff]
    %v1363 = vsel %vm830, %v1356, 0
    %1365 = vmatprep.subr.mxu0 0.0
    %1366 = vmatpush1.msra.mxu0 0.0
    %1367 = vmatprep.subr.mxu0 0.0
    %1368 = vmatpush1.msra.mxu0 0.0
    %1369 = vmatprep.subr.mxu0 0.0
    %1370 = vmatpush1.msra.mxu0 0.0
    %1371 = vmatprep.subr.mxu0 0.0
    %1372 = vmatpush1.msra.mxu0 0.0
    %1373 = vmatprep.subr.mxu0 0.0
    %1374 = vmatpush1.msra.mxu0 0.0
    %1375 = vmatprep.subr.mxu0 0.0
    %1376 = vmatpush1.msra.mxu0 0.0
    %1377 = vmatprep.subr.mxu0 0.0
    %1378 = vmatpush1.msra.mxu0 0.0
    %1379 = vmatprep.subr.mxu0 0.0
    %1380 = vmatpush1.msra.mxu0 0.0
    %1381 = vmatprep.subr.mxu0 0.0
    %1382 = vmatpush1.msra.mxu0 0.0
    %1383 = vmatprep.subr.mxu0 0.0
    %1384 = vmatpush1.msra.mxu0 0.0
    %1385 = vmatprep.subr.mxu0 0.0
    %1386 = vmatpush1.msra.mxu0 0.0
    %1387 = vmatprep.subr.mxu0 0.0
    %1388 = vmatpush1.msra.mxu0 0.0
    %1389 = vmatprep.subr.mxu0 0.0
    %1390 = vmatpush1.msra.mxu0 %v828
    %1391 = vmatprep.subr.mxu0 0.0
    %1392 = vmatpush1.msra.mxu0 %v827
    %1393 = vmatprep.subr.mxu0 0.0
    %1394 = vmatpush1.msra.mxu0 %v826
    %1395 = vmatprep.subr.mxu0 0.0
    %1396 = vmatpush1.msra.mxu0 %v825
    %1397 = vmatprep.subr.mxu0 0.0
    %1398 = vmatpush2.msra.mxu0 0.0
    %1399 = vmatprep.subr.mxu0 0.0
    %1400 = vmatpush2.msra.mxu0 0.0
    %1401 = vmatprep.subr.mxu0 0.0
    %1402 = vmatpush2.msra.mxu0 0.0
    %1403 = vmatprep.subr.mxu0 0.0
    %1404 = vmatpush2.msra.mxu0 0.0
    %1405 = vmatprep.subr.mxu0 0.0
    %1406 = vmatpush2.msra.mxu0 0.0
    %1407 = vmatprep.subr.mxu0 0.0
    %1408 = vmatpush2.msra.mxu0 0.0
    %1409 = vmatprep.subr.mxu0 0.0
    %1410 = vmatpush2.msra.mxu0 0.0
    %1411 = vmatprep.subr.mxu0 0.0
    %1412 = vmatpush2.msra.mxu0 0.0
    %1413 = vmatprep.subr.mxu0 0.0
    %1414 = vmatpush2.msra.mxu0 0.0
    %1415 = vmatprep.subr.mxu0 0.0
    %1416 = vmatpush2.msra.mxu0 0.0
    %1417 = vmatprep.subr.mxu0 0.0
    %1418 = vmatpush2.msra.mxu0 0.0
    %1419 = vmatprep.subr.mxu0 0.0
    %1420 = vmatpush2.msra.mxu0 0.0
    %1421 = vmatprep.subr.mxu0 0.0
    %1422 = vmatpush2.msra.mxu0 0.0
    %1423 = vmatprep.subr.mxu0 0.0
    %1424 = vmatpush2.msra.mxu0 0.0
    %1425 = vmatprep.subr.mxu0 0.0
    %1426 = vmatpush2.msra.mxu0 0.0
    %1427 = vmatprep.subr.mxu0 0.0
    %1428 = vmatpush2.msra.mxu0 0.0
    %1429 = vmatprep.mubr.f32.mxu0 0.0
    %1430 = vmatmul.mubr.f32.gmra.mxu0 %v1363
    %v1431 = vpop.f32.mrf.mxu0
    %v1432 = vadd.f32 0.0, %v1431
    %v1433 = vpop.f32.mrf.mxu0
    %1434 = vdwg.mxu0
    %v1435 = vadd.f32 %v1362, %v1432
    %v1436 = vxor.u32 %v1435, 2147483648
    %v1437 = vmul.f32 %v1436, 1.442695
    %v1438 = vpow.pop %v1437
    %v1439 = vadd.f32 %v1438, 1.0
    %v1440 = vrcp.pop %v1439
    %v1441 = vmul.f32 1.0, %v1440
    %v1442 = vtanh.pop %v1435
    %v1443 = vmul.f32 %v1441, %v1347
    %1445 = vrot.lane.b32.xlu0 %v1442, 32
    %v1446 = vpop.permute.xlu0 %1445
    %v1448 = vmul.f32 %v1441, %v1446
    %1450 = vrot.lane.b32.xlu0 %v1448, 32
    %v1451 = vpop.permute.xlu0 %1450
    %v1453 = vadd.f32 %v1443, %v1451
    %v1454 = vtanh.pop %v1453
    %1456 = vrot.lane.b32.xlu0 %v1454, 32
    %v1457 = vpop.permute.xlu0 %1456
    %v1459 = vmul.f32 %v1441, %v1457
    %1461 = vrot.lane.b32.xlu0 %v1459, 64
    %v1462 = vpop.permute.xlu0 %1461
    %s1464 = scalar_lea.vmem [#allocation4], 40
    %1465 = vst.msk [vmem:[%s1464] sm:$0xff] %vm933, %v1462
    %s1466 = scalar_lea.vmem [#allocation4], 112
    %1467 = vst.msk [vmem:[%s1466] sm:$0xff] %vm936, %v1462
    %v1468 = vld [vmem:[%s802] sm:$0xff]
    %v1469 = vsel %vm830, %v1462, 0
    %1471 = vmatprep.subr.mxu0 0.0
    %1472 = vmatpush1.msra.mxu0 0.0
    %1473 = vmatprep.subr.mxu0 0.0
    %1474 = vmatpush1.msra.mxu0 0.0
    %1475 = vmatprep.subr.mxu0 0.0
    %1476 = vmatpush1.msra.mxu0 0.0
    %1477 = vmatprep.subr.mxu0 0.0
    %1478 = vmatpush1.msra.mxu0 0.0
    %1479 = vmatprep.subr.mxu0 0.0
    %1480 = vmatpush1.msra.mxu0 0.0
    %1481 = vmatprep.subr.mxu0 0.0
    %1482 = vmatpush1.msra.mxu0 0.0
    %1483 = vmatprep.subr.mxu0 0.0
    %1484 = vmatpush1.msra.mxu0 0.0
    %1485 = vmatprep.subr.mxu0 0.0
    %1486 = vmatpush1.msra.mxu0 0.0
    %1487 = vmatprep.subr.mxu0 0.0
    %1488 = vmatpush1.msra.mxu0 0.0
    %1489 = vmatprep.subr.mxu0 0.0
    %1490 = vmatpush1.msra.mxu0 0.0
    %1491 = vmatprep.subr.mxu0 0.0
    %1492 = vmatpush1.msra.mxu0 0.0
    %1493 = vmatprep.subr.mxu0 0.0
    %1494 = vmatpush1.msra.mxu0 0.0
    %1495 = vmatprep.subr.mxu0 0.0
    %1496 = vmatpush1.msra.mxu0 %v828
    %1497 = vmatprep.subr.mxu0 0.0
    %1498 = vmatpush1.msra.mxu0 %v827
    %1499 = vmatprep.subr.mxu0 0.0
    %1500 = vmatpush1.msra.mxu0 %v826
    %1501 = vmatprep.subr.mxu0 0.0
    %1502 = vmatpush1.msra.mxu0 %v825
    %1503 = vmatprep.subr.mxu0 0.0
    %1504 = vmatpush2.msra.mxu0 0.0
    %1505 = vmatprep.subr.mxu0 0.0
    %1506 = vmatpush2.msra.mxu0 0.0
    %1507 = vmatprep.subr.mxu0 0.0
    %1508 = vmatpush2.msra.mxu0 0.0
    %1509 = vmatprep.subr.mxu0 0.0
    %1510 = vmatpush2.msra.mxu0 0.0
    %1511 = vmatprep.subr.mxu0 0.0
    %1512 = vmatpush2.msra.mxu0 0.0
    %1513 = vmatprep.subr.mxu0 0.0
    %1514 = vmatpush2.msra.mxu0 0.0
    %1515 = vmatprep.subr.mxu0 0.0
    %1516 = vmatpush2.msra.mxu0 0.0
    %1517 = vmatprep.subr.mxu0 0.0
    %1518 = vmatpush2.msra.mxu0 0.0
    %1519 = vmatprep.subr.mxu0 0.0
    %1520 = vmatpush2.msra.mxu0 0.0
    %1521 = vmatprep.subr.mxu0 0.0
    %1522 = vmatpush2.msra.mxu0 0.0
    %1523 = vmatprep.subr.mxu0 0.0
    %1524 = vmatpush2.msra.mxu0 0.0
    %1525 = vmatprep.subr.mxu0 0.0
    %1526 = vmatpush2.msra.mxu0 0.0
    %1527 = vmatprep.subr.mxu0 0.0
    %1528 = vmatpush2.msra.mxu0 0.0
    %1529 = vmatprep.subr.mxu0 0.0
    %1530 = vmatpush2.msra.mxu0 0.0
    %1531 = vmatprep.subr.mxu0 0.0
    %1532 = vmatpush2.msra.mxu0 0.0
    %1533 = vmatprep.subr.mxu0 0.0
    %1534 = vmatpush2.msra.mxu0 0.0
    %1535 = vmatprep.mubr.f32.mxu0 0.0
    %1536 = vmatmul.mubr.f32.gmra.mxu0 %v1469
    %v1537 = vpop.f32.mrf.mxu0
    %v1538 = vadd.f32 0.0, %v1537
    %v1539 = vpop.f32.mrf.mxu0
    %1540 = vdwg.mxu0
    %v1541 = vadd.f32 %v1468, %v1538
    %v1542 = vxor.u32 %v1541, 2147483648
    %v1543 = vmul.f32 %v1542, 1.442695
    %v1544 = vpow.pop %v1543
    %v1545 = vadd.f32 %v1544, 1.0
    %v1546 = vrcp.pop %v1545
    %v1547 = vmul.f32 1.0, %v1546
    %v1548 = vtanh.pop %v1541
    %v1549 = vmul.f32 %v1547, %v1453
    %1551 = vrot.lane.b32.xlu0 %v1548, 32
    %v1552 = vpop.permute.xlu0 %1551
    %v1554 = vmul.f32 %v1547, %v1552
    %1556 = vrot.lane.b32.xlu0 %v1554, 32
    %v1557 = vpop.permute.xlu0 %1556
    %v1559 = vadd.f32 %v1549, %v1557
    %v1560 = vtanh.pop %v1559
    %1562 = vrot.lane.b32.xlu0 %v1560, 32
    %v1563 = vpop.permute.xlu0 %1562
    %v1565 = vmul.f32 %v1547, %v1563
    %1567 = vrot.lane.b32.xlu0 %v1565, 64
    %v1568 = vpop.permute.xlu0 %1567
    %s1570 = scalar_lea.vmem [#allocation4], 48
    %1571 = vst.msk [vmem:[%s1570] sm:$0xff] %vm933, %v1568
    %s1572 = scalar_lea.vmem [#allocation4], 104
    %1573 = vst.msk [vmem:[%s1572] sm:$0xff] %vm936, %v1568
    %v1574 = vld [vmem:[%s808] sm:$0xff]
    %v1575 = vsel %vm830, %v1568, 0
    %1577 = vmatprep.subr.mxu0 0.0
    %1578 = vmatpush1.msra.mxu0 0.0
    %1579 = vmatprep.subr.mxu0 0.0
    %1580 = vmatpush1.msra.mxu0 0.0
    %1581 = vmatprep.subr.mxu0 0.0
    %1582 = vmatpush1.msra.mxu0 0.0
    %1583 = vmatprep.subr.mxu0 0.0
    %1584 = vmatpush1.msra.mxu0 0.0
    %1585 = vmatprep.subr.mxu0 0.0
    %1586 = vmatpush1.msra.mxu0 0.0
    %1587 = vmatprep.subr.mxu0 0.0
    %1588 = vmatpush1.msra.mxu0 0.0
    %1589 = vmatprep.subr.mxu0 0.0
    %1590 = vmatpush1.msra.mxu0 0.0
    %1591 = vmatprep.subr.mxu0 0.0
    %1592 = vmatpush1.msra.mxu0 0.0
    %1593 = vmatprep.subr.mxu0 0.0
    %1594 = vmatpush1.msra.mxu0 0.0
    %1595 = vmatprep.subr.mxu0 0.0
    %1596 = vmatpush1.msra.mxu0 0.0
    %1597 = vmatprep.subr.mxu0 0.0
    %1598 = vmatpush1.msra.mxu0 0.0
    %1599 = vmatprep.subr.mxu0 0.0
    %1600 = vmatpush1.msra.mxu0 0.0
    %1601 = vmatprep.subr.mxu0 0.0
    %1602 = vmatpush1.msra.mxu0 %v828
    %1603 = vmatprep.subr.mxu0 0.0
    %1604 = vmatpush1.msra.mxu0 %v827
    %1605 = vmatprep.subr.mxu0 0.0
    %1606 = vmatpush1.msra.mxu0 %v826
    %1607 = vmatprep.subr.mxu0 0.0
    %1608 = vmatpush1.msra.mxu0 %v825
    %1609 = vmatprep.subr.mxu0 0.0
    %1610 = vmatpush2.msra.mxu0 0.0
    %1611 = vmatprep.subr.mxu0 0.0
    %1612 = vmatpush2.msra.mxu0 0.0
    %1613 = vmatprep.subr.mxu0 0.0
    %1614 = vmatpush2.msra.mxu0 0.0
    %1615 = vmatprep.subr.mxu0 0.0
    %1616 = vmatpush2.msra.mxu0 0.0
    %1617 = vmatprep.subr.mxu0 0.0
    %1618 = vmatpush2.msra.mxu0 0.0
    %1619 = vmatprep.subr.mxu0 0.0
    %1620 = vmatpush2.msra.mxu0 0.0
    %1621 = vmatprep.subr.mxu0 0.0
    %1622 = vmatpush2.msra.mxu0 0.0
    %1623 = vmatprep.subr.mxu0 0.0
    %1624 = vmatpush2.msra.mxu0 0.0
    %1625 = vmatprep.subr.mxu0 0.0
    %1626 = vmatpush2.msra.mxu0 0.0
    %1627 = vmatprep.subr.mxu0 0.0
    %1628 = vmatpush2.msra.mxu0 0.0
    %1629 = vmatprep.subr.mxu0 0.0
    %1630 = vmatpush2.msra.mxu0 0.0
    %1631 = vmatprep.subr.mxu0 0.0
    %1632 = vmatpush2.msra.mxu0 0.0
    %1633 = vmatprep.subr.mxu0 0.0
    %1634 = vmatpush2.msra.mxu0 0.0
    %1635 = vmatprep.subr.mxu0 0.0
    %1636 = vmatpush2.msra.mxu0 0.0
    %1637 = vmatprep.subr.mxu0 0.0
    %1638 = vmatpush2.msra.mxu0 0.0
    %1639 = vmatprep.subr.mxu0 0.0
    %1640 = vmatpush2.msra.mxu0 0.0
    %1641 = vmatprep.mubr.f32.mxu0 0.0
    %1642 = vmatmul.mubr.f32.gmra.mxu0 %v1575
    %v1643 = vpop.f32.mrf.mxu0
    %v1644 = vadd.f32 0.0, %v1643
    %v1645 = vpop.f32.mrf.mxu0
    %1646 = vdwg.mxu0
    %v1647 = vadd.f32 %v1574, %v1644
    %v1648 = vxor.u32 %v1647, 2147483648
    %v1649 = vmul.f32 %v1648, 1.442695
    %v1650 = vpow.pop %v1649
    %v1651 = vadd.f32 %v1650, 1.0
    %v1652 = vrcp.pop %v1651
    %v1653 = vmul.f32 1.0, %v1652
    %v1654 = vtanh.pop %v1647
    %v1655 = vmul.f32 %v1653, %v1559
    %1657 = vrot.lane.b32.xlu0 %v1654, 32
    %v1658 = vpop.permute.xlu0 %1657
    %v1660 = vmul.f32 %v1653, %v1658
    %1662 = vrot.lane.b32.xlu0 %v1660, 32
    %v1663 = vpop.permute.xlu0 %1662
    %v1665 = vadd.f32 %v1655, %v1663
    %v1666 = vtanh.pop %v1665
    %1668 = vrot.lane.b32.xlu0 %v1666, 32
    %v1669 = vpop.permute.xlu0 %1668
    %v1671 = vmul.f32 %v1653, %v1669
    %1673 = vrot.lane.b32.xlu0 %v1671, 64
    %v1674 = vpop.permute.xlu0 %1673
    %s1676 = scalar_lea.vmem [#allocation4], 56
    %1677 = vst.msk [vmem:[%s1676] sm:$0xff] %vm933, %v1674
    %s1678 = scalar_lea.vmem [#allocation4], 96
    %1679 = vst.msk [vmem:[%s1678] sm:$0xff] %vm936, %v1674
    %v1680 = vld [vmem:[%s814] sm:$0xff]
    %v1681 = vsel %vm830, %v1674, 0
    %1683 = vmatprep.subr.mxu0 0.0
    %1684 = vmatpush1.msra.mxu0 0.0
    %1685 = vmatprep.subr.mxu0 0.0
    %1686 = vmatpush1.msra.mxu0 0.0
    %1687 = vmatprep.subr.mxu0 0.0
    %1688 = vmatpush1.msra.mxu0 0.0
    %1689 = vmatprep.subr.mxu0 0.0
    %1690 = vmatpush1.msra.mxu0 0.0
    %1691 = vmatprep.subr.mxu0 0.0
    %1692 = vmatpush1.msra.mxu0 0.0
    %1693 = vmatprep.subr.mxu0 0.0
    %1694 = vmatpush1.msra.mxu0 0.0
    %1695 = vmatprep.subr.mxu0 0.0
    %1696 = vmatpush1.msra.mxu0 0.0
    %1697 = vmatprep.subr.mxu0 0.0
    %1698 = vmatpush1.msra.mxu0 0.0
    %1699 = vmatprep.subr.mxu0 0.0
    %1700 = vmatpush1.msra.mxu0 0.0
    %1701 = vmatprep.subr.mxu0 0.0
    %1702 = vmatpush1.msra.mxu0 0.0
    %1703 = vmatprep.subr.mxu0 0.0
    %1704 = vmatpush1.msra.mxu0 0.0
    %1705 = vmatprep.subr.mxu0 0.0
    %1706 = vmatpush1.msra.mxu0 0.0
    %1707 = vmatprep.subr.mxu0 0.0
    %1708 = vmatpush1.msra.mxu0 %v828
    %1709 = vmatprep.subr.mxu0 0.0
    %1710 = vmatpush1.msra.mxu0 %v827
    %1711 = vmatprep.subr.mxu0 0.0
    %1712 = vmatpush1.msra.mxu0 %v826
    %1713 = vmatprep.subr.mxu0 0.0
    %1714 = vmatpush1.msra.mxu0 %v825
    %1715 = vmatprep.subr.mxu0 0.0
    %1716 = vmatpush2.msra.mxu0 0.0
    %1717 = vmatprep.subr.mxu0 0.0
    %1718 = vmatpush2.msra.mxu0 0.0
    %1719 = vmatprep.subr.mxu0 0.0
    %1720 = vmatpush2.msra.mxu0 0.0
    %1721 = vmatprep.subr.mxu0 0.0
    %1722 = vmatpush2.msra.mxu0 0.0
    %1723 = vmatprep.subr.mxu0 0.0
    %1724 = vmatpush2.msra.mxu0 0.0
    %1725 = vmatprep.subr.mxu0 0.0
    %1726 = vmatpush2.msra.mxu0 0.0
    %1727 = vmatprep.subr.mxu0 0.0
    %1728 = vmatpush2.msra.mxu0 0.0
    %1729 = vmatprep.subr.mxu0 0.0
    %1730 = vmatpush2.msra.mxu0 0.0
    %1731 = vmatprep.subr.mxu0 0.0
    %1732 = vmatpush2.msra.mxu0 0.0
    %1733 = vmatprep.subr.mxu0 0.0
    %1734 = vmatpush2.msra.mxu0 0.0
    %1735 = vmatprep.subr.mxu0 0.0
    %1736 = vmatpush2.msra.mxu0 0.0
    %1737 = vmatprep.subr.mxu0 0.0
    %1738 = vmatpush2.msra.mxu0 0.0
    %1739 = vmatprep.subr.mxu0 0.0
    %1740 = vmatpush2.msra.mxu0 0.0
    %1741 = vmatprep.subr.mxu0 0.0
    %1742 = vmatpush2.msra.mxu0 0.0
    %1743 = vmatprep.subr.mxu0 0.0
    %1744 = vmatpush2.msra.mxu0 0.0
    %1745 = vmatprep.subr.mxu0 0.0
    %1746 = vmatpush2.msra.mxu0 0.0
    %1747 = vmatprep.mubr.f32.mxu0 0.0
    %1748 = vmatmul.mubr.f32.gmra.mxu0 %v1681
    %v1749 = vpop.f32.mrf.mxu0
    %v1750 = vadd.f32 0.0, %v1749
    %v1751 = vpop.f32.mrf.mxu0
    %1752 = vdwg.mxu0
    %v1753 = vadd.f32 %v1680, %v1750
    %v1754 = vxor.u32 %v1753, 2147483648
    %v1755 = vmul.f32 %v1754, 1.442695
    %v1756 = vpow.pop %v1755
    %v1757 = vadd.f32 %v1756, 1.0
    %v1758 = vrcp.pop %v1757
    %v1759 = vmul.f32 1.0, %v1758
    %v1760 = vtanh.pop %v1753
    %v1761 = vmul.f32 %v1759, %v1665
    %1763 = vrot.lane.b32.xlu0 %v1760, 32
    %v1764 = vpop.permute.xlu0 %1763
    %v1766 = vmul.f32 %v1759, %v1764
    %1768 = vrot.lane.b32.xlu0 %v1766, 32
    %v1769 = vpop.permute.xlu0 %1768
    %v1771 = vadd.f32 %v1761, %v1769
    %v1772 = vtanh.pop %v1771
    %1774 = vrot.lane.b32.xlu0 %v1772, 32
    %v1775 = vpop.permute.xlu0 %1774
    %v1777 = vmul.f32 %v1759, %v1775
    %1779 = vrot.lane.b32.xlu0 %v1777, 64
    %v1780 = vpop.permute.xlu0 %1779
    %s1782 = scalar_lea.vmem [#allocation4], 64
    %1783 = vst.msk [vmem:[%s1782] sm:$0xff] %vm933, %v1780
    %s1784 = scalar_lea.vmem [#allocation4], 88
    %1785 = vst.msk [vmem:[%s1784] sm:$0xff] %vm936, %v1780
    %v1786 = vld [vmem:[%s820] sm:$0xff]
    %v1787 = vsel %vm830, %v1780, 0
    %1789 = vmatprep.subr.mxu0 0.0
    %1790 = vmatpush1.msra.mxu0 0.0
    %1791 = vmatprep.subr.mxu0 0.0
    %1792 = vmatpush1.msra.mxu0 0.0
    %1793 = vmatprep.subr.mxu0 0.0
    %1794 = vmatpush1.msra.mxu0 0.0
    %1795 = vmatprep.subr.mxu0 0.0
    %1796 = vmatpush1.msra.mxu0 0.0
    %1797 = vmatprep.subr.mxu0 0.0
    %1798 = vmatpush1.msra.mxu0 0.0
    %1799 = vmatprep.subr.mxu0 0.0
    %1800 = vmatpush1.msra.mxu0 0.0
    %1801 = vmatprep.subr.mxu0 0.0
    %1802 = vmatpush1.msra.mxu0 0.0
    %1803 = vmatprep.subr.mxu0 0.0
    %1804 = vmatpush1.msra.mxu0 0.0
    %1805 = vmatprep.subr.mxu0 0.0
    %1806 = vmatpush1.msra.mxu0 0.0
    %1807 = vmatprep.subr.mxu0 0.0
    %1808 = vmatpush1.msra.mxu0 0.0
    %1809 = vmatprep.subr.mxu0 0.0
    %1810 = vmatpush1.msra.mxu0 0.0
    %1811 = vmatprep.subr.mxu0 0.0
    %1812 = vmatpush1.msra.mxu0 0.0
    %1813 = vmatprep.subr.mxu0 0.0
    %1814 = vmatpush1.msra.mxu0 %v828
    %1815 = vmatprep.subr.mxu0 0.0
    %1816 = vmatpush1.msra.mxu0 %v827
    %1817 = vmatprep.subr.mxu0 0.0
    %1818 = vmatpush1.msra.mxu0 %v826
    %1819 = vmatprep.subr.mxu0 0.0
    %1820 = vmatpush1.msra.mxu0 %v825
    %1821 = vmatprep.subr.mxu0 0.0
    %1822 = vmatpush2.msra.mxu0 0.0
    %1823 = vmatprep.subr.mxu0 0.0
    %1824 = vmatpush2.msra.mxu0 0.0
    %1825 = vmatprep.subr.mxu0 0.0
    %1826 = vmatpush2.msra.mxu0 0.0
    %1827 = vmatprep.subr.mxu0 0.0
    %1828 = vmatpush2.msra.mxu0 0.0
    %1829 = vmatprep.subr.mxu0 0.0
    %1830 = vmatpush2.msra.mxu0 0.0
    %1831 = vmatprep.subr.mxu0 0.0
    %1832 = vmatpush2.msra.mxu0 0.0
    %1833 = vmatprep.subr.mxu0 0.0
    %1834 = vmatpush2.msra.mxu0 0.0
    %1835 = vmatprep.subr.mxu0 0.0
    %1836 = vmatpush2.msra.mxu0 0.0
    %1837 = vmatprep.subr.mxu0 0.0
    %1838 = vmatpush2.msra.mxu0 0.0
    %1839 = vmatprep.subr.mxu0 0.0
    %1840 = vmatpush2.msra.mxu0 0.0
    %1841 = vmatprep.subr.mxu0 0.0
    %1842 = vmatpush2.msra.mxu0 0.0
    %1843 = vmatprep.subr.mxu0 0.0
    %1844 = vmatpush2.msra.mxu0 0.0
    %1845 = vmatprep.subr.mxu0 0.0
    %1846 = vmatpush2.msra.mxu0 0.0
    %1847 = vmatprep.subr.mxu0 0.0
    %1848 = vmatpush2.msra.mxu0 0.0
    %1849 = vmatprep.subr.mxu0 0.0
    %1850 = vmatpush2.msra.mxu0 0.0
    %1851 = vmatprep.subr.mxu0 0.0
    %1852 = vmatpush2.msra.mxu0 0.0
    %1853 = vmatprep.mubr.f32.mxu0 0.0
    %1854 = vmatmul.mubr.f32.gmra.mxu0 %v1787
    %v1855 = vpop.f32.mrf.mxu0
    %v1856 = vadd.f32 0.0, %v1855
    %v1857 = vpop.f32.mrf.mxu0
    %1858 = vdwg.mxu0
    %v1859 = vadd.f32 %v1786, %v1856
    %v1860 = vxor.u32 %v1859, 2147483648
    %v1861 = vmul.f32 %v1860, 1.442695
    %v1862 = vpow.pop %v1861
    %v1863 = vadd.f32 %v1862, 1.0
    %v1864 = vrcp.pop %v1863
    %v1865 = vmul.f32 1.0, %v1864
    %v1866 = vtanh.pop %v1859
    %v1867 = vmul.f32 %v1865, %v1771
    %1869 = vrot.lane.b32.xlu0 %v1866, 32
    %v1870 = vpop.permute.xlu0 %1869
    %v1872 = vmul.f32 %v1865, %v1870
    %1874 = vrot.lane.b32.xlu0 %v1872, 32
    %v1875 = vpop.permute.xlu0 %1874
    %v1877 = vadd.f32 %v1867, %v1875
    %v1878 = vtanh.pop %v1877
    %1880 = vrot.lane.b32.xlu0 %v1878, 32
    %v1881 = vpop.permute.xlu0 %1880
    %v1883 = vmul.f32 %v1865, %v1881
    %1885 = vrot.lane.b32.xlu0 %v1883, 64
    %v1886 = vpop.permute.xlu0 %1885
    %s1888 = scalar_lea.vmem [#allocation4], 72
    %1889 = vst.msk [vmem:[%s1888] sm:$0xff] %vm933, %v1886
    %s1890 = scalar_lea.vmem [#allocation4], 80
    %1891 = vst.msk [vmem:[%s1890] sm:$0xff] %vm936, %v1886
    %v1892 = vld [vmem:[%s823] sm:$0xff]
    %v1893 = vsel %vm830, %v1886, 0
    %1895 = vmatprep.subr.mxu0 0.0
    %1896 = vmatpush1.msra.mxu0 0.0
    %1897 = vmatprep.subr.mxu0 0.0
    %1898 = vmatpush1.msra.mxu0 0.0
    %1899 = vmatprep.subr.mxu0 0.0
    %1900 = vmatpush1.msra.mxu0 0.0
    %1901 = vmatprep.subr.mxu0 0.0
    %1902 = vmatpush1.msra.mxu0 0.0
    %1903 = vmatprep.subr.mxu0 0.0
    %1904 = vmatpush1.msra.mxu0 0.0
    %1905 = vmatprep.subr.mxu0 0.0
    %1906 = vmatpush1.msra.mxu0 0.0
    %1907 = vmatprep.subr.mxu0 0.0
    %1908 = vmatpush1.msra.mxu0 0.0
    %1909 = vmatprep.subr.mxu0 0.0
    %1910 = vmatpush1.msra.mxu0 0.0
    %1911 = vmatprep.subr.mxu0 0.0
    %1912 = vmatpush1.msra.mxu0 0.0
    %1913 = vmatprep.subr.mxu0 0.0
    %1914 = vmatpush1.msra.mxu0 0.0
    %1915 = vmatprep.subr.mxu0 0.0
    %1916 = vmatpush1.msra.mxu0 0.0
    %1917 = vmatprep.subr.mxu0 0.0
    %1918 = vmatpush1.msra.mxu0 0.0
    %1919 = vmatprep.subr.mxu0 0.0
    %1920 = vmatpush1.msra.mxu0 %v828
    %1921 = vmatprep.subr.mxu0 0.0
    %1922 = vmatpush1.msra.mxu0 %v827
    %1923 = vmatprep.subr.mxu0 0.0
    %1924 = vmatpush1.msra.mxu0 %v826
    %1925 = vmatprep.subr.mxu0 0.0
    %1926 = vmatpush1.msra.mxu0 %v825
    %1927 = vmatprep.subr.mxu0 0.0
    %1928 = vmatpush2.msra.mxu0 0.0
    %1929 = vmatprep.subr.mxu0 0.0
    %1930 = vmatpush2.msra.mxu0 0.0
    %1931 = vmatprep.subr.mxu0 0.0
    %1932 = vmatpush2.msra.mxu0 0.0
    %1933 = vmatprep.subr.mxu0 0.0
    %1934 = vmatpush2.msra.mxu0 0.0
    %1935 = vmatprep.subr.mxu0 0.0
    %1936 = vmatpush2.msra.mxu0 0.0
    %1937 = vmatprep.subr.mxu0 0.0
    %1938 = vmatpush2.msra.mxu0 0.0
    %1939 = vmatprep.subr.mxu0 0.0
    %1940 = vmatpush2.msra.mxu0 0.0
    %1941 = vmatprep.subr.mxu0 0.0
    %1942 = vmatpush2.msra.mxu0 0.0
    %1943 = vmatprep.subr.mxu0 0.0
    %1944 = vmatpush2.msra.mxu0 0.0
    %1945 = vmatprep.subr.mxu0 0.0
    %1946 = vmatpush2.msra.mxu0 0.0
    %1947 = vmatprep.subr.mxu0 0.0
    %1948 = vmatpush2.msra.mxu0 0.0
    %1949 = vmatprep.subr.mxu0 0.0
    %1950 = vmatpush2.msra.mxu0 0.0
    %1951 = vmatprep.subr.mxu0 0.0
    %1952 = vmatpush2.msra.mxu0 0.0
    %1953 = vmatprep.subr.mxu0 0.0
    %1954 = vmatpush2.msra.mxu0 0.0
    %1955 = vmatprep.subr.mxu0 0.0
    %1956 = vmatpush2.msra.mxu0 0.0
    %1957 = vmatprep.subr.mxu0 0.0
    %1958 = vmatpush2.msra.mxu0 0.0
    %1959 = vmatprep.mubr.f32.mxu0 0.0
    %1960 = vmatmul.mubr.f32.gmra.mxu0 %v1893
    %v1961 = vpop.f32.mrf.mxu0
    %v1962 = vadd.f32 0.0, %v1961
    %v1963 = vpop.f32.mrf.mxu0
    %1964 = vdwg.mxu0
    %v1965 = vadd.f32 %v1892, %v1962
    %v1966 = vxor.u32 %v1965, 2147483648
    %v1967 = vmul.f32 %v1966, 1.442695
    %v1968 = vpow.pop %v1967
    %v1969 = vadd.f32 %v1968, 1.0
    %v1970 = vrcp.pop %v1969
    %v1971 = vmul.f32 1.0, %v1970
    %v1972 = vtanh.pop %v1965
    %v1973 = vmul.f32 %v1971, %v1877
    %1975 = vrot.lane.b32.xlu0 %v1972, 32
    %v1976 = vpop.permute.xlu0 %1975
    %v1978 = vmul.f32 %v1971, %v1976
    %1980 = vrot.lane.b32.xlu0 %v1978, 32
    %v1981 = vpop.permute.xlu0 %1980
    %v1983 = vadd.f32 %v1973, %v1981
    %v1984 = vtanh.pop %v1983
    %1986 = vrot.lane.b32.xlu0 %v1984, 32
    %v1987 = vpop.permute.xlu0 %1986
    %v1989 = vmul.f32 %v1971, %v1987
    %1991 = vrot.lane.b32.xlu0 %v1989, 64
    %v1992 = vpop.permute.xlu0 %1991
    %1994 = vst.msk [vmem:[%s1890] sm:$0xff] %vm933, %v1992
    %1995 = vst.msk [vmem:[%s1888] sm:$0xff] %vm936, %v1992
    %v1996 = vld [vmem:[%s817] sm:$0xff]
    %v1997 = vsel %vm830, %v1992, 0
    %1999 = vmatprep.subr.mxu0 0.0
    %2000 = vmatpush1.msra.mxu0 0.0
    %2001 = vmatprep.subr.mxu0 0.0
    %2002 = vmatpush1.msra.mxu0 0.0
    %2003 = vmatprep.subr.mxu0 0.0
    %2004 = vmatpush1.msra.mxu0 0.0
    %2005 = vmatprep.subr.mxu0 0.0
    %2006 = vmatpush1.msra.mxu0 0.0
    %2007 = vmatprep.subr.mxu0 0.0
    %2008 = vmatpush1.msra.mxu0 0.0
    %2009 = vmatprep.subr.mxu0 0.0
    %2010 = vmatpush1.msra.mxu0 0.0
    %2011 = vmatprep.subr.mxu0 0.0
    %2012 = vmatpush1.msra.mxu0 0.0
    %2013 = vmatprep.subr.mxu0 0.0
    %2014 = vmatpush1.msra.mxu0 0.0
    %2015 = vmatprep.subr.mxu0 0.0
    %2016 = vmatpush1.msra.mxu0 0.0
    %2017 = vmatprep.subr.mxu0 0.0
    %2018 = vmatpush1.msra.mxu0 0.0
    %2019 = vmatprep.subr.mxu0 0.0
    %2020 = vmatpush1.msra.mxu0 0.0
    %2021 = vmatprep.subr.mxu0 0.0
    %2022 = vmatpush1.msra.mxu0 0.0
    %2023 = vmatprep.subr.mxu0 0.0
    %2024 = vmatpush1.msra.mxu0 %v828
    %2025 = vmatprep.subr.mxu0 0.0
    %2026 = vmatpush1.msra.mxu0 %v827
    %2027 = vmatprep.subr.mxu0 0.0
    %2028 = vmatpush1.msra.mxu0 %v826
    %2029 = vmatprep.subr.mxu0 0.0
    %2030 = vmatpush1.msra.mxu0 %v825
    %2031 = vmatprep.subr.mxu0 0.0
    %2032 = vmatpush2.msra.mxu0 0.0
    %2033 = vmatprep.subr.mxu0 0.0
    %2034 = vmatpush2.msra.mxu0 0.0
    %2035 = vmatprep.subr.mxu0 0.0
    %2036 = vmatpush2.msra.mxu0 0.0
    %2037 = vmatprep.subr.mxu0 0.0
    %2038 = vmatpush2.msra.mxu0 0.0
    %2039 = vmatprep.subr.mxu0 0.0
    %2040 = vmatpush2.msra.mxu0 0.0
    %2041 = vmatprep.subr.mxu0 0.0
    %2042 = vmatpush2.msra.mxu0 0.0
    %2043 = vmatprep.subr.mxu0 0.0
    %2044 = vmatpush2.msra.mxu0 0.0
    %2045 = vmatprep.subr.mxu0 0.0
    %2046 = vmatpush2.msra.mxu0 0.0
    %2047 = vmatprep.subr.mxu0 0.0
    %2048 = vmatpush2.msra.mxu0 0.0
    %2049 = vmatprep.subr.mxu0 0.0
    %2050 = vmatpush2.msra.mxu0 0.0
    %2051 = vmatprep.subr.mxu0 0.0
    %2052 = vmatpush2.msra.mxu0 0.0
    %2053 = vmatprep.subr.mxu0 0.0
    %2054 = vmatpush2.msra.mxu0 0.0
    %2055 = vmatprep.subr.mxu0 0.0
    %2056 = vmatpush2.msra.mxu0 0.0
    %2057 = vmatprep.subr.mxu0 0.0
    %2058 = vmatpush2.msra.mxu0 0.0
    %2059 = vmatprep.subr.mxu0 0.0
    %2060 = vmatpush2.msra.mxu0 0.0
    %2061 = vmatprep.subr.mxu0 0.0
    %2062 = vmatpush2.msra.mxu0 0.0
    %2063 = vmatprep.mubr.f32.mxu0 0.0
    %2064 = vmatmul.mubr.f32.gmra.mxu0 %v1997
    %v2065 = vpop.f32.mrf.mxu0
    %v2066 = vadd.f32 0.0, %v2065
    %v2067 = vpop.f32.mrf.mxu0
    %2068 = vdwg.mxu0
    %v2069 = vadd.f32 %v1996, %v2066
    %v2070 = vxor.u32 %v2069, 2147483648
    %v2071 = vmul.f32 %v2070, 1.442695
    %v2072 = vpow.pop %v2071
    %v2073 = vadd.f32 %v2072, 1.0
    %v2074 = vrcp.pop %v2073
    %v2075 = vmul.f32 1.0, %v2074
    %v2076 = vtanh.pop %v2069
    %v2077 = vmul.f32 %v2075, %v1983
    %2079 = vrot.lane.b32.xlu0 %v2076, 32
    %v2080 = vpop.permute.xlu0 %2079
    %v2082 = vmul.f32 %v2075, %v2080
    %2084 = vrot.lane.b32.xlu0 %v2082, 32
    %v2085 = vpop.permute.xlu0 %2084
    %v2087 = vadd.f32 %v2077, %v2085
    %v2088 = vtanh.pop %v2087
    %2090 = vrot.lane.b32.xlu0 %v2088, 32
    %v2091 = vpop.permute.xlu0 %2090
    %v2093 = vmul.f32 %v2075, %v2091
    %2095 = vrot.lane.b32.xlu0 %v2093, 64
    %v2096 = vpop.permute.xlu0 %2095
    %2098 = vst.msk [vmem:[%s1784] sm:$0xff] %vm933, %v2096
    %2099 = vst.msk [vmem:[%s1782] sm:$0xff] %vm936, %v2096
    %v2100 = vld [vmem:[%s811] sm:$0xff]
    %v2101 = vsel %vm830, %v2096, 0
    %2103 = vmatprep.subr.mxu0 0.0
    %2104 = vmatpush1.msra.mxu0 0.0
    %2105 = vmatprep.subr.mxu0 0.0
    %2106 = vmatpush1.msra.mxu0 0.0
    %2107 = vmatprep.subr.mxu0 0.0
    %2108 = vmatpush1.msra.mxu0 0.0
    %2109 = vmatprep.subr.mxu0 0.0
    %2110 = vmatpush1.msra.mxu0 0.0
    %2111 = vmatprep.subr.mxu0 0.0
    %2112 = vmatpush1.msra.mxu0 0.0
    %2113 = vmatprep.subr.mxu0 0.0
    %2114 = vmatpush1.msra.mxu0 0.0
    %2115 = vmatprep.subr.mxu0 0.0
    %2116 = vmatpush1.msra.mxu0 0.0
    %2117 = vmatprep.subr.mxu0 0.0
    %2118 = vmatpush1.msra.mxu0 0.0
    %2119 = vmatprep.subr.mxu0 0.0
    %2120 = vmatpush1.msra.mxu0 0.0
    %2121 = vmatprep.subr.mxu0 0.0
    %2122 = vmatpush1.msra.mxu0 0.0
    %2123 = vmatprep.subr.mxu0 0.0
    %2124 = vmatpush1.msra.mxu0 0.0
    %2125 = vmatprep.subr.mxu0 0.0
    %2126 = vmatpush1.msra.mxu0 0.0
    %2127 = vmatprep.subr.mxu0 0.0
    %2128 = vmatpush1.msra.mxu0 %v828
    %2129 = vmatprep.subr.mxu0 0.0
    %2130 = vmatpush1.msra.mxu0 %v827
    %2131 = vmatprep.subr.mxu0 0.0
    %2132 = vmatpush1.msra.mxu0 %v826
    %2133 = vmatprep.subr.mxu0 0.0
    %2134 = vmatpush1.msra.mxu0 %v825
    %2135 = vmatprep.subr.mxu0 0.0
    %2136 = vmatpush2.msra.mxu0 0.0
    %2137 = vmatprep.subr.mxu0 0.0
    %2138 = vmatpush2.msra.mxu0 0.0
    %2139 = vmatprep.subr.mxu0 0.0
    %2140 = vmatpush2.msra.mxu0 0.0
    %2141 = vmatprep.subr.mxu0 0.0
    %2142 = vmatpush2.msra.mxu0 0.0
    %2143 = vmatprep.subr.mxu0 0.0
    %2144 = vmatpush2.msra.mxu0 0.0
    %2145 = vmatprep.subr.mxu0 0.0
    %2146 = vmatpush2.msra.mxu0 0.0
    %2147 = vmatprep.subr.mxu0 0.0
    %2148 = vmatpush2.msra.mxu0 0.0
    %2149 = vmatprep.subr.mxu0 0.0
    %2150 = vmatpush2.msra.mxu0 0.0
    %2151 = vmatprep.subr.mxu0 0.0
    %2152 = vmatpush2.msra.mxu0 0.0
    %2153 = vmatprep.subr.mxu0 0.0
    %2154 = vmatpush2.msra.mxu0 0.0
    %2155 = vmatprep.subr.mxu0 0.0
    %2156 = vmatpush2.msra.mxu0 0.0
    %2157 = vmatprep.subr.mxu0 0.0
    %2158 = vmatpush2.msra.mxu0 0.0
    %2159 = vmatprep.subr.mxu0 0.0
    %2160 = vmatpush2.msra.mxu0 0.0
    %2161 = vmatprep.subr.mxu0 0.0
    %2162 = vmatpush2.msra.mxu0 0.0
    %2163 = vmatprep.subr.mxu0 0.0
    %2164 = vmatpush2.msra.mxu0 0.0
    %2165 = vmatprep.subr.mxu0 0.0
    %2166 = vmatpush2.msra.mxu0 0.0
    %2167 = vmatprep.mubr.f32.mxu0 0.0
    %2168 = vmatmul.mubr.f32.gmra.mxu0 %v2101
    %v2169 = vpop.f32.mrf.mxu0
    %v2170 = vadd.f32 0.0, %v2169
    %v2171 = vpop.f32.mrf.mxu0
    %2172 = vdwg.mxu0
    %v2173 = vadd.f32 %v2100, %v2170
    %v2174 = vxor.u32 %v2173, 2147483648
    %v2175 = vmul.f32 %v2174, 1.442695
    %v2176 = vpow.pop %v2175
    %v2177 = vadd.f32 %v2176, 1.0
    %v2178 = vrcp.pop %v2177
    %v2179 = vmul.f32 1.0, %v2178
    %v2180 = vtanh.pop %v2173
    %v2181 = vmul.f32 %v2179, %v2087
    %2183 = vrot.lane.b32.xlu0 %v2180, 32
    %v2184 = vpop.permute.xlu0 %2183
    %v2186 = vmul.f32 %v2179, %v2184
    %2188 = vrot.lane.b32.xlu0 %v2186, 32
    %v2189 = vpop.permute.xlu0 %2188
    %v2191 = vadd.f32 %v2181, %v2189
    %v2192 = vtanh.pop %v2191
    %2194 = vrot.lane.b32.xlu0 %v2192, 32
    %v2195 = vpop.permute.xlu0 %2194
    %v2197 = vmul.f32 %v2179, %v2195
    %2199 = vrot.lane.b32.xlu0 %v2197, 64
    %v2200 = vpop.permute.xlu0 %2199
    %2202 = vst.msk [vmem:[%s1678] sm:$0xff] %vm933, %v2200
    %2203 = vst.msk [vmem:[%s1676] sm:$0xff] %vm936, %v2200
    %v2204 = vld [vmem:[%s805] sm:$0xff]
    %v2205 = vsel %vm830, %v2200, 0
    %2207 = vmatprep.subr.mxu0 0.0
    %2208 = vmatpush1.msra.mxu0 0.0
    %2209 = vmatprep.subr.mxu0 0.0
    %2210 = vmatpush1.msra.mxu0 0.0
    %2211 = vmatprep.subr.mxu0 0.0
    %2212 = vmatpush1.msra.mxu0 0.0
    %2213 = vmatprep.subr.mxu0 0.0
    %2214 = vmatpush1.msra.mxu0 0.0
    %2215 = vmatprep.subr.mxu0 0.0
    %2216 = vmatpush1.msra.mxu0 0.0
    %2217 = vmatprep.subr.mxu0 0.0
    %2218 = vmatpush1.msra.mxu0 0.0
    %2219 = vmatprep.subr.mxu0 0.0
    %2220 = vmatpush1.msra.mxu0 0.0
    %2221 = vmatprep.subr.mxu0 0.0
    %2222 = vmatpush1.msra.mxu0 0.0
    %2223 = vmatprep.subr.mxu0 0.0
    %2224 = vmatpush1.msra.mxu0 0.0
    %2225 = vmatprep.subr.mxu0 0.0
    %2226 = vmatpush1.msra.mxu0 0.0
    %2227 = vmatprep.subr.mxu0 0.0
    %2228 = vmatpush1.msra.mxu0 0.0
    %2229 = vmatprep.subr.mxu0 0.0
    %2230 = vmatpush1.msra.mxu0 0.0
    %2231 = vmatprep.subr.mxu0 0.0
    %2232 = vmatpush1.msra.mxu0 %v828
    %2233 = vmatprep.subr.mxu0 0.0
    %2234 = vmatpush1.msra.mxu0 %v827
    %2235 = vmatprep.subr.mxu0 0.0
    %2236 = vmatpush1.msra.mxu0 %v826
    %2237 = vmatprep.subr.mxu0 0.0
    %2238 = vmatpush1.msra.mxu0 %v825
    %2239 = vmatprep.subr.mxu0 0.0
    %2240 = vmatpush2.msra.mxu0 0.0
    %2241 = vmatprep.subr.mxu0 0.0
    %2242 = vmatpush2.msra.mxu0 0.0
    %2243 = vmatprep.subr.mxu0 0.0
    %2244 = vmatpush2.msra.mxu0 0.0
    %2245 = vmatprep.subr.mxu0 0.0
    %2246 = vmatpush2.msra.mxu0 0.0
    %2247 = vmatprep.subr.mxu0 0.0
    %2248 = vmatpush2.msra.mxu0 0.0
    %2249 = vmatprep.subr.mxu0 0.0
    %2250 = vmatpush2.msra.mxu0 0.0
    %2251 = vmatprep.subr.mxu0 0.0
    %2252 = vmatpush2.msra.mxu0 0.0
    %2253 = vmatprep.subr.mxu0 0.0
    %2254 = vmatpush2.msra.mxu0 0.0
    %2255 = vmatprep.subr.mxu0 0.0
    %2256 = vmatpush2.msra.mxu0 0.0
    %2257 = vmatprep.subr.mxu0 0.0
    %2258 = vmatpush2.msra.mxu0 0.0
    %2259 = vmatprep.subr.mxu0 0.0
    %2260 = vmatpush2.msra.mxu0 0.0
    %2261 = vmatprep.subr.mxu0 0.0
    %2262 = vmatpush2.msra.mxu0 0.0
    %2263 = vmatprep.subr.mxu0 0.0
    %2264 = vmatpush2.msra.mxu0 0.0
    %2265 = vmatprep.subr.mxu0 0.0
    %2266 = vmatpush2.msra.mxu0 0.0
    %2267 = vmatprep.subr.mxu0 0.0
    %2268 = vmatpush2.msra.mxu0 0.0
    %2269 = vmatprep.subr.mxu0 0.0
    %2270 = vmatpush2.msra.mxu0 0.0
    %2271 = vmatprep.mubr.f32.mxu0 0.0
    %2272 = vmatmul.mubr.f32.gmra.mxu0 %v2205
    %v2273 = vpop.f32.mrf.mxu0
    %v2274 = vadd.f32 0.0, %v2273
    %v2275 = vpop.f32.mrf.mxu0
    %2276 = vdwg.mxu0
    %v2277 = vadd.f32 %v2204, %v2274
    %v2278 = vxor.u32 %v2277, 2147483648
    %v2279 = vmul.f32 %v2278, 1.442695
    %v2280 = vpow.pop %v2279
    %v2281 = vadd.f32 %v2280, 1.0
    %v2282 = vrcp.pop %v2281
    %v2283 = vmul.f32 1.0, %v2282
    %v2284 = vtanh.pop %v2277
    %v2285 = vmul.f32 %v2283, %v2191
    %2287 = vrot.lane.b32.xlu0 %v2284, 32
    %v2288 = vpop.permute.xlu0 %2287
    %v2290 = vmul.f32 %v2283, %v2288
    %2292 = vrot.lane.b32.xlu0 %v2290, 32
    %v2293 = vpop.permute.xlu0 %2292
    %v2295 = vadd.f32 %v2285, %v2293
    %v2296 = vtanh.pop %v2295
    %2298 = vrot.lane.b32.xlu0 %v2296, 32
    %v2299 = vpop.permute.xlu0 %2298
    %v2301 = vmul.f32 %v2283, %v2299
    %2303 = vrot.lane.b32.xlu0 %v2301, 64
    %v2304 = vpop.permute.xlu0 %2303
    %2306 = vst.msk [vmem:[%s1572] sm:$0xff] %vm933, %v2304
    %2307 = vst.msk [vmem:[%s1570] sm:$0xff] %vm936, %v2304
    %v2308 = vld [vmem:[%s799] sm:$0xff]
    %v2309 = vsel %vm830, %v2304, 0
    %2311 = vmatprep.subr.mxu0 0.0
    %2312 = vmatpush1.msra.mxu0 0.0
    %2313 = vmatprep.subr.mxu0 0.0
    %2314 = vmatpush1.msra.mxu0 0.0
    %2315 = vmatprep.subr.mxu0 0.0
    %2316 = vmatpush1.msra.mxu0 0.0
    %2317 = vmatprep.subr.mxu0 0.0
    %2318 = vmatpush1.msra.mxu0 0.0
    %2319 = vmatprep.subr.mxu0 0.0
    %2320 = vmatpush1.msra.mxu0 0.0
    %2321 = vmatprep.subr.mxu0 0.0
    %2322 = vmatpush1.msra.mxu0 0.0
    %2323 = vmatprep.subr.mxu0 0.0
    %2324 = vmatpush1.msra.mxu0 0.0
    %2325 = vmatprep.subr.mxu0 0.0
    %2326 = vmatpush1.msra.mxu0 0.0
    %2327 = vmatprep.subr.mxu0 0.0
    %2328 = vmatpush1.msra.mxu0 0.0
    %2329 = vmatprep.subr.mxu0 0.0
    %2330 = vmatpush1.msra.mxu0 0.0
    %2331 = vmatprep.subr.mxu0 0.0
    %2332 = vmatpush1.msra.mxu0 0.0
    %2333 = vmatprep.subr.mxu0 0.0
    %2334 = vmatpush1.msra.mxu0 0.0
    %2335 = vmatprep.subr.mxu0 0.0
    %2336 = vmatpush1.msra.mxu0 %v828
    %2337 = vmatprep.subr.mxu0 0.0
    %2338 = vmatpush1.msra.mxu0 %v827
    %2339 = vmatprep.subr.mxu0 0.0
    %2340 = vmatpush1.msra.mxu0 %v826
    %2341 = vmatprep.subr.mxu0 0.0
    %2342 = vmatpush1.msra.mxu0 %v825
    %2343 = vmatprep.subr.mxu0 0.0
    %2344 = vmatpush2.msra.mxu0 0.0
    %2345 = vmatprep.subr.mxu0 0.0
    %2346 = vmatpush2.msra.mxu0 0.0
    %2347 = vmatprep.subr.mxu0 0.0
    %2348 = vmatpush2.msra.mxu0 0.0
    %2349 = vmatprep.subr.mxu0 0.0
    %2350 = vmatpush2.msra.mxu0 0.0
    %2351 = vmatprep.subr.mxu0 0.0
    %2352 = vmatpush2.msra.mxu0 0.0
    %2353 = vmatprep.subr.mxu0 0.0
    %2354 = vmatpush2.msra.mxu0 0.0
    %2355 = vmatprep.subr.mxu0 0.0
    %2356 = vmatpush2.msra.mxu0 0.0
    %2357 = vmatprep.subr.mxu0 0.0
    %2358 = vmatpush2.msra.mxu0 0.0
    %2359 = vmatprep.subr.mxu0 0.0
    %2360 = vmatpush2.msra.mxu0 0.0
    %2361 = vmatprep.subr.mxu0 0.0
    %2362 = vmatpush2.msra.mxu0 0.0
    %2363 = vmatprep.subr.mxu0 0.0
    %2364 = vmatpush2.msra.mxu0 0.0
    %2365 = vmatprep.subr.mxu0 0.0
    %2366 = vmatpush2.msra.mxu0 0.0
    %2367 = vmatprep.subr.mxu0 0.0
    %2368 = vmatpush2.msra.mxu0 0.0
    %2369 = vmatprep.subr.mxu0 0.0
    %2370 = vmatpush2.msra.mxu0 0.0
    %2371 = vmatprep.subr.mxu0 0.0
    %2372 = vmatpush2.msra.mxu0 0.0
    %2373 = vmatprep.subr.mxu0 0.0
    %2374 = vmatpush2.msra.mxu0 0.0
    %2375 = vmatprep.mubr.f32.mxu0 0.0
    %2376 = vmatmul.mubr.f32.gmra.mxu0 %v2309
    %v2377 = vpop.f32.mrf.mxu0
    %v2378 = vadd.f32 0.0, %v2377
    %v2379 = vpop.f32.mrf.mxu0
    %2380 = vdwg.mxu0
    %v2381 = vadd.f32 %v2308, %v2378
    %v2382 = vxor.u32 %v2381, 2147483648
    %v2383 = vmul.f32 %v2382, 1.442695
    %v2384 = vpow.pop %v2383
    %v2385 = vadd.f32 %v2384, 1.0
    %v2386 = vrcp.pop %v2385
    %v2387 = vmul.f32 1.0, %v2386
    %v2388 = vtanh.pop %v2381
    %v2389 = vmul.f32 %v2387, %v2295
    %2391 = vrot.lane.b32.xlu0 %v2388, 32
    %v2392 = vpop.permute.xlu0 %2391
    %v2394 = vmul.f32 %v2387, %v2392
    %2396 = vrot.lane.b32.xlu0 %v2394, 32
    %v2397 = vpop.permute.xlu0 %2396
    %v2399 = vadd.f32 %v2389, %v2397
    %v2400 = vtanh.pop %v2399
    %2402 = vrot.lane.b32.xlu0 %v2400, 32
    %v2403 = vpop.permute.xlu0 %2402
    %v2405 = vmul.f32 %v2387, %v2403
    %2407 = vrot.lane.b32.xlu0 %v2405, 64
    %v2408 = vpop.permute.xlu0 %2407
    %2410 = vst.msk [vmem:[%s1466] sm:$0xff] %vm933, %v2408
    %2411 = vst.msk [vmem:[%s1464] sm:$0xff] %vm936, %v2408
    %v2412 = vld [vmem:[%s793] sm:$0xff]
    %v2413 = vsel %vm830, %v2408, 0
    %2415 = vmatprep.subr.mxu0 0.0
    %2416 = vmatpush1.msra.mxu0 0.0
    %2417 = vmatprep.subr.mxu0 0.0
    %2418 = vmatpush1.msra.mxu0 0.0
    %2419 = vmatprep.subr.mxu0 0.0
    %2420 = vmatpush1.msra.mxu0 0.0
    %2421 = vmatprep.subr.mxu0 0.0
    %2422 = vmatpush1.msra.mxu0 0.0
    %2423 = vmatprep.subr.mxu0 0.0
    %2424 = vmatpush1.msra.mxu0 0.0
    %2425 = vmatprep.subr.mxu0 0.0
    %2426 = vmatpush1.msra.mxu0 0.0
    %2427 = vmatprep.subr.mxu0 0.0
    %2428 = vmatpush1.msra.mxu0 0.0
    %2429 = vmatprep.subr.mxu0 0.0
    %2430 = vmatpush1.msra.mxu0 0.0
    %2431 = vmatprep.subr.mxu0 0.0
    %2432 = vmatpush1.msra.mxu0 0.0
    %2433 = vmatprep.subr.mxu0 0.0
    %2434 = vmatpush1.msra.mxu0 0.0
    %2435 = vmatprep.subr.mxu0 0.0
    %2436 = vmatpush1.msra.mxu0 0.0
    %2437 = vmatprep.subr.mxu0 0.0
    %2438 = vmatpush1.msra.mxu0 0.0
    %2439 = vmatprep.subr.mxu0 0.0
    %2440 = vmatpush1.msra.mxu0 %v828
    %2441 = vmatprep.subr.mxu0 0.0
    %2442 = vmatpush1.msra.mxu0 %v827
    %2443 = vmatprep.subr.mxu0 0.0
    %2444 = vmatpush1.msra.mxu0 %v826
    %2445 = vmatprep.subr.mxu0 0.0
    %2446 = vmatpush1.msra.mxu0 %v825
    %2447 = vmatprep.subr.mxu0 0.0
    %2448 = vmatpush2.msra.mxu0 0.0
    %2449 = vmatprep.subr.mxu0 0.0
    %2450 = vmatpush2.msra.mxu0 0.0
    %2451 = vmatprep.subr.mxu0 0.0
    %2452 = vmatpush2.msra.mxu0 0.0
    %2453 = vmatprep.subr.mxu0 0.0
    %2454 = vmatpush2.msra.mxu0 0.0
    %2455 = vmatprep.subr.mxu0 0.0
    %2456 = vmatpush2.msra.mxu0 0.0
    %2457 = vmatprep.subr.mxu0 0.0
    %2458 = vmatpush2.msra.mxu0 0.0
    %2459 = vmatprep.subr.mxu0 0.0
    %2460 = vmatpush2.msra.mxu0 0.0
    %2461 = vmatprep.subr.mxu0 0.0
    %2462 = vmatpush2.msra.mxu0 0.0
    %2463 = vmatprep.subr.mxu0 0.0
    %2464 = vmatpush2.msra.mxu0 0.0
    %2465 = vmatprep.subr.mxu0 0.0
    %2466 = vmatpush2.msra.mxu0 0.0
    %2467 = vmatprep.subr.mxu0 0.0
    %2468 = vmatpush2.msra.mxu0 0.0
    %2469 = vmatprep.subr.mxu0 0.0
    %2470 = vmatpush2.msra.mxu0 0.0
    %2471 = vmatprep.subr.mxu0 0.0
    %2472 = vmatpush2.msra.mxu0 0.0
    %2473 = vmatprep.subr.mxu0 0.0
    %2474 = vmatpush2.msra.mxu0 0.0
    %2475 = vmatprep.subr.mxu0 0.0
    %2476 = vmatpush2.msra.mxu0 0.0
    %2477 = vmatprep.subr.mxu0 0.0
    %2478 = vmatpush2.msra.mxu0 0.0
    %2479 = vmatprep.mubr.f32.mxu0 0.0
    %2480 = vmatmul.mubr.f32.gmra.mxu0 %v2413
    %v2481 = vpop.f32.mrf.mxu0
    %v2482 = vadd.f32 0.0, %v2481
    %v2483 = vpop.f32.mrf.mxu0
    %2484 = vdwg.mxu0
    %v2485 = vadd.f32 %v2412, %v2482
    %v2486 = vxor.u32 %v2485, 2147483648
    %v2487 = vmul.f32 %v2486, 1.442695
    %v2488 = vpow.pop %v2487
    %v2489 = vadd.f32 %v2488, 1.0
    %v2490 = vrcp.pop %v2489
    %v2491 = vmul.f32 1.0, %v2490
    %v2492 = vtanh.pop %v2485
    %v2493 = vmul.f32 %v2491, %v2399
    %2495 = vrot.lane.b32.xlu0 %v2492, 32
    %v2496 = vpop.permute.xlu0 %2495
    %v2498 = vmul.f32 %v2491, %v2496
    %2500 = vrot.lane.b32.xlu0 %v2498, 32
    %v2501 = vpop.permute.xlu0 %2500
    %v2503 = vadd.f32 %v2493, %v2501
    %v2504 = vtanh.pop %v2503
    %2506 = vrot.lane.b32.xlu0 %v2504, 32
    %v2507 = vpop.permute.xlu0 %2506
    %v2509 = vmul.f32 %v2491, %v2507
    %2511 = vrot.lane.b32.xlu0 %v2509, 64
    %v2512 = vpop.permute.xlu0 %2511
    %2514 = vst.msk [vmem:[%s1360] sm:$0xff] %vm933, %v2512
    %2515 = vst.msk [vmem:[%s1358] sm:$0xff] %vm936, %v2512
    %v2516 = vld [vmem:[%s787] sm:$0xff]
    %v2517 = vsel %vm830, %v2512, 0
    %2519 = vmatprep.subr.mxu0 0.0
    %2520 = vmatpush1.msra.mxu0 0.0
    %2521 = vmatprep.subr.mxu0 0.0
    %2522 = vmatpush1.msra.mxu0 0.0
    %2523 = vmatprep.subr.mxu0 0.0
    %2524 = vmatpush1.msra.mxu0 0.0
    %2525 = vmatprep.subr.mxu0 0.0
    %2526 = vmatpush1.msra.mxu0 0.0
    %2527 = vmatprep.subr.mxu0 0.0
    %2528 = vmatpush1.msra.mxu0 0.0
    %2529 = vmatprep.subr.mxu0 0.0
    %2530 = vmatpush1.msra.mxu0 0.0
    %2531 = vmatprep.subr.mxu0 0.0
    %2532 = vmatpush1.msra.mxu0 0.0
    %2533 = vmatprep.subr.mxu0 0.0
    %2534 = vmatpush1.msra.mxu0 0.0
    %2535 = vmatprep.subr.mxu0 0.0
    %2536 = vmatpush1.msra.mxu0 0.0
    %2537 = vmatprep.subr.mxu0 0.0
    %2538 = vmatpush1.msra.mxu0 0.0
    %2539 = vmatprep.subr.mxu0 0.0
    %2540 = vmatpush1.msra.mxu0 0.0
    %2541 = vmatprep.subr.mxu0 0.0
    %2542 = vmatpush1.msra.mxu0 0.0
    %2543 = vmatprep.subr.mxu0 0.0
    %2544 = vmatpush1.msra.mxu0 %v828
    %2545 = vmatprep.subr.mxu0 0.0
    %2546 = vmatpush1.msra.mxu0 %v827
    %2547 = vmatprep.subr.mxu0 0.0
    %2548 = vmatpush1.msra.mxu0 %v826
    %2549 = vmatprep.subr.mxu0 0.0
    %2550 = vmatpush1.msra.mxu0 %v825
    %2551 = vmatprep.subr.mxu0 0.0
    %2552 = vmatpush2.msra.mxu0 0.0
    %2553 = vmatprep.subr.mxu0 0.0
    %2554 = vmatpush2.msra.mxu0 0.0
    %2555 = vmatprep.subr.mxu0 0.0
    %2556 = vmatpush2.msra.mxu0 0.0
    %2557 = vmatprep.subr.mxu0 0.0
    %2558 = vmatpush2.msra.mxu0 0.0
    %2559 = vmatprep.subr.mxu0 0.0
    %2560 = vmatpush2.msra.mxu0 0.0
    %2561 = vmatprep.subr.mxu0 0.0
    %2562 = vmatpush2.msra.mxu0 0.0
    %2563 = vmatprep.subr.mxu0 0.0
    %2564 = vmatpush2.msra.mxu0 0.0
    %2565 = vmatprep.subr.mxu0 0.0
    %2566 = vmatpush2.msra.mxu0 0.0
    %2567 = vmatprep.subr.mxu0 0.0
    %2568 = vmatpush2.msra.mxu0 0.0
    %2569 = vmatprep.subr.mxu0 0.0
    %2570 = vmatpush2.msra.mxu0 0.0
    %2571 = vmatprep.subr.mxu0 0.0
    %2572 = vmatpush2.msra.mxu0 0.0
    %2573 = vmatprep.subr.mxu0 0.0
    %2574 = vmatpush2.msra.mxu0 0.0
    %2575 = vmatprep.subr.mxu0 0.0
    %2576 = vmatpush2.msra.mxu0 0.0
    %2577 = vmatprep.subr.mxu0 0.0
    %2578 = vmatpush2.msra.mxu0 0.0
    %2579 = vmatprep.subr.mxu0 0.0
    %2580 = vmatpush2.msra.mxu0 0.0
    %2581 = vmatprep.subr.mxu0 0.0
    %2582 = vmatpush2.msra.mxu0 0.0
    %2583 = vmatprep.mubr.f32.mxu0 0.0
    %2584 = vmatmul.mubr.f32.gmra.mxu0 %v2517
    %v2585 = vpop.f32.mrf.mxu0
    %v2586 = vadd.f32 0.0, %v2585
    %v2587 = vpop.f32.mrf.mxu0
    %2588 = vdwg.mxu0
    %v2589 = vadd.f32 %v2516, %v2586
    %v2590 = vxor.u32 %v2589, 2147483648
    %v2591 = vmul.f32 %v2590, 1.442695
    %v2592 = vpow.pop %v2591
    %v2593 = vadd.f32 %v2592, 1.0
    %v2594 = vrcp.pop %v2593
    %v2595 = vmul.f32 1.0, %v2594
    %v2596 = vtanh.pop %v2589
    %v2597 = vmul.f32 %v2595, %v2503
    %2599 = vrot.lane.b32.xlu0 %v2596, 32
    %v2600 = vpop.permute.xlu0 %2599
    %v2602 = vmul.f32 %v2595, %v2600
    %2604 = vrot.lane.b32.xlu0 %v2602, 32
    %v2605 = vpop.permute.xlu0 %2604
    %v2607 = vadd.f32 %v2597, %v2605
    %v2608 = vtanh.pop %v2607
    %2610 = vrot.lane.b32.xlu0 %v2608, 32
    %v2611 = vpop.permute.xlu0 %2610
    %v2613 = vmul.f32 %v2595, %v2611
    %2615 = vrot.lane.b32.xlu0 %v2613, 64
    %v2616 = vpop.permute.xlu0 %2615
    %2618 = vst.msk [vmem:[%s1254] sm:$0xff] %vm933, %v2616
    %2619 = vst.msk [vmem:[%s1252] sm:$0xff] %vm936, %v2616
    %v2620 = vld [vmem:[%s781] sm:$0xff]
    %v2621 = vsel %vm830, %v2616, 0
    %2623 = vmatprep.subr.mxu0 0.0
    %2624 = vmatpush1.msra.mxu0 0.0
    %2625 = vmatprep.subr.mxu0 0.0
    %2626 = vmatpush1.msra.mxu0 0.0
    %2627 = vmatprep.subr.mxu0 0.0
    %2628 = vmatpush1.msra.mxu0 0.0
    %2629 = vmatprep.subr.mxu0 0.0
    %2630 = vmatpush1.msra.mxu0 0.0
    %2631 = vmatprep.subr.mxu0 0.0
    %2632 = vmatpush1.msra.mxu0 0.0
    %2633 = vmatprep.subr.mxu0 0.0
    %2634 = vmatpush1.msra.mxu0 0.0
    %2635 = vmatprep.subr.mxu0 0.0
    %2636 = vmatpush1.msra.mxu0 0.0
    %2637 = vmatprep.subr.mxu0 0.0
    %2638 = vmatpush1.msra.mxu0 0.0
    %2639 = vmatprep.subr.mxu0 0.0
    %2640 = vmatpush1.msra.mxu0 0.0
    %2641 = vmatprep.subr.mxu0 0.0
    %2642 = vmatpush1.msra.mxu0 0.0
    %2643 = vmatprep.subr.mxu0 0.0
    %2644 = vmatpush1.msra.mxu0 0.0
    %2645 = vmatprep.subr.mxu0 0.0
    %2646 = vmatpush1.msra.mxu0 0.0
    %2647 = vmatprep.subr.mxu0 0.0
    %2648 = vmatpush1.msra.mxu0 %v828
    %2649 = vmatprep.subr.mxu0 0.0
    %2650 = vmatpush1.msra.mxu0 %v827
    %2651 = vmatprep.subr.mxu0 0.0
    %2652 = vmatpush1.msra.mxu0 %v826
    %2653 = vmatprep.subr.mxu0 0.0
    %2654 = vmatpush1.msra.mxu0 %v825
    %2655 = vmatprep.subr.mxu0 0.0
    %2656 = vmatpush2.msra.mxu0 0.0
    %2657 = vmatprep.subr.mxu0 0.0
    %2658 = vmatpush2.msra.mxu0 0.0
    %2659 = vmatprep.subr.mxu0 0.0
    %2660 = vmatpush2.msra.mxu0 0.0
    %2661 = vmatprep.subr.mxu0 0.0
    %2662 = vmatpush2.msra.mxu0 0.0
    %2663 = vmatprep.subr.mxu0 0.0
    %2664 = vmatpush2.msra.mxu0 0.0
    %2665 = vmatprep.subr.mxu0 0.0
    %2666 = vmatpush2.msra.mxu0 0.0
    %2667 = vmatprep.subr.mxu0 0.0
    %2668 = vmatpush2.msra.mxu0 0.0
    %2669 = vmatprep.subr.mxu0 0.0
    %2670 = vmatpush2.msra.mxu0 0.0
    %2671 = vmatprep.subr.mxu0 0.0
    %2672 = vmatpush2.msra.mxu0 0.0
    %2673 = vmatprep.subr.mxu0 0.0
    %2674 = vmatpush2.msra.mxu0 0.0
    %2675 = vmatprep.subr.mxu0 0.0
    %2676 = vmatpush2.msra.mxu0 0.0
    %2677 = vmatprep.subr.mxu0 0.0
    %2678 = vmatpush2.msra.mxu0 0.0
    %2679 = vmatprep.subr.mxu0 0.0
    %2680 = vmatpush2.msra.mxu0 0.0
    %2681 = vmatprep.subr.mxu0 0.0
    %2682 = vmatpush2.msra.mxu0 0.0
    %2683 = vmatprep.subr.mxu0 0.0
    %2684 = vmatpush2.msra.mxu0 0.0
    %2685 = vmatprep.subr.mxu0 0.0
    %2686 = vmatpush2.msra.mxu0 0.0
    %2687 = vmatprep.mubr.f32.mxu0 0.0
    %2688 = vmatmul.mubr.f32.gmra.mxu0 %v2621
    %v2689 = vpop.f32.mrf.mxu0
    %v2690 = vadd.f32 0.0, %v2689
    %v2691 = vpop.f32.mrf.mxu0
    %2692 = vdwg.mxu0
    %v2693 = vadd.f32 %v2620, %v2690
    %v2694 = vxor.u32 %v2693, 2147483648
    %v2695 = vmul.f32 %v2694, 1.442695
    %v2696 = vpow.pop %v2695
    %v2697 = vadd.f32 %v2696, 1.0
    %v2698 = vrcp.pop %v2697
    %v2699 = vmul.f32 1.0, %v2698
    %v2700 = vtanh.pop %v2693
    %v2701 = vmul.f32 %v2699, %v2607
    %2703 = vrot.lane.b32.xlu0 %v2700, 32
    %v2704 = vpop.permute.xlu0 %2703
    %v2706 = vmul.f32 %v2699, %v2704
    %2708 = vrot.lane.b32.xlu0 %v2706, 32
    %v2709 = vpop.permute.xlu0 %2708
    %v2711 = vadd.f32 %v2701, %v2709
    %v2712 = vtanh.pop %v2711
    %2714 = vrot.lane.b32.xlu0 %v2712, 32
    %v2715 = vpop.permute.xlu0 %2714
    %v2717 = vmul.f32 %v2699, %v2715
    %2719 = vrot.lane.b32.xlu0 %v2717, 64
    %v2720 = vpop.permute.xlu0 %2719
    %2722 = vst.msk [vmem:[%s1148] sm:$0xff] %vm933, %v2720
    %2723 = vst.msk [vmem:[%s1146] sm:$0xff] %vm936, %v2720
    %v2724 = vld [vmem:[%s775] sm:$0xff]
    %v2725 = vsel %vm830, %v2720, 0
    %2727 = vmatprep.subr.mxu0 0.0
    %2728 = vmatpush1.msra.mxu0 0.0
    %2729 = vmatprep.subr.mxu0 0.0
    %2730 = vmatpush1.msra.mxu0 0.0
    %2731 = vmatprep.subr.mxu0 0.0
    %2732 = vmatpush1.msra.mxu0 0.0
    %2733 = vmatprep.subr.mxu0 0.0
    %2734 = vmatpush1.msra.mxu0 0.0
    %2735 = vmatprep.subr.mxu0 0.0
    %2736 = vmatpush1.msra.mxu0 0.0
    %2737 = vmatprep.subr.mxu0 0.0
    %2738 = vmatpush1.msra.mxu0 0.0
    %2739 = vmatprep.subr.mxu0 0.0
    %2740 = vmatpush1.msra.mxu0 0.0
    %2741 = vmatprep.subr.mxu0 0.0
    %2742 = vmatpush1.msra.mxu0 0.0
    %2743 = vmatprep.subr.mxu0 0.0
    %2744 = vmatpush1.msra.mxu0 0.0
    %2745 = vmatprep.subr.mxu0 0.0
    %2746 = vmatpush1.msra.mxu0 0.0
    %2747 = vmatprep.subr.mxu0 0.0
    %2748 = vmatpush1.msra.mxu0 0.0
    %2749 = vmatprep.subr.mxu0 0.0
    %2750 = vmatpush1.msra.mxu0 0.0
    %2751 = vmatprep.subr.mxu0 0.0
    %2752 = vmatpush1.msra.mxu0 %v828
    %2753 = vmatprep.subr.mxu0 0.0
    %2754 = vmatpush1.msra.mxu0 %v827
    %2755 = vmatprep.subr.mxu0 0.0
    %2756 = vmatpush1.msra.mxu0 %v826
    %2757 = vmatprep.subr.mxu0 0.0
    %2758 = vmatpush1.msra.mxu0 %v825
    %2759 = vmatprep.subr.mxu0 0.0
    %2760 = vmatpush2.msra.mxu0 0.0
    %2761 = vmatprep.subr.mxu0 0.0
    %2762 = vmatpush2.msra.mxu0 0.0
    %2763 = vmatprep.subr.mxu0 0.0
    %2764 = vmatpush2.msra.mxu0 0.0
    %2765 = vmatprep.subr.mxu0 0.0
    %2766 = vmatpush2.msra.mxu0 0.0
    %2767 = vmatprep.subr.mxu0 0.0
    %2768 = vmatpush2.msra.mxu0 0.0
    %2769 = vmatprep.subr.mxu0 0.0
    %2770 = vmatpush2.msra.mxu0 0.0
    %2771 = vmatprep.subr.mxu0 0.0
    %2772 = vmatpush2.msra.mxu0 0.0
    %2773 = vmatprep.subr.mxu0 0.0
    %2774 = vmatpush2.msra.mxu0 0.0
    %2775 = vmatprep.subr.mxu0 0.0
    %2776 = vmatpush2.msra.mxu0 0.0
    %2777 = vmatprep.subr.mxu0 0.0
    %2778 = vmatpush2.msra.mxu0 0.0
    %2779 = vmatprep.subr.mxu0 0.0
    %2780 = vmatpush2.msra.mxu0 0.0
    %2781 = vmatprep.subr.mxu0 0.0
    %2782 = vmatpush2.msra.mxu0 0.0
    %2783 = vmatprep.subr.mxu0 0.0
    %2784 = vmatpush2.msra.mxu0 0.0
    %2785 = vmatprep.subr.mxu0 0.0
    %2786 = vmatpush2.msra.mxu0 0.0
    %2787 = vmatprep.subr.mxu0 0.0
    %2788 = vmatpush2.msra.mxu0 0.0
    %2789 = vmatprep.subr.mxu0 0.0
    %2790 = vmatpush2.msra.mxu0 0.0
    %2791 = vmatprep.mubr.f32.mxu0 0.0
    %2792 = vmatmul.mubr.f32.gmra.mxu0 %v2725
    %v2793 = vpop.f32.mrf.mxu0
    %v2794 = vadd.f32 0.0, %v2793
    %v2795 = vpop.f32.mrf.mxu0
    %2796 = vdwg.mxu0
    %v2797 = vadd.f32 %v2724, %v2794
    %v2798 = vxor.u32 %v2797, 2147483648
    %v2799 = vmul.f32 %v2798, 1.442695
    %v2800 = vpow.pop %v2799
    %v2801 = vadd.f32 %v2800, 1.0
    %v2802 = vrcp.pop %v2801
    %v2803 = vmul.f32 1.0, %v2802
    %v2804 = vtanh.pop %v2797
    %v2805 = vmul.f32 %v2803, %v2711
    %2807 = vrot.lane.b32.xlu0 %v2804, 32
    %v2808 = vpop.permute.xlu0 %2807
    %v2810 = vmul.f32 %v2803, %v2808
    %2812 = vrot.lane.b32.xlu0 %v2810, 32
    %v2813 = vpop.permute.xlu0 %2812
    %v2815 = vadd.f32 %v2805, %v2813
    %v2816 = vtanh.pop %v2815
    %2818 = vrot.lane.b32.xlu0 %v2816, 32
    %v2819 = vpop.permute.xlu0 %2818
    %v2821 = vmul.f32 %v2803, %v2819
    %2823 = vrot.lane.b32.xlu0 %v2821, 64
    %v2824 = vpop.permute.xlu0 %2823
    %2826 = vst.msk [vmem:[%s1042] sm:$0xff] %vm933, %v2824
    %2827 = vst.msk [vmem:[%s1040] sm:$0xff] %vm936, %v2824
    %v2828 = vld [vmem:[%s769] sm:$0xff]
    %v2829 = vsel %vm830, %v2824, 0
    %2831 = vmatprep.subr.mxu0 0.0
    %2832 = vmatpush1.msra.mxu0 0.0
    %2833 = vmatprep.subr.mxu0 0.0
    %2834 = vmatpush1.msra.mxu0 0.0
    %2835 = vmatprep.subr.mxu0 0.0
    %2836 = vmatpush1.msra.mxu0 0.0
    %2837 = vmatprep.subr.mxu0 0.0
    %2838 = vmatpush1.msra.mxu0 0.0
    %2839 = vmatprep.subr.mxu0 0.0
    %2840 = vmatpush1.msra.mxu0 0.0
    %2841 = vmatprep.subr.mxu0 0.0
    %2842 = vmatpush1.msra.mxu0 0.0
    %2843 = vmatprep.subr.mxu0 0.0
    %2844 = vmatpush1.msra.mxu0 0.0
    %2845 = vmatprep.subr.mxu0 0.0
    %2846 = vmatpush1.msra.mxu0 0.0
    %2847 = vmatprep.subr.mxu0 0.0
    %2848 = vmatpush1.msra.mxu0 0.0
    %2849 = vmatprep.subr.mxu0 0.0
    %2850 = vmatpush1.msra.mxu0 0.0
    %2851 = vmatprep.subr.mxu0 0.0
    %2852 = vmatpush1.msra.mxu0 0.0
    %2853 = vmatprep.subr.mxu0 0.0
    %2854 = vmatpush1.msra.mxu0 0.0
    %2855 = vmatprep.subr.mxu0 0.0
    %2856 = vmatpush1.msra.mxu0 %v828
    %2857 = vmatprep.subr.mxu0 0.0
    %2858 = vmatpush1.msra.mxu0 %v827
    %2859 = vmatprep.subr.mxu0 0.0
    %2860 = vmatpush1.msra.mxu0 %v826
    %2861 = vmatprep.subr.mxu0 0.0
    %2862 = vmatpush1.msra.mxu0 %v825
    %2863 = vmatprep.subr.mxu0 0.0
    %2864 = vmatpush2.msra.mxu0 0.0
    %2865 = vmatprep.subr.mxu0 0.0
    %2866 = vmatpush2.msra.mxu0 0.0
    %2867 = vmatprep.subr.mxu0 0.0
    %2868 = vmatpush2.msra.mxu0 0.0
    %2869 = vmatprep.subr.mxu0 0.0
    %2870 = vmatpush2.msra.mxu0 0.0
    %2871 = vmatprep.subr.mxu0 0.0
    %2872 = vmatpush2.msra.mxu0 0.0
    %2873 = vmatprep.subr.mxu0 0.0
    %2874 = vmatpush2.msra.mxu0 0.0
    %2875 = vmatprep.subr.mxu0 0.0
    %2876 = vmatpush2.msra.mxu0 0.0
    %2877 = vmatprep.subr.mxu0 0.0
    %2878 = vmatpush2.msra.mxu0 0.0
    %2879 = vmatprep.subr.mxu0 0.0
    %2880 = vmatpush2.msra.mxu0 0.0
    %2881 = vmatprep.subr.mxu0 0.0
    %2882 = vmatpush2.msra.mxu0 0.0
    %2883 = vmatprep.subr.mxu0 0.0
    %2884 = vmatpush2.msra.mxu0 0.0
    %2885 = vmatprep.subr.mxu0 0.0
    %2886 = vmatpush2.msra.mxu0 0.0
    %2887 = vmatprep.subr.mxu0 0.0
    %2888 = vmatpush2.msra.mxu0 0.0
    %2889 = vmatprep.subr.mxu0 0.0
    %2890 = vmatpush2.msra.mxu0 0.0
    %2891 = vmatprep.subr.mxu0 0.0
    %2892 = vmatpush2.msra.mxu0 0.0
    %2893 = vmatprep.subr.mxu0 0.0
    %2894 = vmatpush2.msra.mxu0 0.0
    %2895 = vmatprep.mubr.f32.mxu0 0.0
    %2896 = vmatmul.mubr.f32.gmra.mxu0 %v2829
    %v2897 = vpop.f32.mrf.mxu0
    %v2898 = vadd.f32 0.0, %v2897
    %v2899 = vpop.f32.mrf.mxu0
    %2900 = vdwg.mxu0
    %v2901 = vadd.f32 %v2828, %v2898
    %v2902 = vxor.u32 %v2901, 2147483648
    %v2903 = vmul.f32 %v2902, 1.442695
    %v2904 = vpow.pop %v2903
    %v2905 = vadd.f32 %v2904, 1.0
    %v2906 = vrcp.pop %v2905
    %v2907 = vmul.f32 1.0, %v2906
    %v2908 = vtanh.pop %v2901
    %v2909 = vmul.f32 %v2907, %v2815
    %2911 = vrot.lane.b32.xlu0 %v2908, 32
    %v2912 = vpop.permute.xlu0 %2911
    %v2914 = vmul.f32 %v2907, %v2912
    %2916 = vrot.lane.b32.xlu0 %v2914, 32
    %v2917 = vpop.permute.xlu0 %2916
    %v2919 = vadd.f32 %v2909, %v2917
    %v2920 = vtanh.pop %v2919
    %2922 = vrot.lane.b32.xlu0 %v2920, 32
    %v2923 = vpop.permute.xlu0 %2922
    %v2925 = vmul.f32 %v2907, %v2923
    %2927 = vrot.lane.b32.xlu0 %v2925, 64
    %v2928 = vpop.permute.xlu0 %2927
    %2930 = vst.msk [vmem:[%s935] sm:$0xff] %vm933, %v2928
    %2931 = vst.msk [vmem:[#allocation4] sm:$0xff] %vm936, %v2928
    %v2932 = vld [vmem:[#allocation4] sm:$0xff]
    %v2933 = vld [vmem:[#allocation4 + $0x8] sm:$0xff]
    %v2934 = vld [vmem:[#allocation4 + $0x10] sm:$0xff]
    %v2935 = vld [vmem:[#allocation4 + $0x18] sm:$0xff]
    %v2936 = vld [vmem:[#allocation4 + $0x20] sm:$0xff]
    %v2937 = vld [vmem:[#allocation4 + $0x28] sm:$0xff]
    %v2938 = vld [vmem:[#allocation4 + $0x30] sm:$0xff]
    %v2939 = vld [vmem:[#allocation4 + $0x38] sm:$0xff]
    %v2940 = vld [vmem:[#allocation4 + $0x40] sm:$0xff]
    %v2941 = vld [vmem:[#allocation4 + $0x48] sm:$0xff]
    %v2942 = vld [vmem:[#allocation4 + $0x50] sm:$0xff]
    %v2943 = vld [vmem:[#allocation4 + $0x58] sm:$0xff]
    %v2944 = vld [vmem:[#allocation4 + $0x60] sm:$0xff]
    %v2945 = vld [vmem:[#allocation4 + $0x68] sm:$0xff]
    %v2946 = vld [vmem:[#allocation4 + $0x70] sm:$0xff]
    %v2947 = vld [vmem:[#allocation4 + $0x78] sm:$0xff]
    %v2948 = vld [vmem:[#allocation4 + $0x80] sm:$0xff]
    %v2949 = vld [vmem:[#allocation4 + $0x88] sm:$0xff]
    %v2950 = vld [vmem:[#allocation4 + $0x90] sm:$0xff]
    %v2951 = vld [vmem:[#allocation4 + $0x98] sm:$0xff]
    %v2952 = vld [vmem:[%s5] sm:$0xff]
    %v2953 = vld [vmem:[%s5 + $0x8] sm:$0xff]
    %v2954 = vld [vmem:[%s5 + $0x10] sm:$0xff]
    %v2955 = vld [vmem:[%s5 + $0x18] sm:$0xff]
    %v2956 = vld [vmem:[%s6] sm:$0x1]
    %v2958 = vlaneseq
    %v2959 = vshrl.u32 %v2958, 7
    %v2960 = vsub.s32 0, %v2959
    %v2961 = vrot.slane %v2956, %v2960
    %v2964 = vsel %vm830, %v2932, 0
    %v2967 = vsel %vm830, %v2933, 0
    %v2970 = vsel %vm830, %v2934, 0
    %v2973 = vsel %vm830, %v2935, 0
    %v2976 = vsel %vm830, %v2936, 0
    %v2979 = vsel %vm830, %v2937, 0
    %v2982 = vsel %vm830, %v2938, 0
    %v2985 = vsel %vm830, %v2939, 0
    %v2988 = vsel %vm830, %v2940, 0
    %v2991 = vsel %vm830, %v2941, 0
    %v2994 = vsel %vm830, %v2942, 0
    %v2997 = vsel %vm830, %v2943, 0
    %v3000 = vsel %vm830, %v2944, 0
    %v3003 = vsel %vm830, %v2945, 0
    %v3006 = vsel %vm830, %v2946, 0
    %v3009 = vsel %vm830, %v2947, 0
    %v3012 = vsel %vm830, %v2948, 0
    %v3015 = vsel %vm830, %v2949, 0
    %v3018 = vsel %vm830, %v2950, 0
    %v3021 = vsel %vm830, %v2951, 0
    %3023 = vmatprep.subr.mxu0 0.0
    %3024 = vmatpush1.msra.mxu0 0.0
    %3025 = vmatprep.subr.mxu0 0.0
    %3026 = vmatpush1.msra.mxu0 0.0
    %3027 = vmatprep.subr.mxu0 0.0
    %3028 = vmatpush1.msra.mxu0 0.0
    %3029 = vmatprep.subr.mxu0 0.0
    %3030 = vmatpush1.msra.mxu0 0.0
    %3031 = vmatprep.subr.mxu0 0.0
    %3032 = vmatpush1.msra.mxu0 0.0
    %3033 = vmatprep.subr.mxu0 0.0
    %3034 = vmatpush1.msra.mxu0 0.0
    %3035 = vmatprep.subr.mxu0 0.0
    %3036 = vmatpush1.msra.mxu0 0.0
    %3037 = vmatprep.subr.mxu0 0.0
    %3038 = vmatpush1.msra.mxu0 0.0
    %3039 = vmatprep.subr.mxu0 0.0
    %3040 = vmatpush1.msra.mxu0 0.0
    %3041 = vmatprep.subr.mxu0 0.0
    %3042 = vmatpush1.msra.mxu0 0.0
    %3043 = vmatprep.subr.mxu0 0.0
    %3044 = vmatpush1.msra.mxu0 0.0
    %3045 = vmatprep.subr.mxu0 0.0
    %3046 = vmatpush1.msra.mxu0 0.0
    %3047 = vmatprep.subr.mxu0 0.0
    %3048 = vmatpush1.msra.mxu0 %v2955
    %3049 = vmatprep.subr.mxu0 0.0
    %3050 = vmatpush1.msra.mxu0 %v2954
    %3051 = vmatprep.subr.mxu0 0.0
    %3052 = vmatpush1.msra.mxu0 %v2953
    %3053 = vmatprep.subr.mxu0 0.0
    %3054 = vmatpush1.msra.mxu0 %v2952
    %3055 = vmatprep.subr.mxu0 0.0
    %3056 = vmatpush2.msra.mxu0 0.0
    %3057 = vmatprep.subr.mxu0 0.0
    %3058 = vmatpush2.msra.mxu0 0.0
    %3059 = vmatprep.subr.mxu0 0.0
    %3060 = vmatpush2.msra.mxu0 0.0
    %3061 = vmatprep.subr.mxu0 0.0
    %3062 = vmatpush2.msra.mxu0 0.0
    %3063 = vmatprep.subr.mxu0 0.0
    %3064 = vmatpush2.msra.mxu0 0.0
    %3065 = vmatprep.subr.mxu0 0.0
    %3066 = vmatpush2.msra.mxu0 0.0
    %3067 = vmatprep.subr.mxu0 0.0
    %3068 = vmatpush2.msra.mxu0 0.0
    %3069 = vmatprep.subr.mxu0 0.0
    %3070 = vmatpush2.msra.mxu0 0.0
    %3071 = vmatprep.subr.mxu0 0.0
    %3072 = vmatpush2.msra.mxu0 0.0
    %3073 = vmatprep.subr.mxu0 0.0
    %3074 = vmatpush2.msra.mxu0 0.0
    %3075 = vmatprep.subr.mxu0 0.0
    %3076 = vmatpush2.msra.mxu0 0.0
    %3077 = vmatprep.subr.mxu0 0.0
    %3078 = vmatpush2.msra.mxu0 0.0
    %3079 = vmatprep.subr.mxu0 0.0
    %3080 = vmatpush2.msra.mxu0 0.0
    %3081 = vmatprep.subr.mxu0 0.0
    %3082 = vmatpush2.msra.mxu0 0.0
    %3083 = vmatprep.subr.mxu0 0.0
    %3084 = vmatpush2.msra.mxu0 0.0
    %3085 = vmatprep.subr.mxu0 0.0
    %3086 = vmatpush2.msra.mxu0 0.0
    %3087 = vmatprep.mubr.f32.mxu0 0.0
    %3088 = vmatmul.mubr.f32.gmra.mxu0 %v2964
    %v3089 = vpop.f32.mrf.mxu0
    %v3090 = vadd.f32 %v2961, %v3089
    %v3091 = vpop.f32.mrf.mxu0
    %3092 = vmatprep.mubr.f32.mxu0 0.0
    %3093 = vmatmul.mubr.f32.gmra.mxu0 %v2967
    %v3094 = vpop.f32.mrf.mxu0
    %v3095 = vadd.f32 %v2961, %v3094
    %v3096 = vpop.f32.mrf.mxu0
    %3097 = vmatprep.mubr.f32.mxu0 0.0
    %3098 = vmatmul.mubr.f32.gmra.mxu0 %v2970
    %v3099 = vpop.f32.mrf.mxu0
    %v3100 = vadd.f32 %v2961, %v3099
    %v3101 = vpop.f32.mrf.mxu0
    %3102 = vmatprep.mubr.f32.mxu0 0.0
    %3103 = vmatmul.mubr.f32.gmra.mxu0 %v2973
    %v3104 = vpop.f32.mrf.mxu0
    %v3105 = vadd.f32 %v2961, %v3104
    %v3106 = vpop.f32.mrf.mxu0
    %3107 = vmatprep.mubr.f32.mxu0 0.0
    %3108 = vmatmul.mubr.f32.gmra.mxu0 %v2976
    %v3109 = vpop.f32.mrf.mxu0
    %v3110 = vadd.f32 %v2961, %v3109
    %v3111 = vpop.f32.mrf.mxu0
    %3112 = vmatprep.mubr.f32.mxu0 0.0
    %3113 = vmatmul.mubr.f32.gmra.mxu0 %v2979
    %v3114 = vpop.f32.mrf.mxu0
    %v3115 = vadd.f32 %v2961, %v3114
    %v3116 = vpop.f32.mrf.mxu0
    %3117 = vmatprep.mubr.f32.mxu0 0.0
    %3118 = vmatmul.mubr.f32.gmra.mxu0 %v2982
    %v3119 = vpop.f32.mrf.mxu0
    %v3120 = vadd.f32 %v2961, %v3119
    %v3121 = vpop.f32.mrf.mxu0
    %3122 = vmatprep.mubr.f32.mxu0 0.0
    %3123 = vmatmul.mubr.f32.gmra.mxu0 %v2985
    %v3124 = vpop.f32.mrf.mxu0
    %v3125 = vadd.f32 %v2961, %v3124
    %v3126 = vpop.f32.mrf.mxu0
    %3127 = vmatprep.mubr.f32.mxu0 0.0
    %3128 = vmatmul.mubr.f32.gmra.mxu0 %v2988
    %v3129 = vpop.f32.mrf.mxu0
    %v3130 = vadd.f32 %v2961, %v3129
    %v3131 = vpop.f32.mrf.mxu0
    %3132 = vmatprep.mubr.f32.mxu0 0.0
    %3133 = vmatmul.mubr.f32.gmra.mxu0 %v2991
    %v3134 = vpop.f32.mrf.mxu0
    %v3135 = vadd.f32 %v2961, %v3134
    %v3136 = vpop.f32.mrf.mxu0
    %3137 = vmatprep.mubr.f32.mxu0 0.0
    %3138 = vmatmul.mubr.f32.gmra.mxu0 %v2994
    %v3139 = vpop.f32.mrf.mxu0
    %v3140 = vadd.f32 %v2961, %v3139
    %v3141 = vpop.f32.mrf.mxu0
    %3142 = vmatprep.mubr.f32.mxu0 0.0
    %3143 = vmatmul.mubr.f32.gmra.mxu0 %v2997
    %v3144 = vpop.f32.mrf.mxu0
    %v3145 = vadd.f32 %v2961, %v3144
    %v3146 = vpop.f32.mrf.mxu0
    %3147 = vmatprep.mubr.f32.mxu0 0.0
    %3148 = vmatmul.mubr.f32.gmra.mxu0 %v3000
    %v3149 = vpop.f32.mrf.mxu0
    %v3150 = vadd.f32 %v2961, %v3149
    %v3151 = vpop.f32.mrf.mxu0
    %3152 = vmatprep.mubr.f32.mxu0 0.0
    %3153 = vmatmul.mubr.f32.gmra.mxu0 %v3003
    %v3154 = vpop.f32.mrf.mxu0
    %v3155 = vadd.f32 %v2961, %v3154
    %v3156 = vpop.f32.mrf.mxu0
    %3157 = vmatprep.mubr.f32.mxu0 0.0
    %3158 = vmatmul.mubr.f32.gmra.mxu0 %v3006
    %v3159 = vpop.f32.mrf.mxu0
    %v3160 = vadd.f32 %v2961, %v3159
    %v3161 = vpop.f32.mrf.mxu0
    %3162 = vmatprep.mubr.f32.mxu0 0.0
    %3163 = vmatmul.mubr.f32.gmra.mxu0 %v3009
    %v3164 = vpop.f32.mrf.mxu0
    %v3165 = vadd.f32 %v2961, %v3164
    %v3166 = vpop.f32.mrf.mxu0
    %3167 = vmatprep.mubr.f32.mxu0 0.0
    %3168 = vmatmul.mubr.f32.gmra.mxu0 %v3012
    %v3169 = vpop.f32.mrf.mxu0
    %v3170 = vadd.f32 %v2961, %v3169
    %v3171 = vpop.f32.mrf.mxu0
    %3172 = vmatprep.mubr.f32.mxu0 0.0
    %3173 = vmatmul.mubr.f32.gmra.mxu0 %v3015
    %v3174 = vpop.f32.mrf.mxu0
    %v3175 = vadd.f32 %v2961, %v3174
    %v3176 = vpop.f32.mrf.mxu0
    %3177 = vmatprep.mubr.f32.mxu0 0.0
    %3178 = vmatmul.mubr.f32.gmra.mxu0 %v3018
    %v3179 = vpop.f32.mrf.mxu0
    %v3180 = vadd.f32 %v2961, %v3179
    %v3181 = vpop.f32.mrf.mxu0
    %3182 = vmatprep.mubr.f32.mxu0 0.0
    %3183 = vmatmul.mubr.f32.gmra.mxu0 %v3021
    %v3184 = vpop.f32.mrf.mxu0
    %v3185 = vadd.f32 %v2961, %v3184
    %v3186 = vpop.f32.mrf.mxu0
    %3187 = vdwg.mxu0
    %v3188 = vsel %vm54, %v3090, %v3185
    %3189 = vst [vmem:[#allocation3] sm:$0xff] %v3188
    %v3190 = vsel %vm54, %v3185, %v3090
    %s3191 = scalar_lea.vmem [#allocation3], 152
    %3192 = vst [vmem:[%s3191] sm:$0xff] %v3190
    %v3193 = vsel %vm54, %v3095, %v3180
    %s3194 = scalar_lea.vmem [#allocation3], 8
    %3195 = vst [vmem:[%s3194] sm:$0xff] %v3193
    %v3196 = vsel %vm54, %v3180, %v3095
    %s3197 = scalar_lea.vmem [#allocation3], 144
    %3198 = vst [vmem:[%s3197] sm:$0xff] %v3196
    %v3199 = vsel %vm54, %v3100, %v3175
    %s3200 = scalar_lea.vmem [#allocation3], 16
    %3201 = vst [vmem:[%s3200] sm:$0xff] %v3199
    %v3202 = vsel %vm54, %v3175, %v3100
    %s3203 = scalar_lea.vmem [#allocation3], 136
    %3204 = vst [vmem:[%s3203] sm:$0xff] %v3202
    %v3205 = vsel %vm54, %v3105, %v3170
    %s3206 = scalar_lea.vmem [#allocation3], 24
    %3207 = vst [vmem:[%s3206] sm:$0xff] %v3205
    %v3208 = vsel %vm54, %v3170, %v3105
    %s3209 = scalar_lea.vmem [#allocation3], 128
    %3210 = vst [vmem:[%s3209] sm:$0xff] %v3208
    %v3211 = vsel %vm54, %v3110, %v3165
    %s3212 = scalar_lea.vmem [#allocation3], 32
    %3213 = vst [vmem:[%s3212] sm:$0xff] %v3211
    %v3214 = vsel %vm54, %v3165, %v3110
    %s3215 = scalar_lea.vmem [#allocation3], 120
    %3216 = vst [vmem:[%s3215] sm:$0xff] %v3214
    %v3217 = vsel %vm54, %v3115, %v3160
    %s3218 = scalar_lea.vmem [#allocation3], 40
    %3219 = vst [vmem:[%s3218] sm:$0xff] %v3217
    %v3220 = vsel %vm54, %v3160, %v3115
    %s3221 = scalar_lea.vmem [#allocation3], 112
    %3222 = vst [vmem:[%s3221] sm:$0xff] %v3220
    %v3223 = vsel %vm54, %v3120, %v3155
    %s3224 = scalar_lea.vmem [#allocation3], 48
    %3225 = vst [vmem:[%s3224] sm:$0xff] %v3223
    %v3226 = vsel %vm54, %v3155, %v3120
    %s3227 = scalar_lea.vmem [#allocation3], 104
    %3228 = vst [vmem:[%s3227] sm:$0xff] %v3226
    %v3229 = vsel %vm54, %v3125, %v3150
    %s3230 = scalar_lea.vmem [#allocation3], 56
    %3231 = vst [vmem:[%s3230] sm:$0xff] %v3229
    %v3232 = vsel %vm54, %v3150, %v3125
    %s3233 = scalar_lea.vmem [#allocation3], 96
    %3234 = vst [vmem:[%s3233] sm:$0xff] %v3232
    %v3235 = vsel %vm54, %v3130, %v3145
    %s3236 = scalar_lea.vmem [#allocation3], 64
    %3237 = vst [vmem:[%s3236] sm:$0xff] %v3235
    %v3238 = vsel %vm54, %v3145, %v3130
    %s3239 = scalar_lea.vmem [#allocation3], 88
    %3240 = vst [vmem:[%s3239] sm:$0xff] %v3238
    %v3241 = vsel %vm54, %v3135, %v3140
    %s3242 = scalar_lea.vmem [#allocation3], 72
    %3243 = vst [vmem:[%s3242] sm:$0xff] %v3241
    %v3244 = vsel %vm54, %v3140, %v3135
    %s3245 = scalar_lea.vmem [#allocation3], 80
    %3246 = vst [vmem:[%s3245] sm:$0xff] %v3244
    %v3247 = vld [vmem:[%s7] sm:$0xff]
    %v3248 = vld [vmem:[%s7 + $0x8] sm:$0xff]
    %v3249 = vld [vmem:[%s7 + $0x10] sm:$0xff]
    %v3250 = vld [vmem:[%s7 + $0x18] sm:$0xff]
    %v3251 = vld [vmem:[#allocation3] sm:$0xff]
    %3252 = vmatprep.subr.mxu0 0.0
    %3253 = vmatpush1.msra.mxu0 0.0
    %3254 = vmatprep.subr.mxu0 0.0
    %3255 = vmatpush1.msra.mxu0 0.0
    %3256 = vmatprep.subr.mxu0 0.0
    %3257 = vmatpush1.msra.mxu0 0.0
    %3258 = vmatprep.subr.mxu0 0.0
    %3259 = vmatpush1.msra.mxu0 0.0
    %3260 = vmatprep.subr.mxu0 0.0
    %3261 = vmatpush1.msra.mxu0 0.0
    %3262 = vmatprep.subr.mxu0 0.0
    %3263 = vmatpush1.msra.mxu0 0.0
    %3264 = vmatprep.subr.mxu0 0.0
    %3265 = vmatpush1.msra.mxu0 0.0
    %3266 = vmatprep.subr.mxu0 0.0
    %3267 = vmatpush1.msra.mxu0 0.0
    %3268 = vmatprep.subr.mxu0 0.0
    %3269 = vmatpush1.msra.mxu0 0.0
    %3270 = vmatprep.subr.mxu0 0.0
    %3271 = vmatpush1.msra.mxu0 0.0
    %3272 = vmatprep.subr.mxu0 0.0
    %3273 = vmatpush1.msra.mxu0 0.0
    %3274 = vmatprep.subr.mxu0 0.0
    %3275 = vmatpush1.msra.mxu0 0.0
    %3276 = vmatprep.subr.mxu0 0.0
    %3277 = vmatpush1.msra.mxu0 %v3250
    %3278 = vmatprep.subr.mxu0 0.0
    %3279 = vmatpush1.msra.mxu0 %v3249
    %3280 = vmatprep.subr.mxu0 0.0
    %3281 = vmatpush1.msra.mxu0 %v3248
    %3282 = vmatprep.subr.mxu0 0.0
    %3283 = vmatpush1.msra.mxu0 %v3247
    %3284 = vmatprep.subr.mxu0 0.0
    %3285 = vmatpush2.msra.mxu0 0.0
    %3286 = vmatprep.subr.mxu0 0.0
    %3287 = vmatpush2.msra.mxu0 0.0
    %3288 = vmatprep.subr.mxu0 0.0
    %3289 = vmatpush2.msra.mxu0 0.0
    %3290 = vmatprep.subr.mxu0 0.0
    %3291 = vmatpush2.msra.mxu0 0.0
    %3292 = vmatprep.subr.mxu0 0.0
    %3293 = vmatpush2.msra.mxu0 0.0
    %3294 = vmatprep.subr.mxu0 0.0
    %3295 = vmatpush2.msra.mxu0 0.0
    %3296 = vmatprep.subr.mxu0 0.0
    %3297 = vmatpush2.msra.mxu0 0.0
    %3298 = vmatprep.subr.mxu0 0.0
    %3299 = vmatpush2.msra.mxu0 0.0
    %3300 = vmatprep.subr.mxu0 0.0
    %3301 = vmatpush2.msra.mxu0 0.0
    %3302 = vmatprep.subr.mxu0 0.0
    %3303 = vmatpush2.msra.mxu0 0.0
    %3304 = vmatprep.subr.mxu0 0.0
    %3305 = vmatpush2.msra.mxu0 0.0
    %3306 = vmatprep.subr.mxu0 0.0
    %3307 = vmatpush2.msra.mxu0 0.0
    %3308 = vmatprep.subr.mxu0 0.0
    %3309 = vmatpush2.msra.mxu0 0.0
    %3310 = vmatprep.subr.mxu0 0.0
    %3311 = vmatpush2.msra.mxu0 0.0
    %3312 = vmatprep.subr.mxu0 0.0
    %3313 = vmatpush2.msra.mxu0 0.0
    %3314 = vmatprep.subr.mxu0 0.0
    %3315 = vmatpush2.msra.mxu0 0.0
    %3316 = vmatprep.mubr.f32.mxu0 0.0
    %3317 = vmatmul.mubr.f32.gmra.mxu0 %v832
    %v3318 = vpop.f32.mrf.mxu0
    %v3319 = vadd.f32 0.0, %v3318
    %v3320 = vpop.f32.mrf.mxu0
    %3321 = vdwg.mxu0
    %v3322 = vadd.f32 %v3251, %v3319
    %v3323 = vxor.u32 %v3322, 2147483648
    %v3324 = vmul.f32 %v3323, 1.442695
    %v3325 = vpow.pop %v3324
    %v3326 = vadd.f32 %v3325, 1.0
    %v3327 = vrcp.pop %v3326
    %v3328 = vmul.f32 1.0, %v3327
    %v3329 = vtanh.pop %v3322
    %v3330 = vmul.f32 %v3328, 0.0
    %3332 = vrot.lane.b32.xlu0 %v3329, 32
    %v3333 = vpop.permute.xlu0 %3332
    %v3335 = vmul.f32 %v3328, %v3333
    %3337 = vrot.lane.b32.xlu0 %v3335, 32
    %v3338 = vpop.permute.xlu0 %3337
    %v3340 = vadd.f32 %v3330, %v3338
    %v3341 = vtanh.pop %v3340
    %3343 = vrot.lane.b32.xlu0 %v3341, 32
    %v3344 = vpop.permute.xlu0 %3343
    %v3346 = vmul.f32 %v3328, %v3344
    %3348 = vrot.lane.b32.xlu0 %v3346, 64
    %v3349 = vpop.permute.xlu0 %3348
    %3351 = vst.msk [vmem:[#allocation5] sm:$0xff] %vm933, %v3349
    %s3352 = scalar_lea.vmem [#allocation5], 152
    %3353 = vst.msk [vmem:[%s3352] sm:$0xff] %vm936, %v3349
    %v3354 = vld [vmem:[%s3194] sm:$0xff]
    %v3355 = vsel %vm830, %v3349, 0
    %3357 = vmatprep.subr.mxu0 0.0
    %3358 = vmatpush1.msra.mxu0 0.0
    %3359 = vmatprep.subr.mxu0 0.0
    %3360 = vmatpush1.msra.mxu0 0.0
    %3361 = vmatprep.subr.mxu0 0.0
    %3362 = vmatpush1.msra.mxu0 0.0
    %3363 = vmatprep.subr.mxu0 0.0
    %3364 = vmatpush1.msra.mxu0 0.0
    %3365 = vmatprep.subr.mxu0 0.0
    %3366 = vmatpush1.msra.mxu0 0.0
    %3367 = vmatprep.subr.mxu0 0.0
    %3368 = vmatpush1.msra.mxu0 0.0
    %3369 = vmatprep.subr.mxu0 0.0
    %3370 = vmatpush1.msra.mxu0 0.0
    %3371 = vmatprep.subr.mxu0 0.0
    %3372 = vmatpush1.msra.mxu0 0.0
    %3373 = vmatprep.subr.mxu0 0.0
    %3374 = vmatpush1.msra.mxu0 0.0
    %3375 = vmatprep.subr.mxu0 0.0
    %3376 = vmatpush1.msra.mxu0 0.0
    %3377 = vmatprep.subr.mxu0 0.0
    %3378 = vmatpush1.msra.mxu0 0.0
    %3379 = vmatprep.subr.mxu0 0.0
    %3380 = vmatpush1.msra.mxu0 0.0
    %3381 = vmatprep.subr.mxu0 0.0
    %3382 = vmatpush1.msra.mxu0 %v3250
    %3383 = vmatprep.subr.mxu0 0.0
    %3384 = vmatpush1.msra.mxu0 %v3249
    %3385 = vmatprep.subr.mxu0 0.0
    %3386 = vmatpush1.msra.mxu0 %v3248
    %3387 = vmatprep.subr.mxu0 0.0
    %3388 = vmatpush1.msra.mxu0 %v3247
    %3389 = vmatprep.subr.mxu0 0.0
    %3390 = vmatpush2.msra.mxu0 0.0
    %3391 = vmatprep.subr.mxu0 0.0
    %3392 = vmatpush2.msra.mxu0 0.0
    %3393 = vmatprep.subr.mxu0 0.0
    %3394 = vmatpush2.msra.mxu0 0.0
    %3395 = vmatprep.subr.mxu0 0.0
    %3396 = vmatpush2.msra.mxu0 0.0
    %3397 = vmatprep.subr.mxu0 0.0
    %3398 = vmatpush2.msra.mxu0 0.0
    %3399 = vmatprep.subr.mxu0 0.0
    %3400 = vmatpush2.msra.mxu0 0.0
    %3401 = vmatprep.subr.mxu0 0.0
    %3402 = vmatpush2.msra.mxu0 0.0
    %3403 = vmatprep.subr.mxu0 0.0
    %3404 = vmatpush2.msra.mxu0 0.0
    %3405 = vmatprep.subr.mxu0 0.0
    %3406 = vmatpush2.msra.mxu0 0.0
    %3407 = vmatprep.subr.mxu0 0.0
    %3408 = vmatpush2.msra.mxu0 0.0
    %3409 = vmatprep.subr.mxu0 0.0
    %3410 = vmatpush2.msra.mxu0 0.0
    %3411 = vmatprep.subr.mxu0 0.0
    %3412 = vmatpush2.msra.mxu0 0.0
    %3413 = vmatprep.subr.mxu0 0.0
    %3414 = vmatpush2.msra.mxu0 0.0
    %3415 = vmatprep.subr.mxu0 0.0
    %3416 = vmatpush2.msra.mxu0 0.0
    %3417 = vmatprep.subr.mxu0 0.0
    %3418 = vmatpush2.msra.mxu0 0.0
    %3419 = vmatprep.subr.mxu0 0.0
    %3420 = vmatpush2.msra.mxu0 0.0
    %3421 = vmatprep.mubr.f32.mxu0 0.0
    %3422 = vmatmul.mubr.f32.gmra.mxu0 %v3355
    %v3423 = vpop.f32.mrf.mxu0
    %v3424 = vadd.f32 0.0, %v3423
    %v3425 = vpop.f32.mrf.mxu0
    %3426 = vdwg.mxu0
    %v3427 = vadd.f32 %v3354, %v3424
    %v3428 = vxor.u32 %v3427, 2147483648
    %v3429 = vmul.f32 %v3428, 1.442695
    %v3430 = vpow.pop %v3429
    %v3431 = vadd.f32 %v3430, 1.0
    %v3432 = vrcp.pop %v3431
    %v3433 = vmul.f32 1.0, %v3432
    %v3434 = vtanh.pop %v3427
    %v3435 = vmul.f32 %v3433, %v3340
    %3437 = vrot.lane.b32.xlu0 %v3434, 32
    %v3438 = vpop.permute.xlu0 %3437
    %v3440 = vmul.f32 %v3433, %v3438
    %3442 = vrot.lane.b32.xlu0 %v3440, 32
    %v3443 = vpop.permute.xlu0 %3442
    %v3445 = vadd.f32 %v3435, %v3443
    %v3446 = vtanh.pop %v3445
    %3448 = vrot.lane.b32.xlu0 %v3446, 32
    %v3449 = vpop.permute.xlu0 %3448
    %v3451 = vmul.f32 %v3433, %v3449
    %3453 = vrot.lane.b32.xlu0 %v3451, 64
    %v3454 = vpop.permute.xlu0 %3453
    %s3456 = scalar_lea.vmem [#allocation5], 8
    %3457 = vst.msk [vmem:[%s3456] sm:$0xff] %vm933, %v3454
    %s3458 = scalar_lea.vmem [#allocation5], 144
    %3459 = vst.msk [vmem:[%s3458] sm:$0xff] %vm936, %v3454
    %v3460 = vld [vmem:[%s3200] sm:$0xff]
    %v3461 = vsel %vm830, %v3454, 0
    %3463 = vmatprep.subr.mxu0 0.0
    %3464 = vmatpush1.msra.mxu0 0.0
    %3465 = vmatprep.subr.mxu0 0.0
    %3466 = vmatpush1.msra.mxu0 0.0
    %3467 = vmatprep.subr.mxu0 0.0
    %3468 = vmatpush1.msra.mxu0 0.0
    %3469 = vmatprep.subr.mxu0 0.0
    %3470 = vmatpush1.msra.mxu0 0.0
    %3471 = vmatprep.subr.mxu0 0.0
    %3472 = vmatpush1.msra.mxu0 0.0
    %3473 = vmatprep.subr.mxu0 0.0
    %3474 = vmatpush1.msra.mxu0 0.0
    %3475 = vmatprep.subr.mxu0 0.0
    %3476 = vmatpush1.msra.mxu0 0.0
    %3477 = vmatprep.subr.mxu0 0.0
    %3478 = vmatpush1.msra.mxu0 0.0
    %3479 = vmatprep.subr.mxu0 0.0
    %3480 = vmatpush1.msra.mxu0 0.0
    %3481 = vmatprep.subr.mxu0 0.0
    %3482 = vmatpush1.msra.mxu0 0.0
    %3483 = vmatprep.subr.mxu0 0.0
    %3484 = vmatpush1.msra.mxu0 0.0
    %3485 = vmatprep.subr.mxu0 0.0
    %3486 = vmatpush1.msra.mxu0 0.0
    %3487 = vmatprep.subr.mxu0 0.0
    %3488 = vmatpush1.msra.mxu0 %v3250
    %3489 = vmatprep.subr.mxu0 0.0
    %3490 = vmatpush1.msra.mxu0 %v3249
    %3491 = vmatprep.subr.mxu0 0.0
    %3492 = vmatpush1.msra.mxu0 %v3248
    %3493 = vmatprep.subr.mxu0 0.0
    %3494 = vmatpush1.msra.mxu0 %v3247
    %3495 = vmatprep.subr.mxu0 0.0
    %3496 = vmatpush2.msra.mxu0 0.0
    %3497 = vmatprep.subr.mxu0 0.0
    %3498 = vmatpush2.msra.mxu0 0.0
    %3499 = vmatprep.subr.mxu0 0.0
    %3500 = vmatpush2.msra.mxu0 0.0
    %3501 = vmatprep.subr.mxu0 0.0
    %3502 = vmatpush2.msra.mxu0 0.0
    %3503 = vmatprep.subr.mxu0 0.0
    %3504 = vmatpush2.msra.mxu0 0.0
    %3505 = vmatprep.subr.mxu0 0.0
    %3506 = vmatpush2.msra.mxu0 0.0
    %3507 = vmatprep.subr.mxu0 0.0
    %3508 = vmatpush2.msra.mxu0 0.0
    %3509 = vmatprep.subr.mxu0 0.0
    %3510 = vmatpush2.msra.mxu0 0.0
    %3511 = vmatprep.subr.mxu0 0.0
    %3512 = vmatpush2.msra.mxu0 0.0
    %3513 = vmatprep.subr.mxu0 0.0
    %3514 = vmatpush2.msra.mxu0 0.0
    %3515 = vmatprep.subr.mxu0 0.0
    %3516 = vmatpush2.msra.mxu0 0.0
    %3517 = vmatprep.subr.mxu0 0.0
    %3518 = vmatpush2.msra.mxu0 0.0
    %3519 = vmatprep.subr.mxu0 0.0
    %3520 = vmatpush2.msra.mxu0 0.0
    %3521 = vmatprep.subr.mxu0 0.0
    %3522 = vmatpush2.msra.mxu0 0.0
    %3523 = vmatprep.subr.mxu0 0.0
    %3524 = vmatpush2.msra.mxu0 0.0
    %3525 = vmatprep.subr.mxu0 0.0
    %3526 = vmatpush2.msra.mxu0 0.0
    %3527 = vmatprep.mubr.f32.mxu0 0.0
    %3528 = vmatmul.mubr.f32.gmra.mxu0 %v3461
    %v3529 = vpop.f32.mrf.mxu0
    %v3530 = vadd.f32 0.0, %v3529
    %v3531 = vpop.f32.mrf.mxu0
    %3532 = vdwg.mxu0
    %v3533 = vadd.f32 %v3460, %v3530
    %v3534 = vxor.u32 %v3533, 2147483648
    %v3535 = vmul.f32 %v3534, 1.442695
    %v3536 = vpow.pop %v3535
    %v3537 = vadd.f32 %v3536, 1.0
    %v3538 = vrcp.pop %v3537
    %v3539 = vmul.f32 1.0, %v3538
    %v3540 = vtanh.pop %v3533
    %v3541 = vmul.f32 %v3539, %v3445
    %3543 = vrot.lane.b32.xlu0 %v3540, 32
    %v3544 = vpop.permute.xlu0 %3543
    %v3546 = vmul.f32 %v3539, %v3544
    %3548 = vrot.lane.b32.xlu0 %v3546, 32
    %v3549 = vpop.permute.xlu0 %3548
    %v3551 = vadd.f32 %v3541, %v3549
    %v3552 = vtanh.pop %v3551
    %3554 = vrot.lane.b32.xlu0 %v3552, 32
    %v3555 = vpop.permute.xlu0 %3554
    %v3557 = vmul.f32 %v3539, %v3555
    %3559 = vrot.lane.b32.xlu0 %v3557, 64
    %v3560 = vpop.permute.xlu0 %3559
    %s3562 = scalar_lea.vmem [#allocation5], 16
    %3563 = vst.msk [vmem:[%s3562] sm:$0xff] %vm933, %v3560
    %s3564 = scalar_lea.vmem [#allocation5], 136
    %3565 = vst.msk [vmem:[%s3564] sm:$0xff] %vm936, %v3560
    %v3566 = vld [vmem:[%s3206] sm:$0xff]
    %v3567 = vsel %vm830, %v3560, 0
    %3569 = vmatprep.subr.mxu0 0.0
    %3570 = vmatpush1.msra.mxu0 0.0
    %3571 = vmatprep.subr.mxu0 0.0
    %3572 = vmatpush1.msra.mxu0 0.0
    %3573 = vmatprep.subr.mxu0 0.0
    %3574 = vmatpush1.msra.mxu0 0.0
    %3575 = vmatprep.subr.mxu0 0.0
    %3576 = vmatpush1.msra.mxu0 0.0
    %3577 = vmatprep.subr.mxu0 0.0
    %3578 = vmatpush1.msra.mxu0 0.0
    %3579 = vmatprep.subr.mxu0 0.0
    %3580 = vmatpush1.msra.mxu0 0.0
    %3581 = vmatprep.subr.mxu0 0.0
    %3582 = vmatpush1.msra.mxu0 0.0
    %3583 = vmatprep.subr.mxu0 0.0
    %3584 = vmatpush1.msra.mxu0 0.0
    %3585 = vmatprep.subr.mxu0 0.0
    %3586 = vmatpush1.msra.mxu0 0.0
    %3587 = vmatprep.subr.mxu0 0.0
    %3588 = vmatpush1.msra.mxu0 0.0
    %3589 = vmatprep.subr.mxu0 0.0
    %3590 = vmatpush1.msra.mxu0 0.0
    %3591 = vmatprep.subr.mxu0 0.0
    %3592 = vmatpush1.msra.mxu0 0.0
    %3593 = vmatprep.subr.mxu0 0.0
    %3594 = vmatpush1.msra.mxu0 %v3250
    %3595 = vmatprep.subr.mxu0 0.0
    %3596 = vmatpush1.msra.mxu0 %v3249
    %3597 = vmatprep.subr.mxu0 0.0
    %3598 = vmatpush1.msra.mxu0 %v3248
    %3599 = vmatprep.subr.mxu0 0.0
    %3600 = vmatpush1.msra.mxu0 %v3247
    %3601 = vmatprep.subr.mxu0 0.0
    %3602 = vmatpush2.msra.mxu0 0.0
    %3603 = vmatprep.subr.mxu0 0.0
    %3604 = vmatpush2.msra.mxu0 0.0
    %3605 = vmatprep.subr.mxu0 0.0
    %3606 = vmatpush2.msra.mxu0 0.0
    %3607 = vmatprep.subr.mxu0 0.0
    %3608 = vmatpush2.msra.mxu0 0.0
    %3609 = vmatprep.subr.mxu0 0.0
    %3610 = vmatpush2.msra.mxu0 0.0
    %3611 = vmatprep.subr.mxu0 0.0
    %3612 = vmatpush2.msra.mxu0 0.0
    %3613 = vmatprep.subr.mxu0 0.0
    %3614 = vmatpush2.msra.mxu0 0.0
    %3615 = vmatprep.subr.mxu0 0.0
    %3616 = vmatpush2.msra.mxu0 0.0
    %3617 = vmatprep.subr.mxu0 0.0
    %3618 = vmatpush2.msra.mxu0 0.0
    %3619 = vmatprep.subr.mxu0 0.0
    %3620 = vmatpush2.msra.mxu0 0.0
    %3621 = vmatprep.subr.mxu0 0.0
    %3622 = vmatpush2.msra.mxu0 0.0
    %3623 = vmatprep.subr.mxu0 0.0
    %3624 = vmatpush2.msra.mxu0 0.0
    %3625 = vmatprep.subr.mxu0 0.0
    %3626 = vmatpush2.msra.mxu0 0.0
    %3627 = vmatprep.subr.mxu0 0.0
    %3628 = vmatpush2.msra.mxu0 0.0
    %3629 = vmatprep.subr.mxu0 0.0
    %3630 = vmatpush2.msra.mxu0 0.0
    %3631 = vmatprep.subr.mxu0 0.0
    %3632 = vmatpush2.msra.mxu0 0.0
    %3633 = vmatprep.mubr.f32.mxu0 0.0
    %3634 = vmatmul.mubr.f32.gmra.mxu0 %v3567
    %v3635 = vpop.f32.mrf.mxu0
    %v3636 = vadd.f32 0.0, %v3635
    %v3637 = vpop.f32.mrf.mxu0
    %3638 = vdwg.mxu0
    %v3639 = vadd.f32 %v3566, %v3636
    %v3640 = vxor.u32 %v3639, 2147483648
    %v3641 = vmul.f32 %v3640, 1.442695
    %v3642 = vpow.pop %v3641
    %v3643 = vadd.f32 %v3642, 1.0
    %v3644 = vrcp.pop %v3643
    %v3645 = vmul.f32 1.0, %v3644
    %v3646 = vtanh.pop %v3639
    %v3647 = vmul.f32 %v3645, %v3551
    %3649 = vrot.lane.b32.xlu0 %v3646, 32
    %v3650 = vpop.permute.xlu0 %3649
    %v3652 = vmul.f32 %v3645, %v3650
    %3654 = vrot.lane.b32.xlu0 %v3652, 32
    %v3655 = vpop.permute.xlu0 %3654
    %v3657 = vadd.f32 %v3647, %v3655
    %v3658 = vtanh.pop %v3657
    %3660 = vrot.lane.b32.xlu0 %v3658, 32
    %v3661 = vpop.permute.xlu0 %3660
    %v3663 = vmul.f32 %v3645, %v3661
    %3665 = vrot.lane.b32.xlu0 %v3663, 64
    %v3666 = vpop.permute.xlu0 %3665
    %s3668 = scalar_lea.vmem [#allocation5], 24
    %3669 = vst.msk [vmem:[%s3668] sm:$0xff] %vm933, %v3666
    %s3670 = scalar_lea.vmem [#allocation5], 128
    %3671 = vst.msk [vmem:[%s3670] sm:$0xff] %vm936, %v3666
    %v3672 = vld [vmem:[%s3212] sm:$0xff]
    %v3673 = vsel %vm830, %v3666, 0
    %3675 = vmatprep.subr.mxu0 0.0
    %3676 = vmatpush1.msra.mxu0 0.0
    %3677 = vmatprep.subr.mxu0 0.0
    %3678 = vmatpush1.msra.mxu0 0.0
    %3679 = vmatprep.subr.mxu0 0.0
    %3680 = vmatpush1.msra.mxu0 0.0
    %3681 = vmatprep.subr.mxu0 0.0
    %3682 = vmatpush1.msra.mxu0 0.0
    %3683 = vmatprep.subr.mxu0 0.0
    %3684 = vmatpush1.msra.mxu0 0.0
    %3685 = vmatprep.subr.mxu0 0.0
    %3686 = vmatpush1.msra.mxu0 0.0
    %3687 = vmatprep.subr.mxu0 0.0
    %3688 = vmatpush1.msra.mxu0 0.0
    %3689 = vmatprep.subr.mxu0 0.0
    %3690 = vmatpush1.msra.mxu0 0.0
    %3691 = vmatprep.subr.mxu0 0.0
    %3692 = vmatpush1.msra.mxu0 0.0
    %3693 = vmatprep.subr.mxu0 0.0
    %3694 = vmatpush1.msra.mxu0 0.0
    %3695 = vmatprep.subr.mxu0 0.0
    %3696 = vmatpush1.msra.mxu0 0.0
    %3697 = vmatprep.subr.mxu0 0.0
    %3698 = vmatpush1.msra.mxu0 0.0
    %3699 = vmatprep.subr.mxu0 0.0
    %3700 = vmatpush1.msra.mxu0 %v3250
    %3701 = vmatprep.subr.mxu0 0.0
    %3702 = vmatpush1.msra.mxu0 %v3249
    %3703 = vmatprep.subr.mxu0 0.0
    %3704 = vmatpush1.msra.mxu0 %v3248
    %3705 = vmatprep.subr.mxu0 0.0
    %3706 = vmatpush1.msra.mxu0 %v3247
    %3707 = vmatprep.subr.mxu0 0.0
    %3708 = vmatpush2.msra.mxu0 0.0
    %3709 = vmatprep.subr.mxu0 0.0
    %3710 = vmatpush2.msra.mxu0 0.0
    %3711 = vmatprep.subr.mxu0 0.0
    %3712 = vmatpush2.msra.mxu0 0.0
    %3713 = vmatprep.subr.mxu0 0.0
    %3714 = vmatpush2.msra.mxu0 0.0
    %3715 = vmatprep.subr.mxu0 0.0
    %3716 = vmatpush2.msra.mxu0 0.0
    %3717 = vmatprep.subr.mxu0 0.0
    %3718 = vmatpush2.msra.mxu0 0.0
    %3719 = vmatprep.subr.mxu0 0.0
    %3720 = vmatpush2.msra.mxu0 0.0
    %3721 = vmatprep.subr.mxu0 0.0
    %3722 = vmatpush2.msra.mxu0 0.0
    %3723 = vmatprep.subr.mxu0 0.0
    %3724 = vmatpush2.msra.mxu0 0.0
    %3725 = vmatprep.subr.mxu0 0.0
    %3726 = vmatpush2.msra.mxu0 0.0
    %3727 = vmatprep.subr.mxu0 0.0
    %3728 = vmatpush2.msra.mxu0 0.0
    %3729 = vmatprep.subr.mxu0 0.0
    %3730 = vmatpush2.msra.mxu0 0.0
    %3731 = vmatprep.subr.mxu0 0.0
    %3732 = vmatpush2.msra.mxu0 0.0
    %3733 = vmatprep.subr.mxu0 0.0
    %3734 = vmatpush2.msra.mxu0 0.0
    %3735 = vmatprep.subr.mxu0 0.0
    %3736 = vmatpush2.msra.mxu0 0.0
    %3737 = vmatprep.subr.mxu0 0.0
    %3738 = vmatpush2.msra.mxu0 0.0
    %3739 = vmatprep.mubr.f32.mxu0 0.0
    %3740 = vmatmul.mubr.f32.gmra.mxu0 %v3673
    %v3741 = vpop.f32.mrf.mxu0
    %v3742 = vadd.f32 0.0, %v3741
    %v3743 = vpop.f32.mrf.mxu0
    %3744 = vdwg.mxu0
    %v3745 = vadd.f32 %v3672, %v3742
    %v3746 = vxor.u32 %v3745, 2147483648
    %v3747 = vmul.f32 %v3746, 1.442695
    %v3748 = vpow.pop %v3747
    %v3749 = vadd.f32 %v3748, 1.0
    %v3750 = vrcp.pop %v3749
    %v3751 = vmul.f32 1.0, %v3750
    %v3752 = vtanh.pop %v3745
    %v3753 = vmul.f32 %v3751, %v3657
    %3755 = vrot.lane.b32.xlu0 %v3752, 32
    %v3756 = vpop.permute.xlu0 %3755
    %v3758 = vmul.f32 %v3751, %v3756
    %3760 = vrot.lane.b32.xlu0 %v3758, 32
    %v3761 = vpop.permute.xlu0 %3760
    %v3763 = vadd.f32 %v3753, %v3761
    %v3764 = vtanh.pop %v3763
    %3766 = vrot.lane.b32.xlu0 %v3764, 32
    %v3767 = vpop.permute.xlu0 %3766
    %v3769 = vmul.f32 %v3751, %v3767
    %3771 = vrot.lane.b32.xlu0 %v3769, 64
    %v3772 = vpop.permute.xlu0 %3771
    %s3774 = scalar_lea.vmem [#allocation5], 32
    %3775 = vst.msk [vmem:[%s3774] sm:$0xff] %vm933, %v3772
    %s3776 = scalar_lea.vmem [#allocation5], 120
    %3777 = vst.msk [vmem:[%s3776] sm:$0xff] %vm936, %v3772
    %v3778 = vld [vmem:[%s3218] sm:$0xff]
    %v3779 = vsel %vm830, %v3772, 0
    %3781 = vmatprep.subr.mxu0 0.0
    %3782 = vmatpush1.msra.mxu0 0.0
    %3783 = vmatprep.subr.mxu0 0.0
    %3784 = vmatpush1.msra.mxu0 0.0
    %3785 = vmatprep.subr.mxu0 0.0
    %3786 = vmatpush1.msra.mxu0 0.0
    %3787 = vmatprep.subr.mxu0 0.0
    %3788 = vmatpush1.msra.mxu0 0.0
    %3789 = vmatprep.subr.mxu0 0.0
    %3790 = vmatpush1.msra.mxu0 0.0
    %3791 = vmatprep.subr.mxu0 0.0
    %3792 = vmatpush1.msra.mxu0 0.0
    %3793 = vmatprep.subr.mxu0 0.0
    %3794 = vmatpush1.msra.mxu0 0.0
    %3795 = vmatprep.subr.mxu0 0.0
    %3796 = vmatpush1.msra.mxu0 0.0
    %3797 = vmatprep.subr.mxu0 0.0
    %3798 = vmatpush1.msra.mxu0 0.0
    %3799 = vmatprep.subr.mxu0 0.0
    %3800 = vmatpush1.msra.mxu0 0.0
    %3801 = vmatprep.subr.mxu0 0.0
    %3802 = vmatpush1.msra.mxu0 0.0
    %3803 = vmatprep.subr.mxu0 0.0
    %3804 = vmatpush1.msra.mxu0 0.0
    %3805 = vmatprep.subr.mxu0 0.0
    %3806 = vmatpush1.msra.mxu0 %v3250
    %3807 = vmatprep.subr.mxu0 0.0
    %3808 = vmatpush1.msra.mxu0 %v3249
    %3809 = vmatprep.subr.mxu0 0.0
    %3810 = vmatpush1.msra.mxu0 %v3248
    %3811 = vmatprep.subr.mxu0 0.0
    %3812 = vmatpush1.msra.mxu0 %v3247
    %3813 = vmatprep.subr.mxu0 0.0
    %3814 = vmatpush2.msra.mxu0 0.0
    %3815 = vmatprep.subr.mxu0 0.0
    %3816 = vmatpush2.msra.mxu0 0.0
    %3817 = vmatprep.subr.mxu0 0.0
    %3818 = vmatpush2.msra.mxu0 0.0
    %3819 = vmatprep.subr.mxu0 0.0
    %3820 = vmatpush2.msra.mxu0 0.0
    %3821 = vmatprep.subr.mxu0 0.0
    %3822 = vmatpush2.msra.mxu0 0.0
    %3823 = vmatprep.subr.mxu0 0.0
    %3824 = vmatpush2.msra.mxu0 0.0
    %3825 = vmatprep.subr.mxu0 0.0
    %3826 = vmatpush2.msra.mxu0 0.0
    %3827 = vmatprep.subr.mxu0 0.0
    %3828 = vmatpush2.msra.mxu0 0.0
    %3829 = vmatprep.subr.mxu0 0.0
    %3830 = vmatpush2.msra.mxu0 0.0
    %3831 = vmatprep.subr.mxu0 0.0
    %3832 = vmatpush2.msra.mxu0 0.0
    %3833 = vmatprep.subr.mxu0 0.0
    %3834 = vmatpush2.msra.mxu0 0.0
    %3835 = vmatprep.subr.mxu0 0.0
    %3836 = vmatpush2.msra.mxu0 0.0
    %3837 = vmatprep.subr.mxu0 0.0
    %3838 = vmatpush2.msra.mxu0 0.0
    %3839 = vmatprep.subr.mxu0 0.0
    %3840 = vmatpush2.msra.mxu0 0.0
    %3841 = vmatprep.subr.mxu0 0.0
    %3842 = vmatpush2.msra.mxu0 0.0
    %3843 = vmatprep.subr.mxu0 0.0
    %3844 = vmatpush2.msra.mxu0 0.0
    %3845 = vmatprep.mubr.f32.mxu0 0.0
    %3846 = vmatmul.mubr.f32.gmra.mxu0 %v3779
    %v3847 = vpop.f32.mrf.mxu0
    %v3848 = vadd.f32 0.0, %v3847
    %v3849 = vpop.f32.mrf.mxu0
    %3850 = vdwg.mxu0
    %v3851 = vadd.f32 %v3778, %v3848
    %v3852 = vxor.u32 %v3851, 2147483648
    %v3853 = vmul.f32 %v3852, 1.442695
    %v3854 = vpow.pop %v3853
    %v3855 = vadd.f32 %v3854, 1.0
    %v3856 = vrcp.pop %v3855
    %v3857 = vmul.f32 1.0, %v3856
    %v3858 = vtanh.pop %v3851
    %v3859 = vmul.f32 %v3857, %v3763
    %3861 = vrot.lane.b32.xlu0 %v3858, 32
    %v3862 = vpop.permute.xlu0 %3861
    %v3864 = vmul.f32 %v3857, %v3862
    %3866 = vrot.lane.b32.xlu0 %v3864, 32
    %v3867 = vpop.permute.xlu0 %3866
    %v3869 = vadd.f32 %v3859, %v3867
    %v3870 = vtanh.pop %v3869
    %3872 = vrot.lane.b32.xlu0 %v3870, 32
    %v3873 = vpop.permute.xlu0 %3872
    %v3875 = vmul.f32 %v3857, %v3873
    %3877 = vrot.lane.b32.xlu0 %v3875, 64
    %v3878 = vpop.permute.xlu0 %3877
    %s3880 = scalar_lea.vmem [#allocation5], 40
    %3881 = vst.msk [vmem:[%s3880] sm:$0xff] %vm933, %v3878
    %s3882 = scalar_lea.vmem [#allocation5], 112
    %3883 = vst.msk [vmem:[%s3882] sm:$0xff] %vm936, %v3878
    %v3884 = vld [vmem:[%s3224] sm:$0xff]
    %v3885 = vsel %vm830, %v3878, 0
    %3887 = vmatprep.subr.mxu0 0.0
    %3888 = vmatpush1.msra.mxu0 0.0
    %3889 = vmatprep.subr.mxu0 0.0
    %3890 = vmatpush1.msra.mxu0 0.0
    %3891 = vmatprep.subr.mxu0 0.0
    %3892 = vmatpush1.msra.mxu0 0.0
    %3893 = vmatprep.subr.mxu0 0.0
    %3894 = vmatpush1.msra.mxu0 0.0
    %3895 = vmatprep.subr.mxu0 0.0
    %3896 = vmatpush1.msra.mxu0 0.0
    %3897 = vmatprep.subr.mxu0 0.0
    %3898 = vmatpush1.msra.mxu0 0.0
    %3899 = vmatprep.subr.mxu0 0.0
    %3900 = vmatpush1.msra.mxu0 0.0
    %3901 = vmatprep.subr.mxu0 0.0
    %3902 = vmatpush1.msra.mxu0 0.0
    %3903 = vmatprep.subr.mxu0 0.0
    %3904 = vmatpush1.msra.mxu0 0.0
    %3905 = vmatprep.subr.mxu0 0.0
    %3906 = vmatpush1.msra.mxu0 0.0
    %3907 = vmatprep.subr.mxu0 0.0
    %3908 = vmatpush1.msra.mxu0 0.0
    %3909 = vmatprep.subr.mxu0 0.0
    %3910 = vmatpush1.msra.mxu0 0.0
    %3911 = vmatprep.subr.mxu0 0.0
    %3912 = vmatpush1.msra.mxu0 %v3250
    %3913 = vmatprep.subr.mxu0 0.0
    %3914 = vmatpush1.msra.mxu0 %v3249
    %3915 = vmatprep.subr.mxu0 0.0
    %3916 = vmatpush1.msra.mxu0 %v3248
    %3917 = vmatprep.subr.mxu0 0.0
    %3918 = vmatpush1.msra.mxu0 %v3247
    %3919 = vmatprep.subr.mxu0 0.0
    %3920 = vmatpush2.msra.mxu0 0.0
    %3921 = vmatprep.subr.mxu0 0.0
    %3922 = vmatpush2.msra.mxu0 0.0
    %3923 = vmatprep.subr.mxu0 0.0
    %3924 = vmatpush2.msra.mxu0 0.0
    %3925 = vmatprep.subr.mxu0 0.0
    %3926 = vmatpush2.msra.mxu0 0.0
    %3927 = vmatprep.subr.mxu0 0.0
    %3928 = vmatpush2.msra.mxu0 0.0
    %3929 = vmatprep.subr.mxu0 0.0
    %3930 = vmatpush2.msra.mxu0 0.0
    %3931 = vmatprep.subr.mxu0 0.0
    %3932 = vmatpush2.msra.mxu0 0.0
    %3933 = vmatprep.subr.mxu0 0.0
    %3934 = vmatpush2.msra.mxu0 0.0
    %3935 = vmatprep.subr.mxu0 0.0
    %3936 = vmatpush2.msra.mxu0 0.0
    %3937 = vmatprep.subr.mxu0 0.0
    %3938 = vmatpush2.msra.mxu0 0.0
    %3939 = vmatprep.subr.mxu0 0.0
    %3940 = vmatpush2.msra.mxu0 0.0
    %3941 = vmatprep.subr.mxu0 0.0
    %3942 = vmatpush2.msra.mxu0 0.0
    %3943 = vmatprep.subr.mxu0 0.0
    %3944 = vmatpush2.msra.mxu0 0.0
    %3945 = vmatprep.subr.mxu0 0.0
    %3946 = vmatpush2.msra.mxu0 0.0
    %3947 = vmatprep.subr.mxu0 0.0
    %3948 = vmatpush2.msra.mxu0 0.0
    %3949 = vmatprep.subr.mxu0 0.0
    %3950 = vmatpush2.msra.mxu0 0.0
    %3951 = vmatprep.mubr.f32.mxu0 0.0
    %3952 = vmatmul.mubr.f32.gmra.mxu0 %v3885
    %v3953 = vpop.f32.mrf.mxu0
    %v3954 = vadd.f32 0.0, %v3953
    %v3955 = vpop.f32.mrf.mxu0
    %3956 = vdwg.mxu0
    %v3957 = vadd.f32 %v3884, %v3954
    %v3958 = vxor.u32 %v3957, 2147483648
    %v3959 = vmul.f32 %v3958, 1.442695
    %v3960 = vpow.pop %v3959
    %v3961 = vadd.f32 %v3960, 1.0
    %v3962 = vrcp.pop %v3961
    %v3963 = vmul.f32 1.0, %v3962
    %v3964 = vtanh.pop %v3957
    %v3965 = vmul.f32 %v3963, %v3869
    %3967 = vrot.lane.b32.xlu0 %v3964, 32
    %v3968 = vpop.permute.xlu0 %3967
    %v3970 = vmul.f32 %v3963, %v3968
    %3972 = vrot.lane.b32.xlu0 %v3970, 32
    %v3973 = vpop.permute.xlu0 %3972
    %v3975 = vadd.f32 %v3965, %v3973
    %v3976 = vtanh.pop %v3975
    %3978 = vrot.lane.b32.xlu0 %v3976, 32
    %v3979 = vpop.permute.xlu0 %3978
    %v3981 = vmul.f32 %v3963, %v3979
    %3983 = vrot.lane.b32.xlu0 %v3981, 64
    %v3984 = vpop.permute.xlu0 %3983
    %s3986 = scalar_lea.vmem [#allocation5], 48
    %3987 = vst.msk [vmem:[%s3986] sm:$0xff] %vm933, %v3984
    %s3988 = scalar_lea.vmem [#allocation5], 104
    %3989 = vst.msk [vmem:[%s3988] sm:$0xff] %vm936, %v3984
    %v3990 = vld [vmem:[%s3230] sm:$0xff]
    %v3991 = vsel %vm830, %v3984, 0
    %3993 = vmatprep.subr.mxu0 0.0
    %3994 = vmatpush1.msra.mxu0 0.0
    %3995 = vmatprep.subr.mxu0 0.0
    %3996 = vmatpush1.msra.mxu0 0.0
    %3997 = vmatprep.subr.mxu0 0.0
    %3998 = vmatpush1.msra.mxu0 0.0
    %3999 = vmatprep.subr.mxu0 0.0
    %4000 = vmatpush1.msra.mxu0 0.0
    %4001 = vmatprep.subr.mxu0 0.0
    %4002 = vmatpush1.msra.mxu0 0.0
    %4003 = vmatprep.subr.mxu0 0.0
    %4004 = vmatpush1.msra.mxu0 0.0
    %4005 = vmatprep.subr.mxu0 0.0
    %4006 = vmatpush1.msra.mxu0 0.0
    %4007 = vmatprep.subr.mxu0 0.0
    %4008 = vmatpush1.msra.mxu0 0.0
    %4009 = vmatprep.subr.mxu0 0.0
    %4010 = vmatpush1.msra.mxu0 0.0
    %4011 = vmatprep.subr.mxu0 0.0
    %4012 = vmatpush1.msra.mxu0 0.0
    %4013 = vmatprep.subr.mxu0 0.0
    %4014 = vmatpush1.msra.mxu0 0.0
    %4015 = vmatprep.subr.mxu0 0.0
    %4016 = vmatpush1.msra.mxu0 0.0
    %4017 = vmatprep.subr.mxu0 0.0
    %4018 = vmatpush1.msra.mxu0 %v3250
    %4019 = vmatprep.subr.mxu0 0.0
    %4020 = vmatpush1.msra.mxu0 %v3249
    %4021 = vmatprep.subr.mxu0 0.0
    %4022 = vmatpush1.msra.mxu0 %v3248
    %4023 = vmatprep.subr.mxu0 0.0
    %4024 = vmatpush1.msra.mxu0 %v3247
    %4025 = vmatprep.subr.mxu0 0.0
    %4026 = vmatpush2.msra.mxu0 0.0
    %4027 = vmatprep.subr.mxu0 0.0
    %4028 = vmatpush2.msra.mxu0 0.0
    %4029 = vmatprep.subr.mxu0 0.0
    %4030 = vmatpush2.msra.mxu0 0.0
    %4031 = vmatprep.subr.mxu0 0.0
    %4032 = vmatpush2.msra.mxu0 0.0
    %4033 = vmatprep.subr.mxu0 0.0
    %4034 = vmatpush2.msra.mxu0 0.0
    %4035 = vmatprep.subr.mxu0 0.0
    %4036 = vmatpush2.msra.mxu0 0.0
    %4037 = vmatprep.subr.mxu0 0.0
    %4038 = vmatpush2.msra.mxu0 0.0
    %4039 = vmatprep.subr.mxu0 0.0
    %4040 = vmatpush2.msra.mxu0 0.0
    %4041 = vmatprep.subr.mxu0 0.0
    %4042 = vmatpush2.msra.mxu0 0.0
    %4043 = vmatprep.subr.mxu0 0.0
    %4044 = vmatpush2.msra.mxu0 0.0
    %4045 = vmatprep.subr.mxu0 0.0
    %4046 = vmatpush2.msra.mxu0 0.0
    %4047 = vmatprep.subr.mxu0 0.0
    %4048 = vmatpush2.msra.mxu0 0.0
    %4049 = vmatprep.subr.mxu0 0.0
    %4050 = vmatpush2.msra.mxu0 0.0
    %4051 = vmatprep.subr.mxu0 0.0
    %4052 = vmatpush2.msra.mxu0 0.0
    %4053 = vmatprep.subr.mxu0 0.0
    %4054 = vmatpush2.msra.mxu0 0.0
    %4055 = vmatprep.subr.mxu0 0.0
    %4056 = vmatpush2.msra.mxu0 0.0
    %4057 = vmatprep.mubr.f32.mxu0 0.0
    %4058 = vmatmul.mubr.f32.gmra.mxu0 %v3991
    %v4059 = vpop.f32.mrf.mxu0
    %v4060 = vadd.f32 0.0, %v4059
    %v4061 = vpop.f32.mrf.mxu0
    %4062 = vdwg.mxu0
    %v4063 = vadd.f32 %v3990, %v4060
    %v4064 = vxor.u32 %v4063, 2147483648
    %v4065 = vmul.f32 %v4064, 1.442695
    %v4066 = vpow.pop %v4065
    %v4067 = vadd.f32 %v4066, 1.0
    %v4068 = vrcp.pop %v4067
    %v4069 = vmul.f32 1.0, %v4068
    %v4070 = vtanh.pop %v4063
    %v4071 = vmul.f32 %v4069, %v3975
    %4073 = vrot.lane.b32.xlu0 %v4070, 32
    %v4074 = vpop.permute.xlu0 %4073
    %v4076 = vmul.f32 %v4069, %v4074
    %4078 = vrot.lane.b32.xlu0 %v4076, 32
    %v4079 = vpop.permute.xlu0 %4078
    %v4081 = vadd.f32 %v4071, %v4079
    %v4082 = vtanh.pop %v4081
    %4084 = vrot.lane.b32.xlu0 %v4082, 32
    %v4085 = vpop.permute.xlu0 %4084
    %v4087 = vmul.f32 %v4069, %v4085
    %4089 = vrot.lane.b32.xlu0 %v4087, 64
    %v4090 = vpop.permute.xlu0 %4089
    %s4092 = scalar_lea.vmem [#allocation5], 56
    %4093 = vst.msk [vmem:[%s4092] sm:$0xff] %vm933, %v4090
    %s4094 = scalar_lea.vmem [#allocation5], 96
    %4095 = vst.msk [vmem:[%s4094] sm:$0xff] %vm936, %v4090
    %v4096 = vld [vmem:[%s3236] sm:$0xff]
    %v4097 = vsel %vm830, %v4090, 0
    %4099 = vmatprep.subr.mxu0 0.0
    %4100 = vmatpush1.msra.mxu0 0.0
    %4101 = vmatprep.subr.mxu0 0.0
    %4102 = vmatpush1.msra.mxu0 0.0
    %4103 = vmatprep.subr.mxu0 0.0
    %4104 = vmatpush1.msra.mxu0 0.0
    %4105 = vmatprep.subr.mxu0 0.0
    %4106 = vmatpush1.msra.mxu0 0.0
    %4107 = vmatprep.subr.mxu0 0.0
    %4108 = vmatpush1.msra.mxu0 0.0
    %4109 = vmatprep.subr.mxu0 0.0
    %4110 = vmatpush1.msra.mxu0 0.0
    %4111 = vmatprep.subr.mxu0 0.0
    %4112 = vmatpush1.msra.mxu0 0.0
    %4113 = vmatprep.subr.mxu0 0.0
    %4114 = vmatpush1.msra.mxu0 0.0
    %4115 = vmatprep.subr.mxu0 0.0
    %4116 = vmatpush1.msra.mxu0 0.0
    %4117 = vmatprep.subr.mxu0 0.0
    %4118 = vmatpush1.msra.mxu0 0.0
    %4119 = vmatprep.subr.mxu0 0.0
    %4120 = vmatpush1.msra.mxu0 0.0
    %4121 = vmatprep.subr.mxu0 0.0
    %4122 = vmatpush1.msra.mxu0 0.0
    %4123 = vmatprep.subr.mxu0 0.0
    %4124 = vmatpush1.msra.mxu0 %v3250
    %4125 = vmatprep.subr.mxu0 0.0
    %4126 = vmatpush1.msra.mxu0 %v3249
    %4127 = vmatprep.subr.mxu0 0.0
    %4128 = vmatpush1.msra.mxu0 %v3248
    %4129 = vmatprep.subr.mxu0 0.0
    %4130 = vmatpush1.msra.mxu0 %v3247
    %4131 = vmatprep.subr.mxu0 0.0
    %4132 = vmatpush2.msra.mxu0 0.0
    %4133 = vmatprep.subr.mxu0 0.0
    %4134 = vmatpush2.msra.mxu0 0.0
    %4135 = vmatprep.subr.mxu0 0.0
    %4136 = vmatpush2.msra.mxu0 0.0
    %4137 = vmatprep.subr.mxu0 0.0
    %4138 = vmatpush2.msra.mxu0 0.0
    %4139 = vmatprep.subr.mxu0 0.0
    %4140 = vmatpush2.msra.mxu0 0.0
    %4141 = vmatprep.subr.mxu0 0.0
    %4142 = vmatpush2.msra.mxu0 0.0
    %4143 = vmatprep.subr.mxu0 0.0
    %4144 = vmatpush2.msra.mxu0 0.0
    %4145 = vmatprep.subr.mxu0 0.0
    %4146 = vmatpush2.msra.mxu0 0.0
    %4147 = vmatprep.subr.mxu0 0.0
    %4148 = vmatpush2.msra.mxu0 0.0
    %4149 = vmatprep.subr.mxu0 0.0
    %4150 = vmatpush2.msra.mxu0 0.0
    %4151 = vmatprep.subr.mxu0 0.0
    %4152 = vmatpush2.msra.mxu0 0.0
    %4153 = vmatprep.subr.mxu0 0.0
    %4154 = vmatpush2.msra.mxu0 0.0
    %4155 = vmatprep.subr.mxu0 0.0
    %4156 = vmatpush2.msra.mxu0 0.0
    %4157 = vmatprep.subr.mxu0 0.0
    %4158 = vmatpush2.msra.mxu0 0.0
    %4159 = vmatprep.subr.mxu0 0.0
    %4160 = vmatpush2.msra.mxu0 0.0
    %4161 = vmatprep.subr.mxu0 0.0
    %4162 = vmatpush2.msra.mxu0 0.0
    %4163 = vmatprep.mubr.f32.mxu0 0.0
    %4164 = vmatmul.mubr.f32.gmra.mxu0 %v4097
    %v4165 = vpop.f32.mrf.mxu0
    %v4166 = vadd.f32 0.0, %v4165
    %v4167 = vpop.f32.mrf.mxu0
    %4168 = vdwg.mxu0
    %v4169 = vadd.f32 %v4096, %v4166
    %v4170 = vxor.u32 %v4169, 2147483648
    %v4171 = vmul.f32 %v4170, 1.442695
    %v4172 = vpow.pop %v4171
    %v4173 = vadd.f32 %v4172, 1.0
    %v4174 = vrcp.pop %v4173
    %v4175 = vmul.f32 1.0, %v4174
    %v4176 = vtanh.pop %v4169
    %v4177 = vmul.f32 %v4175, %v4081
    %4179 = vrot.lane.b32.xlu0 %v4176, 32
    %v4180 = vpop.permute.xlu0 %4179
    %v4182 = vmul.f32 %v4175, %v4180
    %4184 = vrot.lane.b32.xlu0 %v4182, 32
    %v4185 = vpop.permute.xlu0 %4184
    %v4187 = vadd.f32 %v4177, %v4185
    %v4188 = vtanh.pop %v4187
    %4190 = vrot.lane.b32.xlu0 %v4188, 32
    %v4191 = vpop.permute.xlu0 %4190
    %v4193 = vmul.f32 %v4175, %v4191
    %4195 = vrot.lane.b32.xlu0 %v4193, 64
    %v4196 = vpop.permute.xlu0 %4195
    %s4198 = scalar_lea.vmem [#allocation5], 64
    %4199 = vst.msk [vmem:[%s4198] sm:$0xff] %vm933, %v4196
    %s4200 = scalar_lea.vmem [#allocation5], 88
    %4201 = vst.msk [vmem:[%s4200] sm:$0xff] %vm936, %v4196
    %v4202 = vld [vmem:[%s3242] sm:$0xff]
    %v4203 = vsel %vm830, %v4196, 0
    %4205 = vmatprep.subr.mxu0 0.0
    %4206 = vmatpush1.msra.mxu0 0.0
    %4207 = vmatprep.subr.mxu0 0.0
    %4208 = vmatpush1.msra.mxu0 0.0
    %4209 = vmatprep.subr.mxu0 0.0
    %4210 = vmatpush1.msra.mxu0 0.0
    %4211 = vmatprep.subr.mxu0 0.0
    %4212 = vmatpush1.msra.mxu0 0.0
    %4213 = vmatprep.subr.mxu0 0.0
    %4214 = vmatpush1.msra.mxu0 0.0
    %4215 = vmatprep.subr.mxu0 0.0
    %4216 = vmatpush1.msra.mxu0 0.0
    %4217 = vmatprep.subr.mxu0 0.0
    %4218 = vmatpush1.msra.mxu0 0.0
    %4219 = vmatprep.subr.mxu0 0.0
    %4220 = vmatpush1.msra.mxu0 0.0
    %4221 = vmatprep.subr.mxu0 0.0
    %4222 = vmatpush1.msra.mxu0 0.0
    %4223 = vmatprep.subr.mxu0 0.0
    %4224 = vmatpush1.msra.mxu0 0.0
    %4225 = vmatprep.subr.mxu0 0.0
    %4226 = vmatpush1.msra.mxu0 0.0
    %4227 = vmatprep.subr.mxu0 0.0
    %4228 = vmatpush1.msra.mxu0 0.0
    %4229 = vmatprep.subr.mxu0 0.0
    %4230 = vmatpush1.msra.mxu0 %v3250
    %4231 = vmatprep.subr.mxu0 0.0
    %4232 = vmatpush1.msra.mxu0 %v3249
    %4233 = vmatprep.subr.mxu0 0.0
    %4234 = vmatpush1.msra.mxu0 %v3248
    %4235 = vmatprep.subr.mxu0 0.0
    %4236 = vmatpush1.msra.mxu0 %v3247
    %4237 = vmatprep.subr.mxu0 0.0
    %4238 = vmatpush2.msra.mxu0 0.0
    %4239 = vmatprep.subr.mxu0 0.0
    %4240 = vmatpush2.msra.mxu0 0.0
    %4241 = vmatprep.subr.mxu0 0.0
    %4242 = vmatpush2.msra.mxu0 0.0
    %4243 = vmatprep.subr.mxu0 0.0
    %4244 = vmatpush2.msra.mxu0 0.0
    %4245 = vmatprep.subr.mxu0 0.0
    %4246 = vmatpush2.msra.mxu0 0.0
    %4247 = vmatprep.subr.mxu0 0.0
    %4248 = vmatpush2.msra.mxu0 0.0
    %4249 = vmatprep.subr.mxu0 0.0
    %4250 = vmatpush2.msra.mxu0 0.0
    %4251 = vmatprep.subr.mxu0 0.0
    %4252 = vmatpush2.msra.mxu0 0.0
    %4253 = vmatprep.subr.mxu0 0.0
    %4254 = vmatpush2.msra.mxu0 0.0
    %4255 = vmatprep.subr.mxu0 0.0
    %4256 = vmatpush2.msra.mxu0 0.0
    %4257 = vmatprep.subr.mxu0 0.0
    %4258 = vmatpush2.msra.mxu0 0.0
    %4259 = vmatprep.subr.mxu0 0.0
    %4260 = vmatpush2.msra.mxu0 0.0
    %4261 = vmatprep.subr.mxu0 0.0
    %4262 = vmatpush2.msra.mxu0 0.0
    %4263 = vmatprep.subr.mxu0 0.0
    %4264 = vmatpush2.msra.mxu0 0.0
    %4265 = vmatprep.subr.mxu0 0.0
    %4266 = vmatpush2.msra.mxu0 0.0
    %4267 = vmatprep.subr.mxu0 0.0
    %4268 = vmatpush2.msra.mxu0 0.0
    %4269 = vmatprep.mubr.f32.mxu0 0.0
    %4270 = vmatmul.mubr.f32.gmra.mxu0 %v4203
    %v4271 = vpop.f32.mrf.mxu0
    %v4272 = vadd.f32 0.0, %v4271
    %v4273 = vpop.f32.mrf.mxu0
    %4274 = vdwg.mxu0
    %v4275 = vadd.f32 %v4202, %v4272
    %v4276 = vxor.u32 %v4275, 2147483648
    %v4277 = vmul.f32 %v4276, 1.442695
    %v4278 = vpow.pop %v4277
    %v4279 = vadd.f32 %v4278, 1.0
    %v4280 = vrcp.pop %v4279
    %v4281 = vmul.f32 1.0, %v4280
    %v4282 = vtanh.pop %v4275
    %v4283 = vmul.f32 %v4281, %v4187
    %4285 = vrot.lane.b32.xlu0 %v4282, 32
    %v4286 = vpop.permute.xlu0 %4285
    %v4288 = vmul.f32 %v4281, %v4286
    %4290 = vrot.lane.b32.xlu0 %v4288, 32
    %v4291 = vpop.permute.xlu0 %4290
    %v4293 = vadd.f32 %v4283, %v4291
    %v4294 = vtanh.pop %v4293
    %4296 = vrot.lane.b32.xlu0 %v4294, 32
    %v4297 = vpop.permute.xlu0 %4296
    %v4299 = vmul.f32 %v4281, %v4297
    %4301 = vrot.lane.b32.xlu0 %v4299, 64
    %v4302 = vpop.permute.xlu0 %4301
    %s4304 = scalar_lea.vmem [#allocation5], 72
    %4305 = vst.msk [vmem:[%s4304] sm:$0xff] %vm933, %v4302
    %s4306 = scalar_lea.vmem [#allocation5], 80
    %4307 = vst.msk [vmem:[%s4306] sm:$0xff] %vm936, %v4302
    %v4308 = vld [vmem:[%s3245] sm:$0xff]
    %v4309 = vsel %vm830, %v4302, 0
    %4311 = vmatprep.subr.mxu0 0.0
    %4312 = vmatpush1.msra.mxu0 0.0
    %4313 = vmatprep.subr.mxu0 0.0
    %4314 = vmatpush1.msra.mxu0 0.0
    %4315 = vmatprep.subr.mxu0 0.0
    %4316 = vmatpush1.msra.mxu0 0.0
    %4317 = vmatprep.subr.mxu0 0.0
    %4318 = vmatpush1.msra.mxu0 0.0
    %4319 = vmatprep.subr.mxu0 0.0
    %4320 = vmatpush1.msra.mxu0 0.0
    %4321 = vmatprep.subr.mxu0 0.0
    %4322 = vmatpush1.msra.mxu0 0.0
    %4323 = vmatprep.subr.mxu0 0.0
    %4324 = vmatpush1.msra.mxu0 0.0
    %4325 = vmatprep.subr.mxu0 0.0
    %4326 = vmatpush1.msra.mxu0 0.0
    %4327 = vmatprep.subr.mxu0 0.0
    %4328 = vmatpush1.msra.mxu0 0.0
    %4329 = vmatprep.subr.mxu0 0.0
    %4330 = vmatpush1.msra.mxu0 0.0
    %4331 = vmatprep.subr.mxu0 0.0
    %4332 = vmatpush1.msra.mxu0 0.0
    %4333 = vmatprep.subr.mxu0 0.0
    %4334 = vmatpush1.msra.mxu0 0.0
    %4335 = vmatprep.subr.mxu0 0.0
    %4336 = vmatpush1.msra.mxu0 %v3250
    %4337 = vmatprep.subr.mxu0 0.0
    %4338 = vmatpush1.msra.mxu0 %v3249
    %4339 = vmatprep.subr.mxu0 0.0
    %4340 = vmatpush1.msra.mxu0 %v3248
    %4341 = vmatprep.subr.mxu0 0.0
    %4342 = vmatpush1.msra.mxu0 %v3247
    %4343 = vmatprep.subr.mxu0 0.0
    %4344 = vmatpush2.msra.mxu0 0.0
    %4345 = vmatprep.subr.mxu0 0.0
    %4346 = vmatpush2.msra.mxu0 0.0
    %4347 = vmatprep.subr.mxu0 0.0
    %4348 = vmatpush2.msra.mxu0 0.0
    %4349 = vmatprep.subr.mxu0 0.0
    %4350 = vmatpush2.msra.mxu0 0.0
    %4351 = vmatprep.subr.mxu0 0.0
    %4352 = vmatpush2.msra.mxu0 0.0
    %4353 = vmatprep.subr.mxu0 0.0
    %4354 = vmatpush2.msra.mxu0 0.0
    %4355 = vmatprep.subr.mxu0 0.0
    %4356 = vmatpush2.msra.mxu0 0.0
    %4357 = vmatprep.subr.mxu0 0.0
    %4358 = vmatpush2.msra.mxu0 0.0
    %4359 = vmatprep.subr.mxu0 0.0
    %4360 = vmatpush2.msra.mxu0 0.0
    %4361 = vmatprep.subr.mxu0 0.0
    %4362 = vmatpush2.msra.mxu0 0.0
    %4363 = vmatprep.subr.mxu0 0.0
    %4364 = vmatpush2.msra.mxu0 0.0
    %4365 = vmatprep.subr.mxu0 0.0
    %4366 = vmatpush2.msra.mxu0 0.0
    %4367 = vmatprep.subr.mxu0 0.0
    %4368 = vmatpush2.msra.mxu0 0.0
    %4369 = vmatprep.subr.mxu0 0.0
    %4370 = vmatpush2.msra.mxu0 0.0
    %4371 = vmatprep.subr.mxu0 0.0
    %4372 = vmatpush2.msra.mxu0 0.0
    %4373 = vmatprep.subr.mxu0 0.0
    %4374 = vmatpush2.msra.mxu0 0.0
    %4375 = vmatprep.mubr.f32.mxu0 0.0
    %4376 = vmatmul.mubr.f32.gmra.mxu0 %v4309
    %v4377 = vpop.f32.mrf.mxu0
    %v4378 = vadd.f32 0.0, %v4377
    %v4379 = vpop.f32.mrf.mxu0
    %4380 = vdwg.mxu0
    %v4381 = vadd.f32 %v4308, %v4378
    %v4382 = vxor.u32 %v4381, 2147483648
    %v4383 = vmul.f32 %v4382, 1.442695
    %v4384 = vpow.pop %v4383
    %v4385 = vadd.f32 %v4384, 1.0
    %v4386 = vrcp.pop %v4385
    %v4387 = vmul.f32 1.0, %v4386
    %v4388 = vtanh.pop %v4381
    %v4389 = vmul.f32 %v4387, %v4293
    %4391 = vrot.lane.b32.xlu0 %v4388, 32
    %v4392 = vpop.permute.xlu0 %4391
    %v4394 = vmul.f32 %v4387, %v4392
    %4396 = vrot.lane.b32.xlu0 %v4394, 32
    %v4397 = vpop.permute.xlu0 %4396
    %v4399 = vadd.f32 %v4389, %v4397
    %v4400 = vtanh.pop %v4399
    %4402 = vrot.lane.b32.xlu0 %v4400, 32
    %v4403 = vpop.permute.xlu0 %4402
    %v4405 = vmul.f32 %v4387, %v4403
    %4407 = vrot.lane.b32.xlu0 %v4405, 64
    %v4408 = vpop.permute.xlu0 %4407
    %4410 = vst.msk [vmem:[%s4306] sm:$0xff] %vm933, %v4408
    %4411 = vst.msk [vmem:[%s4304] sm:$0xff] %vm936, %v4408
    %v4412 = vld [vmem:[%s3239] sm:$0xff]
    %v4413 = vsel %vm830, %v4408, 0
    %4415 = vmatprep.subr.mxu0 0.0
    %4416 = vmatpush1.msra.mxu0 0.0
    %4417 = vmatprep.subr.mxu0 0.0
    %4418 = vmatpush1.msra.mxu0 0.0
    %4419 = vmatprep.subr.mxu0 0.0
    %4420 = vmatpush1.msra.mxu0 0.0
    %4421 = vmatprep.subr.mxu0 0.0
    %4422 = vmatpush1.msra.mxu0 0.0
    %4423 = vmatprep.subr.mxu0 0.0
    %4424 = vmatpush1.msra.mxu0 0.0
    %4425 = vmatprep.subr.mxu0 0.0
    %4426 = vmatpush1.msra.mxu0 0.0
    %4427 = vmatprep.subr.mxu0 0.0
    %4428 = vmatpush1.msra.mxu0 0.0
    %4429 = vmatprep.subr.mxu0 0.0
    %4430 = vmatpush1.msra.mxu0 0.0
    %4431 = vmatprep.subr.mxu0 0.0
    %4432 = vmatpush1.msra.mxu0 0.0
    %4433 = vmatprep.subr.mxu0 0.0
    %4434 = vmatpush1.msra.mxu0 0.0
    %4435 = vmatprep.subr.mxu0 0.0
    %4436 = vmatpush1.msra.mxu0 0.0
    %4437 = vmatprep.subr.mxu0 0.0
    %4438 = vmatpush1.msra.mxu0 0.0
    %4439 = vmatprep.subr.mxu0 0.0
    %4440 = vmatpush1.msra.mxu0 %v3250
    %4441 = vmatprep.subr.mxu0 0.0
    %4442 = vmatpush1.msra.mxu0 %v3249
    %4443 = vmatprep.subr.mxu0 0.0
    %4444 = vmatpush1.msra.mxu0 %v3248
    %4445 = vmatprep.subr.mxu0 0.0
    %4446 = vmatpush1.msra.mxu0 %v3247
    %4447 = vmatprep.subr.mxu0 0.0
    %4448 = vmatpush2.msra.mxu0 0.0
    %4449 = vmatprep.subr.mxu0 0.0
    %4450 = vmatpush2.msra.mxu0 0.0
    %4451 = vmatprep.subr.mxu0 0.0
    %4452 = vmatpush2.msra.mxu0 0.0
    %4453 = vmatprep.subr.mxu0 0.0
    %4454 = vmatpush2.msra.mxu0 0.0
    %4455 = vmatprep.subr.mxu0 0.0
    %4456 = vmatpush2.msra.mxu0 0.0
    %4457 = vmatprep.subr.mxu0 0.0
    %4458 = vmatpush2.msra.mxu0 0.0
    %4459 = vmatprep.subr.mxu0 0.0
    %4460 = vmatpush2.msra.mxu0 0.0
    %4461 = vmatprep.subr.mxu0 0.0
    %4462 = vmatpush2.msra.mxu0 0.0
    %4463 = vmatprep.subr.mxu0 0.0
    %4464 = vmatpush2.msra.mxu0 0.0
    %4465 = vmatprep.subr.mxu0 0.0
    %4466 = vmatpush2.msra.mxu0 0.0
    %4467 = vmatprep.subr.mxu0 0.0
    %4468 = vmatpush2.msra.mxu0 0.0
    %4469 = vmatprep.subr.mxu0 0.0
    %4470 = vmatpush2.msra.mxu0 0.0
    %4471 = vmatprep.subr.mxu0 0.0
    %4472 = vmatpush2.msra.mxu0 0.0
    %4473 = vmatprep.subr.mxu0 0.0
    %4474 = vmatpush2.msra.mxu0 0.0
    %4475 = vmatprep.subr.mxu0 0.0
    %4476 = vmatpush2.msra.mxu0 0.0
    %4477 = vmatprep.subr.mxu0 0.0
    %4478 = vmatpush2.msra.mxu0 0.0
    %4479 = vmatprep.mubr.f32.mxu0 0.0
    %4480 = vmatmul.mubr.f32.gmra.mxu0 %v4413
    %v4481 = vpop.f32.mrf.mxu0
    %v4482 = vadd.f32 0.0, %v4481
    %v4483 = vpop.f32.mrf.mxu0
    %4484 = vdwg.mxu0
    %v4485 = vadd.f32 %v4412, %v4482
    %v4486 = vxor.u32 %v4485, 2147483648
    %v4487 = vmul.f32 %v4486, 1.442695
    %v4488 = vpow.pop %v4487
    %v4489 = vadd.f32 %v4488, 1.0
    %v4490 = vrcp.pop %v4489
    %v4491 = vmul.f32 1.0, %v4490
    %v4492 = vtanh.pop %v4485
    %v4493 = vmul.f32 %v4491, %v4399
    %4495 = vrot.lane.b32.xlu0 %v4492, 32
    %v4496 = vpop.permute.xlu0 %4495
    %v4498 = vmul.f32 %v4491, %v4496
    %4500 = vrot.lane.b32.xlu0 %v4498, 32
    %v4501 = vpop.permute.xlu0 %4500
    %v4503 = vadd.f32 %v4493, %v4501
    %v4504 = vtanh.pop %v4503
    %4506 = vrot.lane.b32.xlu0 %v4504, 32
    %v4507 = vpop.permute.xlu0 %4506
    %v4509 = vmul.f32 %v4491, %v4507
    %4511 = vrot.lane.b32.xlu0 %v4509, 64
    %v4512 = vpop.permute.xlu0 %4511
    %4514 = vst.msk [vmem:[%s4200] sm:$0xff] %vm933, %v4512
    %4515 = vst.msk [vmem:[%s4198] sm:$0xff] %vm936, %v4512
    %v4516 = vld [vmem:[%s3233] sm:$0xff]
    %v4517 = vsel %vm830, %v4512, 0
    %4519 = vmatprep.subr.mxu0 0.0
    %4520 = vmatpush1.msra.mxu0 0.0
    %4521 = vmatprep.subr.mxu0 0.0
    %4522 = vmatpush1.msra.mxu0 0.0
    %4523 = vmatprep.subr.mxu0 0.0
    %4524 = vmatpush1.msra.mxu0 0.0
    %4525 = vmatprep.subr.mxu0 0.0
    %4526 = vmatpush1.msra.mxu0 0.0
    %4527 = vmatprep.subr.mxu0 0.0
    %4528 = vmatpush1.msra.mxu0 0.0
    %4529 = vmatprep.subr.mxu0 0.0
    %4530 = vmatpush1.msra.mxu0 0.0
    %4531 = vmatprep.subr.mxu0 0.0
    %4532 = vmatpush1.msra.mxu0 0.0
    %4533 = vmatprep.subr.mxu0 0.0
    %4534 = vmatpush1.msra.mxu0 0.0
    %4535 = vmatprep.subr.mxu0 0.0
    %4536 = vmatpush1.msra.mxu0 0.0
    %4537 = vmatprep.subr.mxu0 0.0
    %4538 = vmatpush1.msra.mxu0 0.0
    %4539 = vmatprep.subr.mxu0 0.0
    %4540 = vmatpush1.msra.mxu0 0.0
    %4541 = vmatprep.subr.mxu0 0.0
    %4542 = vmatpush1.msra.mxu0 0.0
    %4543 = vmatprep.subr.mxu0 0.0
    %4544 = vmatpush1.msra.mxu0 %v3250
    %4545 = vmatprep.subr.mxu0 0.0
    %4546 = vmatpush1.msra.mxu0 %v3249
    %4547 = vmatprep.subr.mxu0 0.0
    %4548 = vmatpush1.msra.mxu0 %v3248
    %4549 = vmatprep.subr.mxu0 0.0
    %4550 = vmatpush1.msra.mxu0 %v3247
    %4551 = vmatprep.subr.mxu0 0.0
    %4552 = vmatpush2.msra.mxu0 0.0
    %4553 = vmatprep.subr.mxu0 0.0
    %4554 = vmatpush2.msra.mxu0 0.0
    %4555 = vmatprep.subr.mxu0 0.0
    %4556 = vmatpush2.msra.mxu0 0.0
    %4557 = vmatprep.subr.mxu0 0.0
    %4558 = vmatpush2.msra.mxu0 0.0
    %4559 = vmatprep.subr.mxu0 0.0
    %4560 = vmatpush2.msra.mxu0 0.0
    %4561 = vmatprep.subr.mxu0 0.0
    %4562 = vmatpush2.msra.mxu0 0.0
    %4563 = vmatprep.subr.mxu0 0.0
    %4564 = vmatpush2.msra.mxu0 0.0
    %4565 = vmatprep.subr.mxu0 0.0
    %4566 = vmatpush2.msra.mxu0 0.0
    %4567 = vmatprep.subr.mxu0 0.0
    %4568 = vmatpush2.msra.mxu0 0.0
    %4569 = vmatprep.subr.mxu0 0.0
    %4570 = vmatpush2.msra.mxu0 0.0
    %4571 = vmatprep.subr.mxu0 0.0
    %4572 = vmatpush2.msra.mxu0 0.0
    %4573 = vmatprep.subr.mxu0 0.0
    %4574 = vmatpush2.msra.mxu0 0.0
    %4575 = vmatprep.subr.mxu0 0.0
    %4576 = vmatpush2.msra.mxu0 0.0
    %4577 = vmatprep.subr.mxu0 0.0
    %4578 = vmatpush2.msra.mxu0 0.0
    %4579 = vmatprep.subr.mxu0 0.0
    %4580 = vmatpush2.msra.mxu0 0.0
    %4581 = vmatprep.subr.mxu0 0.0
    %4582 = vmatpush2.msra.mxu0 0.0
    %4583 = vmatprep.mubr.f32.mxu0 0.0
    %4584 = vmatmul.mubr.f32.gmra.mxu0 %v4517
    %v4585 = vpop.f32.mrf.mxu0
    %v4586 = vadd.f32 0.0, %v4585
    %v4587 = vpop.f32.mrf.mxu0
    %4588 = vdwg.mxu0
    %v4589 = vadd.f32 %v4516, %v4586
    %v4590 = vxor.u32 %v4589, 2147483648
    %v4591 = vmul.f32 %v4590, 1.442695
    %v4592 = vpow.pop %v4591
    %v4593 = vadd.f32 %v4592, 1.0
    %v4594 = vrcp.pop %v4593
    %v4595 = vmul.f32 1.0, %v4594
    %v4596 = vtanh.pop %v4589
    %v4597 = vmul.f32 %v4595, %v4503
    %4599 = vrot.lane.b32.xlu0 %v4596, 32
    %v4600 = vpop.permute.xlu0 %4599
    %v4602 = vmul.f32 %v4595, %v4600
    %4604 = vrot.lane.b32.xlu0 %v4602, 32
    %v4605 = vpop.permute.xlu0 %4604
    %v4607 = vadd.f32 %v4597, %v4605
    %v4608 = vtanh.pop %v4607
    %4610 = vrot.lane.b32.xlu0 %v4608, 32
    %v4611 = vpop.permute.xlu0 %4610
    %v4613 = vmul.f32 %v4595, %v4611
    %4615 = vrot.lane.b32.xlu0 %v4613, 64
    %v4616 = vpop.permute.xlu0 %4615
    %4618 = vst.msk [vmem:[%s4094] sm:$0xff] %vm933, %v4616
    %4619 = vst.msk [vmem:[%s4092] sm:$0xff] %vm936, %v4616
    %v4620 = vld [vmem:[%s3227] sm:$0xff]
    %v4621 = vsel %vm830, %v4616, 0
    %4623 = vmatprep.subr.mxu0 0.0
    %4624 = vmatpush1.msra.mxu0 0.0
    %4625 = vmatprep.subr.mxu0 0.0
    %4626 = vmatpush1.msra.mxu0 0.0
    %4627 = vmatprep.subr.mxu0 0.0
    %4628 = vmatpush1.msra.mxu0 0.0
    %4629 = vmatprep.subr.mxu0 0.0
    %4630 = vmatpush1.msra.mxu0 0.0
    %4631 = vmatprep.subr.mxu0 0.0
    %4632 = vmatpush1.msra.mxu0 0.0
    %4633 = vmatprep.subr.mxu0 0.0
    %4634 = vmatpush1.msra.mxu0 0.0
    %4635 = vmatprep.subr.mxu0 0.0
    %4636 = vmatpush1.msra.mxu0 0.0
    %4637 = vmatprep.subr.mxu0 0.0
    %4638 = vmatpush1.msra.mxu0 0.0
    %4639 = vmatprep.subr.mxu0 0.0
    %4640 = vmatpush1.msra.mxu0 0.0
    %4641 = vmatprep.subr.mxu0 0.0
    %4642 = vmatpush1.msra.mxu0 0.0
    %4643 = vmatprep.subr.mxu0 0.0
    %4644 = vmatpush1.msra.mxu0 0.0
    %4645 = vmatprep.subr.mxu0 0.0
    %4646 = vmatpush1.msra.mxu0 0.0
    %4647 = vmatprep.subr.mxu0 0.0
    %4648 = vmatpush1.msra.mxu0 %v3250
    %4649 = vmatprep.subr.mxu0 0.0
    %4650 = vmatpush1.msra.mxu0 %v3249
    %4651 = vmatprep.subr.mxu0 0.0
    %4652 = vmatpush1.msra.mxu0 %v3248
    %4653 = vmatprep.subr.mxu0 0.0
    %4654 = vmatpush1.msra.mxu0 %v3247
    %4655 = vmatprep.subr.mxu0 0.0
    %4656 = vmatpush2.msra.mxu0 0.0
    %4657 = vmatprep.subr.mxu0 0.0
    %4658 = vmatpush2.msra.mxu0 0.0
    %4659 = vmatprep.subr.mxu0 0.0
    %4660 = vmatpush2.msra.mxu0 0.0
    %4661 = vmatprep.subr.mxu0 0.0
    %4662 = vmatpush2.msra.mxu0 0.0
    %4663 = vmatprep.subr.mxu0 0.0
    %4664 = vmatpush2.msra.mxu0 0.0
    %4665 = vmatprep.subr.mxu0 0.0
    %4666 = vmatpush2.msra.mxu0 0.0
    %4667 = vmatprep.subr.mxu0 0.0
    %4668 = vmatpush2.msra.mxu0 0.0
    %4669 = vmatprep.subr.mxu0 0.0
    %4670 = vmatpush2.msra.mxu0 0.0
    %4671 = vmatprep.subr.mxu0 0.0
    %4672 = vmatpush2.msra.mxu0 0.0
    %4673 = vmatprep.subr.mxu0 0.0
    %4674 = vmatpush2.msra.mxu0 0.0
    %4675 = vmatprep.subr.mxu0 0.0
    %4676 = vmatpush2.msra.mxu0 0.0
    %4677 = vmatprep.subr.mxu0 0.0
    %4678 = vmatpush2.msra.mxu0 0.0
    %4679 = vmatprep.subr.mxu0 0.0
    %4680 = vmatpush2.msra.mxu0 0.0
    %4681 = vmatprep.subr.mxu0 0.0
    %4682 = vmatpush2.msra.mxu0 0.0
    %4683 = vmatprep.subr.mxu0 0.0
    %4684 = vmatpush2.msra.mxu0 0.0
    %4685 = vmatprep.subr.mxu0 0.0
    %4686 = vmatpush2.msra.mxu0 0.0
    %4687 = vmatprep.mubr.f32.mxu0 0.0
    %4688 = vmatmul.mubr.f32.gmra.mxu0 %v4621
    %v4689 = vpop.f32.mrf.mxu0
    %v4690 = vadd.f32 0.0, %v4689
    %v4691 = vpop.f32.mrf.mxu0
    %4692 = vdwg.mxu0
    %v4693 = vadd.f32 %v4620, %v4690
    %v4694 = vxor.u32 %v4693, 2147483648
    %v4695 = vmul.f32 %v4694, 1.442695
    %v4696 = vpow.pop %v4695
    %v4697 = vadd.f32 %v4696, 1.0
    %v4698 = vrcp.pop %v4697
    %v4699 = vmul.f32 1.0, %v4698
    %v4700 = vtanh.pop %v4693
    %v4701 = vmul.f32 %v4699, %v4607
    %4703 = vrot.lane.b32.xlu0 %v4700, 32
    %v4704 = vpop.permute.xlu0 %4703
    %v4706 = vmul.f32 %v4699, %v4704
    %4708 = vrot.lane.b32.xlu0 %v4706, 32
    %v4709 = vpop.permute.xlu0 %4708
    %v4711 = vadd.f32 %v4701, %v4709
    %v4712 = vtanh.pop %v4711
    %4714 = vrot.lane.b32.xlu0 %v4712, 32
    %v4715 = vpop.permute.xlu0 %4714
    %v4717 = vmul.f32 %v4699, %v4715
    %4719 = vrot.lane.b32.xlu0 %v4717, 64
    %v4720 = vpop.permute.xlu0 %4719
    %4722 = vst.msk [vmem:[%s3988] sm:$0xff] %vm933, %v4720
    %4723 = vst.msk [vmem:[%s3986] sm:$0xff] %vm936, %v4720
    %v4724 = vld [vmem:[%s3221] sm:$0xff]
    %v4725 = vsel %vm830, %v4720, 0
    %4727 = vmatprep.subr.mxu0 0.0
    %4728 = vmatpush1.msra.mxu0 0.0
    %4729 = vmatprep.subr.mxu0 0.0
    %4730 = vmatpush1.msra.mxu0 0.0
    %4731 = vmatprep.subr.mxu0 0.0
    %4732 = vmatpush1.msra.mxu0 0.0
    %4733 = vmatprep.subr.mxu0 0.0
    %4734 = vmatpush1.msra.mxu0 0.0
    %4735 = vmatprep.subr.mxu0 0.0
    %4736 = vmatpush1.msra.mxu0 0.0
    %4737 = vmatprep.subr.mxu0 0.0
    %4738 = vmatpush1.msra.mxu0 0.0
    %4739 = vmatprep.subr.mxu0 0.0
    %4740 = vmatpush1.msra.mxu0 0.0
    %4741 = vmatprep.subr.mxu0 0.0
    %4742 = vmatpush1.msra.mxu0 0.0
    %4743 = vmatprep.subr.mxu0 0.0
    %4744 = vmatpush1.msra.mxu0 0.0
    %4745 = vmatprep.subr.mxu0 0.0
    %4746 = vmatpush1.msra.mxu0 0.0
    %4747 = vmatprep.subr.mxu0 0.0
    %4748 = vmatpush1.msra.mxu0 0.0
    %4749 = vmatprep.subr.mxu0 0.0
    %4750 = vmatpush1.msra.mxu0 0.0
    %4751 = vmatprep.subr.mxu0 0.0
    %4752 = vmatpush1.msra.mxu0 %v3250
    %4753 = vmatprep.subr.mxu0 0.0
    %4754 = vmatpush1.msra.mxu0 %v3249
    %4755 = vmatprep.subr.mxu0 0.0
    %4756 = vmatpush1.msra.mxu0 %v3248
    %4757 = vmatprep.subr.mxu0 0.0
    %4758 = vmatpush1.msra.mxu0 %v3247
    %4759 = vmatprep.subr.mxu0 0.0
    %4760 = vmatpush2.msra.mxu0 0.0
    %4761 = vmatprep.subr.mxu0 0.0
    %4762 = vmatpush2.msra.mxu0 0.0
    %4763 = vmatprep.subr.mxu0 0.0
    %4764 = vmatpush2.msra.mxu0 0.0
    %4765 = vmatprep.subr.mxu0 0.0
    %4766 = vmatpush2.msra.mxu0 0.0
    %4767 = vmatprep.subr.mxu0 0.0
    %4768 = vmatpush2.msra.mxu0 0.0
    %4769 = vmatprep.subr.mxu0 0.0
    %4770 = vmatpush2.msra.mxu0 0.0
    %4771 = vmatprep.subr.mxu0 0.0
    %4772 = vmatpush2.msra.mxu0 0.0
    %4773 = vmatprep.subr.mxu0 0.0
    %4774 = vmatpush2.msra.mxu0 0.0
    %4775 = vmatprep.subr.mxu0 0.0
    %4776 = vmatpush2.msra.mxu0 0.0
    %4777 = vmatprep.subr.mxu0 0.0
    %4778 = vmatpush2.msra.mxu0 0.0
    %4779 = vmatprep.subr.mxu0 0.0
    %4780 = vmatpush2.msra.mxu0 0.0
    %4781 = vmatprep.subr.mxu0 0.0
    %4782 = vmatpush2.msra.mxu0 0.0
    %4783 = vmatprep.subr.mxu0 0.0
    %4784 = vmatpush2.msra.mxu0 0.0
    %4785 = vmatprep.subr.mxu0 0.0
    %4786 = vmatpush2.msra.mxu0 0.0
    %4787 = vmatprep.subr.mxu0 0.0
    %4788 = vmatpush2.msra.mxu0 0.0
    %4789 = vmatprep.subr.mxu0 0.0
    %4790 = vmatpush2.msra.mxu0 0.0
    %4791 = vmatprep.mubr.f32.mxu0 0.0
    %4792 = vmatmul.mubr.f32.gmra.mxu0 %v4725
    %v4793 = vpop.f32.mrf.mxu0
    %v4794 = vadd.f32 0.0, %v4793
    %v4795 = vpop.f32.mrf.mxu0
    %4796 = vdwg.mxu0
    %v4797 = vadd.f32 %v4724, %v4794
    %v4798 = vxor.u32 %v4797, 2147483648
    %v4799 = vmul.f32 %v4798, 1.442695
    %v4800 = vpow.pop %v4799
    %v4801 = vadd.f32 %v4800, 1.0
    %v4802 = vrcp.pop %v4801
    %v4803 = vmul.f32 1.0, %v4802
    %v4804 = vtanh.pop %v4797
    %v4805 = vmul.f32 %v4803, %v4711
    %4807 = vrot.lane.b32.xlu0 %v4804, 32
    %v4808 = vpop.permute.xlu0 %4807
    %v4810 = vmul.f32 %v4803, %v4808
    %4812 = vrot.lane.b32.xlu0 %v4810, 32
    %v4813 = vpop.permute.xlu0 %4812
    %v4815 = vadd.f32 %v4805, %v4813
    %v4816 = vtanh.pop %v4815
    %4818 = vrot.lane.b32.xlu0 %v4816, 32
    %v4819 = vpop.permute.xlu0 %4818
    %v4821 = vmul.f32 %v4803, %v4819
    %4823 = vrot.lane.b32.xlu0 %v4821, 64
    %v4824 = vpop.permute.xlu0 %4823
    %4826 = vst.msk [vmem:[%s3882] sm:$0xff] %vm933, %v4824
    %4827 = vst.msk [vmem:[%s3880] sm:$0xff] %vm936, %v4824
    %v4828 = vld [vmem:[%s3215] sm:$0xff]
    %v4829 = vsel %vm830, %v4824, 0
    %4831 = vmatprep.subr.mxu0 0.0
    %4832 = vmatpush1.msra.mxu0 0.0
    %4833 = vmatprep.subr.mxu0 0.0
    %4834 = vmatpush1.msra.mxu0 0.0
    %4835 = vmatprep.subr.mxu0 0.0
    %4836 = vmatpush1.msra.mxu0 0.0
    %4837 = vmatprep.subr.mxu0 0.0
    %4838 = vmatpush1.msra.mxu0 0.0
    %4839 = vmatprep.subr.mxu0 0.0
    %4840 = vmatpush1.msra.mxu0 0.0
    %4841 = vmatprep.subr.mxu0 0.0
    %4842 = vmatpush1.msra.mxu0 0.0
    %4843 = vmatprep.subr.mxu0 0.0
    %4844 = vmatpush1.msra.mxu0 0.0
    %4845 = vmatprep.subr.mxu0 0.0
    %4846 = vmatpush1.msra.mxu0 0.0
    %4847 = vmatprep.subr.mxu0 0.0
    %4848 = vmatpush1.msra.mxu0 0.0
    %4849 = vmatprep.subr.mxu0 0.0
    %4850 = vmatpush1.msra.mxu0 0.0
    %4851 = vmatprep.subr.mxu0 0.0
    %4852 = vmatpush1.msra.mxu0 0.0
    %4853 = vmatprep.subr.mxu0 0.0
    %4854 = vmatpush1.msra.mxu0 0.0
    %4855 = vmatprep.subr.mxu0 0.0
    %4856 = vmatpush1.msra.mxu0 %v3250
    %4857 = vmatprep.subr.mxu0 0.0
    %4858 = vmatpush1.msra.mxu0 %v3249
    %4859 = vmatprep.subr.mxu0 0.0
    %4860 = vmatpush1.msra.mxu0 %v3248
    %4861 = vmatprep.subr.mxu0 0.0
    %4862 = vmatpush1.msra.mxu0 %v3247
    %4863 = vmatprep.subr.mxu0 0.0
    %4864 = vmatpush2.msra.mxu0 0.0
    %4865 = vmatprep.subr.mxu0 0.0
    %4866 = vmatpush2.msra.mxu0 0.0
    %4867 = vmatprep.subr.mxu0 0.0
    %4868 = vmatpush2.msra.mxu0 0.0
    %4869 = vmatprep.subr.mxu0 0.0
    %4870 = vmatpush2.msra.mxu0 0.0
    %4871 = vmatprep.subr.mxu0 0.0
    %4872 = vmatpush2.msra.mxu0 0.0
    %4873 = vmatprep.subr.mxu0 0.0
    %4874 = vmatpush2.msra.mxu0 0.0
    %4875 = vmatprep.subr.mxu0 0.0
    %4876 = vmatpush2.msra.mxu0 0.0
    %4877 = vmatprep.subr.mxu0 0.0
    %4878 = vmatpush2.msra.mxu0 0.0
    %4879 = vmatprep.subr.mxu0 0.0
    %4880 = vmatpush2.msra.mxu0 0.0
    %4881 = vmatprep.subr.mxu0 0.0
    %4882 = vmatpush2.msra.mxu0 0.0
    %4883 = vmatprep.subr.mxu0 0.0
    %4884 = vmatpush2.msra.mxu0 0.0
    %4885 = vmatprep.subr.mxu0 0.0
    %4886 = vmatpush2.msra.mxu0 0.0
    %4887 = vmatprep.subr.mxu0 0.0
    %4888 = vmatpush2.msra.mxu0 0.0
    %4889 = vmatprep.subr.mxu0 0.0
    %4890 = vmatpush2.msra.mxu0 0.0
    %4891 = vmatprep.subr.mxu0 0.0
    %4892 = vmatpush2.msra.mxu0 0.0
    %4893 = vmatprep.subr.mxu0 0.0
    %4894 = vmatpush2.msra.mxu0 0.0
    %4895 = vmatprep.mubr.f32.mxu0 0.0
    %4896 = vmatmul.mubr.f32.gmra.mxu0 %v4829
    %v4897 = vpop.f32.mrf.mxu0
    %v4898 = vadd.f32 0.0, %v4897
    %v4899 = vpop.f32.mrf.mxu0
    %4900 = vdwg.mxu0
    %v4901 = vadd.f32 %v4828, %v4898
    %v4902 = vxor.u32 %v4901, 2147483648
    %v4903 = vmul.f32 %v4902, 1.442695
    %v4904 = vpow.pop %v4903
    %v4905 = vadd.f32 %v4904, 1.0
    %v4906 = vrcp.pop %v4905
    %v4907 = vmul.f32 1.0, %v4906
    %v4908 = vtanh.pop %v4901
    %v4909 = vmul.f32 %v4907, %v4815
    %4911 = vrot.lane.b32.xlu0 %v4908, 32
    %v4912 = vpop.permute.xlu0 %4911
    %v4914 = vmul.f32 %v4907, %v4912
    %4916 = vrot.lane.b32.xlu0 %v4914, 32
    %v4917 = vpop.permute.xlu0 %4916
    %v4919 = vadd.f32 %v4909, %v4917
    %v4920 = vtanh.pop %v4919
    %4922 = vrot.lane.b32.xlu0 %v4920, 32
    %v4923 = vpop.permute.xlu0 %4922
    %v4925 = vmul.f32 %v4907, %v4923
    %4927 = vrot.lane.b32.xlu0 %v4925, 64
    %v4928 = vpop.permute.xlu0 %4927
    %4930 = vst.msk [vmem:[%s3776] sm:$0xff] %vm933, %v4928
    %4931 = vst.msk [vmem:[%s3774] sm:$0xff] %vm936, %v4928
    %v4932 = vld [vmem:[%s3209] sm:$0xff]
    %v4933 = vsel %vm830, %v4928, 0
    %4935 = vmatprep.subr.mxu0 0.0
    %4936 = vmatpush1.msra.mxu0 0.0
    %4937 = vmatprep.subr.mxu0 0.0
    %4938 = vmatpush1.msra.mxu0 0.0
    %4939 = vmatprep.subr.mxu0 0.0
    %4940 = vmatpush1.msra.mxu0 0.0
    %4941 = vmatprep.subr.mxu0 0.0
    %4942 = vmatpush1.msra.mxu0 0.0
    %4943 = vmatprep.subr.mxu0 0.0
    %4944 = vmatpush1.msra.mxu0 0.0
    %4945 = vmatprep.subr.mxu0 0.0
    %4946 = vmatpush1.msra.mxu0 0.0
    %4947 = vmatprep.subr.mxu0 0.0
    %4948 = vmatpush1.msra.mxu0 0.0
    %4949 = vmatprep.subr.mxu0 0.0
    %4950 = vmatpush1.msra.mxu0 0.0
    %4951 = vmatprep.subr.mxu0 0.0
    %4952 = vmatpush1.msra.mxu0 0.0
    %4953 = vmatprep.subr.mxu0 0.0
    %4954 = vmatpush1.msra.mxu0 0.0
    %4955 = vmatprep.subr.mxu0 0.0
    %4956 = vmatpush1.msra.mxu0 0.0
    %4957 = vmatprep.subr.mxu0 0.0
    %4958 = vmatpush1.msra.mxu0 0.0
    %4959 = vmatprep.subr.mxu0 0.0
    %4960 = vmatpush1.msra.mxu0 %v3250
    %4961 = vmatprep.subr.mxu0 0.0
    %4962 = vmatpush1.msra.mxu0 %v3249
    %4963 = vmatprep.subr.mxu0 0.0
    %4964 = vmatpush1.msra.mxu0 %v3248
    %4965 = vmatprep.subr.mxu0 0.0
    %4966 = vmatpush1.msra.mxu0 %v3247
    %4967 = vmatprep.subr.mxu0 0.0
    %4968 = vmatpush2.msra.mxu0 0.0
    %4969 = vmatprep.subr.mxu0 0.0
    %4970 = vmatpush2.msra.mxu0 0.0
    %4971 = vmatprep.subr.mxu0 0.0
    %4972 = vmatpush2.msra.mxu0 0.0
    %4973 = vmatprep.subr.mxu0 0.0
    %4974 = vmatpush2.msra.mxu0 0.0
    %4975 = vmatprep.subr.mxu0 0.0
    %4976 = vmatpush2.msra.mxu0 0.0
    %4977 = vmatprep.subr.mxu0 0.0
    %4978 = vmatpush2.msra.mxu0 0.0
    %4979 = vmatprep.subr.mxu0 0.0
    %4980 = vmatpush2.msra.mxu0 0.0
    %4981 = vmatprep.subr.mxu0 0.0
    %4982 = vmatpush2.msra.mxu0 0.0
    %4983 = vmatprep.subr.mxu0 0.0
    %4984 = vmatpush2.msra.mxu0 0.0
    %4985 = vmatprep.subr.mxu0 0.0
    %4986 = vmatpush2.msra.mxu0 0.0
    %4987 = vmatprep.subr.mxu0 0.0
    %4988 = vmatpush2.msra.mxu0 0.0
    %4989 = vmatprep.subr.mxu0 0.0
    %4990 = vmatpush2.msra.mxu0 0.0
    %4991 = vmatprep.subr.mxu0 0.0
    %4992 = vmatpush2.msra.mxu0 0.0
    %4993 = vmatprep.subr.mxu0 0.0
    %4994 = vmatpush2.msra.mxu0 0.0
    %4995 = vmatprep.subr.mxu0 0.0
    %4996 = vmatpush2.msra.mxu0 0.0
    %4997 = vmatprep.subr.mxu0 0.0
    %4998 = vmatpush2.msra.mxu0 0.0
    %4999 = vmatprep.mubr.f32.mxu0 0.0
    %5000 = vmatmul.mubr.f32.gmra.mxu0 %v4933
    %v5001 = vpop.f32.mrf.mxu0
    %v5002 = vadd.f32 0.0, %v5001
    %v5003 = vpop.f32.mrf.mxu0
    %5004 = vdwg.mxu0
    %v5005 = vadd.f32 %v4932, %v5002
    %v5006 = vxor.u32 %v5005, 2147483648
    %v5007 = vmul.f32 %v5006, 1.442695
    %v5008 = vpow.pop %v5007
    %v5009 = vadd.f32 %v5008, 1.0
    %v5010 = vrcp.pop %v5009
    %v5011 = vmul.f32 1.0, %v5010
    %v5012 = vtanh.pop %v5005
    %v5013 = vmul.f32 %v5011, %v4919
    %5015 = vrot.lane.b32.xlu0 %v5012, 32
    %v5016 = vpop.permute.xlu0 %5015
    %v5018 = vmul.f32 %v5011, %v5016
    %5020 = vrot.lane.b32.xlu0 %v5018, 32
    %v5021 = vpop.permute.xlu0 %5020
    %v5023 = vadd.f32 %v5013, %v5021
    %v5024 = vtanh.pop %v5023
    %5026 = vrot.lane.b32.xlu0 %v5024, 32
    %v5027 = vpop.permute.xlu0 %5026
    %v5029 = vmul.f32 %v5011, %v5027
    %5031 = vrot.lane.b32.xlu0 %v5029, 64
    %v5032 = vpop.permute.xlu0 %5031
    %5034 = vst.msk [vmem:[%s3670] sm:$0xff] %vm933, %v5032
    %5035 = vst.msk [vmem:[%s3668] sm:$0xff] %vm936, %v5032
    %v5036 = vld [vmem:[%s3203] sm:$0xff]
    %v5037 = vsel %vm830, %v5032, 0
    %5039 = vmatprep.subr.mxu0 0.0
    %5040 = vmatpush1.msra.mxu0 0.0
    %5041 = vmatprep.subr.mxu0 0.0
    %5042 = vmatpush1.msra.mxu0 0.0
    %5043 = vmatprep.subr.mxu0 0.0
    %5044 = vmatpush1.msra.mxu0 0.0
    %5045 = vmatprep.subr.mxu0 0.0
    %5046 = vmatpush1.msra.mxu0 0.0
    %5047 = vmatprep.subr.mxu0 0.0
    %5048 = vmatpush1.msra.mxu0 0.0
    %5049 = vmatprep.subr.mxu0 0.0
    %5050 = vmatpush1.msra.mxu0 0.0
    %5051 = vmatprep.subr.mxu0 0.0
    %5052 = vmatpush1.msra.mxu0 0.0
    %5053 = vmatprep.subr.mxu0 0.0
    %5054 = vmatpush1.msra.mxu0 0.0
    %5055 = vmatprep.subr.mxu0 0.0
    %5056 = vmatpush1.msra.mxu0 0.0
    %5057 = vmatprep.subr.mxu0 0.0
    %5058 = vmatpush1.msra.mxu0 0.0
    %5059 = vmatprep.subr.mxu0 0.0
    %5060 = vmatpush1.msra.mxu0 0.0
    %5061 = vmatprep.subr.mxu0 0.0
    %5062 = vmatpush1.msra.mxu0 0.0
    %5063 = vmatprep.subr.mxu0 0.0
    %5064 = vmatpush1.msra.mxu0 %v3250
    %5065 = vmatprep.subr.mxu0 0.0
    %5066 = vmatpush1.msra.mxu0 %v3249
    %5067 = vmatprep.subr.mxu0 0.0
    %5068 = vmatpush1.msra.mxu0 %v3248
    %5069 = vmatprep.subr.mxu0 0.0
    %5070 = vmatpush1.msra.mxu0 %v3247
    %5071 = vmatprep.subr.mxu0 0.0
    %5072 = vmatpush2.msra.mxu0 0.0
    %5073 = vmatprep.subr.mxu0 0.0
    %5074 = vmatpush2.msra.mxu0 0.0
    %5075 = vmatprep.subr.mxu0 0.0
    %5076 = vmatpush2.msra.mxu0 0.0
    %5077 = vmatprep.subr.mxu0 0.0
    %5078 = vmatpush2.msra.mxu0 0.0
    %5079 = vmatprep.subr.mxu0 0.0
    %5080 = vmatpush2.msra.mxu0 0.0
    %5081 = vmatprep.subr.mxu0 0.0
    %5082 = vmatpush2.msra.mxu0 0.0
    %5083 = vmatprep.subr.mxu0 0.0
    %5084 = vmatpush2.msra.mxu0 0.0
    %5085 = vmatprep.subr.mxu0 0.0
    %5086 = vmatpush2.msra.mxu0 0.0
    %5087 = vmatprep.subr.mxu0 0.0
    %5088 = vmatpush2.msra.mxu0 0.0
    %5089 = vmatprep.subr.mxu0 0.0
    %5090 = vmatpush2.msra.mxu0 0.0
    %5091 = vmatprep.subr.mxu0 0.0
    %5092 = vmatpush2.msra.mxu0 0.0
    %5093 = vmatprep.subr.mxu0 0.0
    %5094 = vmatpush2.msra.mxu0 0.0
    %5095 = vmatprep.subr.mxu0 0.0
    %5096 = vmatpush2.msra.mxu0 0.0
    %5097 = vmatprep.subr.mxu0 0.0
    %5098 = vmatpush2.msra.mxu0 0.0
    %5099 = vmatprep.subr.mxu0 0.0
    %5100 = vmatpush2.msra.mxu0 0.0
    %5101 = vmatprep.subr.mxu0 0.0
    %5102 = vmatpush2.msra.mxu0 0.0
    %5103 = vmatprep.mubr.f32.mxu0 0.0
    %5104 = vmatmul.mubr.f32.gmra.mxu0 %v5037
    %v5105 = vpop.f32.mrf.mxu0
    %v5106 = vadd.f32 0.0, %v5105
    %v5107 = vpop.f32.mrf.mxu0
    %5108 = vdwg.mxu0
    %v5109 = vadd.f32 %v5036, %v5106
    %v5110 = vxor.u32 %v5109, 2147483648
    %v5111 = vmul.f32 %v5110, 1.442695
    %v5112 = vpow.pop %v5111
    %v5113 = vadd.f32 %v5112, 1.0
    %v5114 = vrcp.pop %v5113
    %v5115 = vmul.f32 1.0, %v5114
    %v5116 = vtanh.pop %v5109
    %v5117 = vmul.f32 %v5115, %v5023
    %5119 = vrot.lane.b32.xlu0 %v5116, 32
    %v5120 = vpop.permute.xlu0 %5119
    %v5122 = vmul.f32 %v5115, %v5120
    %5124 = vrot.lane.b32.xlu0 %v5122, 32
    %v5125 = vpop.permute.xlu0 %5124
    %v5127 = vadd.f32 %v5117, %v5125
    %v5128 = vtanh.pop %v5127
    %5130 = vrot.lane.b32.xlu0 %v5128, 32
    %v5131 = vpop.permute.xlu0 %5130
    %v5133 = vmul.f32 %v5115, %v5131
    %5135 = vrot.lane.b32.xlu0 %v5133, 64
    %v5136 = vpop.permute.xlu0 %5135
    %5138 = vst.msk [vmem:[%s3564] sm:$0xff] %vm933, %v5136
    %5139 = vst.msk [vmem:[%s3562] sm:$0xff] %vm936, %v5136
    %v5140 = vld [vmem:[%s3197] sm:$0xff]
    %v5141 = vsel %vm830, %v5136, 0
    %5143 = vmatprep.subr.mxu0 0.0
    %5144 = vmatpush1.msra.mxu0 0.0
    %5145 = vmatprep.subr.mxu0 0.0
    %5146 = vmatpush1.msra.mxu0 0.0
    %5147 = vmatprep.subr.mxu0 0.0
    %5148 = vmatpush1.msra.mxu0 0.0
    %5149 = vmatprep.subr.mxu0 0.0
    %5150 = vmatpush1.msra.mxu0 0.0
    %5151 = vmatprep.subr.mxu0 0.0
    %5152 = vmatpush1.msra.mxu0 0.0
    %5153 = vmatprep.subr.mxu0 0.0
    %5154 = vmatpush1.msra.mxu0 0.0
    %5155 = vmatprep.subr.mxu0 0.0
    %5156 = vmatpush1.msra.mxu0 0.0
    %5157 = vmatprep.subr.mxu0 0.0
    %5158 = vmatpush1.msra.mxu0 0.0
    %5159 = vmatprep.subr.mxu0 0.0
    %5160 = vmatpush1.msra.mxu0 0.0
    %5161 = vmatprep.subr.mxu0 0.0
    %5162 = vmatpush1.msra.mxu0 0.0
    %5163 = vmatprep.subr.mxu0 0.0
    %5164 = vmatpush1.msra.mxu0 0.0
    %5165 = vmatprep.subr.mxu0 0.0
    %5166 = vmatpush1.msra.mxu0 0.0
    %5167 = vmatprep.subr.mxu0 0.0
    %5168 = vmatpush1.msra.mxu0 %v3250
    %5169 = vmatprep.subr.mxu0 0.0
    %5170 = vmatpush1.msra.mxu0 %v3249
    %5171 = vmatprep.subr.mxu0 0.0
    %5172 = vmatpush1.msra.mxu0 %v3248
    %5173 = vmatprep.subr.mxu0 0.0
    %5174 = vmatpush1.msra.mxu0 %v3247
    %5175 = vmatprep.subr.mxu0 0.0
    %5176 = vmatpush2.msra.mxu0 0.0
    %5177 = vmatprep.subr.mxu0 0.0
    %5178 = vmatpush2.msra.mxu0 0.0
    %5179 = vmatprep.subr.mxu0 0.0
    %5180 = vmatpush2.msra.mxu0 0.0
    %5181 = vmatprep.subr.mxu0 0.0
    %5182 = vmatpush2.msra.mxu0 0.0
    %5183 = vmatprep.subr.mxu0 0.0
    %5184 = vmatpush2.msra.mxu0 0.0
    %5185 = vmatprep.subr.mxu0 0.0
    %5186 = vmatpush2.msra.mxu0 0.0
    %5187 = vmatprep.subr.mxu0 0.0
    %5188 = vmatpush2.msra.mxu0 0.0
    %5189 = vmatprep.subr.mxu0 0.0
    %5190 = vmatpush2.msra.mxu0 0.0
    %5191 = vmatprep.subr.mxu0 0.0
    %5192 = vmatpush2.msra.mxu0 0.0
    %5193 = vmatprep.subr.mxu0 0.0
    %5194 = vmatpush2.msra.mxu0 0.0
    %5195 = vmatprep.subr.mxu0 0.0
    %5196 = vmatpush2.msra.mxu0 0.0
    %5197 = vmatprep.subr.mxu0 0.0
    %5198 = vmatpush2.msra.mxu0 0.0
    %5199 = vmatprep.subr.mxu0 0.0
    %5200 = vmatpush2.msra.mxu0 0.0
    %5201 = vmatprep.subr.mxu0 0.0
    %5202 = vmatpush2.msra.mxu0 0.0
    %5203 = vmatprep.subr.mxu0 0.0
    %5204 = vmatpush2.msra.mxu0 0.0
    %5205 = vmatprep.subr.mxu0 0.0
    %5206 = vmatpush2.msra.mxu0 0.0
    %5207 = vmatprep.mubr.f32.mxu0 0.0
    %5208 = vmatmul.mubr.f32.gmra.mxu0 %v5141
    %v5209 = vpop.f32.mrf.mxu0
    %v5210 = vadd.f32 0.0, %v5209
    %v5211 = vpop.f32.mrf.mxu0
    %5212 = vdwg.mxu0
    %v5213 = vadd.f32 %v5140, %v5210
    %v5214 = vxor.u32 %v5213, 2147483648
    %v5215 = vmul.f32 %v5214, 1.442695
    %v5216 = vpow.pop %v5215
    %v5217 = vadd.f32 %v5216, 1.0
    %v5218 = vrcp.pop %v5217
    %v5219 = vmul.f32 1.0, %v5218
    %v5220 = vtanh.pop %v5213
    %v5221 = vmul.f32 %v5219, %v5127
    %5223 = vrot.lane.b32.xlu0 %v5220, 32
    %v5224 = vpop.permute.xlu0 %5223
    %v5226 = vmul.f32 %v5219, %v5224
    %5228 = vrot.lane.b32.xlu0 %v5226, 32
    %v5229 = vpop.permute.xlu0 %5228
    %v5231 = vadd.f32 %v5221, %v5229
    %v5232 = vtanh.pop %v5231
    %5234 = vrot.lane.b32.xlu0 %v5232, 32
    %v5235 = vpop.permute.xlu0 %5234
    %v5237 = vmul.f32 %v5219, %v5235
    %5239 = vrot.lane.b32.xlu0 %v5237, 64
    %v5240 = vpop.permute.xlu0 %5239
    %5242 = vst.msk [vmem:[%s3458] sm:$0xff] %vm933, %v5240
    %5243 = vst.msk [vmem:[%s3456] sm:$0xff] %vm936, %v5240
    %v5244 = vld [vmem:[%s3191] sm:$0xff]
    %v5245 = vsel %vm830, %v5240, 0
    %5247 = vmatprep.subr.mxu0 0.0
    %5248 = vmatpush1.msra.mxu0 0.0
    %5249 = vmatprep.subr.mxu0 0.0
    %5250 = vmatpush1.msra.mxu0 0.0
    %5251 = vmatprep.subr.mxu0 0.0
    %5252 = vmatpush1.msra.mxu0 0.0
    %5253 = vmatprep.subr.mxu0 0.0
    %5254 = vmatpush1.msra.mxu0 0.0
    %5255 = vmatprep.subr.mxu0 0.0
    %5256 = vmatpush1.msra.mxu0 0.0
    %5257 = vmatprep.subr.mxu0 0.0
    %5258 = vmatpush1.msra.mxu0 0.0
    %5259 = vmatprep.subr.mxu0 0.0
    %5260 = vmatpush1.msra.mxu0 0.0
    %5261 = vmatprep.subr.mxu0 0.0
    %5262 = vmatpush1.msra.mxu0 0.0
    %5263 = vmatprep.subr.mxu0 0.0
    %5264 = vmatpush1.msra.mxu0 0.0
    %5265 = vmatprep.subr.mxu0 0.0
    %5266 = vmatpush1.msra.mxu0 0.0
    %5267 = vmatprep.subr.mxu0 0.0
    %5268 = vmatpush1.msra.mxu0 0.0
    %5269 = vmatprep.subr.mxu0 0.0
    %5270 = vmatpush1.msra.mxu0 0.0
    %5271 = vmatprep.subr.mxu0 0.0
    %5272 = vmatpush1.msra.mxu0 %v3250
    %5273 = vmatprep.subr.mxu0 0.0
    %5274 = vmatpush1.msra.mxu0 %v3249
    %5275 = vmatprep.subr.mxu0 0.0
    %5276 = vmatpush1.msra.mxu0 %v3248
    %5277 = vmatprep.subr.mxu0 0.0
    %5278 = vmatpush1.msra.mxu0 %v3247
    %5279 = vmatprep.subr.mxu0 0.0
    %5280 = vmatpush2.msra.mxu0 0.0
    %5281 = vmatprep.subr.mxu0 0.0
    %5282 = vmatpush2.msra.mxu0 0.0
    %5283 = vmatprep.subr.mxu0 0.0
    %5284 = vmatpush2.msra.mxu0 0.0
    %5285 = vmatprep.subr.mxu0 0.0
    %5286 = vmatpush2.msra.mxu0 0.0
    %5287 = vmatprep.subr.mxu0 0.0
    %5288 = vmatpush2.msra.mxu0 0.0
    %5289 = vmatprep.subr.mxu0 0.0
    %5290 = vmatpush2.msra.mxu0 0.0
    %5291 = vmatprep.subr.mxu0 0.0
    %5292 = vmatpush2.msra.mxu0 0.0
    %5293 = vmatprep.subr.mxu0 0.0
    %5294 = vmatpush2.msra.mxu0 0.0
    %5295 = vmatprep.subr.mxu0 0.0
    %5296 = vmatpush2.msra.mxu0 0.0
    %5297 = vmatprep.subr.mxu0 0.0
    %5298 = vmatpush2.msra.mxu0 0.0
    %5299 = vmatprep.subr.mxu0 0.0
    %5300 = vmatpush2.msra.mxu0 0.0
    %5301 = vmatprep.subr.mxu0 0.0
    %5302 = vmatpush2.msra.mxu0 0.0
    %5303 = vmatprep.subr.mxu0 0.0
    %5304 = vmatpush2.msra.mxu0 0.0
    %5305 = vmatprep.subr.mxu0 0.0
    %5306 = vmatpush2.msra.mxu0 0.0
    %5307 = vmatprep.subr.mxu0 0.0
    %5308 = vmatpush2.msra.mxu0 0.0
    %5309 = vmatprep.subr.mxu0 0.0
    %5310 = vmatpush2.msra.mxu0 0.0
    %5311 = vmatprep.mubr.f32.mxu0 0.0
    %5312 = vmatmul.mubr.f32.gmra.mxu0 %v5245
    %v5313 = vpop.f32.mrf.mxu0
    %v5314 = vadd.f32 0.0, %v5313
    %v5315 = vpop.f32.mrf.mxu0
    %5316 = vdwg.mxu0
    %v5317 = vadd.f32 %v5244, %v5314
    %v5318 = vxor.u32 %v5317, 2147483648
    %v5319 = vmul.f32 %v5318, 1.442695
    %v5320 = vpow.pop %v5319
    %v5321 = vadd.f32 %v5320, 1.0
    %v5322 = vrcp.pop %v5321
    %v5323 = vmul.f32 1.0, %v5322
    %v5324 = vtanh.pop %v5317
    %v5325 = vmul.f32 %v5323, %v5231
    %5327 = vrot.lane.b32.xlu0 %v5324, 32
    %v5328 = vpop.permute.xlu0 %5327
    %v5330 = vmul.f32 %v5323, %v5328
    %5332 = vrot.lane.b32.xlu0 %v5330, 32
    %v5333 = vpop.permute.xlu0 %5332
    %v5335 = vadd.f32 %v5325, %v5333
    %v5336 = vtanh.pop %v5335
    %5338 = vrot.lane.b32.xlu0 %v5336, 32
    %v5339 = vpop.permute.xlu0 %5338
    %v5341 = vmul.f32 %v5323, %v5339
    %5343 = vrot.lane.b32.xlu0 %v5341, 64
    %v5344 = vpop.permute.xlu0 %5343
    %5346 = vst.msk [vmem:[%s3352] sm:$0xff] %vm933, %v5344
    %5347 = vst.msk [vmem:[#allocation5] sm:$0xff] %vm936, %v5344
    %v5348 = vld [vmem:[#allocation5] sm:$0xff]
    %v5349 = vld [vmem:[#allocation5 + $0x8] sm:$0xff]
    %v5350 = vld [vmem:[#allocation5 + $0x10] sm:$0xff]
    %v5351 = vld [vmem:[#allocation5 + $0x18] sm:$0xff]
    %v5352 = vld [vmem:[#allocation5 + $0x20] sm:$0xff]
    %v5353 = vld [vmem:[#allocation5 + $0x28] sm:$0xff]
    %v5354 = vld [vmem:[#allocation5 + $0x30] sm:$0xff]
    %v5355 = vld [vmem:[#allocation5 + $0x38] sm:$0xff]
    %v5356 = vld [vmem:[#allocation5 + $0x40] sm:$0xff]
    %v5357 = vld [vmem:[#allocation5 + $0x48] sm:$0xff]
    %v5358 = vld [vmem:[#allocation5 + $0x50] sm:$0xff]
    %v5359 = vld [vmem:[#allocation5 + $0x58] sm:$0xff]
    %v5360 = vld [vmem:[#allocation5 + $0x60] sm:$0xff]
    %v5361 = vld [vmem:[#allocation5 + $0x68] sm:$0xff]
    %v5362 = vld [vmem:[#allocation5 + $0x70] sm:$0xff]
    %v5363 = vld [vmem:[#allocation5 + $0x78] sm:$0xff]
    %v5364 = vld [vmem:[#allocation5 + $0x80] sm:$0xff]
    %v5365 = vld [vmem:[#allocation5 + $0x88] sm:$0xff]
    %v5366 = vld [vmem:[#allocation5 + $0x90] sm:$0xff]
    %v5367 = vld [vmem:[#allocation5 + $0x98] sm:$0xff]
    %v5368 = vlaneseq
    %v5369 = vshrl.u32 %v5368, 7
    %v5370 = vadd.s32 %v5369, 8
    %v5371 = vadd.s32 %v5369, 16
    %v5372 = vadd.s32 %v5369, 24
    %vm5373 = vcmp.lt.s32.totalorder %v5369, 10
    %vm5374 = vcmp.lt.s32.totalorder %v5370, 10
    %vm5375 = vcmp.lt.s32.totalorder %v5371, 10
    %vm5376 = vcmp.lt.s32.totalorder %v5372, 10
    %vm5377 = vcmp.ge.s32.totalorder %v5369, 16
    %vm5378 = vcmp.ge.s32.totalorder %v5370, 16
    %vm5379 = vcmp.ge.s32.totalorder %v5371, 16
    %vm5380 = vcmp.ge.s32.totalorder %v5372, 16
    %vm5381 = vcmp.lt.s32.totalorder %v5369, 26
    %vm5382 = vcmp.lt.s32.totalorder %v5370, 26
    %vm5383 = vcmp.lt.s32.totalorder %v5371, 26
    %vm5384 = vcmp.lt.s32.totalorder %v5372, 26
    %vm5385 = vmand %vm5377, %vm5381
    %vm5386 = vmand %vm5378, %vm5382
    %vm5387 = vmand %vm5379, %vm5383
    %vm5388 = vmand %vm5380, %vm5384
    %vm5389 = vmor %vm5373, %vm5385
    %vm5390 = vmor %vm5374, %vm5386
    %vm5391 = vmor %vm5375, %vm5387
    %vm5392 = vmor %vm5376, %vm5388
    %v5393 = vsel %vm5389, 1, 0
    %v5394 = vsel %vm5390, 1, 0
    %v5395 = vsel %vm5391, 1, 0
    %v5396 = vsel %vm5392, 1, 0
    %v5397 = vcvt.s32.f32 %v5393
    %v5398 = vcvt.s32.f32 %v5394
    %v5399 = vcvt.s32.f32 %v5395
    %v5400 = vcvt.s32.f32 %v5396
    %v5401 = vld [vmem:[%s8] sm:$0xff]
    %v5402 = vld [vmem:[%s8 + $0x8] sm:$0xff]
    %v5403 = vld [vmem:[%s8 + $0x10] sm:$0xff]
    %v5404 = vld [vmem:[%s8 + $0x18] sm:$0xff]
    %v5405 = vld [vmem:[#allocation6] sm:$0x1]
    %v5407 = vlaneseq
    %v5408 = vshrl.u32 %v5407, 7
    %v5409 = vsub.s32 0, %v5408
    %v5410 = vrot.slane %v5405, %v5409
    %v5413 = vsel %vm830, %v5348, 0
    %v5416 = vsel %vm830, %v5349, 0
    %v5419 = vsel %vm830, %v5350, 0
    %v5422 = vsel %vm830, %v5351, 0
    %v5425 = vsel %vm830, %v5352, 0
    %v5428 = vsel %vm830, %v5353, 0
    %v5431 = vsel %vm830, %v5354, 0
    %v5434 = vsel %vm830, %v5355, 0
    %v5437 = vsel %vm830, %v5356, 0
    %v5440 = vsel %vm830, %v5357, 0
    %v5443 = vsel %vm830, %v5358, 0
    %v5446 = vsel %vm830, %v5359, 0
    %v5449 = vsel %vm830, %v5360, 0
    %v5452 = vsel %vm830, %v5361, 0
    %v5455 = vsel %vm830, %v5362, 0
    %v5458 = vsel %vm830, %v5363, 0
    %v5461 = vsel %vm830, %v5364, 0
    %v5464 = vsel %vm830, %v5365, 0
    %v5467 = vsel %vm830, %v5366, 0
    %v5470 = vsel %vm830, %v5367, 0
    %5472 = vmatprep.subr.mxu0 0.0
    %5473 = vmatpush1.msra.mxu0 0.0
    %5474 = vmatprep.subr.mxu0 0.0
    %5475 = vmatpush1.msra.mxu0 0.0
    %5476 = vmatprep.subr.mxu0 0.0
    %5477 = vmatpush1.msra.mxu0 0.0
    %5478 = vmatprep.subr.mxu0 0.0
    %5479 = vmatpush1.msra.mxu0 0.0
    %5480 = vmatprep.subr.mxu0 0.0
    %5481 = vmatpush1.msra.mxu0 0.0
    %5482 = vmatprep.subr.mxu0 0.0
    %5483 = vmatpush1.msra.mxu0 0.0
    %5484 = vmatprep.subr.mxu0 0.0
    %5485 = vmatpush1.msra.mxu0 0.0
    %5486 = vmatprep.subr.mxu0 0.0
    %5487 = vmatpush1.msra.mxu0 0.0
    %5488 = vmatprep.subr.mxu0 0.0
    %5489 = vmatpush1.msra.mxu0 0.0
    %5490 = vmatprep.subr.mxu0 0.0
    %5491 = vmatpush1.msra.mxu0 0.0
    %5492 = vmatprep.subr.mxu0 0.0
    %5493 = vmatpush1.msra.mxu0 0.0
    %5494 = vmatprep.subr.mxu0 0.0
    %5495 = vmatpush1.msra.mxu0 0.0
    %5496 = vmatprep.subr.mxu0 0.0
    %5497 = vmatpush1.msra.mxu0 %v5404
    %5498 = vmatprep.subr.mxu0 0.0
    %5499 = vmatpush1.msra.mxu0 %v5403
    %5500 = vmatprep.subr.mxu0 0.0
    %5501 = vmatpush1.msra.mxu0 %v5402
    %5502 = vmatprep.subr.mxu0 0.0
    %5503 = vmatpush1.msra.mxu0 %v5401
    %5504 = vmatprep.subr.mxu0 0.0
    %5505 = vmatpush2.msra.mxu0 0.0
    %5506 = vmatprep.subr.mxu0 0.0
    %5507 = vmatpush2.msra.mxu0 0.0
    %5508 = vmatprep.subr.mxu0 0.0
    %5509 = vmatpush2.msra.mxu0 0.0
    %5510 = vmatprep.subr.mxu0 0.0
    %5511 = vmatpush2.msra.mxu0 0.0
    %5512 = vmatprep.subr.mxu0 0.0
    %5513 = vmatpush2.msra.mxu0 0.0
    %5514 = vmatprep.subr.mxu0 0.0
    %5515 = vmatpush2.msra.mxu0 0.0
    %5516 = vmatprep.subr.mxu0 0.0
    %5517 = vmatpush2.msra.mxu0 0.0
    %5518 = vmatprep.subr.mxu0 0.0
    %5519 = vmatpush2.msra.mxu0 0.0
    %5520 = vmatprep.subr.mxu0 0.0
    %5521 = vmatpush2.msra.mxu0 0.0
    %5522 = vmatprep.subr.mxu0 0.0
    %5523 = vmatpush2.msra.mxu0 0.0
    %5524 = vmatprep.subr.mxu0 0.0
    %5525 = vmatpush2.msra.mxu0 0.0
    %5526 = vmatprep.subr.mxu0 0.0
    %5527 = vmatpush2.msra.mxu0 0.0
    %5528 = vmatprep.subr.mxu0 0.0
    %5529 = vmatpush2.msra.mxu0 0.0
    %5530 = vmatprep.subr.mxu0 0.0
    %5531 = vmatpush2.msra.mxu0 0.0
    %5532 = vmatprep.subr.mxu0 0.0
    %5533 = vmatpush2.msra.mxu0 0.0
    %5534 = vmatprep.subr.mxu0 0.0
    %5535 = vmatpush2.msra.mxu0 0.0
    %5536 = vmatprep.mubr.f32.mxu0 0.0
    %5537 = vmatmul.mubr.f32.gmra.mxu0 %v5413
    %v5538 = vpop.f32.mrf.mxu0
    %v5539 = vadd.f32 %v5410, %v5538
    %v5540 = vpop.f32.mrf.mxu0
    %5541 = vmatprep.mubr.f32.mxu0 0.0
    %5542 = vmatmul.mubr.f32.gmra.mxu0 %v5416
    %v5543 = vpop.f32.mrf.mxu0
    %v5544 = vadd.f32 %v5410, %v5543
    %v5545 = vpop.f32.mrf.mxu0
    %5546 = vmatprep.mubr.f32.mxu0 0.0
    %5547 = vmatmul.mubr.f32.gmra.mxu0 %v5419
    %v5548 = vpop.f32.mrf.mxu0
    %v5549 = vadd.f32 %v5410, %v5548
    %v5550 = vpop.f32.mrf.mxu0
    %5551 = vmatprep.mubr.f32.mxu0 0.0
    %5552 = vmatmul.mubr.f32.gmra.mxu0 %v5422
    %v5553 = vpop.f32.mrf.mxu0
    %v5554 = vadd.f32 %v5410, %v5553
    %v5555 = vpop.f32.mrf.mxu0
    %5556 = vmatprep.mubr.f32.mxu0 0.0
    %5557 = vmatmul.mubr.f32.gmra.mxu0 %v5425
    %v5558 = vpop.f32.mrf.mxu0
    %v5559 = vadd.f32 %v5410, %v5558
    %v5560 = vpop.f32.mrf.mxu0
    %5561 = vmatprep.mubr.f32.mxu0 0.0
    %5562 = vmatmul.mubr.f32.gmra.mxu0 %v5428
    %v5563 = vpop.f32.mrf.mxu0
    %v5564 = vadd.f32 %v5410, %v5563
    %v5565 = vpop.f32.mrf.mxu0
    %5566 = vmatprep.mubr.f32.mxu0 0.0
    %5567 = vmatmul.mubr.f32.gmra.mxu0 %v5431
    %v5568 = vpop.f32.mrf.mxu0
    %v5569 = vadd.f32 %v5410, %v5568
    %v5570 = vpop.f32.mrf.mxu0
    %5571 = vmatprep.mubr.f32.mxu0 0.0
    %5572 = vmatmul.mubr.f32.gmra.mxu0 %v5434
    %v5573 = vpop.f32.mrf.mxu0
    %v5574 = vadd.f32 %v5410, %v5573
    %v5575 = vpop.f32.mrf.mxu0
    %5576 = vmatprep.mubr.f32.mxu0 0.0
    %5577 = vmatmul.mubr.f32.gmra.mxu0 %v5437
    %v5578 = vpop.f32.mrf.mxu0
    %v5579 = vadd.f32 %v5410, %v5578
    %v5580 = vpop.f32.mrf.mxu0
    %5581 = vmatprep.mubr.f32.mxu0 0.0
    %5582 = vmatmul.mubr.f32.gmra.mxu0 %v5440
    %v5583 = vpop.f32.mrf.mxu0
    %v5584 = vadd.f32 %v5410, %v5583
    %v5585 = vpop.f32.mrf.mxu0
    %5586 = vmatprep.mubr.f32.mxu0 0.0
    %5587 = vmatmul.mubr.f32.gmra.mxu0 %v5443
    %v5588 = vpop.f32.mrf.mxu0
    %v5589 = vadd.f32 %v5410, %v5588
    %v5590 = vpop.f32.mrf.mxu0
    %5591 = vmatprep.mubr.f32.mxu0 0.0
    %5592 = vmatmul.mubr.f32.gmra.mxu0 %v5446
    %v5593 = vpop.f32.mrf.mxu0
    %v5594 = vadd.f32 %v5410, %v5593
    %v5595 = vpop.f32.mrf.mxu0
    %5596 = vmatprep.mubr.f32.mxu0 0.0
    %5597 = vmatmul.mubr.f32.gmra.mxu0 %v5449
    %v5598 = vpop.f32.mrf.mxu0
    %v5599 = vadd.f32 %v5410, %v5598
    %v5600 = vpop.f32.mrf.mxu0
    %5601 = vmatprep.mubr.f32.mxu0 0.0
    %5602 = vmatmul.mubr.f32.gmra.mxu0 %v5452
    %v5603 = vpop.f32.mrf.mxu0
    %v5604 = vadd.f32 %v5410, %v5603
    %v5605 = vpop.f32.mrf.mxu0
    %5606 = vmatprep.mubr.f32.mxu0 0.0
    %5607 = vmatmul.mubr.f32.gmra.mxu0 %v5455
    %v5608 = vpop.f32.mrf.mxu0
    %v5609 = vadd.f32 %v5410, %v5608
    %v5610 = vpop.f32.mrf.mxu0
    %5611 = vmatprep.mubr.f32.mxu0 0.0
    %5612 = vmatmul.mubr.f32.gmra.mxu0 %v5458
    %v5613 = vpop.f32.mrf.mxu0
    %v5614 = vadd.f32 %v5410, %v5613
    %v5615 = vpop.f32.mrf.mxu0
    %5616 = vmatprep.mubr.f32.mxu0 0.0
    %5617 = vmatmul.mubr.f32.gmra.mxu0 %v5461
    %v5618 = vpop.f32.mrf.mxu0
    %v5619 = vadd.f32 %v5410, %v5618
    %v5620 = vpop.f32.mrf.mxu0
    %5621 = vmatprep.mubr.f32.mxu0 0.0
    %5622 = vmatmul.mubr.f32.gmra.mxu0 %v5464
    %v5623 = vpop.f32.mrf.mxu0
    %v5624 = vadd.f32 %v5410, %v5623
    %v5625 = vpop.f32.mrf.mxu0
    %5626 = vmatprep.mubr.f32.mxu0 0.0
    %5627 = vmatmul.mubr.f32.gmra.mxu0 %v5467
    %v5628 = vpop.f32.mrf.mxu0
    %v5629 = vadd.f32 %v5410, %v5628
    %v5630 = vpop.f32.mrf.mxu0
    %5631 = vmatprep.mubr.f32.mxu0 0.0
    %5632 = vmatmul.mubr.f32.gmra.mxu0 %v5470
    %v5633 = vpop.f32.mrf.mxu0
    %v5634 = vadd.f32 %v5410, %v5633
    %v5635 = vpop.f32.mrf.mxu0
    %5636 = vdwg.mxu0
    %v5637 = vmax.f32 %v5348, 0.0
    %v5638 = vmax.f32 %v5349, 0.0
    %v5639 = vmax.f32 %v5350, 0.0
    %v5640 = vmax.f32 %v5351, 0.0
    %v5641 = vmax.f32 %v5352, 0.0
    %v5642 = vmax.f32 %v5353, 0.0
    %v5643 = vmax.f32 %v5354, 0.0
    %v5644 = vmax.f32 %v5355, 0.0
    %v5645 = vmax.f32 %v5356, 0.0
    %v5646 = vmax.f32 %v5357, 0.0
    %v5647 = vmax.f32 %v5358, 0.0
    %v5648 = vmax.f32 %v5359, 0.0
    %v5649 = vmax.f32 %v5360, 0.0
    %v5650 = vmax.f32 %v5361, 0.0
    %v5651 = vmax.f32 %v5362, 0.0
    %v5652 = vmax.f32 %v5363, 0.0
    %v5653 = vmax.f32 %v5364, 0.0
    %v5654 = vmax.f32 %v5365, 0.0
    %v5655 = vmax.f32 %v5366, 0.0
    %v5656 = vmax.f32 %v5367, 0.0
    %v5658 = vsel %vm830, %v5637, 0
    %v5661 = vsel %vm830, %v5638, 0
    %v5664 = vsel %vm830, %v5639, 0
    %v5667 = vsel %vm830, %v5640, 0
    %v5670 = vsel %vm830, %v5641, 0
    %v5673 = vsel %vm830, %v5642, 0
    %v5676 = vsel %vm830, %v5643, 0
    %v5679 = vsel %vm830, %v5644, 0
    %v5682 = vsel %vm830, %v5645, 0
    %v5685 = vsel %vm830, %v5646, 0
    %v5688 = vsel %vm830, %v5647, 0
    %v5691 = vsel %vm830, %v5648, 0
    %v5694 = vsel %vm830, %v5649, 0
    %v5697 = vsel %vm830, %v5650, 0
    %v5700 = vsel %vm830, %v5651, 0
    %v5703 = vsel %vm830, %v5652, 0
    %v5706 = vsel %vm830, %v5653, 0
    %v5709 = vsel %vm830, %v5654, 0
    %v5712 = vsel %vm830, %v5655, 0
    %v5715 = vsel %vm830, %v5656, 0
    %5717 = vmatprep.subr.mxu0 0.0
    %5718 = vmatpush1.msra.mxu0 0.0
    %5719 = vmatprep.subr.mxu0 0.0
    %5720 = vmatpush1.msra.mxu0 0.0
    %5721 = vmatprep.subr.mxu0 0.0
    %5722 = vmatpush1.msra.mxu0 0.0
    %5723 = vmatprep.subr.mxu0 0.0
    %5724 = vmatpush1.msra.mxu0 0.0
    %5725 = vmatprep.subr.mxu0 0.0
    %5726 = vmatpush1.msra.mxu0 0.0
    %5727 = vmatprep.subr.mxu0 0.0
    %5728 = vmatpush1.msra.mxu0 0.0
    %5729 = vmatprep.subr.mxu0 0.0
    %5730 = vmatpush1.msra.mxu0 0.0
    %5731 = vmatprep.subr.mxu0 0.0
    %5732 = vmatpush1.msra.mxu0 0.0
    %5733 = vmatprep.subr.mxu0 0.0
    %5734 = vmatpush1.msra.mxu0 0.0
    %5735 = vmatprep.subr.mxu0 0.0
    %5736 = vmatpush1.msra.mxu0 0.0
    %5737 = vmatprep.subr.mxu0 0.0
    %5738 = vmatpush1.msra.mxu0 0.0
    %5739 = vmatprep.subr.mxu0 0.0
    %5740 = vmatpush1.msra.mxu0 0.0
    %5741 = vmatprep.subr.mxu0 0.0
    %5742 = vmatpush1.msra.mxu0 %v5400
    %5743 = vmatprep.subr.mxu0 0.0
    %5744 = vmatpush1.msra.mxu0 %v5399
    %5745 = vmatprep.subr.mxu0 0.0
    %5746 = vmatpush1.msra.mxu0 %v5398
    %5747 = vmatprep.subr.mxu0 0.0
    %5748 = vmatpush1.msra.mxu0 %v5397
    %5749 = vmatprep.subr.mxu0 0.0
    %5750 = vmatpush2.msra.mxu0 0.0
    %5751 = vmatprep.subr.mxu0 0.0
    %5752 = vmatpush2.msra.mxu0 0.0
    %5753 = vmatprep.subr.mxu0 0.0
    %5754 = vmatpush2.msra.mxu0 0.0
    %5755 = vmatprep.subr.mxu0 0.0
    %5756 = vmatpush2.msra.mxu0 0.0
    %5757 = vmatprep.subr.mxu0 0.0
    %5758 = vmatpush2.msra.mxu0 0.0
    %5759 = vmatprep.subr.mxu0 0.0
    %5760 = vmatpush2.msra.mxu0 0.0
    %5761 = vmatprep.subr.mxu0 0.0
    %5762 = vmatpush2.msra.mxu0 0.0
    %5763 = vmatprep.subr.mxu0 0.0
    %5764 = vmatpush2.msra.mxu0 0.0
    %5765 = vmatprep.subr.mxu0 0.0
    %5766 = vmatpush2.msra.mxu0 0.0
    %5767 = vmatprep.subr.mxu0 0.0
    %5768 = vmatpush2.msra.mxu0 0.0
    %5769 = vmatprep.subr.mxu0 0.0
    %5770 = vmatpush2.msra.mxu0 0.0
    %5771 = vmatprep.subr.mxu0 0.0
    %5772 = vmatpush2.msra.mxu0 0.0
    %5773 = vmatprep.subr.mxu0 0.0
    %5774 = vmatpush2.msra.mxu0 0.0
    %5775 = vmatprep.subr.mxu0 0.0
    %5776 = vmatpush2.msra.mxu0 0.0
    %5777 = vmatprep.subr.mxu0 0.0
    %5778 = vmatpush2.msra.mxu0 0.0
    %5779 = vmatprep.subr.mxu0 0.0
    %5780 = vmatpush2.msra.mxu0 0.0
    %5781 = vmatprep.mubr.f32.mxu0 0.0
    %5782 = vmatmul.mubr.f32.gmra.mxu0 %v5658
    %v5783 = vpop.f32.mrf.mxu0
    %v5784 = vadd.f32 0.0, %v5783
    %v5785 = vpop.f32.mrf.mxu0
    %5786 = vmatprep.mubr.f32.mxu0 0.0
    %5787 = vmatmul.mubr.f32.gmra.mxu0 %v5661
    %v5788 = vpop.f32.mrf.mxu0
    %v5789 = vadd.f32 0.0, %v5788
    %v5790 = vpop.f32.mrf.mxu0
    %5791 = vmatprep.mubr.f32.mxu0 0.0
    %5792 = vmatmul.mubr.f32.gmra.mxu0 %v5664
    %v5793 = vpop.f32.mrf.mxu0
    %v5794 = vadd.f32 0.0, %v5793
    %v5795 = vpop.f32.mrf.mxu0
    %5796 = vmatprep.mubr.f32.mxu0 0.0
    %5797 = vmatmul.mubr.f32.gmra.mxu0 %v5667
    %v5798 = vpop.f32.mrf.mxu0
    %v5799 = vadd.f32 0.0, %v5798
    %v5800 = vpop.f32.mrf.mxu0
    %5801 = vmatprep.mubr.f32.mxu0 0.0
    %5802 = vmatmul.mubr.f32.gmra.mxu0 %v5670
    %v5803 = vpop.f32.mrf.mxu0
    %v5804 = vadd.f32 0.0, %v5803
    %v5805 = vpop.f32.mrf.mxu0
    %5806 = vmatprep.mubr.f32.mxu0 0.0
    %5807 = vmatmul.mubr.f32.gmra.mxu0 %v5673
    %v5808 = vpop.f32.mrf.mxu0
    %v5809 = vadd.f32 0.0, %v5808
    %v5810 = vpop.f32.mrf.mxu0
    %5811 = vmatprep.mubr.f32.mxu0 0.0
    %5812 = vmatmul.mubr.f32.gmra.mxu0 %v5676
    %v5813 = vpop.f32.mrf.mxu0
    %v5814 = vadd.f32 0.0, %v5813
    %v5815 = vpop.f32.mrf.mxu0
    %5816 = vmatprep.mubr.f32.mxu0 0.0
    %5817 = vmatmul.mubr.f32.gmra.mxu0 %v5679
    %v5818 = vpop.f32.mrf.mxu0
    %v5819 = vadd.f32 0.0, %v5818
    %v5820 = vpop.f32.mrf.mxu0
    %5821 = vmatprep.mubr.f32.mxu0 0.0
    %5822 = vmatmul.mubr.f32.gmra.mxu0 %v5682
    %v5823 = vpop.f32.mrf.mxu0
    %v5824 = vadd.f32 0.0, %v5823
    %v5825 = vpop.f32.mrf.mxu0
    %5826 = vmatprep.mubr.f32.mxu0 0.0
    %5827 = vmatmul.mubr.f32.gmra.mxu0 %v5685
    %v5828 = vpop.f32.mrf.mxu0
    %v5829 = vadd.f32 0.0, %v5828
    %v5830 = vpop.f32.mrf.mxu0
    %5831 = vmatprep.mubr.f32.mxu0 0.0
    %5832 = vmatmul.mubr.f32.gmra.mxu0 %v5688
    %v5833 = vpop.f32.mrf.mxu0
    %v5834 = vadd.f32 0.0, %v5833
    %v5835 = vpop.f32.mrf.mxu0
    %5836 = vmatprep.mubr.f32.mxu0 0.0
    %5837 = vmatmul.mubr.f32.gmra.mxu0 %v5691
    %v5838 = vpop.f32.mrf.mxu0
    %v5839 = vadd.f32 0.0, %v5838
    %v5840 = vpop.f32.mrf.mxu0
    %5841 = vmatprep.mubr.f32.mxu0 0.0
    %5842 = vmatmul.mubr.f32.gmra.mxu0 %v5694
    %v5843 = vpop.f32.mrf.mxu0
    %v5844 = vadd.f32 0.0, %v5843
    %v5845 = vpop.f32.mrf.mxu0
    %5846 = vmatprep.mubr.f32.mxu0 0.0
    %5847 = vmatmul.mubr.f32.gmra.mxu0 %v5697
    %v5848 = vpop.f32.mrf.mxu0
    %v5849 = vadd.f32 0.0, %v5848
    %v5850 = vpop.f32.mrf.mxu0
    %5851 = vmatprep.mubr.f32.mxu0 0.0
    %5852 = vmatmul.mubr.f32.gmra.mxu0 %v5700
    %v5853 = vpop.f32.mrf.mxu0
    %v5854 = vadd.f32 0.0, %v5853
    %v5855 = vpop.f32.mrf.mxu0
    %5856 = vmatprep.mubr.f32.mxu0 0.0
    %5857 = vmatmul.mubr.f32.gmra.mxu0 %v5703
    %v5858 = vpop.f32.mrf.mxu0
    %v5859 = vadd.f32 0.0, %v5858
    %v5860 = vpop.f32.mrf.mxu0
    %5861 = vmatprep.mubr.f32.mxu0 0.0
    %5862 = vmatmul.mubr.f32.gmra.mxu0 %v5706
    %v5863 = vpop.f32.mrf.mxu0
    %v5864 = vadd.f32 0.0, %v5863
    %v5865 = vpop.f32.mrf.mxu0
    %5866 = vmatprep.mubr.f32.mxu0 0.0
    %5867 = vmatmul.mubr.f32.gmra.mxu0 %v5709
    %v5868 = vpop.f32.mrf.mxu0
    %v5869 = vadd.f32 0.0, %v5868
    %v5870 = vpop.f32.mrf.mxu0
    %5871 = vmatprep.mubr.f32.mxu0 0.0
    %5872 = vmatmul.mubr.f32.gmra.mxu0 %v5712
    %v5873 = vpop.f32.mrf.mxu0
    %v5874 = vadd.f32 0.0, %v5873
    %v5875 = vpop.f32.mrf.mxu0
    %5876 = vmatprep.mubr.f32.mxu0 0.0
    %5877 = vmatmul.mubr.f32.gmra.mxu0 %v5715
    %v5878 = vpop.f32.mrf.mxu0
    %v5879 = vadd.f32 0.0, %v5878
    %v5880 = vpop.f32.mrf.mxu0
    %5881 = vdwg.mxu0
    %5902 = vrot.lane.b32.xlu0 %v5539, 2
    %v5903 = vpop.permute.xlu0 %5902
    %5904 = vrot.lane.b32.xlu0 %v5544, 2
    %v5905 = vpop.permute.xlu0 %5904
    %5906 = vrot.lane.b32.xlu0 %v5549, 2
    %v5907 = vpop.permute.xlu0 %5906
    %5908 = vrot.lane.b32.xlu0 %v5554, 2
    %v5909 = vpop.permute.xlu0 %5908
    %5910 = vrot.lane.b32.xlu0 %v5559, 2
    %v5911 = vpop.permute.xlu0 %5910
    %5912 = vrot.lane.b32.xlu0 %v5564, 2
    %v5913 = vpop.permute.xlu0 %5912
    %5914 = vrot.lane.b32.xlu0 %v5569, 2
    %v5915 = vpop.permute.xlu0 %5914
    %5916 = vrot.lane.b32.xlu0 %v5574, 2
    %v5917 = vpop.permute.xlu0 %5916
    %5918 = vrot.lane.b32.xlu0 %v5579, 2
    %v5919 = vpop.permute.xlu0 %5918
    %5920 = vrot.lane.b32.xlu0 %v5584, 2
    %v5921 = vpop.permute.xlu0 %5920
    %5922 = vrot.lane.b32.xlu0 %v5589, 2
    %v5923 = vpop.permute.xlu0 %5922
    %5924 = vrot.lane.b32.xlu0 %v5594, 2
    %v5925 = vpop.permute.xlu0 %5924
    %5926 = vrot.lane.b32.xlu0 %v5599, 2
    %v5927 = vpop.permute.xlu0 %5926
    %5928 = vrot.lane.b32.xlu0 %v5604, 2
    %v5929 = vpop.permute.xlu0 %5928
    %5930 = vrot.lane.b32.xlu0 %v5609, 2
    %v5931 = vpop.permute.xlu0 %5930
    %5932 = vrot.lane.b32.xlu0 %v5614, 2
    %v5933 = vpop.permute.xlu0 %5932
    %5934 = vrot.lane.b32.xlu0 %v5619, 2
    %v5935 = vpop.permute.xlu0 %5934
    %5936 = vrot.lane.b32.xlu0 %v5624, 2
    %v5937 = vpop.permute.xlu0 %5936
    %5938 = vrot.lane.b32.xlu0 %v5629, 2
    %v5939 = vpop.permute.xlu0 %5938
    %5940 = vrot.lane.b32.xlu0 %v5634, 2
    %v5941 = vpop.permute.xlu0 %5940
    %v5962 = vsel %vm75, -1e+09, %v5903
    %v5963 = vsel %vm76, -1e+09, %v5905
    %v5964 = vsel %vm77, -1e+09, %v5907
    %v5965 = vsel %vm78, -1e+09, %v5909
    %v5966 = vsel %vm79, -1e+09, %v5911
    %v5967 = vsel %vm80, -1e+09, %v5913
    %v5968 = vsel %vm81, -1e+09, %v5915
    %v5969 = vsel %vm82, -1e+09, %v5917
    %v5970 = vsel %vm83, -1e+09, %v5919
    %v5971 = vsel %vm84, -1e+09, %v5921
    %v5972 = vsel %vm85, -1e+09, %v5923
    %v5973 = vsel %vm86, -1e+09, %v5925
    %v5974 = vsel %vm87, -1e+09, %v5927
    %v5975 = vsel %vm88, -1e+09, %v5929
    %v5976 = vsel %vm89, -1e+09, %v5931
    %v5977 = vsel %vm90, -1e+09, %v5933
    %v5978 = vsel %vm91, -1e+09, %v5935
    %v5979 = vsel %vm92, -1e+09, %v5937
    %v5980 = vsel %vm93, -1e+09, %v5939
    %v5981 = vsel %vm94, -1e+09, %v5941
    %v5982 = vmax.f32 %v5962, 0.0
    %v5983 = vmax.f32 %v5963, 0.0
    %v5984 = vmax.f32 %v5964, 0.0
    %v5985 = vmax.f32 %v5965, 0.0
    %v5986 = vmax.f32 %v5966, 0.0
    %v5987 = vmax.f32 %v5967, 0.0
    %v5988 = vmax.f32 %v5968, 0.0
    %v5989 = vmax.f32 %v5969, 0.0
    %v5990 = vmax.f32 %v5970, 0.0
    %v5991 = vmax.f32 %v5971, 0.0
    %v5992 = vmax.f32 %v5972, 0.0
    %v5993 = vmax.f32 %v5973, 0.0
    %v5994 = vmax.f32 %v5974, 0.0
    %v5995 = vmax.f32 %v5975, 0.0
    %v5996 = vmax.f32 %v5976, 0.0
    %v5997 = vmax.f32 %v5977, 0.0
    %v5998 = vmax.f32 %v5978, 0.0
    %v5999 = vmax.f32 %v5979, 0.0
    %v6000 = vmax.f32 %v5980, 0.0
    %v6001 = vmax.f32 %v5981, 0.0
    %6022 = vrot.lane.b32.xlu0 %v5784, 2
    %v6023 = vpop.permute.xlu0 %6022
    %6024 = vrot.lane.b32.xlu0 %v5789, 2
    %v6025 = vpop.permute.xlu0 %6024
    %6026 = vrot.lane.b32.xlu0 %v5794, 2
    %v6027 = vpop.permute.xlu0 %6026
    %6028 = vrot.lane.b32.xlu0 %v5799, 2
    %v6029 = vpop.permute.xlu0 %6028
    %6030 = vrot.lane.b32.xlu0 %v5804, 2
    %v6031 = vpop.permute.xlu0 %6030
    %6032 = vrot.lane.b32.xlu0 %v5809, 2
    %v6033 = vpop.permute.xlu0 %6032
    %6034 = vrot.lane.b32.xlu0 %v5814, 2
    %v6035 = vpop.permute.xlu0 %6034
    %6036 = vrot.lane.b32.xlu0 %v5819, 2
    %v6037 = vpop.permute.xlu0 %6036
    %6038 = vrot.lane.b32.xlu0 %v5824, 2
    %v6039 = vpop.permute.xlu0 %6038
    %6040 = vrot.lane.b32.xlu0 %v5829, 2
    %v6041 = vpop.permute.xlu0 %6040
    %6042 = vrot.lane.b32.xlu0 %v5834, 2
    %v6043 = vpop.permute.xlu0 %6042
    %6044 = vrot.lane.b32.xlu0 %v5839, 2
    %v6045 = vpop.permute.xlu0 %6044
    %6046 = vrot.lane.b32.xlu0 %v5844, 2
    %v6047 = vpop.permute.xlu0 %6046
    %6048 = vrot.lane.b32.xlu0 %v5849, 2
    %v6049 = vpop.permute.xlu0 %6048
    %6050 = vrot.lane.b32.xlu0 %v5854, 2
    %v6051 = vpop.permute.xlu0 %6050
    %6052 = vrot.lane.b32.xlu0 %v5859, 2
    %v6053 = vpop.permute.xlu0 %6052
    %6054 = vrot.lane.b32.xlu0 %v5864, 2
    %v6055 = vpop.permute.xlu0 %6054
    %6056 = vrot.lane.b32.xlu0 %v5869, 2
    %v6057 = vpop.permute.xlu0 %6056
    %6058 = vrot.lane.b32.xlu0 %v5874, 2
    %v6059 = vpop.permute.xlu0 %6058
    %6060 = vrot.lane.b32.xlu0 %v5879, 2
    %v6061 = vpop.permute.xlu0 %6060
    %v6082 = vmul.f32 %v5982, %v6023
    %v6083 = vmul.f32 %v5983, %v6025
    %v6084 = vmul.f32 %v5984, %v6027
    %v6085 = vmul.f32 %v5985, %v6029
    %v6086 = vmul.f32 %v5986, %v6031
    %v6087 = vmul.f32 %v5987, %v6033
    %v6088 = vmul.f32 %v5988, %v6035
    %v6089 = vmul.f32 %v5989, %v6037
    %v6090 = vmul.f32 %v5990, %v6039
    %v6091 = vmul.f32 %v5991, %v6041
    %v6092 = vmul.f32 %v5992, %v6043
    %v6093 = vmul.f32 %v5993, %v6045
    %v6094 = vmul.f32 %v5994, %v6047
    %v6095 = vmul.f32 %v5995, %v6049
    %v6096 = vmul.f32 %v5996, %v6051
    %v6097 = vmul.f32 %v5997, %v6053
    %v6098 = vmul.f32 %v5998, %v6055
    %v6099 = vmul.f32 %v5999, %v6057
    %v6100 = vmul.f32 %v6000, %v6059
    %v6101 = vmul.f32 %v6001, %v6061
    %v6102 = vsel %vm75, 0.0, 1.0
    %v6103 = vsel %vm76, 0.0, 1.0
    %v6104 = vsel %vm77, 0.0, 1.0
    %v6105 = vsel %vm78, 0.0, 1.0
    %v6106 = vsel %vm79, 0.0, 1.0
    %v6107 = vsel %vm80, 0.0, 1.0
    %v6108 = vsel %vm81, 0.0, 1.0
    %v6109 = vsel %vm82, 0.0, 1.0
    %v6110 = vsel %vm83, 0.0, 1.0
    %v6111 = vsel %vm84, 0.0, 1.0
    %v6112 = vsel %vm85, 0.0, 1.0
    %v6113 = vsel %vm86, 0.0, 1.0
    %v6114 = vsel %vm87, 0.0, 1.0
    %v6115 = vsel %vm88, 0.0, 1.0
    %v6116 = vsel %vm89, 0.0, 1.0
    %v6117 = vsel %vm90, 0.0, 1.0
    %v6118 = vsel %vm91, 0.0, 1.0
    %v6119 = vsel %vm92, 0.0, 1.0
    %v6120 = vsel %vm93, 0.0, 1.0
    %v6121 = vsel %vm94, 0.0, 1.0
    %v6122 = vmul.f32 %v6082, %v6102
    %v6123 = vmul.f32 %v6083, %v6103
    %v6124 = vmul.f32 %v6084, %v6104
    %v6125 = vmul.f32 %v6085, %v6105
    %v6126 = vmul.f32 %v6086, %v6106
    %v6127 = vmul.f32 %v6087, %v6107
    %v6128 = vmul.f32 %v6088, %v6108
    %v6129 = vmul.f32 %v6089, %v6109
    %v6130 = vmul.f32 %v6090, %v6110
    %v6131 = vmul.f32 %v6091, %v6111
    %v6132 = vmul.f32 %v6092, %v6112
    %v6133 = vmul.f32 %v6093, %v6113
    %v6134 = vmul.f32 %v6094, %v6114
    %v6135 = vmul.f32 %v6095, %v6115
    %v6136 = vmul.f32 %v6096, %v6116
    %v6137 = vmul.f32 %v6097, %v6117
    %v6138 = vmul.f32 %v6098, %v6118
    %v6139 = vmul.f32 %v6099, %v6119
    %v6140 = vmul.f32 %v6100, %v6120
    %v6141 = vmul.f32 %v6101, %v6121
    %6143 = vrot.lane.b32.xlu0 %v6122, 126
    %v6144 = vpop.permute.xlu0 %6143
    %6147 = vrot.lane.b32.xlu0 %v6123, 127
    %v6148 = vpop.permute.xlu0 %6147
    %6151 = vrot.lane.b32.xlu0 %v6125, 1
    %v6152 = vpop.permute.xlu0 %6151
    %6155 = vrot.lane.b32.xlu0 %v6126, 2
    %v6156 = vpop.permute.xlu0 %6155
    %6159 = vrot.lane.b32.xlu0 %v6127, 3
    %v6160 = vpop.permute.xlu0 %6159
    %6163 = vrot.lane.b32.xlu0 %v6128, 4
    %v6164 = vpop.permute.xlu0 %6163
    %6167 = vrot.lane.b32.xlu0 %v6129, 5
    %v6168 = vpop.permute.xlu0 %6167
    %6171 = vrot.lane.b32.xlu0 %v6130, 6
    %v6172 = vpop.permute.xlu0 %6171
    %6175 = vrot.lane.b32.xlu0 %v6131, 7
    %v6176 = vpop.permute.xlu0 %6175
    %6179 = vrot.lane.b32.xlu0 %v6132, 8
    %v6180 = vpop.permute.xlu0 %6179
    %6183 = vrot.lane.b32.xlu0 %v6133, 9
    %v6184 = vpop.permute.xlu0 %6183
    %6187 = vrot.lane.b32.xlu0 %v6134, 10
    %v6188 = vpop.permute.xlu0 %6187
    %6191 = vrot.lane.b32.xlu0 %v6135, 11
    %v6192 = vpop.permute.xlu0 %6191
    %6195 = vrot.lane.b32.xlu0 %v6136, 12
    %v6196 = vpop.permute.xlu0 %6195
    %6199 = vrot.lane.b32.xlu0 %v6137, 13
    %v6200 = vpop.permute.xlu0 %6199
    %vm6202 = vcmask 7168
    %v6203 = vsel %vm6202, %v6144, %v6148
    %vm6204 = vcmask 15360
    %v6205 = vsel %vm6204, %v6203, %v6124
    %v6206 = vsel %vm299, %v6205, %v6152
    %vm6207 = vcmask 31744
    %v6208 = vsel %vm6207, %v6206, %v6156
    %vm6209 = vcmask 39936
    %v6210 = vsel %vm6209, %v6208, %v6160
    %vm6211 = vcmask 48128
    %v6212 = vsel %vm6211, %v6210, %v6164
    %vm6213 = vcmask 56320
    %v6214 = vsel %vm6213, %v6212, %v6168
    %vm6215 = vcmask 64512
    %v6216 = vsel %vm6215, %v6214, %v6172
    %vm6217 = vcmask 72704
    %v6218 = vsel %vm6217, %v6216, %v6176
    %vm6219 = vcmask 80896
    %v6220 = vsel %vm6219, %v6218, %v6180
    %vm6221 = vcmask 89088
    %v6222 = vsel %vm6221, %v6220, %v6184
    %vm6223 = vcmask 97280
    %v6224 = vsel %vm6223, %v6222, %v6188
    %vm6225 = vcmask 105472
    %v6226 = vsel %vm6225, %v6224, %v6192
    %vm6227 = vcmask 113664
    %v6228 = vsel %vm6227, %v6226, %v6196
    %vm6229 = vcmask 121856
    %v6230 = vsel %vm6229, %v6228, %v6200
    %6232 = vrot.lane.b32.xlu0 %v6138, 126
    %v6233 = vpop.permute.xlu0 %6232
    %6236 = vrot.lane.b32.xlu0 %v6139, 127
    %v6237 = vpop.permute.xlu0 %6236
    %6240 = vrot.lane.b32.xlu0 %v6141, 1
    %v6241 = vpop.permute.xlu0 %6240
    %v6243 = vsel %vm6202, %v6233, %v6237
    %v6244 = vsel %vm6204, %v6243, %v6140
    %v6245 = vsel %vm299, %v6244, %v6241
    %6247 = vrot.lane.b32.xlu0 %v6245, 16
    %v6248 = vpop.permute.xlu0 %6247
    %v6250 = vsel %vm933, %v6230, %v6248
    %vm6251 = vcmask 162816
    %6252 = vst.msk [vmem:[#allocation7] sm:$0xff] %vm6251, %v6250
    %v6253 = vsel %vm6251, %v6250, 0.0
    %6254 = vadd.xlane.f32.xlu0 %v6253
    %v6255 = vpop.xlane.xlu0 %6254
    %6256 = vst.msk [vmem:[%s10] sm:$0xff] %vm6202, %v6255
    // Predicated region
    $region42: #{tpu_custom_call.1} parent=1 // pred_check
      _
    $region43: #{tpu_custom_call.1} parent=1 // pred_check_branch
      %6258 = sbr.rel (0) target = $region45
    $region44: #{tpu_custom_call.1} parent=1 // pred_region
      _
    $region45: #{tpu_custom_call.1} parent=1 // pred_fallthru
      _
    // Predicated region
    $region46: #{tpu_custom_call.1} parent=1 // pred_check
      _
    $region47: #{tpu_custom_call.1} parent=1 // pred_check_branch
      %6260 = sbr.rel (0) target = $region49
    $region48: #{tpu_custom_call.1} parent=1 // pred_region
      %s6262 = ssub.s32 128, 128
      %6263 = vsyncadd [#allocation8], %s6262
      %s6265 = sshll.u32 [#allocation7], 4
      %s6266 = int_to_ptr.vmem [resolvable:$true] %s6265
      %6268 = dma.vmem_to_hbm [thread:$0]  %s6266, 128, %s11, [#allocation8]
    $region49: #{tpu_custom_call.1} parent=1 // pred_fallthru
      _
    // Predicated region
    $region50: #{tpu_custom_call.1} parent=1 // pred_check
      _
    $region51: #{tpu_custom_call.1} parent=1 // pred_check_branch
      %6270 = sbr.rel (0) target = $region53
    $region52: #{tpu_custom_call.1} parent=1 // pred_region
      _
    $region53: #{tpu_custom_call.1} parent=1 // pred_fallthru
      _
    // Predicated region
    $region54: #{tpu_custom_call.1} parent=1 // pred_check
      _
    $region55: #{tpu_custom_call.1} parent=1 // pred_check_branch
      %6272 = sbr.rel (0) target = $region57
    $region56: #{tpu_custom_call.1} parent=1 // pred_region
      %6273 = dma.done [#allocation8], 128
    $region57: #{tpu_custom_call.1} parent=1 // pred_fallthru
      _
    %6274 = vsyncpa [#allocation8], 1

</llo_original>
